<compile_context>
chip_gen: v6e
topology: v6e:2x2x1
jax: 0.10.0
libtpu: 0.0.40
codegen_flags: <defaults>
</compile_context>

<pallas_src>
import math
from functools import partial

import jax
import jax.numpy as jnp
from jax.experimental import pallas as pl
from jax.experimental.pallas import tpu as pltpu

BN_EPS = 1e-5
CP = 128  # padded channel width (TPU lane width)


def _gelu_exact(y):
    # exact erf-based GELU == torch.nn.GELU() default
    return 0.5 * y * (1.0 + jax.lax.erf(y * (1.0 / math.sqrt(2.0))))


# ------------------------------ Pallas kernel ------------------------------ #
def conv_stem_kernel(x16_ref, w1_ref, w2_ref, w3_ref, scale_ref, shift_ref,
                     o_ref, y1s_ref, y2_ref, *, A1, B1, H2, W2, H3, W3, CIN):
    f32 = jnp.float32

    # Scratch borders double as the convolutions' zero padding.
    y1s_ref[...] = jnp.zeros_like(y1s_ref)
    y2_ref[...] = jnp.zeros_like(y2_ref)

    # ---- layer 1: 3x3 stride-2 conv, computed directly in 2x2 output-parity
    # (space-to-depth) form so that layer 2 only needs unit-stride slices.
    # Cin=3 -> VPU broadcast-FMA implicit GEMM (27 FMAs per parity plane).
    for p in range(2):
        for q in range(2):
            acc = jnp.zeros((A1, B1, CP), f32)
            for kh in range(3):
                for kw in range(3):
                    u, v = 2 * p + kh, 2 * q + kw
                    sub = (u % 4) * 4 + (v % 4)        # which 4x4-s2d sub-image
                    da, db = u // 4, v // 4            # offset inside it
                    win = x16_ref[sub, da:da + A1, db:db + B1, :].astype(f32)
                    wt = w1_ref[kh * 3 + kw]           # (CIN, CP) f32
                    for ci in range(CIN):
                        acc += win[:, :, ci:ci + 1] * wt[ci:ci + 1, :]
            y = _gelu_exact(acc * scale_ref[0:1, :] + shift_ref[0:1, :])
            y1s_ref[2 * p + q, 1:1 + A1, 1:1 + B1, :] = y.astype(y1s_ref.dtype)

    # ---- layer 2: 3x3 stride-2 conv on y1.  The parity-split y1 turns every
    # stride-2 tap into a unit-stride window; K = N = 128 bf16 MXU matmuls.
    acc = jnp.zeros((H2 * W2, CP), f32)
    for kh in range(3):
        p, dr = ((1, 0), (0, 1), (1, 1))[kh]
        for kw in range(3):
            q, dc = ((1, 0), (0, 1), (1, 1))[kw]
            win = y1s_ref[2 * p + q, dr:dr + H2, dc:dc + W2, :]
            acc += jnp.dot(win.reshape(H2 * W2, CP), w2_ref[kh * 3 + kw],
                           preferred_element_type=f32)
    y = _gelu_exact(acc * scale_ref[1:2, :] + shift_ref[1:2, :])
    y2_ref[1:1 + H2, 1:1 + W2, :] = y.reshape(H2, W2, CP).astype(y2_ref.dtype)

    # ---- layer 3: 3x3 stride-1 conv.
    acc = jnp.zeros((H3 * W3, CP), f32)
    for kh in range(3):
        for kw in range(3):
            win = y2_ref[kh:kh + H3, kw:kw + W3, :]
            acc += jnp.dot(win.reshape(H3 * W3, CP), w3_ref[kh * 3 + kw],
                           preferred_element_type=f32)
    y = _gelu_exact(acc * scale_ref[2:3, :] + shift_ref[2:3, :])
    o_ref[0] = y.astype(o_ref.dtype)   # (H3*W3, CP): lane-dense store (minor dim 128)


# ------------------------------- wrapper (JAX) ------------------------------ #
def conv_stem_forward(x_nchw, folded_params, out_channels):
    """Pallas implementation of ConvStem.forward (NCHW in / NCHW out)."""
    w1, w2, w3, scales, shifts = folded_params
    x = jnp.transpose(x_nchw, (0, 2, 3, 1)).astype(jnp.float32)  # -> NHWC
    N, H, W, CIN = x.shape
    # TODO(synk): general H/W (not multiples of 4) needs edge handling in the s2d split.
    assert H % 4 == 0 and W % 4 == 0, (H, W)

    Ho1, Wo1 = H // 2, W // 2        # layer-1 output (stride 2)
    A1, B1 = Ho1 // 2, Wo1 // 2      # its 2x2-parity plane size
    H2, W2 = A1, B1                  # layer-2 output (stride 2)
    H3, W3 = H2, W2                  # layer-3 output (stride 1)
    A16, B16 = A1 + 1, B1 + 1

    # 4x4 space-to-depth of the zero-padded input (~1x input bytes; replaces the
    # old 9x-expanded HBM im2col):  x16[n*16 + 4r + c, a, b, ch] = x_pad[n, 4a+r, 4b+c, ch]
    xp = jnp.pad(x, ((0, 0), (1, 3), (1, 3), (0, 0)))
    x16 = xp.reshape(N, A16, 4, B16, 4, CIN).transpose(0, 2, 4, 1, 3, 5)
    x16 = x16.reshape(N * 16, A16, B16, CIN).astype(jnp.bfloat16)

    kernel = partial(conv_stem_kernel, A1=A1, B1=B1, H2=H2, W2=W2,
                     H3=H3, W3=W3, CIN=CIN)
    out = pl.pallas_call(
        kernel,
        out_shape=jax.ShapeDtypeStruct((N, H3 * W3, CP), jnp.float32),
        grid=(N,),
        in_specs=[
            pl.BlockSpec((16, A16, B16, CIN), lambda n: (n, 0, 0, 0)),  # s2d image
            pl.BlockSpec(w1.shape, lambda n: (0, 0, 0)),                # (9,CIN,CP) f32
            pl.BlockSpec(w2.shape, lambda n: (0, 0, 0)),                # (9,CP,CP) bf16
            pl.BlockSpec(w3.shape, lambda n: (0, 0, 0)),                # (9,CP,CP) bf16
            pl.BlockSpec(scales.shape, lambda n: (0, 0)),               # (3,CP) f32
            pl.BlockSpec(shifts.shape, lambda n: (0, 0)),               # (3,CP) f32
        ],
        out_specs=pl.BlockSpec((1, H3 * W3, CP), lambda n: (n, 0, 0)),
        scratch_shapes=[
            pltpu.VMEM((4, A1 + 2, B1 + 2, CP), jnp.bfloat16),  # parity-split y1 (+pad)
            pltpu.VMEM((H2 + 2, W2 + 2, CP), jnp.bfloat16),     # y2 (+pad)
        ],
        compiler_params=pltpu.CompilerParams(
            dimension_semantics=("parallel",)),  # >=2 grid steps -> both v7x TCs
    )(x16, w1, w2, w3, scales, shifts)

    out = out.reshape(N, H3, W3, CP)[..., :out_channels]
    return jnp.transpose(out, (0, 3, 1, 2))      # -> NCHW


conv_stem = jax.jit(conv_stem_forward, static_argnums=(2,))


# ------------------------------ parameter init ------------------------------ #
def init_conv_stem_params(key, out_channels):
    """Deterministic synthetic parameters for the 3 conv/BN layers (inference BN)."""
    assert out_channels <= CP
    cins = [3, out_channels, out_channels]
    cin_pads = [3, CP, CP]
    strides = [2, 2, 1]
    raw, w_taps, scales, shifts = [], [], [], []
    for cin, cin_pad, stride in zip(cins, cin_pads, strides):
        key, k_w, k_g, k_b, k_m, k_v = jax.random.split(key, 6)
        fan_in = cin * 9
        w = jax.random.normal(k_w, (out_channels, cin, 3, 3), jnp.float32) * (
            1.0 / math.sqrt(fan_in))
        gamma = 1.0 + 0.1 * jax.random.normal(k_g, (out_channels,), jnp.float32)
        beta = 0.1 * jax.random.normal(k_b, (out_channels,), jnp.float32)
        rmean = 0.1 * jax.random.normal(k_m, (out_channels,), jnp.float32)
        rvar = jnp.abs(jax.random.normal(k_v, (out_channels,), jnp.float32)) + 0.5
        raw.append((w, gamma, beta, rmean, rvar, stride))

        # (Cout, Cin, kh, kw) -> (9, Cin, Cout), zero-padded to (9, cin_pad, CP).
        wt = jnp.transpose(w, (2, 3, 1, 0)).reshape(9, cin, out_channels)
        wt = jnp.pad(wt, ((0, 0), (0, cin_pad - cin), (0, CP - out_channels)))
        w_taps.append(wt)

        s = gamma / jnp.sqrt(rvar + BN_EPS)
        sh = beta - rmean * s
        # padded channels: scale 1 / shift 0 -> they stay exactly zero through GELU
        scales.append(jnp.pad(s, (0, CP - out_channels), constant_values=1.0))
        shifts.append(jnp.pad(sh, (0, CP - out_channels), constant_values=0.0))

    folded = (w_taps[0].astype(jnp.float32),      # layer 1 runs on the VPU in f32
              w_taps[1].astype(jnp.bfloat16),     # layers 2/3 feed the MXU in bf16
              w_taps[2].astype(jnp.bfloat16),
              jnp.stack(scales), jnp.stack(shifts))
    return raw, folded


# ----------------------------- pure-JAX reference --------------------------- #
def conv_stem_reference(x_nchw, raw_params):
    y = x_nchw.astype(jnp.float32)
    for w, gamma, beta, rmean, rvar, stride in raw_params:
        y = jax.lax.conv_general_dilated(
            y, w, (stride, stride), ((1, 1), (1, 1)),
            dimension_numbers=("NCHW", "OIHW", "NCHW"))
        s = gamma / jnp.sqrt(rvar + BN_EPS)
        y = y * s[None, :, None, None] + (beta - rmean * s)[None, :, None, None]
        y = jax.nn.gelu(y, approximate=False)
    return y


if __name__ == "__main__":
    out_channels = 32
    key = jax.random.PRNGKey(0)
    key, k_x = jax.random.split(key)
    x = jax.random.normal(k_x, (2, 3, 16, 16), jnp.float32)  # NCHW, like PyTorch

    raw_params, folded_params = init_conv_stem_params(key, out_channels)

    out = jax.block_until_ready(conv_stem(x, folded_params, out_channels))
    # sanity: (2, 32, 4, 4) after strides 2,2,1 on 16x16
    assert out.shape == (2, out_channels, 4, 4), out.shape

    ref = jax.block_until_ready(conv_stem_reference(x, raw_params))
    # bf16 MXU operands (input stream + layer-2/3 weights/activations) vs. a pure
    # f32 reference -> compare with a bf16-appropriate tolerance.
    max_err = float(jnp.max(jnp.abs(out - ref)))
    ref_scale = float(jnp.max(jnp.abs(ref)))
    assert max_err <= 3e-2 * ref_scale + 1e-3, (max_err, ref_scale)

    print("KERNEL_OK")
</pallas_src>

<mosaic_0001>
module attributes {stable_mosaic.version = 11 : i64} {
  func.func @conv_stem_kernel(%arg0: i32, %arg1: memref<16x5x5x3xbf16, #tpu.memory_space<vmem>>, %arg2: memref<9x3x128xf32, #tpu.memory_space<vmem>>, %arg3: memref<9x128x128xbf16, #tpu.memory_space<vmem>>, %arg4: memref<9x128x128xbf16, #tpu.memory_space<vmem>>, %arg5: memref<3x128xf32, #tpu.memory_space<vmem>>, %arg6: memref<3x128xf32, #tpu.memory_space<vmem>>, %arg7: memref<1x16x128xf32, #tpu.memory_space<vmem>>, %arg8: memref<4x6x6x128xbf16, #tpu.memory_space<vmem>>, %arg9: memref<6x6x128xbf16, #tpu.memory_space<vmem>>) attributes {dimension_semantics = [#tpu.dimension_semantics<parallel>], iteration_bounds = array<i64: 2>, scalar_prefetch = 0 : i64, scratch_operands = 2 : i64, tpu.core_type = #tpu.core_type<tc>, window_params = [{transform_indices = @transform_0, window_bounds = array<i64: 16, 5, 5, 3>}, {pipeline_mode = #tpu.pipeline_mode<synchronous>, transform_indices = @transform_1, window_bounds = array<i64: 9, 3, 128>}, {pipeline_mode = #tpu.pipeline_mode<synchronous>, transform_indices = @transform_2, window_bounds = array<i64: 9, 128, 128>}, {pipeline_mode = #tpu.pipeline_mode<synchronous>, transform_indices = @transform_3, window_bounds = array<i64: 9, 128, 128>}, {pipeline_mode = #tpu.pipeline_mode<synchronous>, transform_indices = @transform_4, window_bounds = array<i64: 3, 128>}, {pipeline_mode = #tpu.pipeline_mode<synchronous>, transform_indices = @transform_5, window_bounds = array<i64: 3, 128>}, {transform_indices = @transform_6, window_bounds = array<i64: 1, 16, 128>}]} {
    %cst = arith.constant 0.000000e+00 : bf16
    %0 = vector.broadcast %cst : bf16 to vector<4x6x6x128xbf16>
    %c0 = arith.constant 0 : index
    %c0_0 = arith.constant 0 : index
    %c0_1 = arith.constant 0 : index
    %c0_2 = arith.constant 0 : index
    %1 = vector.load %arg8[%c0, %c0_0, %c0_1, %c0_2] : memref<4x6x6x128xbf16, #tpu.memory_space<vmem>>, vector<4x6x6x128xbf16>
    tpu.vector_store %arg8[%c0, %c0_0, %c0_1, %c0_2], %0 {strides = array<i32>} : memref<4x6x6x128xbf16, #tpu.memory_space<vmem>>, vector<4x6x6x128xbf16>,
    %cst_3 = arith.constant 0.000000e+00 : bf16
    %2 = vector.broadcast %cst_3 : bf16 to vector<6x6x128xbf16>
    %c0_4 = arith.constant 0 : index
    %c0_5 = arith.constant 0 : index
    %c0_6 = arith.constant 0 : index
    %3 = vector.load %arg9[%c0_4, %c0_5, %c0_6] : memref<6x6x128xbf16, #tpu.memory_space<vmem>>, vector<6x6x128xbf16>
    tpu.vector_store %arg9[%c0_4, %c0_5, %c0_6], %2 {strides = array<i32>} : memref<6x6x128xbf16, #tpu.memory_space<vmem>>, vector<6x6x128xbf16>,
    %cst_7 = arith.constant 0.000000e+00 : f32
    %4 = vector.broadcast %cst_7 : f32 to vector<4x4x128xf32>
    %c0_8 = arith.constant 0 : index
    %c0_9 = arith.constant 0 : index
    %c0_10 = arith.constant 0 : index
    %c0_11 = arith.constant 0 : index
    %5 = vector.load %arg1[%c0_8, %c0_9, %c0_10, %c0_11] : memref<16x5x5x3xbf16, #tpu.memory_space<vmem>>, vector<1x4x4x3xbf16>
    %6 = vector.shape_cast %5 : vector<1x4x4x3xbf16> to vector<4x4x3xbf16>
    %7 = arith.extf %6 : vector<4x4x3xbf16> to vector<4x4x3xf32>
    %c0_12 = arith.constant 0 : index
    %c0_13 = arith.constant 0 : index
    %c0_14 = arith.constant 0 : index
    %8 = vector.load %arg2[%c0_12, %c0_13, %c0_14] : memref<9x3x128xf32, #tpu.memory_space<vmem>>, vector<1x3x128xf32>
    %9 = vector.shape_cast %8 : vector<1x3x128xf32> to vector<3x128xf32>
    %10 = vector.extract_strided_slice %7 {offsets = [0, 0, 0], sizes = [4, 4, 1], strides = [1, 1, 1]} : vector<4x4x3xf32> to vector<4x4x1xf32>
    %11 = vector.extract_strided_slice %9 {offsets = [0, 0], sizes = [1, 128], strides = [1, 1]} : vector<3x128xf32> to vector<1x128xf32>
    %12 = vector.shape_cast %11 : vector<1x128xf32> to vector<1x1x128xf32>
    %13 = vector.broadcast %10 : vector<4x4x1xf32> to vector<4x4x128xf32>
    %14 = vector.broadcast %12 : vector<1x1x128xf32> to vector<4x4x128xf32>
    %15 = arith.mulf %13, %14 : vector<4x4x128xf32>
    %16 = arith.addf %4, %15 : vector<4x4x128xf32>
    %17 = vector.extract_strided_slice %7 {offsets = [0, 0, 1], sizes = [4, 4, 1], strides = [1, 1, 1]} : vector<4x4x3xf32> to vector<4x4x1xf32>
    %18 = vector.extract_strided_slice %9 {offsets = [1, 0], sizes = [1, 128], strides = [1, 1]} : vector<3x128xf32> to vector<1x128xf32>
    %19 = vector.shape_cast %18 : vector<1x128xf32> to vector<1x1x128xf32>
    %20 = vector.broadcast %17 : vector<4x4x1xf32> to vector<4x4x128xf32>
    %21 = vector.broadcast %19 : vector<1x1x128xf32> to vector<4x4x128xf32>
    %22 = arith.mulf %20, %21 : vector<4x4x128xf32>
    %23 = arith.addf %16, %22 : vector<4x4x128xf32>
    %24 = vector.extract_strided_slice %7 {offsets = [0, 0, 2], sizes = [4, 4, 1], strides = [1, 1, 1]} : vector<4x4x3xf32> to vector<4x4x1xf32>
    %25 = vector.extract_strided_slice %9 {offsets = [2, 0], sizes = [1, 128], strides = [1, 1]} : vector<3x128xf32> to vector<1x128xf32>
    %26 = vector.shape_cast %25 : vector<1x128xf32> to vector<1x1x128xf32>
    %27 = vector.broadcast %24 : vector<4x4x1xf32> to vector<4x4x128xf32>
    %28 = vector.broadcast %26 : vector<1x1x128xf32> to vector<4x4x128xf32>
    %29 = arith.mulf %27, %28 : vector<4x4x128xf32>
    %30 = arith.addf %23, %29 : vector<4x4x128xf32>
    %c1 = arith.constant 1 : index
    %c0_15 = arith.constant 0 : index
    %c0_16 = arith.constant 0 : index
    %c0_17 = arith.constant 0 : index
    %31 = vector.load %arg1[%c1, %c0_15, %c0_16, %c0_17] : memref<16x5x5x3xbf16, #tpu.memory_space<vmem>>, vector<1x4x4x3xbf16>
    %32 = vector.shape_cast %31 : vector<1x4x4x3xbf16> to vector<4x4x3xbf16>
    %33 = arith.extf %32 : vector<4x4x3xbf16> to vector<4x4x3xf32>
    %c1_18 = arith.constant 1 : index
    %c0_19 = arith.constant 0 : index
    %c0_20 = arith.constant 0 : index
    %34 = vector.load %arg2[%c1_18, %c0_19, %c0_20] : memref<9x3x128xf32, #tpu.memory_space<vmem>>, vector<1x3x128xf32>
    %35 = vector.shape_cast %34 : vector<1x3x128xf32> to vector<3x128xf32>
    %36 = vector.extract_strided_slice %33 {offsets = [0, 0, 0], sizes = [4, 4, 1], strides = [1, 1, 1]} : vector<4x4x3xf32> to vector<4x4x1xf32>
    %37 = vector.extract_strided_slice %35 {offsets = [0, 0], sizes = [1, 128], strides = [1, 1]} : vector<3x128xf32> to vector<1x128xf32>
    %38 = vector.shape_cast %37 : vector<1x128xf32> to vector<1x1x128xf32>
    %39 = vector.broadcast %36 : vector<4x4x1xf32> to vector<4x4x128xf32>
    %40 = vector.broadcast %38 : vector<1x1x128xf32> to vector<4x4x128xf32>
    %41 = arith.mulf %39, %40 : vector<4x4x128xf32>
    %42 = arith.addf %30, %41 : vector<4x4x128xf32>
    %43 = vector.extract_strided_slice %33 {offsets = [0, 0, 1], sizes = [4, 4, 1], strides = [1, 1, 1]} : vector<4x4x3xf32> to vector<4x4x1xf32>
    %44 = vector.extract_strided_slice %35 {offsets = [1, 0], sizes = [1, 128], strides = [1, 1]} : vector<3x128xf32> to vector<1x128xf32>
    %45 = vector.shape_cast %44 : vector<1x128xf32> to vector<1x1x128xf32>
    %46 = vector.broadcast %43 : vector<4x4x1xf32> to vector<4x4x128xf32>
    %47 = vector.broadcast %45 : vector<1x1x128xf32> to vector<4x4x128xf32>
    %48 = arith.mulf %46, %47 : vector<4x4x128xf32>
    %49 = arith.addf %42, %48 : vector<4x4x128xf32>
    %50 = vector.extract_strided_slice %33 {offsets = [0, 0, 2], sizes = [4, 4, 1], strides = [1, 1, 1]} : vector<4x4x3xf32> to vector<4x4x1xf32>
    %51 = vector.extract_strided_slice %35 {offsets = [2, 0], sizes = [1, 128], strides = [1, 1]} : vector<3x128xf32> to vector<1x128xf32>
    %52 = vector.shape_cast %51 : vector<1x128xf32> to vector<1x1x128xf32>
    %53 = vector.broadcast %50 : vector<4x4x1xf32> to vector<4x4x128xf32>
    %54 = vector.broadcast %52 : vector<1x1x128xf32> to vector<4x4x128xf32>
    %55 = arith.mulf %53, %54 : vector<4x4x128xf32>
    %56 = arith.addf %49, %55 : vector<4x4x128xf32>
    %c2 = arith.constant 2 : index
    %c0_21 = arith.constant 0 : index
    %c0_22 = arith.constant 0 : index
    %c0_23 = arith.constant 0 : index
    %57 = vector.load %arg1[%c2, %c0_21, %c0_22, %c0_23] : memref<16x5x5x3xbf16, #tpu.memory_space<vmem>>, vector<1x4x4x3xbf16>
    %58 = vector.shape_cast %57 : vector<1x4x4x3xbf16> to vector<4x4x3xbf16>
    %59 = arith.extf %58 : vector<4x4x3xbf16> to vector<4x4x3xf32>
    %c2_24 = arith.constant 2 : index
    %c0_25 = arith.constant 0 : index
    %c0_26 = arith.constant 0 : index
    %60 = vector.load %arg2[%c2_24, %c0_25, %c0_26] : memref<9x3x128xf32, #tpu.memory_space<vmem>>, vector<1x3x128xf32>
    %61 = vector.shape_cast %60 : vector<1x3x128xf32> to vector<3x128xf32>
    %62 = vector.extract_strided_slice %59 {offsets = [0, 0, 0], sizes = [4, 4, 1], strides = [1, 1, 1]} : vector<4x4x3xf32> to vector<4x4x1xf32>
    %63 = vector.extract_strided_slice %61 {offsets = [0, 0], sizes = [1, 128], strides = [1, 1]} : vector<3x128xf32> to vector<1x128xf32>
    %64 = vector.shape_cast %63 : vector<1x128xf32> to vector<1x1x128xf32>
    %65 = vector.broadcast %62 : vector<4x4x1xf32> to vector<4x4x128xf32>
    %66 = vector.broadcast %64 : vector<1x1x128xf32> to vector<4x4x128xf32>
    %67 = arith.mulf %65, %66 : vector<4x4x128xf32>
    %68 = arith.addf %56, %67 : vector<4x4x128xf32>
    %69 = vector.extract_strided_slice %59 {offsets = [0, 0, 1], sizes = [4, 4, 1], strides = [1, 1, 1]} : vector<4x4x3xf32> to vector<4x4x1xf32>
    %70 = vector.extract_strided_slice %61 {offsets = [1, 0], sizes = [1, 128], strides = [1, 1]} : vector<3x128xf32> to vector<1x128xf32>
    %71 = vector.shape_cast %70 : vector<1x128xf32> to vector<1x1x128xf32>
    %72 = vector.broadcast %69 : vector<4x4x1xf32> to vector<4x4x128xf32>
    %73 = vector.broadcast %71 : vector<1x1x128xf32> to vector<4x4x128xf32>
    %74 = arith.mulf %72, %73 : vector<4x4x128xf32>
    %75 = arith.addf %68, %74 : vector<4x4x128xf32>
    %76 = vector.extract_strided_slice %59 {offsets = [0, 0, 2], sizes = [4, 4, 1], strides = [1, 1, 1]} : vector<4x4x3xf32> to vector<4x4x1xf32>
    %77 = vector.extract_strided_slice %61 {offsets = [2, 0], sizes = [1, 128], strides = [1, 1]} : vector<3x128xf32> to vector<1x128xf32>
    %78 = vector.shape_cast %77 : vector<1x128xf32> to vector<1x1x128xf32>
    %79 = vector.broadcast %76 : vector<4x4x1xf32> to vector<4x4x128xf32>
    %80 = vector.broadcast %78 : vector<1x1x128xf32> to vector<4x4x128xf32>
    %81 = arith.mulf %79, %80 : vector<4x4x128xf32>
    %82 = arith.addf %75, %81 : vector<4x4x128xf32>
    %c4 = arith.constant 4 : index
    %c0_27 = arith.constant 0 : index
    %c0_28 = arith.constant 0 : index
    %c0_29 = arith.constant 0 : index
    %83 = vector.load %arg1[%c4, %c0_27, %c0_28, %c0_29] : memref<16x5x5x3xbf16, #tpu.memory_space<vmem>>, vector<1x4x4x3xbf16>
    %84 = vector.shape_cast %83 : vector<1x4x4x3xbf16> to vector<4x4x3xbf16>
    %85 = arith.extf %84 : vector<4x4x3xbf16> to vector<4x4x3xf32>
    %c3 = arith.constant 3 : index
    %c0_30 = arith.constant 0 : index
    %c0_31 = arith.constant 0 : index
    %86 = vector.load %arg2[%c3, %c0_30, %c0_31] : memref<9x3x128xf32, #tpu.memory_space<vmem>>, vector<1x3x128xf32>
    %87 = vector.shape_cast %86 : vector<1x3x128xf32> to vector<3x128xf32>
    %88 = vector.extract_strided_slice %85 {offsets = [0, 0, 0], sizes = [4, 4, 1], strides = [1, 1, 1]} : vector<4x4x3xf32> to vector<4x4x1xf32>
    %89 = vector.extract_strided_slice %87 {offsets = [0, 0], sizes = [1, 128], strides = [1, 1]} : vector<3x128xf32> to vector<1x128xf32>
    %90 = vector.shape_cast %89 : vector<1x128xf32> to vector<1x1x128xf32>
    %91 = vector.broadcast %88 : vector<4x4x1xf32> to vector<4x4x128xf32>
    %92 = vector.broadcast %90 : vector<1x1x128xf32> to vector<4x4x128xf32>
    %93 = arith.mulf %91, %92 : vector<4x4x128xf32>
    %94 = arith.addf %82, %93 : vector<4x4x128xf32>
    %95 = vector.extract_strided_slice %85 {offsets = [0, 0, 1], sizes = [4, 4, 1], strides = [1, 1, 1]} : vector<4x4x3xf32> to vector<4x4x1xf32>
    %96 = vector.extract_strided_slice %87 {offsets = [1, 0], sizes = [1, 128], strides = [1, 1]} : vector<3x128xf32> to vector<1x128xf32>
    %97 = vector.shape_cast %96 : vector<1x128xf32> to vector<1x1x128xf32>
    %98 = vector.broadcast %95 : vector<4x4x1xf32> to vector<4x4x128xf32>
    %99 = vector.broadcast %97 : vector<1x1x128xf32> to vector<4x4x128xf32>
    %100 = arith.mulf %98, %99 : vector<4x4x128xf32>
    %101 = arith.addf %94, %100 : vector<4x4x128xf32>
    %102 = vector.extract_strided_slice %85 {offsets = [0, 0, 2], sizes = [4, 4, 1], strides = [1, 1, 1]} : vector<4x4x3xf32> to vector<4x4x1xf32>
    %103 = vector.extract_strided_slice %87 {offsets = [2, 0], sizes = [1, 128], strides = [1, 1]} : vector<3x128xf32> to vector<1x128xf32>
    %104 = vector.shape_cast %103 : vector<1x128xf32> to vector<1x1x128xf32>
    %105 = vector.broadcast %102 : vector<4x4x1xf32> to vector<4x4x128xf32>
    %106 = vector.broadcast %104 : vector<1x1x128xf32> to vector<4x4x128xf32>
    %107 = arith.mulf %105, %106 : vector<4x4x128xf32>
    %108 = arith.addf %101, %107 : vector<4x4x128xf32>
    %c5 = arith.constant 5 : index
    %c0_32 = arith.constant 0 : index
    %c0_33 = arith.constant 0 : index
    %c0_34 = arith.constant 0 : index
    %109 = vector.load %arg1[%c5, %c0_32, %c0_33, %c0_34] : memref<16x5x5x3xbf16, #tpu.memory_space<vmem>>, vector<1x4x4x3xbf16>
    %110 = vector.shape_cast %109 : vector<1x4x4x3xbf16> to vector<4x4x3xbf16>
    %111 = arith.extf %110 : vector<4x4x3xbf16> to vector<4x4x3xf32>
    %c4_35 = arith.constant 4 : index
    %c0_36 = arith.constant 0 : index
    %c0_37 = arith.constant 0 : index
    %112 = vector.load %arg2[%c4_35, %c0_36, %c0_37] : memref<9x3x128xf32, #tpu.memory_space<vmem>>, vector<1x3x128xf32>
    %113 = vector.shape_cast %112 : vector<1x3x128xf32> to vector<3x128xf32>
    %114 = vector.extract_strided_slice %111 {offsets = [0, 0, 0], sizes = [4, 4, 1], strides = [1, 1, 1]} : vector<4x4x3xf32> to vector<4x4x1xf32>
    %115 = vector.extract_strided_slice %113 {offsets = [0, 0], sizes = [1, 128], strides = [1, 1]} : vector<3x128xf32> to vector<1x128xf32>
    %116 = vector.shape_cast %115 : vector<1x128xf32> to vector<1x1x128xf32>
    %117 = vector.broadcast %114 : vector<4x4x1xf32> to vector<4x4x128xf32>
    %118 = vector.broadcast %116 : vector<1x1x128xf32> to vector<4x4x128xf32>
    %119 = arith.mulf %117, %118 : vector<4x4x128xf32>
    %120 = arith.addf %108, %119 : vector<4x4x128xf32>
    %121 = vector.extract_strided_slice %111 {offsets = [0, 0, 1], sizes = [4, 4, 1], strides = [1, 1, 1]} : vector<4x4x3xf32> to vector<4x4x1xf32>
    %122 = vector.extract_strided_slice %113 {offsets = [1, 0], sizes = [1, 128], strides = [1, 1]} : vector<3x128xf32> to vector<1x128xf32>
    %123 = vector.shape_cast %122 : vector<1x128xf32> to vector<1x1x128xf32>
    %124 = vector.broadcast %121 : vector<4x4x1xf32> to vector<4x4x128xf32>
    %125 = vector.broadcast %123 : vector<1x1x128xf32> to vector<4x4x128xf32>
    %126 = arith.mulf %124, %125 : vector<4x4x128xf32>
    %127 = arith.addf %120, %126 : vector<4x4x128xf32>
    %128 = vector.extract_strided_slice %111 {offsets = [0, 0, 2], sizes = [4, 4, 1], strides = [1, 1, 1]} : vector<4x4x3xf32> to vector<4x4x1xf32>
    %129 = vector.extract_strided_slice %113 {offsets = [2, 0], sizes = [1, 128], strides = [1, 1]} : vector<3x128xf32> to vector<1x128xf32>
    %130 = vector.shape_cast %129 : vector<1x128xf32> to vector<1x1x128xf32>
    %131 = vector.broadcast %128 : vector<4x4x1xf32> to vector<4x4x128xf32>
    %132 = vector.broadcast %130 : vector<1x1x128xf32> to vector<4x4x128xf32>
    %133 = arith.mulf %131, %132 : vector<4x4x128xf32>
    %134 = arith.addf %127, %133 : vector<4x4x128xf32>
    %c6 = arith.constant 6 : index
    %c0_38 = arith.constant 0 : index
    %c0_39 = arith.constant 0 : index
    %c0_40 = arith.constant 0 : index
    %135 = vector.load %arg1[%c6, %c0_38, %c0_39, %c0_40] : memref<16x5x5x3xbf16, #tpu.memory_space<vmem>>, vector<1x4x4x3xbf16>
    %136 = vector.shape_cast %135 : vector<1x4x4x3xbf16> to vector<4x4x3xbf16>
    %137 = arith.extf %136 : vector<4x4x3xbf16> to vector<4x4x3xf32>
    %c5_41 = arith.constant 5 : index
    %c0_42 = arith.constant 0 : index
    %c0_43 = arith.constant 0 : index
    %138 = vector.load %arg2[%c5_41, %c0_42, %c0_43] : memref<9x3x128xf32, #tpu.memory_space<vmem>>, vector<1x3x128xf32>
    %139 = vector.shape_cast %138 : vector<1x3x128xf32> to vector<3x128xf32>
    %140 = vector.extract_strided_slice %137 {offsets = [0, 0, 0], sizes = [4, 4, 1], strides = [1, 1, 1]} : vector<4x4x3xf32> to vector<4x4x1xf32>
    %141 = vector.extract_strided_slice %139 {offsets = [0, 0], sizes = [1, 128], strides = [1, 1]} : vector<3x128xf32> to vector<1x128xf32>
    %142 = vector.shape_cast %141 : vector<1x128xf32> to vector<1x1x128xf32>
    %143 = vector.broadcast %140 : vector<4x4x1xf32> to vector<4x4x128xf32>
    %144 = vector.broadcast %142 : vector<1x1x128xf32> to vector<4x4x128xf32>
    %145 = arith.mulf %143, %144 : vector<4x4x128xf32>
    %146 = arith.addf %134, %145 : vector<4x4x128xf32>
    %147 = vector.extract_strided_slice %137 {offsets = [0, 0, 1], sizes = [4, 4, 1], strides = [1, 1, 1]} : vector<4x4x3xf32> to vector<4x4x1xf32>
    %148 = vector.extract_strided_slice %139 {offsets = [1, 0], sizes = [1, 128], strides = [1, 1]} : vector<3x128xf32> to vector<1x128xf32>
    %149 = vector.shape_cast %148 : vector<1x128xf32> to vector<1x1x128xf32>
    %150 = vector.broadcast %147 : vector<4x4x1xf32> to vector<4x4x128xf32>
    %151 = vector.broadcast %149 : vector<1x1x128xf32> to vector<4x4x128xf32>
    %152 = arith.mulf %150, %151 : vector<4x4x128xf32>
    %153 = arith.addf %146, %152 : vector<4x4x128xf32>
    %154 = vector.extract_strided_slice %137 {offsets = [0, 0, 2], sizes = [4, 4, 1], strides = [1, 1, 1]} : vector<4x4x3xf32> to vector<4x4x1xf32>
    %155 = vector.extract_strided_slice %139 {offsets = [2, 0], sizes = [1, 128], strides = [1, 1]} : vector<3x128xf32> to vector<1x128xf32>
    %156 = vector.shape_cast %155 : vector<1x128xf32> to vector<1x1x128xf32>
    %157 = vector.broadcast %154 : vector<4x4x1xf32> to vector<4x4x128xf32>
    %158 = vector.broadcast %156 : vector<1x1x128xf32> to vector<4x4x128xf32>
    %159 = arith.mulf %157, %158 : vector<4x4x128xf32>
    %160 = arith.addf %153, %159 : vector<4x4x128xf32>
    %c8 = arith.constant 8 : index
    %c0_44 = arith.constant 0 : index
    %c0_45 = arith.constant 0 : index
    %c0_46 = arith.constant 0 : index
    %161 = vector.load %arg1[%c8, %c0_44, %c0_45, %c0_46] : memref<16x5x5x3xbf16, #tpu.memory_space<vmem>>, vector<1x4x4x3xbf16>
    %162 = vector.shape_cast %161 : vector<1x4x4x3xbf16> to vector<4x4x3xbf16>
    %163 = arith.extf %162 : vector<4x4x3xbf16> to vector<4x4x3xf32>
    %c6_47 = arith.constant 6 : index
    %c0_48 = arith.constant 0 : index
    %c0_49 = arith.constant 0 : index
    %164 = vector.load %arg2[%c6_47, %c0_48, %c0_49] : memref<9x3x128xf32, #tpu.memory_space<vmem>>, vector<1x3x128xf32>
    %165 = vector.shape_cast %164 : vector<1x3x128xf32> to vector<3x128xf32>
    %166 = vector.extract_strided_slice %163 {offsets = [0, 0, 0], sizes = [4, 4, 1], strides = [1, 1, 1]} : vector<4x4x3xf32> to vector<4x4x1xf32>
    %167 = vector.extract_strided_slice %165 {offsets = [0, 0], sizes = [1, 128], strides = [1, 1]} : vector<3x128xf32> to vector<1x128xf32>
    %168 = vector.shape_cast %167 : vector<1x128xf32> to vector<1x1x128xf32>
    %169 = vector.broadcast %166 : vector<4x4x1xf32> to vector<4x4x128xf32>
    %170 = vector.broadcast %168 : vector<1x1x128xf32> to vector<4x4x128xf32>
    %171 = arith.mulf %169, %170 : vector<4x4x128xf32>
    %172 = arith.addf %160, %171 : vector<4x4x128xf32>
    %173 = vector.extract_strided_slice %163 {offsets = [0, 0, 1], sizes = [4, 4, 1], strides = [1, 1, 1]} : vector<4x4x3xf32> to vector<4x4x1xf32>
    %174 = vector.extract_strided_slice %165 {offsets = [1, 0], sizes = [1, 128], strides = [1, 1]} : vector<3x128xf32> to vector<1x128xf32>
    %175 = vector.shape_cast %174 : vector<1x128xf32> to vector<1x1x128xf32>
    %176 = vector.broadcast %173 : vector<4x4x1xf32> to vector<4x4x128xf32>
    %177 = vector.broadcast %175 : vector<1x1x128xf32> to vector<4x4x128xf32>
    %178 = arith.mulf %176, %177 : vector<4x4x128xf32>
    %179 = arith.addf %172, %178 : vector<4x4x128xf32>
    %180 = vector.extract_strided_slice %163 {offsets = [0, 0, 2], sizes = [4, 4, 1], strides = [1, 1, 1]} : vector<4x4x3xf32> to vector<4x4x1xf32>
    %181 = vector.extract_strided_slice %165 {offsets = [2, 0], sizes = [1, 128], strides = [1, 1]} : vector<3x128xf32> to vector<1x128xf32>
    %182 = vector.shape_cast %181 : vector<1x128xf32> to vector<1x1x128xf32>
    %183 = vector.broadcast %180 : vector<4x4x1xf32> to vector<4x4x128xf32>
    %184 = vector.broadcast %182 : vector<1x1x128xf32> to vector<4x4x128xf32>
    %185 = arith.mulf %183, %184 : vector<4x4x128xf32>
    %186 = arith.addf %179, %185 : vector<4x4x128xf32>
    %c9 = arith.constant 9 : index
    %c0_50 = arith.constant 0 : index
    %c0_51 = arith.constant 0 : index
    %c0_52 = arith.constant 0 : index
    %187 = vector.load %arg1[%c9, %c0_50, %c0_51, %c0_52] : memref<16x5x5x3xbf16, #tpu.memory_space<vmem>>, vector<1x4x4x3xbf16>
    %188 = vector.shape_cast %187 : vector<1x4x4x3xbf16> to vector<4x4x3xbf16>
    %189 = arith.extf %188 : vector<4x4x3xbf16> to vector<4x4x3xf32>
    %c7 = arith.constant 7 : index
    %c0_53 = arith.constant 0 : index
    %c0_54 = arith.constant 0 : index
    %190 = vector.load %arg2[%c7, %c0_53, %c0_54] : memref<9x3x128xf32, #tpu.memory_space<vmem>>, vector<1x3x128xf32>
    %191 = vector.shape_cast %190 : vector<1x3x128xf32> to vector<3x128xf32>
    %192 = vector.extract_strided_slice %189 {offsets = [0, 0, 0], sizes = [4, 4, 1], strides = [1, 1, 1]} : vector<4x4x3xf32> to vector<4x4x1xf32>
    %193 = vector.extract_strided_slice %191 {offsets = [0, 0], sizes = [1, 128], strides = [1, 1]} : vector<3x128xf32> to vector<1x128xf32>
    %194 = vector.shape_cast %193 : vector<1x128xf32> to vector<1x1x128xf32>
    %195 = vector.broadcast %192 : vector<4x4x1xf32> to vector<4x4x128xf32>
    %196 = vector.broadcast %194 : vector<1x1x128xf32> to vector<4x4x128xf32>
    %197 = arith.mulf %195, %196 : vector<4x4x128xf32>
    %198 = arith.addf %186, %197 : vector<4x4x128xf32>
    %199 = vector.extract_strided_slice %189 {offsets = [0, 0, 1], sizes = [4, 4, 1], strides = [1, 1, 1]} : vector<4x4x3xf32> to vector<4x4x1xf32>
    %200 = vector.extract_strided_slice %191 {offsets = [1, 0], sizes = [1, 128], strides = [1, 1]} : vector<3x128xf32> to vector<1x128xf32>
    %201 = vector.shape_cast %200 : vector<1x128xf32> to vector<1x1x128xf32>
    %202 = vector.broadcast %199 : vector<4x4x1xf32> to vector<4x4x128xf32>
    %203 = vector.broadcast %201 : vector<1x1x128xf32> to vector<4x4x128xf32>
    %204 = arith.mulf %202, %203 : vector<4x4x128xf32>
    %205 = arith.addf %198, %204 : vector<4x4x128xf32>
    %206 = vector.extract_strided_slice %189 {offsets = [0, 0, 2], sizes = [4, 4, 1], strides = [1, 1, 1]} : vector<4x4x3xf32> to vector<4x4x1xf32>
    %207 = vector.extract_strided_slice %191 {offsets = [2, 0], sizes = [1, 128], strides = [1, 1]} : vector<3x128xf32> to vector<1x128xf32>
    %208 = vector.shape_cast %207 : vector<1x128xf32> to vector<1x1x128xf32>
    %209 = vector.broadcast %206 : vector<4x4x1xf32> to vector<4x4x128xf32>
    %210 = vector.broadcast %208 : vector<1x1x128xf32> to vector<4x4x128xf32>
    %211 = arith.mulf %209, %210 : vector<4x4x128xf32>
    %212 = arith.addf %205, %211 : vector<4x4x128xf32>
    %c10 = arith.constant 10 : index
    %c0_55 = arith.constant 0 : index
    %c0_56 = arith.constant 0 : index
    %c0_57 = arith.constant 0 : index
    %213 = vector.load %arg1[%c10, %c0_55, %c0_56, %c0_57] : memref<16x5x5x3xbf16, #tpu.memory_space<vmem>>, vector<1x4x4x3xbf16>
    %214 = vector.shape_cast %213 : vector<1x4x4x3xbf16> to vector<4x4x3xbf16>
    %215 = arith.extf %214 : vector<4x4x3xbf16> to vector<4x4x3xf32>
    %c8_58 = arith.constant 8 : index
    %c0_59 = arith.constant 0 : index
    %c0_60 = arith.constant 0 : index
    %216 = vector.load %arg2[%c8_58, %c0_59, %c0_60] : memref<9x3x128xf32, #tpu.memory_space<vmem>>, vector<1x3x128xf32>
    %217 = vector.shape_cast %216 : vector<1x3x128xf32> to vector<3x128xf32>
    %218 = vector.extract_strided_slice %215 {offsets = [0, 0, 0], sizes = [4, 4, 1], strides = [1, 1, 1]} : vector<4x4x3xf32> to vector<4x4x1xf32>
    %219 = vector.extract_strided_slice %217 {offsets = [0, 0], sizes = [1, 128], strides = [1, 1]} : vector<3x128xf32> to vector<1x128xf32>
    %220 = vector.shape_cast %219 : vector<1x128xf32> to vector<1x1x128xf32>
    %221 = vector.broadcast %218 : vector<4x4x1xf32> to vector<4x4x128xf32>
    %222 = vector.broadcast %220 : vector<1x1x128xf32> to vector<4x4x128xf32>
    %223 = arith.mulf %221, %222 : vector<4x4x128xf32>
    %224 = arith.addf %212, %223 : vector<4x4x128xf32>
    %225 = vector.extract_strided_slice %215 {offsets = [0, 0, 1], sizes = [4, 4, 1], strides = [1, 1, 1]} : vector<4x4x3xf32> to vector<4x4x1xf32>
    %226 = vector.extract_strided_slice %217 {offsets = [1, 0], sizes = [1, 128], strides = [1, 1]} : vector<3x128xf32> to vector<1x128xf32>
    %227 = vector.shape_cast %226 : vector<1x128xf32> to vector<1x1x128xf32>
    %228 = vector.broadcast %225 : vector<4x4x1xf32> to vector<4x4x128xf32>
    %229 = vector.broadcast %227 : vector<1x1x128xf32> to vector<4x4x128xf32>
    %230 = arith.mulf %228, %229 : vector<4x4x128xf32>
    %231 = arith.addf %224, %230 : vector<4x4x128xf32>
    %232 = vector.extract_strided_slice %215 {offsets = [0, 0, 2], sizes = [4, 4, 1], strides = [1, 1, 1]} : vector<4x4x3xf32> to vector<4x4x1xf32>
    %233 = vector.extract_strided_slice %217 {offsets = [2, 0], sizes = [1, 128], strides = [1, 1]} : vector<3x128xf32> to vector<1x128xf32>
    %234 = vector.shape_cast %233 : vector<1x128xf32> to vector<1x1x128xf32>
    %235 = vector.broadcast %232 : vector<4x4x1xf32> to vector<4x4x128xf32>
    %236 = vector.broadcast %234 : vector<1x1x128xf32> to vector<4x4x128xf32>
    %237 = arith.mulf %235, %236 : vector<4x4x128xf32>
    %238 = arith.addf %231, %237 : vector<4x4x128xf32>
    %c0_61 = arith.constant 0 : index
    %c0_62 = arith.constant 0 : index
    %239 = vector.load %arg5[%c0_61, %c0_62] : memref<3x128xf32, #tpu.memory_space<vmem>>, vector<1x128xf32>
    %240 = vector.shape_cast %239 : vector<1x128xf32> to vector<1x1x128xf32>
    %241 = vector.broadcast %240 : vector<1x1x128xf32> to vector<4x4x128xf32>
    %242 = arith.mulf %238, %241 : vector<4x4x128xf32>
    %c0_63 = arith.constant 0 : index
    %c0_64 = arith.constant 0 : index
    %243 = vector.load %arg6[%c0_63, %c0_64] : memref<3x128xf32, #tpu.memory_space<vmem>>, vector<1x128xf32>
    %244 = vector.shape_cast %243 : vector<1x128xf32> to vector<1x1x128xf32>
    %245 = vector.broadcast %244 : vector<1x1x128xf32> to vector<4x4x128xf32>
    %246 = arith.addf %242, %245 : vector<4x4x128xf32>
    %cst_65 = arith.constant 5.000000e-01 : f32
    %247 = vector.broadcast %cst_65 : f32 to vector<4x4x128xf32>
    %248 = arith.mulf %247, %246 : vector<4x4x128xf32>
    %cst_66 = arith.constant 0.707106769 : f32
    %249 = vector.broadcast %cst_66 : f32 to vector<4x4x128xf32>
    %250 = arith.mulf %246, %249 : vector<4x4x128xf32>
    %251 = math.erf %250 : vector<4x4x128xf32>
    %cst_67 = arith.constant 1.000000e+00 : f32
    %252 = vector.broadcast %cst_67 : f32 to vector<4x4x128xf32>
    %253 = arith.addf %252, %251 : vector<4x4x128xf32>
    %254 = arith.mulf %248, %253 : vector<4x4x128xf32>
    %255 = arith.truncf %254 : vector<4x4x128xf32> to vector<4x4x128xbf16>
    %c0_68 = arith.constant 0 : index
    %c1_69 = arith.constant 1 : index
    %c1_70 = arith.constant 1 : index
    %c0_71 = arith.constant 0 : index
    %256 = vector.load %arg8[%c0_68, %c1_69, %c1_70, %c0_71] : memref<4x6x6x128xbf16, #tpu.memory_space<vmem>>, vector<1x4x4x128xbf16>
    %257 = vector.shape_cast %256 : vector<1x4x4x128xbf16> to vector<4x4x128xbf16>
    %258 = vector.shape_cast %255 : vector<4x4x128xbf16> to vector<1x4x4x128xbf16>
    tpu.vector_store %arg8[%c0_68, %c1_69, %c1_70, %c0_71], %258 {strides = array<i32>} : memref<4x6x6x128xbf16, #tpu.memory_space<vmem>>, vector<1x4x4x128xbf16>,
    %cst_72 = arith.constant 0.000000e+00 : f32
    %259 = vector.broadcast %cst_72 : f32 to vector<4x4x128xf32>
    %c2_73 = arith.constant 2 : index
    %c0_74 = arith.constant 0 : index
    %c0_75 = arith.constant 0 : index
    %c0_76 = arith.constant 0 : index
    %260 = vector.load %arg1[%c2_73, %c0_74, %c0_75, %c0_76] : memref<16x5x5x3xbf16, #tpu.memory_space<vmem>>, vector<1x4x4x3xbf16>
    %261 = vector.shape_cast %260 : vector<1x4x4x3xbf16> to vector<4x4x3xbf16>
    %262 = arith.extf %261 : vector<4x4x3xbf16> to vector<4x4x3xf32>
    %c0_77 = arith.constant 0 : index
    %c0_78 = arith.constant 0 : index
    %c0_79 = arith.constant 0 : index
    %263 = vector.load %arg2[%c0_77, %c0_78, %c0_79] : memref<9x3x128xf32, #tpu.memory_space<vmem>>, vector<1x3x128xf32>
    %264 = vector.shape_cast %263 : vector<1x3x128xf32> to vector<3x128xf32>
    %265 = vector.extract_strided_slice %262 {offsets = [0, 0, 0], sizes = [4, 4, 1], strides = [1, 1, 1]} : vector<4x4x3xf32> to vector<4x4x1xf32>
    %266 = vector.extract_strided_slice %264 {offsets = [0, 0], sizes = [1, 128], strides = [1, 1]} : vector<3x128xf32> to vector<1x128xf32>
    %267 = vector.shape_cast %266 : vector<1x128xf32> to vector<1x1x128xf32>
    %268 = vector.broadcast %265 : vector<4x4x1xf32> to vector<4x4x128xf32>
    %269 = vector.broadcast %267 : vector<1x1x128xf32> to vector<4x4x128xf32>
    %270 = arith.mulf %268, %269 : vector<4x4x128xf32>
    %271 = arith.addf %259, %270 : vector<4x4x128xf32>
    %272 = vector.extract_strided_slice %262 {offsets = [0, 0, 1], sizes = [4, 4, 1], strides = [1, 1, 1]} : vector<4x4x3xf32> to vector<4x4x1xf32>
    %273 = vector.extract_strided_slice %264 {offsets = [1, 0], sizes = [1, 128], strides = [1, 1]} : vector<3x128xf32> to vector<1x128xf32>
    %274 = vector.shape_cast %273 : vector<1x128xf32> to vector<1x1x128xf32>
    %275 = vector.broadcast %272 : vector<4x4x1xf32> to vector<4x4x128xf32>
    %276 = vector.broadcast %274 : vector<1x1x128xf32> to vector<4x4x128xf32>
    %277 = arith.mulf %275, %276 : vector<4x4x128xf32>
    %278 = arith.addf %271, %277 : vector<4x4x128xf32>
    %279 = vector.extract_strided_slice %262 {offsets = [0, 0, 2], sizes = [4, 4, 1], strides = [1, 1, 1]} : vector<4x4x3xf32> to vector<4x4x1xf32>
    %280 = vector.extract_strided_slice %264 {offsets = [2, 0], sizes = [1, 128], strides = [1, 1]} : vector<3x128xf32> to vector<1x128xf32>
    %281 = vector.shape_cast %280 : vector<1x128xf32> to vector<1x1x128xf32>
    %282 = vector.broadcast %279 : vector<4x4x1xf32> to vector<4x4x128xf32>
    %283 = vector.broadcast %281 : vector<1x1x128xf32> to vector<4x4x128xf32>
    %284 = arith.mulf %282, %283 : vector<4x4x128xf32>
    %285 = arith.addf %278, %284 : vector<4x4x128xf32>
    %c3_80 = arith.constant 3 : index
    %c0_81 = arith.constant 0 : index
    %c0_82 = arith.constant 0 : index
    %c0_83 = arith.constant 0 : index
    %286 = vector.load %arg1[%c3_80, %c0_81, %c0_82, %c0_83] : memref<16x5x5x3xbf16, #tpu.memory_space<vmem>>, vector<1x4x4x3xbf16>
    %287 = vector.shape_cast %286 : vector<1x4x4x3xbf16> to vector<4x4x3xbf16>
    %288 = arith.extf %287 : vector<4x4x3xbf16> to vector<4x4x3xf32>
    %c1_84 = arith.constant 1 : index
    %c0_85 = arith.constant 0 : index
    %c0_86 = arith.constant 0 : index
    %289 = vector.load %arg2[%c1_84, %c0_85, %c0_86] : memref<9x3x128xf32, #tpu.memory_space<vmem>>, vector<1x3x128xf32>
    %290 = vector.shape_cast %289 : vector<1x3x128xf32> to vector<3x128xf32>
    %291 = vector.extract_strided_slice %288 {offsets = [0, 0, 0], sizes = [4, 4, 1], strides = [1, 1, 1]} : vector<4x4x3xf32> to vector<4x4x1xf32>
    %292 = vector.extract_strided_slice %290 {offsets = [0, 0], sizes = [1, 128], strides = [1, 1]} : vector<3x128xf32> to vector<1x128xf32>
    %293 = vector.shape_cast %292 : vector<1x128xf32> to vector<1x1x128xf32>
    %294 = vector.broadcast %291 : vector<4x4x1xf32> to vector<4x4x128xf32>
    %295 = vector.broadcast %293 : vector<1x1x128xf32> to vector<4x4x128xf32>
    %296 = arith.mulf %294, %295 : vector<4x4x128xf32>
    %297 = arith.addf %285, %296 : vector<4x4x128xf32>
    %298 = vector.extract_strided_slice %288 {offsets = [0, 0, 1], sizes = [4, 4, 1], strides = [1, 1, 1]} : vector<4x4x3xf32> to vector<4x4x1xf32>
    %299 = vector.extract_strided_slice %290 {offsets = [1, 0], sizes = [1, 128], strides = [1, 1]} : vector<3x128xf32> to vector<1x128xf32>
    %300 = vector.shape_cast %299 : vector<1x128xf32> to vector<1x1x128xf32>
    %301 = vector.broadcast %298 : vector<4x4x1xf32> to vector<4x4x128xf32>
    %302 = vector.broadcast %300 : vector<1x1x128xf32> to vector<4x4x128xf32>
    %303 = arith.mulf %301, %302 : vector<4x4x128xf32>
    %304 = arith.addf %297, %303 : vector<4x4x128xf32>
    %305 = vector.extract_strided_slice %288 {offsets = [0, 0, 2], sizes = [4, 4, 1], strides = [1, 1, 1]} : vector<4x4x3xf32> to vector<4x4x1xf32>
    %306 = vector.extract_strided_slice %290 {offsets = [2, 0], sizes = [1, 128], strides = [1, 1]} : vector<3x128xf32> to vector<1x128xf32>
    %307 = vector.shape_cast %306 : vector<1x128xf32> to vector<1x1x128xf32>
    %308 = vector.broadcast %305 : vector<4x4x1xf32> to vector<4x4x128xf32>
    %309 = vector.broadcast %307 : vector<1x1x128xf32> to vector<4x4x128xf32>
    %310 = arith.mulf %308, %309 : vector<4x4x128xf32>
    %311 = arith.addf %304, %310 : vector<4x4x128xf32>
    %c0_87 = arith.constant 0 : index
    %c0_88 = arith.constant 0 : index
    %c1_89 = arith.constant 1 : index
    %c0_90 = arith.constant 0 : index
    %312 = vector.load %arg1[%c0_87, %c0_88, %c1_89, %c0_90] : memref<16x5x5x3xbf16, #tpu.memory_space<vmem>>, vector<1x4x4x3xbf16>
    %313 = vector.shape_cast %312 : vector<1x4x4x3xbf16> to vector<4x4x3xbf16>
    %314 = arith.extf %313 : vector<4x4x3xbf16> to vector<4x4x3xf32>
    %c2_91 = arith.constant 2 : index
    %c0_92 = arith.constant 0 : index
    %c0_93 = arith.constant 0 : index
    %315 = vector.load %arg2[%c2_91, %c0_92, %c0_93] : memref<9x3x128xf32, #tpu.memory_space<vmem>>, vector<1x3x128xf32>
    %316 = vector.shape_cast %315 : vector<1x3x128xf32> to vector<3x128xf32>
    %317 = vector.extract_strided_slice %314 {offsets = [0, 0, 0], sizes = [4, 4, 1], strides = [1, 1, 1]} : vector<4x4x3xf32> to vector<4x4x1xf32>
    %318 = vector.extract_strided_slice %316 {offsets = [0, 0], sizes = [1, 128], strides = [1, 1]} : vector<3x128xf32> to vector<1x128xf32>
    %319 = vector.shape_cast %318 : vector<1x128xf32> to vector<1x1x128xf32>
    %320 = vector.broadcast %317 : vector<4x4x1xf32> to vector<4x4x128xf32>
    %321 = vector.broadcast %319 : vector<1x1x128xf32> to vector<4x4x128xf32>
    %322 = arith.mulf %320, %321 : vector<4x4x128xf32>
    %323 = arith.addf %311, %322 : vector<4x4x128xf32>
    %324 = vector.extract_strided_slice %314 {offsets = [0, 0, 1], sizes = [4, 4, 1], strides = [1, 1, 1]} : vector<4x4x3xf32> to vector<4x4x1xf32>
    %325 = vector.extract_strided_slice %316 {offsets = [1, 0], sizes = [1, 128], strides = [1, 1]} : vector<3x128xf32> to vector<1x128xf32>
    %326 = vector.shape_cast %325 : vector<1x128xf32> to vector<1x1x128xf32>
    %327 = vector.broadcast %324 : vector<4x4x1xf32> to vector<4x4x128xf32>
    %328 = vector.broadcast %326 : vector<1x1x128xf32> to vector<4x4x128xf32>
    %329 = arith.mulf %327, %328 : vector<4x4x128xf32>
    %330 = arith.addf %323, %329 : vector<4x4x128xf32>
    %331 = vector.extract_strided_slice %314 {offsets = [0, 0, 2], sizes = [4, 4, 1], strides = [1, 1, 1]} : vector<4x4x3xf32> to vector<4x4x1xf32>
    %332 = vector.extract_strided_slice %316 {offsets = [2, 0], sizes = [1, 128], strides = [1, 1]} : vector<3x128xf32> to vector<1x128xf32>
    %333 = vector.shape_cast %332 : vector<1x128xf32> to vector<1x1x128xf32>
    %334 = vector.broadcast %331 : vector<4x4x1xf32> to vector<4x4x128xf32>
    %335 = vector.broadcast %333 : vector<1x1x128xf32> to vector<4x4x128xf32>
    %336 = arith.mulf %334, %335 : vector<4x4x128xf32>
    %337 = arith.addf %330, %336 : vector<4x4x128xf32>
    %c6_94 = arith.constant 6 : index
    %c0_95 = arith.constant 0 : index
    %c0_96 = arith.constant 0 : index
    %c0_97 = arith.constant 0 : index
    %338 = vector.load %arg1[%c6_94, %c0_95, %c0_96, %c0_97] : memref<16x5x5x3xbf16, #tpu.memory_space<vmem>>, vector<1x4x4x3xbf16>
    %339 = vector.shape_cast %338 : vector<1x4x4x3xbf16> to vector<4x4x3xbf16>
    %340 = arith.extf %339 : vector<4x4x3xbf16> to vector<4x4x3xf32>
    %c3_98 = arith.constant 3 : index
    %c0_99 = arith.constant 0 : index
    %c0_100 = arith.constant 0 : index
    %341 = vector.load %arg2[%c3_98, %c0_99, %c0_100] : memref<9x3x128xf32, #tpu.memory_space<vmem>>, vector<1x3x128xf32>
    %342 = vector.shape_cast %341 : vector<1x3x128xf32> to vector<3x128xf32>
    %343 = vector.extract_strided_slice %340 {offsets = [0, 0, 0], sizes = [4, 4, 1], strides = [1, 1, 1]} : vector<4x4x3xf32> to vector<4x4x1xf32>
    %344 = vector.extract_strided_slice %342 {offsets = [0, 0], sizes = [1, 128], strides = [1, 1]} : vector<3x128xf32> to vector<1x128xf32>
    %345 = vector.shape_cast %344 : vector<1x128xf32> to vector<1x1x128xf32>
    %346 = vector.broadcast %343 : vector<4x4x1xf32> to vector<4x4x128xf32>
    %347 = vector.broadcast %345 : vector<1x1x128xf32> to vector<4x4x128xf32>
    %348 = arith.mulf %346, %347 : vector<4x4x128xf32>
    %349 = arith.addf %337, %348 : vector<4x4x128xf32>
    %350 = vector.extract_strided_slice %340 {offsets = [0, 0, 1], sizes = [4, 4, 1], strides = [1, 1, 1]} : vector<4x4x3xf32> to vector<4x4x1xf32>
    %351 = vector.extract_strided_slice %342 {offsets = [1, 0], sizes = [1, 128], strides = [1, 1]} : vector<3x128xf32> to vector<1x128xf32>
    %352 = vector.shape_cast %351 : vector<1x128xf32> to vector<1x1x128xf32>
    %353 = vector.broadcast %350 : vector<4x4x1xf32> to vector<4x4x128xf32>
    %354 = vector.broadcast %352 : vector<1x1x128xf32> to vector<4x4x128xf32>
    %355 = arith.mulf %353, %354 : vector<4x4x128xf32>
    %356 = arith.addf %349, %355 : vector<4x4x128xf32>
    %357 = vector.extract_strided_slice %340 {offsets = [0, 0, 2], sizes = [4, 4, 1], strides = [1, 1, 1]} : vector<4x4x3xf32> to vector<4x4x1xf32>
    %358 = vector.extract_strided_slice %342 {offsets = [2, 0], sizes = [1, 128], strides = [1, 1]} : vector<3x128xf32> to vector<1x128xf32>
    %359 = vector.shape_cast %358 : vector<1x128xf32> to vector<1x1x128xf32>
    %360 = vector.broadcast %357 : vector<4x4x1xf32> to vector<4x4x128xf32>
    %361 = vector.broadcast %359 : vector<1x1x128xf32> to vector<4x4x128xf32>
    %362 = arith.mulf %360, %361 : vector<4x4x128xf32>
    %363 = arith.addf %356, %362 : vector<4x4x128xf32>
    %c7_101 = arith.constant 7 : index
    %c0_102 = arith.constant 0 : index
    %c0_103 = arith.constant 0 : index
    %c0_104 = arith.constant 0 : index
    %364 = vector.load %arg1[%c7_101, %c0_102, %c0_103, %c0_104] : memref<16x5x5x3xbf16, #tpu.memory_space<vmem>>, vector<1x4x4x3xbf16>
    %365 = vector.shape_cast %364 : vector<1x4x4x3xbf16> to vector<4x4x3xbf16>
    %366 = arith.extf %365 : vector<4x4x3xbf16> to vector<4x4x3xf32>
    %c4_105 = arith.constant 4 : index
    %c0_106 = arith.constant 0 : index
    %c0_107 = arith.constant 0 : index
    %367 = vector.load %arg2[%c4_105, %c0_106, %c0_107] : memref<9x3x128xf32, #tpu.memory_space<vmem>>, vector<1x3x128xf32>
    %368 = vector.shape_cast %367 : vector<1x3x128xf32> to vector<3x128xf32>
    %369 = vector.extract_strided_slice %366 {offsets = [0, 0, 0], sizes = [4, 4, 1], strides = [1, 1, 1]} : vector<4x4x3xf32> to vector<4x4x1xf32>
    %370 = vector.extract_strided_slice %368 {offsets = [0, 0], sizes = [1, 128], strides = [1, 1]} : vector<3x128xf32> to vector<1x128xf32>
    %371 = vector.shape_cast %370 : vector<1x128xf32> to vector<1x1x128xf32>
    %372 = vector.broadcast %369 : vector<4x4x1xf32> to vector<4x4x128xf32>
    %373 = vector.broadcast %371 : vector<1x1x128xf32> to vector<4x4x128xf32>
    %374 = arith.mulf %372, %373 : vector<4x4x128xf32>
    %375 = arith.addf %363, %374 : vector<4x4x128xf32>
    %376 = vector.extract_strided_slice %366 {offsets = [0, 0, 1], sizes = [4, 4, 1], strides = [1, 1, 1]} : vector<4x4x3xf32> to vector<4x4x1xf32>
    %377 = vector.extract_strided_slice %368 {offsets = [1, 0], sizes = [1, 128], strides = [1, 1]} : vector<3x128xf32> to vector<1x128xf32>
    %378 = vector.shape_cast %377 : vector<1x128xf32> to vector<1x1x128xf32>
    %379 = vector.broadcast %376 : vector<4x4x1xf32> to vector<4x4x128xf32>
    %380 = vector.broadcast %378 : vector<1x1x128xf32> to vector<4x4x128xf32>
    %381 = arith.mulf %379, %380 : vector<4x4x128xf32>
    %382 = arith.addf %375, %381 : vector<4x4x128xf32>
    %383 = vector.extract_strided_slice %366 {offsets = [0, 0, 2], sizes = [4, 4, 1], strides = [1, 1, 1]} : vector<4x4x3xf32> to vector<4x4x1xf32>
    %384 = vector.extract_strided_slice %368 {offsets = [2, 0], sizes = [1, 128], strides = [1, 1]} : vector<3x128xf32> to vector<1x128xf32>
    %385 = vector.shape_cast %384 : vector<1x128xf32> to vector<1x1x128xf32>
    %386 = vector.broadcast %383 : vector<4x4x1xf32> to vector<4x4x128xf32>
    %387 = vector.broadcast %385 : vector<1x1x128xf32> to vector<4x4x128xf32>
    %388 = arith.mulf %386, %387 : vector<4x4x128xf32>
    %389 = arith.addf %382, %388 : vector<4x4x128xf32>
    %c4_108 = arith.constant 4 : index
    %c0_109 = arith.constant 0 : index
    %c1_110 = arith.constant 1 : index
    %c0_111 = arith.constant 0 : index
    %390 = vector.load %arg1[%c4_108, %c0_109, %c1_110, %c0_111] : memref<16x5x5x3xbf16, #tpu.memory_space<vmem>>, vector<1x4x4x3xbf16>
    %391 = vector.shape_cast %390 : vector<1x4x4x3xbf16> to vector<4x4x3xbf16>
    %392 = arith.extf %391 : vector<4x4x3xbf16> to vector<4x4x3xf32>
    %c5_112 = arith.constant 5 : index
    %c0_113 = arith.constant 0 : index
    %c0_114 = arith.constant 0 : index
    %393 = vector.load %arg2[%c5_112, %c0_113, %c0_114] : memref<9x3x128xf32, #tpu.memory_space<vmem>>, vector<1x3x128xf32>
    %394 = vector.shape_cast %393 : vector<1x3x128xf32> to vector<3x128xf32>
    %395 = vector.extract_strided_slice %392 {offsets = [0, 0, 0], sizes = [4, 4, 1], strides = [1, 1, 1]} : vector<4x4x3xf32> to vector<4x4x1xf32>
    %396 = vector.extract_strided_slice %394 {offsets = [0, 0], sizes = [1, 128], strides = [1, 1]} : vector<3x128xf32> to vector<1x128xf32>
    %397 = vector.shape_cast %396 : vector<1x128xf32> to vector<1x1x128xf32>
    %398 = vector.broadcast %395 : vector<4x4x1xf32> to vector<4x4x128xf32>
    %399 = vector.broadcast %397 : vector<1x1x128xf32> to vector<4x4x128xf32>
    %400 = arith.mulf %398, %399 : vector<4x4x128xf32>
    %401 = arith.addf %389, %400 : vector<4x4x128xf32>
    %402 = vector.extract_strided_slice %392 {offsets = [0, 0, 1], sizes = [4, 4, 1], strides = [1, 1, 1]} : vector<4x4x3xf32> to vector<4x4x1xf32>
    %403 = vector.extract_strided_slice %394 {offsets = [1, 0], sizes = [1, 128], strides = [1, 1]} : vector<3x128xf32> to vector<1x128xf32>
    %404 = vector.shape_cast %403 : vector<1x128xf32> to vector<1x1x128xf32>
    %405 = vector.broadcast %402 : vector<4x4x1xf32> to vector<4x4x128xf32>
    %406 = vector.broadcast %404 : vector<1x1x128xf32> to vector<4x4x128xf32>
    %407 = arith.mulf %405, %406 : vector<4x4x128xf32>
    %408 = arith.addf %401, %407 : vector<4x4x128xf32>
    %409 = vector.extract_strided_slice %392 {offsets = [0, 0, 2], sizes = [4, 4, 1], strides = [1, 1, 1]} : vector<4x4x3xf32> to vector<4x4x1xf32>
    %410 = vector.extract_strided_slice %394 {offsets = [2, 0], sizes = [1, 128], strides = [1, 1]} : vector<3x128xf32> to vector<1x128xf32>
    %411 = vector.shape_cast %410 : vector<1x128xf32> to vector<1x1x128xf32>
    %412 = vector.broadcast %409 : vector<4x4x1xf32> to vector<4x4x128xf32>
    %413 = vector.broadcast %411 : vector<1x1x128xf32> to vector<4x4x128xf32>
    %414 = arith.mulf %412, %413 : vector<4x4x128xf32>
    %415 = arith.addf %408, %414 : vector<4x4x128xf32>
    %c10_115 = arith.constant 10 : index
    %c0_116 = arith.constant 0 : index
    %c0_117 = arith.constant 0 : index
    %c0_118 = arith.constant 0 : index
    %416 = vector.load %arg1[%c10_115, %c0_116, %c0_117, %c0_118] : memref<16x5x5x3xbf16, #tpu.memory_space<vmem>>, vector<1x4x4x3xbf16>
    %417 = vector.shape_cast %416 : vector<1x4x4x3xbf16> to vector<4x4x3xbf16>
    %418 = arith.extf %417 : vector<4x4x3xbf16> to vector<4x4x3xf32>
    %c6_119 = arith.constant 6 : index
    %c0_120 = arith.constant 0 : index
    %c0_121 = arith.constant 0 : index
    %419 = vector.load %arg2[%c6_119, %c0_120, %c0_121] : memref<9x3x128xf32, #tpu.memory_space<vmem>>, vector<1x3x128xf32>
    %420 = vector.shape_cast %419 : vector<1x3x128xf32> to vector<3x128xf32>
    %421 = vector.extract_strided_slice %418 {offsets = [0, 0, 0], sizes = [4, 4, 1], strides = [1, 1, 1]} : vector<4x4x3xf32> to vector<4x4x1xf32>
    %422 = vector.extract_strided_slice %420 {offsets = [0, 0], sizes = [1, 128], strides = [1, 1]} : vector<3x128xf32> to vector<1x128xf32>
    %423 = vector.shape_cast %422 : vector<1x128xf32> to vector<1x1x128xf32>
    %424 = vector.broadcast %421 : vector<4x4x1xf32> to vector<4x4x128xf32>
    %425 = vector.broadcast %423 : vector<1x1x128xf32> to vector<4x4x128xf32>
    %426 = arith.mulf %424, %425 : vector<4x4x128xf32>
    %427 = arith.addf %415, %426 : vector<4x4x128xf32>
    %428 = vector.extract_strided_slice %418 {offsets = [0, 0, 1], sizes = [4, 4, 1], strides = [1, 1, 1]} : vector<4x4x3xf32> to vector<4x4x1xf32>
    %429 = vector.extract_strided_slice %420 {offsets = [1, 0], sizes = [1, 128], strides = [1, 1]} : vector<3x128xf32> to vector<1x128xf32>
    %430 = vector.shape_cast %429 : vector<1x128xf32> to vector<1x1x128xf32>
    %431 = vector.broadcast %428 : vector<4x4x1xf32> to vector<4x4x128xf32>
    %432 = vector.broadcast %430 : vector<1x1x128xf32> to vector<4x4x128xf32>
    %433 = arith.mulf %431, %432 : vector<4x4x128xf32>
    %434 = arith.addf %427, %433 : vector<4x4x128xf32>
    %435 = vector.extract_strided_slice %418 {offsets = [0, 0, 2], sizes = [4, 4, 1], strides = [1, 1, 1]} : vector<4x4x3xf32> to vector<4x4x1xf32>
    %436 = vector.extract_strided_slice %420 {offsets = [2, 0], sizes = [1, 128], strides = [1, 1]} : vector<3x128xf32> to vector<1x128xf32>
    %437 = vector.shape_cast %436 : vector<1x128xf32> to vector<1x1x128xf32>
    %438 = vector.broadcast %435 : vector<4x4x1xf32> to vector<4x4x128xf32>
    %439 = vector.broadcast %437 : vector<1x1x128xf32> to vector<4x4x128xf32>
    %440 = arith.mulf %438, %439 : vector<4x4x128xf32>
    %441 = arith.addf %434, %440 : vector<4x4x128xf32>
    %c11 = arith.constant 11 : index
    %c0_122 = arith.constant 0 : index
    %c0_123 = arith.constant 0 : index
    %c0_124 = arith.constant 0 : index
    %442 = vector.load %arg1[%c11, %c0_122, %c0_123, %c0_124] : memref<16x5x5x3xbf16, #tpu.memory_space<vmem>>, vector<1x4x4x3xbf16>
    %443 = vector.shape_cast %442 : vector<1x4x4x3xbf16> to vector<4x4x3xbf16>
    %444 = arith.extf %443 : vector<4x4x3xbf16> to vector<4x4x3xf32>
    %c7_125 = arith.constant 7 : index
    %c0_126 = arith.constant 0 : index
    %c0_127 = arith.constant 0 : index
    %445 = vector.load %arg2[%c7_125, %c0_126, %c0_127] : memref<9x3x128xf32, #tpu.memory_space<vmem>>, vector<1x3x128xf32>
    %446 = vector.shape_cast %445 : vector<1x3x128xf32> to vector<3x128xf32>
    %447 = vector.extract_strided_slice %444 {offsets = [0, 0, 0], sizes = [4, 4, 1], strides = [1, 1, 1]} : vector<4x4x3xf32> to vector<4x4x1xf32>
    %448 = vector.extract_strided_slice %446 {offsets = [0, 0], sizes = [1, 128], strides = [1, 1]} : vector<3x128xf32> to vector<1x128xf32>
    %449 = vector.shape_cast %448 : vector<1x128xf32> to vector<1x1x128xf32>
    %450 = vector.broadcast %447 : vector<4x4x1xf32> to vector<4x4x128xf32>
    %451 = vector.broadcast %449 : vector<1x1x128xf32> to vector<4x4x128xf32>
    %452 = arith.mulf %450, %451 : vector<4x4x128xf32>
    %453 = arith.addf %441, %452 : vector<4x4x128xf32>
    %454 = vector.extract_strided_slice %444 {offsets = [0, 0, 1], sizes = [4, 4, 1], strides = [1, 1, 1]} : vector<4x4x3xf32> to vector<4x4x1xf32>
    %455 = vector.extract_strided_slice %446 {offsets = [1, 0], sizes = [1, 128], strides = [1, 1]} : vector<3x128xf32> to vector<1x128xf32>
    %456 = vector.shape_cast %455 : vector<1x128xf32> to vector<1x1x128xf32>
    %457 = vector.broadcast %454 : vector<4x4x1xf32> to vector<4x4x128xf32>
    %458 = vector.broadcast %456 : vector<1x1x128xf32> to vector<4x4x128xf32>
    %459 = arith.mulf %457, %458 : vector<4x4x128xf32>
    %460 = arith.addf %453, %459 : vector<4x4x128xf32>
    %461 = vector.extract_strided_slice %444 {offsets = [0, 0, 2], sizes = [4, 4, 1], strides = [1, 1, 1]} : vector<4x4x3xf32> to vector<4x4x1xf32>
    %462 = vector.extract_strided_slice %446 {offsets = [2, 0], sizes = [1, 128], strides = [1, 1]} : vector<3x128xf32> to vector<1x128xf32>
    %463 = vector.shape_cast %462 : vector<1x128xf32> to vector<1x1x128xf32>
    %464 = vector.broadcast %461 : vector<4x4x1xf32> to vector<4x4x128xf32>
    %465 = vector.broadcast %463 : vector<1x1x128xf32> to vector<4x4x128xf32>
    %466 = arith.mulf %464, %465 : vector<4x4x128xf32>
    %467 = arith.addf %460, %466 : vector<4x4x128xf32>
    %c8_128 = arith.constant 8 : index
    %c0_129 = arith.constant 0 : index
    %c1_130 = arith.constant 1 : index
    %c0_131 = arith.constant 0 : index
    %468 = vector.load %arg1[%c8_128, %c0_129, %c1_130, %c0_131] : memref<16x5x5x3xbf16, #tpu.memory_space<vmem>>, vector<1x4x4x3xbf16>
    %469 = vector.shape_cast %468 : vector<1x4x4x3xbf16> to vector<4x4x3xbf16>
    %470 = arith.extf %469 : vector<4x4x3xbf16> to vector<4x4x3xf32>
    %c8_132 = arith.constant 8 : index
    %c0_133 = arith.constant 0 : index
    %c0_134 = arith.constant 0 : index
    %471 = vector.load %arg2[%c8_132, %c0_133, %c0_134] : memref<9x3x128xf32, #tpu.memory_space<vmem>>, vector<1x3x128xf32>
    %472 = vector.shape_cast %471 : vector<1x3x128xf32> to vector<3x128xf32>
    %473 = vector.extract_strided_slice %470 {offsets = [0, 0, 0], sizes = [4, 4, 1], strides = [1, 1, 1]} : vector<4x4x3xf32> to vector<4x4x1xf32>
    %474 = vector.extract_strided_slice %472 {offsets = [0, 0], sizes = [1, 128], strides = [1, 1]} : vector<3x128xf32> to vector<1x128xf32>
    %475 = vector.shape_cast %474 : vector<1x128xf32> to vector<1x1x128xf32>
    %476 = vector.broadcast %473 : vector<4x4x1xf32> to vector<4x4x128xf32>
    %477 = vector.broadcast %475 : vector<1x1x128xf32> to vector<4x4x128xf32>
    %478 = arith.mulf %476, %477 : vector<4x4x128xf32>
    %479 = arith.addf %467, %478 : vector<4x4x128xf32>
    %480 = vector.extract_strided_slice %470 {offsets = [0, 0, 1], sizes = [4, 4, 1], strides = [1, 1, 1]} : vector<4x4x3xf32> to vector<4x4x1xf32>
    %481 = vector.extract_strided_slice %472 {offsets = [1, 0], sizes = [1, 128], strides = [1, 1]} : vector<3x128xf32> to vector<1x128xf32>
    %482 = vector.shape_cast %481 : vector<1x128xf32> to vector<1x1x128xf32>
    %483 = vector.broadcast %480 : vector<4x4x1xf32> to vector<4x4x128xf32>
    %484 = vector.broadcast %482 : vector<1x1x128xf32> to vector<4x4x128xf32>
    %485 = arith.mulf %483, %484 : vector<4x4x128xf32>
    %486 = arith.addf %479, %485 : vector<4x4x128xf32>
    %487 = vector.extract_strided_slice %470 {offsets = [0, 0, 2], sizes = [4, 4, 1], strides = [1, 1, 1]} : vector<4x4x3xf32> to vector<4x4x1xf32>
    %488 = vector.extract_strided_slice %472 {offsets = [2, 0], sizes = [1, 128], strides = [1, 1]} : vector<3x128xf32> to vector<1x128xf32>
    %489 = vector.shape_cast %488 : vector<1x128xf32> to vector<1x1x128xf32>
    %490 = vector.broadcast %487 : vector<4x4x1xf32> to vector<4x4x128xf32>
    %491 = vector.broadcast %489 : vector<1x1x128xf32> to vector<4x4x128xf32>
    %492 = arith.mulf %490, %491 : vector<4x4x128xf32>
    %493 = arith.addf %486, %492 : vector<4x4x128xf32>
    %c0_135 = arith.constant 0 : index
    %c0_136 = arith.constant 0 : index
    %494 = vector.load %arg5[%c0_135, %c0_136] : memref<3x128xf32, #tpu.memory_space<vmem>>, vector<1x128xf32>
    %495 = vector.shape_cast %494 : vector<1x128xf32> to vector<1x1x128xf32>
    %496 = vector.broadcast %495 : vector<1x1x128xf32> to vector<4x4x128xf32>
    %497 = arith.mulf %493, %496 : vector<4x4x128xf32>
    %c0_137 = arith.constant 0 : index
    %c0_138 = arith.constant 0 : index
    %498 = vector.load %arg6[%c0_137, %c0_138] : memref<3x128xf32, #tpu.memory_space<vmem>>, vector<1x128xf32>
    %499 = vector.shape_cast %498 : vector<1x128xf32> to vector<1x1x128xf32>
    %500 = vector.broadcast %499 : vector<1x1x128xf32> to vector<4x4x128xf32>
    %501 = arith.addf %497, %500 : vector<4x4x128xf32>
    %cst_139 = arith.constant 5.000000e-01 : f32
    %502 = vector.broadcast %cst_139 : f32 to vector<4x4x128xf32>
    %503 = arith.mulf %502, %501 : vector<4x4x128xf32>
    %cst_140 = arith.constant 0.707106769 : f32
    %504 = vector.broadcast %cst_140 : f32 to vector<4x4x128xf32>
    %505 = arith.mulf %501, %504 : vector<4x4x128xf32>
    %506 = math.erf %505 : vector<4x4x128xf32>
    %cst_141 = arith.constant 1.000000e+00 : f32
    %507 = vector.broadcast %cst_141 : f32 to vector<4x4x128xf32>
    %508 = arith.addf %507, %506 : vector<4x4x128xf32>
    %509 = arith.mulf %503, %508 : vector<4x4x128xf32>
    %510 = arith.truncf %509 : vector<4x4x128xf32> to vector<4x4x128xbf16>
    %c1_142 = arith.constant 1 : index
    %c1_143 = arith.constant 1 : index
    %c1_144 = arith.constant 1 : index
    %c0_145 = arith.constant 0 : index
    %511 = vector.load %arg8[%c1_142, %c1_143, %c1_144, %c0_145] : memref<4x6x6x128xbf16, #tpu.memory_space<vmem>>, vector<1x4x4x128xbf16>
    %512 = vector.shape_cast %511 : vector<1x4x4x128xbf16> to vector<4x4x128xbf16>
    %513 = vector.shape_cast %510 : vector<4x4x128xbf16> to vector<1x4x4x128xbf16>
    tpu.vector_store %arg8[%c1_142, %c1_143, %c1_144, %c0_145], %513 {strides = array<i32>} : memref<4x6x6x128xbf16, #tpu.memory_space<vmem>>, vector<1x4x4x128xbf16>,
    %cst_146 = arith.constant 0.000000e+00 : f32
    %514 = vector.broadcast %cst_146 : f32 to vector<4x4x128xf32>
    %c8_147 = arith.constant 8 : index
    %c0_148 = arith.constant 0 : index
    %c0_149 = arith.constant 0 : index
    %c0_150 = arith.constant 0 : index
    %515 = vector.load %arg1[%c8_147, %c0_148, %c0_149, %c0_150] : memref<16x5x5x3xbf16, #tpu.memory_space<vmem>>, vector<1x4x4x3xbf16>
    %516 = vector.shape_cast %515 : vector<1x4x4x3xbf16> to vector<4x4x3xbf16>
    %517 = arith.extf %516 : vector<4x4x3xbf16> to vector<4x4x3xf32>
    %c0_151 = arith.constant 0 : index
    %c0_152 = arith.constant 0 : index
    %c0_153 = arith.constant 0 : index
    %518 = vector.load %arg2[%c0_151, %c0_152, %c0_153] : memref<9x3x128xf32, #tpu.memory_space<vmem>>, vector<1x3x128xf32>
    %519 = vector.shape_cast %518 : vector<1x3x128xf32> to vector<3x128xf32>
    %520 = vector.extract_strided_slice %517 {offsets = [0, 0, 0], sizes = [4, 4, 1], strides = [1, 1, 1]} : vector<4x4x3xf32> to vector<4x4x1xf32>
    %521 = vector.extract_strided_slice %519 {offsets = [0, 0], sizes = [1, 128], strides = [1, 1]} : vector<3x128xf32> to vector<1x128xf32>
    %522 = vector.shape_cast %521 : vector<1x128xf32> to vector<1x1x128xf32>
    %523 = vector.broadcast %520 : vector<4x4x1xf32> to vector<4x4x128xf32>
    %524 = vector.broadcast %522 : vector<1x1x128xf32> to vector<4x4x128xf32>
    %525 = arith.mulf %523, %524 : vector<4x4x128xf32>
    %526 = arith.addf %514, %525 : vector<4x4x128xf32>
    %527 = vector.extract_strided_slice %517 {offsets = [0, 0, 1], sizes = [4, 4, 1], strides = [1, 1, 1]} : vector<4x4x3xf32> to vector<4x4x1xf32>
    %528 = vector.extract_strided_slice %519 {offsets = [1, 0], sizes = [1, 128], strides = [1, 1]} : vector<3x128xf32> to vector<1x128xf32>
    %529 = vector.shape_cast %528 : vector<1x128xf32> to vector<1x1x128xf32>
    %530 = vector.broadcast %527 : vector<4x4x1xf32> to vector<4x4x128xf32>
    %531 = vector.broadcast %529 : vector<1x1x128xf32> to vector<4x4x128xf32>
    %532 = arith.mulf %530, %531 : vector<4x4x128xf32>
    %533 = arith.addf %526, %532 : vector<4x4x128xf32>
    %534 = vector.extract_strided_slice %517 {offsets = [0, 0, 2], sizes = [4, 4, 1], strides = [1, 1, 1]} : vector<4x4x3xf32> to vector<4x4x1xf32>
    %535 = vector.extract_strided_slice %519 {offsets = [2, 0], sizes = [1, 128], strides = [1, 1]} : vector<3x128xf32> to vector<1x128xf32>
    %536 = vector.shape_cast %535 : vector<1x128xf32> to vector<1x1x128xf32>
    %537 = vector.broadcast %534 : vector<4x4x1xf32> to vector<4x4x128xf32>
    %538 = vector.broadcast %536 : vector<1x1x128xf32> to vector<4x4x128xf32>
    %539 = arith.mulf %537, %538 : vector<4x4x128xf32>
    %540 = arith.addf %533, %539 : vector<4x4x128xf32>
    %c9_154 = arith.constant 9 : index
    %c0_155 = arith.constant 0 : index
    %c0_156 = arith.constant 0 : index
    %c0_157 = arith.constant 0 : index
    %541 = vector.load %arg1[%c9_154, %c0_155, %c0_156, %c0_157] : memref<16x5x5x3xbf16, #tpu.memory_space<vmem>>, vector<1x4x4x3xbf16>
    %542 = vector.shape_cast %541 : vector<1x4x4x3xbf16> to vector<4x4x3xbf16>
    %543 = arith.extf %542 : vector<4x4x3xbf16> to vector<4x4x3xf32>
    %c1_158 = arith.constant 1 : index
    %c0_159 = arith.constant 0 : index
    %c0_160 = arith.constant 0 : index
    %544 = vector.load %arg2[%c1_158, %c0_159, %c0_160] : memref<9x3x128xf32, #tpu.memory_space<vmem>>, vector<1x3x128xf32>
    %545 = vector.shape_cast %544 : vector<1x3x128xf32> to vector<3x128xf32>
    %546 = vector.extract_strided_slice %543 {offsets = [0, 0, 0], sizes = [4, 4, 1], strides = [1, 1, 1]} : vector<4x4x3xf32> to vector<4x4x1xf32>
    %547 = vector.extract_strided_slice %545 {offsets = [0, 0], sizes = [1, 128], strides = [1, 1]} : vector<3x128xf32> to vector<1x128xf32>
    %548 = vector.shape_cast %547 : vector<1x128xf32> to vector<1x1x128xf32>
    %549 = vector.broadcast %546 : vector<4x4x1xf32> to vector<4x4x128xf32>
    %550 = vector.broadcast %548 : vector<1x1x128xf32> to vector<4x4x128xf32>
    %551 = arith.mulf %549, %550 : vector<4x4x128xf32>
    %552 = arith.addf %540, %551 : vector<4x4x128xf32>
    %553 = vector.extract_strided_slice %543 {offsets = [0, 0, 1], sizes = [4, 4, 1], strides = [1, 1, 1]} : vector<4x4x3xf32> to vector<4x4x1xf32>
    %554 = vector.extract_strided_slice %545 {offsets = [1, 0], sizes = [1, 128], strides = [1, 1]} : vector<3x128xf32> to vector<1x128xf32>
    %555 = vector.shape_cast %554 : vector<1x128xf32> to vector<1x1x128xf32>
    %556 = vector.broadcast %553 : vector<4x4x1xf32> to vector<4x4x128xf32>
    %557 = vector.broadcast %555 : vector<1x1x128xf32> to vector<4x4x128xf32>
    %558 = arith.mulf %556, %557 : vector<4x4x128xf32>
    %559 = arith.addf %552, %558 : vector<4x4x128xf32>
    %560 = vector.extract_strided_slice %543 {offsets = [0, 0, 2], sizes = [4, 4, 1], strides = [1, 1, 1]} : vector<4x4x3xf32> to vector<4x4x1xf32>
    %561 = vector.extract_strided_slice %545 {offsets = [2, 0], sizes = [1, 128], strides = [1, 1]} : vector<3x128xf32> to vector<1x128xf32>
    %562 = vector.shape_cast %561 : vector<1x128xf32> to vector<1x1x128xf32>
    %563 = vector.broadcast %560 : vector<4x4x1xf32> to vector<4x4x128xf32>
    %564 = vector.broadcast %562 : vector<1x1x128xf32> to vector<4x4x128xf32>
    %565 = arith.mulf %563, %564 : vector<4x4x128xf32>
    %566 = arith.addf %559, %565 : vector<4x4x128xf32>
    %c10_161 = arith.constant 10 : index
    %c0_162 = arith.constant 0 : index
    %c0_163 = arith.constant 0 : index
    %c0_164 = arith.constant 0 : index
    %567 = vector.load %arg1[%c10_161, %c0_162, %c0_163, %c0_164] : memref<16x5x5x3xbf16, #tpu.memory_space<vmem>>, vector<1x4x4x3xbf16>
    %568 = vector.shape_cast %567 : vector<1x4x4x3xbf16> to vector<4x4x3xbf16>
    %569 = arith.extf %568 : vector<4x4x3xbf16> to vector<4x4x3xf32>
    %c2_165 = arith.constant 2 : index
    %c0_166 = arith.constant 0 : index
    %c0_167 = arith.constant 0 : index
    %570 = vector.load %arg2[%c2_165, %c0_166, %c0_167] : memref<9x3x128xf32, #tpu.memory_space<vmem>>, vector<1x3x128xf32>
    %571 = vector.shape_cast %570 : vector<1x3x128xf32> to vector<3x128xf32>
    %572 = vector.extract_strided_slice %569 {offsets = [0, 0, 0], sizes = [4, 4, 1], strides = [1, 1, 1]} : vector<4x4x3xf32> to vector<4x4x1xf32>
    %573 = vector.extract_strided_slice %571 {offsets = [0, 0], sizes = [1, 128], strides = [1, 1]} : vector<3x128xf32> to vector<1x128xf32>
    %574 = vector.shape_cast %573 : vector<1x128xf32> to vector<1x1x128xf32>
    %575 = vector.broadcast %572 : vector<4x4x1xf32> to vector<4x4x128xf32>
    %576 = vector.broadcast %574 : vector<1x1x128xf32> to vector<4x4x128xf32>
    %577 = arith.mulf %575, %576 : vector<4x4x128xf32>
    %578 = arith.addf %566, %577 : vector<4x4x128xf32>
    %579 = vector.extract_strided_slice %569 {offsets = [0, 0, 1], sizes = [4, 4, 1], strides = [1, 1, 1]} : vector<4x4x3xf32> to vector<4x4x1xf32>
    %580 = vector.extract_strided_slice %571 {offsets = [1, 0], sizes = [1, 128], strides = [1, 1]} : vector<3x128xf32> to vector<1x128xf32>
    %581 = vector.shape_cast %580 : vector<1x128xf32> to vector<1x1x128xf32>
    %582 = vector.broadcast %579 : vector<4x4x1xf32> to vector<4x4x128xf32>
    %583 = vector.broadcast %581 : vector<1x1x128xf32> to vector<4x4x128xf32>
    %584 = arith.mulf %582, %583 : vector<4x4x128xf32>
    %585 = arith.addf %578, %584 : vector<4x4x128xf32>
    %586 = vector.extract_strided_slice %569 {offsets = [0, 0, 2], sizes = [4, 4, 1], strides = [1, 1, 1]} : vector<4x4x3xf32> to vector<4x4x1xf32>
    %587 = vector.extract_strided_slice %571 {offsets = [2, 0], sizes = [1, 128], strides = [1, 1]} : vector<3x128xf32> to vector<1x128xf32>
    %588 = vector.shape_cast %587 : vector<1x128xf32> to vector<1x1x128xf32>
    %589 = vector.broadcast %586 : vector<4x4x1xf32> to vector<4x4x128xf32>
    %590 = vector.broadcast %588 : vector<1x1x128xf32> to vector<4x4x128xf32>
    %591 = arith.mulf %589, %590 : vector<4x4x128xf32>
    %592 = arith.addf %585, %591 : vector<4x4x128xf32>
    %c12 = arith.constant 12 : index
    %c0_168 = arith.constant 0 : index
    %c0_169 = arith.constant 0 : index
    %c0_170 = arith.constant 0 : index
    %593 = vector.load %arg1[%c12, %c0_168, %c0_169, %c0_170] : memref<16x5x5x3xbf16, #tpu.memory_space<vmem>>, vector<1x4x4x3xbf16>
    %594 = vector.shape_cast %593 : vector<1x4x4x3xbf16> to vector<4x4x3xbf16>
    %595 = arith.extf %594 : vector<4x4x3xbf16> to vector<4x4x3xf32>
    %c3_171 = arith.constant 3 : index
    %c0_172 = arith.constant 0 : index
    %c0_173 = arith.constant 0 : index
    %596 = vector.load %arg2[%c3_171, %c0_172, %c0_173] : memref<9x3x128xf32, #tpu.memory_space<vmem>>, vector<1x3x128xf32>
    %597 = vector.shape_cast %596 : vector<1x3x128xf32> to vector<3x128xf32>
    %598 = vector.extract_strided_slice %595 {offsets = [0, 0, 0], sizes = [4, 4, 1], strides = [1, 1, 1]} : vector<4x4x3xf32> to vector<4x4x1xf32>
    %599 = vector.extract_strided_slice %597 {offsets = [0, 0], sizes = [1, 128], strides = [1, 1]} : vector<3x128xf32> to vector<1x128xf32>
    %600 = vector.shape_cast %599 : vector<1x128xf32> to vector<1x1x128xf32>
    %601 = vector.broadcast %598 : vector<4x4x1xf32> to vector<4x4x128xf32>
    %602 = vector.broadcast %600 : vector<1x1x128xf32> to vector<4x4x128xf32>
    %603 = arith.mulf %601, %602 : vector<4x4x128xf32>
    %604 = arith.addf %592, %603 : vector<4x4x128xf32>
    %605 = vector.extract_strided_slice %595 {offsets = [0, 0, 1], sizes = [4, 4, 1], strides = [1, 1, 1]} : vector<4x4x3xf32> to vector<4x4x1xf32>
    %606 = vector.extract_strided_slice %597 {offsets = [1, 0], sizes = [1, 128], strides = [1, 1]} : vector<3x128xf32> to vector<1x128xf32>
    %607 = vector.shape_cast %606 : vector<1x128xf32> to vector<1x1x128xf32>
    %608 = vector.broadcast %605 : vector<4x4x1xf32> to vector<4x4x128xf32>
    %609 = vector.broadcast %607 : vector<1x1x128xf32> to vector<4x4x128xf32>
    %610 = arith.mulf %608, %609 : vector<4x4x128xf32>
    %611 = arith.addf %604, %610 : vector<4x4x128xf32>
    %612 = vector.extract_strided_slice %595 {offsets = [0, 0, 2], sizes = [4, 4, 1], strides = [1, 1, 1]} : vector<4x4x3xf32> to vector<4x4x1xf32>
    %613 = vector.extract_strided_slice %597 {offsets = [2, 0], sizes = [1, 128], strides = [1, 1]} : vector<3x128xf32> to vector<1x128xf32>
    %614 = vector.shape_cast %613 : vector<1x128xf32> to vector<1x1x128xf32>
    %615 = vector.broadcast %612 : vector<4x4x1xf32> to vector<4x4x128xf32>
    %616 = vector.broadcast %614 : vector<1x1x128xf32> to vector<4x4x128xf32>
    %617 = arith.mulf %615, %616 : vector<4x4x128xf32>
    %618 = arith.addf %611, %617 : vector<4x4x128xf32>
    %c13 = arith.constant 13 : index
    %c0_174 = arith.constant 0 : index
    %c0_175 = arith.constant 0 : index
    %c0_176 = arith.constant 0 : index
    %619 = vector.load %arg1[%c13, %c0_174, %c0_175, %c0_176] : memref<16x5x5x3xbf16, #tpu.memory_space<vmem>>, vector<1x4x4x3xbf16>
    %620 = vector.shape_cast %619 : vector<1x4x4x3xbf16> to vector<4x4x3xbf16>
    %621 = arith.extf %620 : vector<4x4x3xbf16> to vector<4x4x3xf32>
    %c4_177 = arith.constant 4 : index
    %c0_178 = arith.constant 0 : index
    %c0_179 = arith.constant 0 : index
    %622 = vector.load %arg2[%c4_177, %c0_178, %c0_179] : memref<9x3x128xf32, #tpu.memory_space<vmem>>, vector<1x3x128xf32>
    %623 = vector.shape_cast %622 : vector<1x3x128xf32> to vector<3x128xf32>
    %624 = vector.extract_strided_slice %621 {offsets = [0, 0, 0], sizes = [4, 4, 1], strides = [1, 1, 1]} : vector<4x4x3xf32> to vector<4x4x1xf32>
    %625 = vector.extract_strided_slice %623 {offsets = [0, 0], sizes = [1, 128], strides = [1, 1]} : vector<3x128xf32> to vector<1x128xf32>
    %626 = vector.shape_cast %625 : vector<1x128xf32> to vector<1x1x128xf32>
    %627 = vector.broadcast %624 : vector<4x4x1xf32> to vector<4x4x128xf32>
    %628 = vector.broadcast %626 : vector<1x1x128xf32> to vector<4x4x128xf32>
    %629 = arith.mulf %627, %628 : vector<4x4x128xf32>
    %630 = arith.addf %618, %629 : vector<4x4x128xf32>
    %631 = vector.extract_strided_slice %621 {offsets = [0, 0, 1], sizes = [4, 4, 1], strides = [1, 1, 1]} : vector<4x4x3xf32> to vector<4x4x1xf32>
    %632 = vector.extract_strided_slice %623 {offsets = [1, 0], sizes = [1, 128], strides = [1, 1]} : vector<3x128xf32> to vector<1x128xf32>
    %633 = vector.shape_cast %632 : vector<1x128xf32> to vector<1x1x128xf32>
    %634 = vector.broadcast %631 : vector<4x4x1xf32> to vector<4x4x128xf32>
    %635 = vector.broadcast %633 : vector<1x1x128xf32> to vector<4x4x128xf32>
    %636 = arith.mulf %634, %635 : vector<4x4x128xf32>
    %637 = arith.addf %630, %636 : vector<4x4x128xf32>
    %638 = vector.extract_strided_slice %621 {offsets = [0, 0, 2], sizes = [4, 4, 1], strides = [1, 1, 1]} : vector<4x4x3xf32> to vector<4x4x1xf32>
    %639 = vector.extract_strided_slice %623 {offsets = [2, 0], sizes = [1, 128], strides = [1, 1]} : vector<3x128xf32> to vector<1x128xf32>
    %640 = vector.shape_cast %639 : vector<1x128xf32> to vector<1x1x128xf32>
    %641 = vector.broadcast %638 : vector<4x4x1xf32> to vector<4x4x128xf32>
    %642 = vector.broadcast %640 : vector<1x1x128xf32> to vector<4x4x128xf32>
    %643 = arith.mulf %641, %642 : vector<4x4x128xf32>
    %644 = arith.addf %637, %643 : vector<4x4x128xf32>
    %c14 = arith.constant 14 : index
    %c0_180 = arith.constant 0 : index
    %c0_181 = arith.constant 0 : index
    %c0_182 = arith.constant 0 : index
    %645 = vector.load %arg1[%c14, %c0_180, %c0_181, %c0_182] : memref<16x5x5x3xbf16, #tpu.memory_space<vmem>>, vector<1x4x4x3xbf16>
    %646 = vector.shape_cast %645 : vector<1x4x4x3xbf16> to vector<4x4x3xbf16>
    %647 = arith.extf %646 : vector<4x4x3xbf16> to vector<4x4x3xf32>
    %c5_183 = arith.constant 5 : index
    %c0_184 = arith.constant 0 : index
    %c0_185 = arith.constant 0 : index
    %648 = vector.load %arg2[%c5_183, %c0_184, %c0_185] : memref<9x3x128xf32, #tpu.memory_space<vmem>>, vector<1x3x128xf32>
    %649 = vector.shape_cast %648 : vector<1x3x128xf32> to vector<3x128xf32>
    %650 = vector.extract_strided_slice %647 {offsets = [0, 0, 0], sizes = [4, 4, 1], strides = [1, 1, 1]} : vector<4x4x3xf32> to vector<4x4x1xf32>
    %651 = vector.extract_strided_slice %649 {offsets = [0, 0], sizes = [1, 128], strides = [1, 1]} : vector<3x128xf32> to vector<1x128xf32>
    %652 = vector.shape_cast %651 : vector<1x128xf32> to vector<1x1x128xf32>
    %653 = vector.broadcast %650 : vector<4x4x1xf32> to vector<4x4x128xf32>
    %654 = vector.broadcast %652 : vector<1x1x128xf32> to vector<4x4x128xf32>
    %655 = arith.mulf %653, %654 : vector<4x4x128xf32>
    %656 = arith.addf %644, %655 : vector<4x4x128xf32>
    %657 = vector.extract_strided_slice %647 {offsets = [0, 0, 1], sizes = [4, 4, 1], strides = [1, 1, 1]} : vector<4x4x3xf32> to vector<4x4x1xf32>
    %658 = vector.extract_strided_slice %649 {offsets = [1, 0], sizes = [1, 128], strides = [1, 1]} : vector<3x128xf32> to vector<1x128xf32>
    %659 = vector.shape_cast %658 : vector<1x128xf32> to vector<1x1x128xf32>
    %660 = vector.broadcast %657 : vector<4x4x1xf32> to vector<4x4x128xf32>
    %661 = vector.broadcast %659 : vector<1x1x128xf32> to vector<4x4x128xf32>
    %662 = arith.mulf %660, %661 : vector<4x4x128xf32>
    %663 = arith.addf %656, %662 : vector<4x4x128xf32>
    %664 = vector.extract_strided_slice %647 {offsets = [0, 0, 2], sizes = [4, 4, 1], strides = [1, 1, 1]} : vector<4x4x3xf32> to vector<4x4x1xf32>
    %665 = vector.extract_strided_slice %649 {offsets = [2, 0], sizes = [1, 128], strides = [1, 1]} : vector<3x128xf32> to vector<1x128xf32>
    %666 = vector.shape_cast %665 : vector<1x128xf32> to vector<1x1x128xf32>
    %667 = vector.broadcast %664 : vector<4x4x1xf32> to vector<4x4x128xf32>
    %668 = vector.broadcast %666 : vector<1x1x128xf32> to vector<4x4x128xf32>
    %669 = arith.mulf %667, %668 : vector<4x4x128xf32>
    %670 = arith.addf %663, %669 : vector<4x4x128xf32>
    %c0_186 = arith.constant 0 : index
    %c1_187 = arith.constant 1 : index
    %c0_188 = arith.constant 0 : index
    %c0_189 = arith.constant 0 : index
    %671 = vector.load %arg1[%c0_186, %c1_187, %c0_188, %c0_189] : memref<16x5x5x3xbf16, #tpu.memory_space<vmem>>, vector<1x4x4x3xbf16>
    %672 = vector.shape_cast %671 : vector<1x4x4x3xbf16> to vector<4x4x3xbf16>
    %673 = arith.extf %672 : vector<4x4x3xbf16> to vector<4x4x3xf32>
    %c6_190 = arith.constant 6 : index
    %c0_191 = arith.constant 0 : index
    %c0_192 = arith.constant 0 : index
    %674 = vector.load %arg2[%c6_190, %c0_191, %c0_192] : memref<9x3x128xf32, #tpu.memory_space<vmem>>, vector<1x3x128xf32>
    %675 = vector.shape_cast %674 : vector<1x3x128xf32> to vector<3x128xf32>
    %676 = vector.extract_strided_slice %673 {offsets = [0, 0, 0], sizes = [4, 4, 1], strides = [1, 1, 1]} : vector<4x4x3xf32> to vector<4x4x1xf32>
    %677 = vector.extract_strided_slice %675 {offsets = [0, 0], sizes = [1, 128], strides = [1, 1]} : vector<3x128xf32> to vector<1x128xf32>
    %678 = vector.shape_cast %677 : vector<1x128xf32> to vector<1x1x128xf32>
    %679 = vector.broadcast %676 : vector<4x4x1xf32> to vector<4x4x128xf32>
    %680 = vector.broadcast %678 : vector<1x1x128xf32> to vector<4x4x128xf32>
    %681 = arith.mulf %679, %680 : vector<4x4x128xf32>
    %682 = arith.addf %670, %681 : vector<4x4x128xf32>
    %683 = vector.extract_strided_slice %673 {offsets = [0, 0, 1], sizes = [4, 4, 1], strides = [1, 1, 1]} : vector<4x4x3xf32> to vector<4x4x1xf32>
    %684 = vector.extract_strided_slice %675 {offsets = [1, 0], sizes = [1, 128], strides = [1, 1]} : vector<3x128xf32> to vector<1x128xf32>
    %685 = vector.shape_cast %684 : vector<1x128xf32> to vector<1x1x128xf32>
    %686 = vector.broadcast %683 : vector<4x4x1xf32> to vector<4x4x128xf32>
    %687 = vector.broadcast %685 : vector<1x1x128xf32> to vector<4x4x128xf32>
    %688 = arith.mulf %686, %687 : vector<4x4x128xf32>
    %689 = arith.addf %682, %688 : vector<4x4x128xf32>
    %690 = vector.extract_strided_slice %673 {offsets = [0, 0, 2], sizes = [4, 4, 1], strides = [1, 1, 1]} : vector<4x4x3xf32> to vector<4x4x1xf32>
    %691 = vector.extract_strided_slice %675 {offsets = [2, 0], sizes = [1, 128], strides = [1, 1]} : vector<3x128xf32> to vector<1x128xf32>
    %692 = vector.shape_cast %691 : vector<1x128xf32> to vector<1x1x128xf32>
    %693 = vector.broadcast %690 : vector<4x4x1xf32> to vector<4x4x128xf32>
    %694 = vector.broadcast %692 : vector<1x1x128xf32> to vector<4x4x128xf32>
    %695 = arith.mulf %693, %694 : vector<4x4x128xf32>
    %696 = arith.addf %689, %695 : vector<4x4x128xf32>
    %c1_193 = arith.constant 1 : index
    %c1_194 = arith.constant 1 : index
    %c0_195 = arith.constant 0 : index
    %c0_196 = arith.constant 0 : index
    %697 = vector.load %arg1[%c1_193, %c1_194, %c0_195, %c0_196] : memref<16x5x5x3xbf16, #tpu.memory_space<vmem>>, vector<1x4x4x3xbf16>
    %698 = vector.shape_cast %697 : vector<1x4x4x3xbf16> to vector<4x4x3xbf16>
    %699 = arith.extf %698 : vector<4x4x3xbf16> to vector<4x4x3xf32>
    %c7_197 = arith.constant 7 : index
    %c0_198 = arith.constant 0 : index
    %c0_199 = arith.constant 0 : index
    %700 = vector.load %arg2[%c7_197, %c0_198, %c0_199] : memref<9x3x128xf32, #tpu.memory_space<vmem>>, vector<1x3x128xf32>
    %701 = vector.shape_cast %700 : vector<1x3x128xf32> to vector<3x128xf32>
    %702 = vector.extract_strided_slice %699 {offsets = [0, 0, 0], sizes = [4, 4, 1], strides = [1, 1, 1]} : vector<4x4x3xf32> to vector<4x4x1xf32>
    %703 = vector.extract_strided_slice %701 {offsets = [0, 0], sizes = [1, 128], strides = [1, 1]} : vector<3x128xf32> to vector<1x128xf32>
    %704 = vector.shape_cast %703 : vector<1x128xf32> to vector<1x1x128xf32>
    %705 = vector.broadcast %702 : vector<4x4x1xf32> to vector<4x4x128xf32>
    %706 = vector.broadcast %704 : vector<1x1x128xf32> to vector<4x4x128xf32>
    %707 = arith.mulf %705, %706 : vector<4x4x128xf32>
    %708 = arith.addf %696, %707 : vector<4x4x128xf32>
    %709 = vector.extract_strided_slice %699 {offsets = [0, 0, 1], sizes = [4, 4, 1], strides = [1, 1, 1]} : vector<4x4x3xf32> to vector<4x4x1xf32>
    %710 = vector.extract_strided_slice %701 {offsets = [1, 0], sizes = [1, 128], strides = [1, 1]} : vector<3x128xf32> to vector<1x128xf32>
    %711 = vector.shape_cast %710 : vector<1x128xf32> to vector<1x1x128xf32>
    %712 = vector.broadcast %709 : vector<4x4x1xf32> to vector<4x4x128xf32>
    %713 = vector.broadcast %711 : vector<1x1x128xf32> to vector<4x4x128xf32>
    %714 = arith.mulf %712, %713 : vector<4x4x128xf32>
    %715 = arith.addf %708, %714 : vector<4x4x128xf32>
    %716 = vector.extract_strided_slice %699 {offsets = [0, 0, 2], sizes = [4, 4, 1], strides = [1, 1, 1]} : vector<4x4x3xf32> to vector<4x4x1xf32>
    %717 = vector.extract_strided_slice %701 {offsets = [2, 0], sizes = [1, 128], strides = [1, 1]} : vector<3x128xf32> to vector<1x128xf32>
    %718 = vector.shape_cast %717 : vector<1x128xf32> to vector<1x1x128xf32>
    %719 = vector.broadcast %716 : vector<4x4x1xf32> to vector<4x4x128xf32>
    %720 = vector.broadcast %718 : vector<1x1x128xf32> to vector<4x4x128xf32>
    %721 = arith.mulf %719, %720 : vector<4x4x128xf32>
    %722 = arith.addf %715, %721 : vector<4x4x128xf32>
    %c2_200 = arith.constant 2 : index
    %c1_201 = arith.constant 1 : index
    %c0_202 = arith.constant 0 : index
    %c0_203 = arith.constant 0 : index
    %723 = vector.load %arg1[%c2_200, %c1_201, %c0_202, %c0_203] : memref<16x5x5x3xbf16, #tpu.memory_space<vmem>>, vector<1x4x4x3xbf16>
    %724 = vector.shape_cast %723 : vector<1x4x4x3xbf16> to vector<4x4x3xbf16>
    %725 = arith.extf %724 : vector<4x4x3xbf16> to vector<4x4x3xf32>
    %c8_204 = arith.constant 8 : index
    %c0_205 = arith.constant 0 : index
    %c0_206 = arith.constant 0 : index
    %726 = vector.load %arg2[%c8_204, %c0_205, %c0_206] : memref<9x3x128xf32, #tpu.memory_space<vmem>>, vector<1x3x128xf32>
    %727 = vector.shape_cast %726 : vector<1x3x128xf32> to vector<3x128xf32>
    %728 = vector.extract_strided_slice %725 {offsets = [0, 0, 0], sizes = [4, 4, 1], strides = [1, 1, 1]} : vector<4x4x3xf32> to vector<4x4x1xf32>
    %729 = vector.extract_strided_slice %727 {offsets = [0, 0], sizes = [1, 128], strides = [1, 1]} : vector<3x128xf32> to vector<1x128xf32>
    %730 = vector.shape_cast %729 : vector<1x128xf32> to vector<1x1x128xf32>
    %731 = vector.broadcast %728 : vector<4x4x1xf32> to vector<4x4x128xf32>
    %732 = vector.broadcast %730 : vector<1x1x128xf32> to vector<4x4x128xf32>
    %733 = arith.mulf %731, %732 : vector<4x4x128xf32>
    %734 = arith.addf %722, %733 : vector<4x4x128xf32>
    %735 = vector.extract_strided_slice %725 {offsets = [0, 0, 1], sizes = [4, 4, 1], strides = [1, 1, 1]} : vector<4x4x3xf32> to vector<4x4x1xf32>
    %736 = vector.extract_strided_slice %727 {offsets = [1, 0], sizes = [1, 128], strides = [1, 1]} : vector<3x128xf32> to vector<1x128xf32>
    %737 = vector.shape_cast %736 : vector<1x128xf32> to vector<1x1x128xf32>
    %738 = vector.broadcast %735 : vector<4x4x1xf32> to vector<4x4x128xf32>
    %739 = vector.broadcast %737 : vector<1x1x128xf32> to vector<4x4x128xf32>
    %740 = arith.mulf %738, %739 : vector<4x4x128xf32>
    %741 = arith.addf %734, %740 : vector<4x4x128xf32>
    %742 = vector.extract_strided_slice %725 {offsets = [0, 0, 2], sizes = [4, 4, 1], strides = [1, 1, 1]} : vector<4x4x3xf32> to vector<4x4x1xf32>
    %743 = vector.extract_strided_slice %727 {offsets = [2, 0], sizes = [1, 128], strides = [1, 1]} : vector<3x128xf32> to vector<1x128xf32>
    %744 = vector.shape_cast %743 : vector<1x128xf32> to vector<1x1x128xf32>
    %745 = vector.broadcast %742 : vector<4x4x1xf32> to vector<4x4x128xf32>
    %746 = vector.broadcast %744 : vector<1x1x128xf32> to vector<4x4x128xf32>
    %747 = arith.mulf %745, %746 : vector<4x4x128xf32>
    %748 = arith.addf %741, %747 : vector<4x4x128xf32>
    %c0_207 = arith.constant 0 : index
    %c0_208 = arith.constant 0 : index
    %749 = vector.load %arg5[%c0_207, %c0_208] : memref<3x128xf32, #tpu.memory_space<vmem>>, vector<1x128xf32>
    %750 = vector.shape_cast %749 : vector<1x128xf32> to vector<1x1x128xf32>
    %751 = vector.broadcast %750 : vector<1x1x128xf32> to vector<4x4x128xf32>
    %752 = arith.mulf %748, %751 : vector<4x4x128xf32>
    %c0_209 = arith.constant 0 : index
    %c0_210 = arith.constant 0 : index
    %753 = vector.load %arg6[%c0_209, %c0_210] : memref<3x128xf32, #tpu.memory_space<vmem>>, vector<1x128xf32>
    %754 = vector.shape_cast %753 : vector<1x128xf32> to vector<1x1x128xf32>
    %755 = vector.broadcast %754 : vector<1x1x128xf32> to vector<4x4x128xf32>
    %756 = arith.addf %752, %755 : vector<4x4x128xf32>
    %cst_211 = arith.constant 5.000000e-01 : f32
    %757 = vector.broadcast %cst_211 : f32 to vector<4x4x128xf32>
    %758 = arith.mulf %757, %756 : vector<4x4x128xf32>
    %cst_212 = arith.constant 0.707106769 : f32
    %759 = vector.broadcast %cst_212 : f32 to vector<4x4x128xf32>
    %760 = arith.mulf %756, %759 : vector<4x4x128xf32>
    %761 = math.erf %760 : vector<4x4x128xf32>
    %cst_213 = arith.constant 1.000000e+00 : f32
    %762 = vector.broadcast %cst_213 : f32 to vector<4x4x128xf32>
    %763 = arith.addf %762, %761 : vector<4x4x128xf32>
    %764 = arith.mulf %758, %763 : vector<4x4x128xf32>
    %765 = arith.truncf %764 : vector<4x4x128xf32> to vector<4x4x128xbf16>
    %c2_214 = arith.constant 2 : index
    %c1_215 = arith.constant 1 : index
    %c1_216 = arith.constant 1 : index
    %c0_217 = arith.constant 0 : index
    %766 = vector.load %arg8[%c2_214, %c1_215, %c1_216, %c0_217] : memref<4x6x6x128xbf16, #tpu.memory_space<vmem>>, vector<1x4x4x128xbf16>
    %767 = vector.shape_cast %766 : vector<1x4x4x128xbf16> to vector<4x4x128xbf16>
    %768 = vector.shape_cast %765 : vector<4x4x128xbf16> to vector<1x4x4x128xbf16>
    tpu.vector_store %arg8[%c2_214, %c1_215, %c1_216, %c0_217], %768 {strides = array<i32>} : memref<4x6x6x128xbf16, #tpu.memory_space<vmem>>, vector<1x4x4x128xbf16>,
    %cst_218 = arith.constant 0.000000e+00 : f32
    %769 = vector.broadcast %cst_218 : f32 to vector<4x4x128xf32>
    %c10_219 = arith.constant 10 : index
    %c0_220 = arith.constant 0 : index
    %c0_221 = arith.constant 0 : index
    %c0_222 = arith.constant 0 : index
    %770 = vector.load %arg1[%c10_219, %c0_220, %c0_221, %c0_222] : memref<16x5x5x3xbf16, #tpu.memory_space<vmem>>, vector<1x4x4x3xbf16>
    %771 = vector.shape_cast %770 : vector<1x4x4x3xbf16> to vector<4x4x3xbf16>
    %772 = arith.extf %771 : vector<4x4x3xbf16> to vector<4x4x3xf32>
    %c0_223 = arith.constant 0 : index
    %c0_224 = arith.constant 0 : index
    %c0_225 = arith.constant 0 : index
    %773 = vector.load %arg2[%c0_223, %c0_224, %c0_225] : memref<9x3x128xf32, #tpu.memory_space<vmem>>, vector<1x3x128xf32>
    %774 = vector.shape_cast %773 : vector<1x3x128xf32> to vector<3x128xf32>
    %775 = vector.extract_strided_slice %772 {offsets = [0, 0, 0], sizes = [4, 4, 1], strides = [1, 1, 1]} : vector<4x4x3xf32> to vector<4x4x1xf32>
    %776 = vector.extract_strided_slice %774 {offsets = [0, 0], sizes = [1, 128], strides = [1, 1]} : vector<3x128xf32> to vector<1x128xf32>
    %777 = vector.shape_cast %776 : vector<1x128xf32> to vector<1x1x128xf32>
    %778 = vector.broadcast %775 : vector<4x4x1xf32> to vector<4x4x128xf32>
    %779 = vector.broadcast %777 : vector<1x1x128xf32> to vector<4x4x128xf32>
    %780 = arith.mulf %778, %779 : vector<4x4x128xf32>
    %781 = arith.addf %769, %780 : vector<4x4x128xf32>
    %782 = vector.extract_strided_slice %772 {offsets = [0, 0, 1], sizes = [4, 4, 1], strides = [1, 1, 1]} : vector<4x4x3xf32> to vector<4x4x1xf32>
    %783 = vector.extract_strided_slice %774 {offsets = [1, 0], sizes = [1, 128], strides = [1, 1]} : vector<3x128xf32> to vector<1x128xf32>
    %784 = vector.shape_cast %783 : vector<1x128xf32> to vector<1x1x128xf32>
    %785 = vector.broadcast %782 : vector<4x4x1xf32> to vector<4x4x128xf32>
    %786 = vector.broadcast %784 : vector<1x1x128xf32> to vector<4x4x128xf32>
    %787 = arith.mulf %785, %786 : vector<4x4x128xf32>
    %788 = arith.addf %781, %787 : vector<4x4x128xf32>
    %789 = vector.extract_strided_slice %772 {offsets = [0, 0, 2], sizes = [4, 4, 1], strides = [1, 1, 1]} : vector<4x4x3xf32> to vector<4x4x1xf32>
    %790 = vector.extract_strided_slice %774 {offsets = [2, 0], sizes = [1, 128], strides = [1, 1]} : vector<3x128xf32> to vector<1x128xf32>
    %791 = vector.shape_cast %790 : vector<1x128xf32> to vector<1x1x128xf32>
    %792 = vector.broadcast %789 : vector<4x4x1xf32> to vector<4x4x128xf32>
    %793 = vector.broadcast %791 : vector<1x1x128xf32> to vector<4x4x128xf32>
    %794 = arith.mulf %792, %793 : vector<4x4x128xf32>
    %795 = arith.addf %788, %794 : vector<4x4x128xf32>
    %c11_226 = arith.constant 11 : index
    %c0_227 = arith.constant 0 : index
    %c0_228 = arith.constant 0 : index
    %c0_229 = arith.constant 0 : index
    %796 = vector.load %arg1[%c11_226, %c0_227, %c0_228, %c0_229] : memref<16x5x5x3xbf16, #tpu.memory_space<vmem>>, vector<1x4x4x3xbf16>
    %797 = vector.shape_cast %796 : vector<1x4x4x3xbf16> to vector<4x4x3xbf16>
    %798 = arith.extf %797 : vector<4x4x3xbf16> to vector<4x4x3xf32>
    %c1_230 = arith.constant 1 : index
    %c0_231 = arith.constant 0 : index
    %c0_232 = arith.constant 0 : index
    %799 = vector.load %arg2[%c1_230, %c0_231, %c0_232] : memref<9x3x128xf32, #tpu.memory_space<vmem>>, vector<1x3x128xf32>
    %800 = vector.shape_cast %799 : vector<1x3x128xf32> to vector<3x128xf32>
    %801 = vector.extract_strided_slice %798 {offsets = [0, 0, 0], sizes = [4, 4, 1], strides = [1, 1, 1]} : vector<4x4x3xf32> to vector<4x4x1xf32>
    %802 = vector.extract_strided_slice %800 {offsets = [0, 0], sizes = [1, 128], strides = [1, 1]} : vector<3x128xf32> to vector<1x128xf32>
    %803 = vector.shape_cast %802 : vector<1x128xf32> to vector<1x1x128xf32>
    %804 = vector.broadcast %801 : vector<4x4x1xf32> to vector<4x4x128xf32>
    %805 = vector.broadcast %803 : vector<1x1x128xf32> to vector<4x4x128xf32>
    %806 = arith.mulf %804, %805 : vector<4x4x128xf32>
    %807 = arith.addf %795, %806 : vector<4x4x128xf32>
    %808 = vector.extract_strided_slice %798 {offsets = [0, 0, 1], sizes = [4, 4, 1], strides = [1, 1, 1]} : vector<4x4x3xf32> to vector<4x4x1xf32>
    %809 = vector.extract_strided_slice %800 {offsets = [1, 0], sizes = [1, 128], strides = [1, 1]} : vector<3x128xf32> to vector<1x128xf32>
    %810 = vector.shape_cast %809 : vector<1x128xf32> to vector<1x1x128xf32>
    %811 = vector.broadcast %808 : vector<4x4x1xf32> to vector<4x4x128xf32>
    %812 = vector.broadcast %810 : vector<1x1x128xf32> to vector<4x4x128xf32>
    %813 = arith.mulf %811, %812 : vector<4x4x128xf32>
    %814 = arith.addf %807, %813 : vector<4x4x128xf32>
    %815 = vector.extract_strided_slice %798 {offsets = [0, 0, 2], sizes = [4, 4, 1], strides = [1, 1, 1]} : vector<4x4x3xf32> to vector<4x4x1xf32>
    %816 = vector.extract_strided_slice %800 {offsets = [2, 0], sizes = [1, 128], strides = [1, 1]} : vector<3x128xf32> to vector<1x128xf32>
    %817 = vector.shape_cast %816 : vector<1x128xf32> to vector<1x1x128xf32>
    %818 = vector.broadcast %815 : vector<4x4x1xf32> to vector<4x4x128xf32>
    %819 = vector.broadcast %817 : vector<1x1x128xf32> to vector<4x4x128xf32>
    %820 = arith.mulf %818, %819 : vector<4x4x128xf32>
    %821 = arith.addf %814, %820 : vector<4x4x128xf32>
    %c8_233 = arith.constant 8 : index
    %c0_234 = arith.constant 0 : index
    %c1_235 = arith.constant 1 : index
    %c0_236 = arith.constant 0 : index
    %822 = vector.load %arg1[%c8_233, %c0_234, %c1_235, %c0_236] : memref<16x5x5x3xbf16, #tpu.memory_space<vmem>>, vector<1x4x4x3xbf16>
    %823 = vector.shape_cast %822 : vector<1x4x4x3xbf16> to vector<4x4x3xbf16>
    %824 = arith.extf %823 : vector<4x4x3xbf16> to vector<4x4x3xf32>
    %c2_237 = arith.constant 2 : index
    %c0_238 = arith.constant 0 : index
    %c0_239 = arith.constant 0 : index
    %825 = vector.load %arg2[%c2_237, %c0_238, %c0_239] : memref<9x3x128xf32, #tpu.memory_space<vmem>>, vector<1x3x128xf32>
    %826 = vector.shape_cast %825 : vector<1x3x128xf32> to vector<3x128xf32>
    %827 = vector.extract_strided_slice %824 {offsets = [0, 0, 0], sizes = [4, 4, 1], strides = [1, 1, 1]} : vector<4x4x3xf32> to vector<4x4x1xf32>
    %828 = vector.extract_strided_slice %826 {offsets = [0, 0], sizes = [1, 128], strides = [1, 1]} : vector<3x128xf32> to vector<1x128xf32>
    %829 = vector.shape_cast %828 : vector<1x128xf32> to vector<1x1x128xf32>
    %830 = vector.broadcast %827 : vector<4x4x1xf32> to vector<4x4x128xf32>
    %831 = vector.broadcast %829 : vector<1x1x128xf32> to vector<4x4x128xf32>
    %832 = arith.mulf %830, %831 : vector<4x4x128xf32>
    %833 = arith.addf %821, %832 : vector<4x4x128xf32>
    %834 = vector.extract_strided_slice %824 {offsets = [0, 0, 1], sizes = [4, 4, 1], strides = [1, 1, 1]} : vector<4x4x3xf32> to vector<4x4x1xf32>
    %835 = vector.extract_strided_slice %826 {offsets = [1, 0], sizes = [1, 128], strides = [1, 1]} : vector<3x128xf32> to vector<1x128xf32>
    %836 = vector.shape_cast %835 : vector<1x128xf32> to vector<1x1x128xf32>
    %837 = vector.broadcast %834 : vector<4x4x1xf32> to vector<4x4x128xf32>
    %838 = vector.broadcast %836 : vector<1x1x128xf32> to vector<4x4x128xf32>
    %839 = arith.mulf %837, %838 : vector<4x4x128xf32>
    %840 = arith.addf %833, %839 : vector<4x4x128xf32>
    %841 = vector.extract_strided_slice %824 {offsets = [0, 0, 2], sizes = [4, 4, 1], strides = [1, 1, 1]} : vector<4x4x3xf32> to vector<4x4x1xf32>
    %842 = vector.extract_strided_slice %826 {offsets = [2, 0], sizes = [1, 128], strides = [1, 1]} : vector<3x128xf32> to vector<1x128xf32>
    %843 = vector.shape_cast %842 : vector<1x128xf32> to vector<1x1x128xf32>
    %844 = vector.broadcast %841 : vector<4x4x1xf32> to vector<4x4x128xf32>
    %845 = vector.broadcast %843 : vector<1x1x128xf32> to vector<4x4x128xf32>
    %846 = arith.mulf %844, %845 : vector<4x4x128xf32>
    %847 = arith.addf %840, %846 : vector<4x4x128xf32>
    %c14_240 = arith.constant 14 : index
    %c0_241 = arith.constant 0 : index
    %c0_242 = arith.constant 0 : index
    %c0_243 = arith.constant 0 : index
    %848 = vector.load %arg1[%c14_240, %c0_241, %c0_242, %c0_243] : memref<16x5x5x3xbf16, #tpu.memory_space<vmem>>, vector<1x4x4x3xbf16>
    %849 = vector.shape_cast %848 : vector<1x4x4x3xbf16> to vector<4x4x3xbf16>
    %850 = arith.extf %849 : vector<4x4x3xbf16> to vector<4x4x3xf32>
    %c3_244 = arith.constant 3 : index
    %c0_245 = arith.constant 0 : index
    %c0_246 = arith.constant 0 : index
    %851 = vector.load %arg2[%c3_244, %c0_245, %c0_246] : memref<9x3x128xf32, #tpu.memory_space<vmem>>, vector<1x3x128xf32>
    %852 = vector.shape_cast %851 : vector<1x3x128xf32> to vector<3x128xf32>
    %853 = vector.extract_strided_slice %850 {offsets = [0, 0, 0], sizes = [4, 4, 1], strides = [1, 1, 1]} : vector<4x4x3xf32> to vector<4x4x1xf32>
    %854 = vector.extract_strided_slice %852 {offsets = [0, 0], sizes = [1, 128], strides = [1, 1]} : vector<3x128xf32> to vector<1x128xf32>
    %855 = vector.shape_cast %854 : vector<1x128xf32> to vector<1x1x128xf32>
    %856 = vector.broadcast %853 : vector<4x4x1xf32> to vector<4x4x128xf32>
    %857 = vector.broadcast %855 : vector<1x1x128xf32> to vector<4x4x128xf32>
    %858 = arith.mulf %856, %857 : vector<4x4x128xf32>
    %859 = arith.addf %847, %858 : vector<4x4x128xf32>
    %860 = vector.extract_strided_slice %850 {offsets = [0, 0, 1], sizes = [4, 4, 1], strides = [1, 1, 1]} : vector<4x4x3xf32> to vector<4x4x1xf32>
    %861 = vector.extract_strided_slice %852 {offsets = [1, 0], sizes = [1, 128], strides = [1, 1]} : vector<3x128xf32> to vector<1x128xf32>
    %862 = vector.shape_cast %861 : vector<1x128xf32> to vector<1x1x128xf32>
    %863 = vector.broadcast %860 : vector<4x4x1xf32> to vector<4x4x128xf32>
    %864 = vector.broadcast %862 : vector<1x1x128xf32> to vector<4x4x128xf32>
    %865 = arith.mulf %863, %864 : vector<4x4x128xf32>
    %866 = arith.addf %859, %865 : vector<4x4x128xf32>
    %867 = vector.extract_strided_slice %850 {offsets = [0, 0, 2], sizes = [4, 4, 1], strides = [1, 1, 1]} : vector<4x4x3xf32> to vector<4x4x1xf32>
    %868 = vector.extract_strided_slice %852 {offsets = [2, 0], sizes = [1, 128], strides = [1, 1]} : vector<3x128xf32> to vector<1x128xf32>
    %869 = vector.shape_cast %868 : vector<1x128xf32> to vector<1x1x128xf32>
    %870 = vector.broadcast %867 : vector<4x4x1xf32> to vector<4x4x128xf32>
    %871 = vector.broadcast %869 : vector<1x1x128xf32> to vector<4x4x128xf32>
    %872 = arith.mulf %870, %871 : vector<4x4x128xf32>
    %873 = arith.addf %866, %872 : vector<4x4x128xf32>
    %c15 = arith.constant 15 : index
    %c0_247 = arith.constant 0 : index
    %c0_248 = arith.constant 0 : index
    %c0_249 = arith.constant 0 : index
    %874 = vector.load %arg1[%c15, %c0_247, %c0_248, %c0_249] : memref<16x5x5x3xbf16, #tpu.memory_space<vmem>>, vector<1x4x4x3xbf16>
    %875 = vector.shape_cast %874 : vector<1x4x4x3xbf16> to vector<4x4x3xbf16>
    %876 = arith.extf %875 : vector<4x4x3xbf16> to vector<4x4x3xf32>
    %c4_250 = arith.constant 4 : index
    %c0_251 = arith.constant 0 : index
    %c0_252 = arith.constant 0 : index
    %877 = vector.load %arg2[%c4_250, %c0_251, %c0_252] : memref<9x3x128xf32, #tpu.memory_space<vmem>>, vector<1x3x128xf32>
    %878 = vector.shape_cast %877 : vector<1x3x128xf32> to vector<3x128xf32>
    %879 = vector.extract_strided_slice %876 {offsets = [0, 0, 0], sizes = [4, 4, 1], strides = [1, 1, 1]} : vector<4x4x3xf32> to vector<4x4x1xf32>
    %880 = vector.extract_strided_slice %878 {offsets = [0, 0], sizes = [1, 128], strides = [1, 1]} : vector<3x128xf32> to vector<1x128xf32>
    %881 = vector.shape_cast %880 : vector<1x128xf32> to vector<1x1x128xf32>
    %882 = vector.broadcast %879 : vector<4x4x1xf32> to vector<4x4x128xf32>
    %883 = vector.broadcast %881 : vector<1x1x128xf32> to vector<4x4x128xf32>
    %884 = arith.mulf %882, %883 : vector<4x4x128xf32>
    %885 = arith.addf %873, %884 : vector<4x4x128xf32>
    %886 = vector.extract_strided_slice %876 {offsets = [0, 0, 1], sizes = [4, 4, 1], strides = [1, 1, 1]} : vector<4x4x3xf32> to vector<4x4x1xf32>
    %887 = vector.extract_strided_slice %878 {offsets = [1, 0], sizes = [1, 128], strides = [1, 1]} : vector<3x128xf32> to vector<1x128xf32>
    %888 = vector.shape_cast %887 : vector<1x128xf32> to vector<1x1x128xf32>
    %889 = vector.broadcast %886 : vector<4x4x1xf32> to vector<4x4x128xf32>
    %890 = vector.broadcast %888 : vector<1x1x128xf32> to vector<4x4x128xf32>
    %891 = arith.mulf %889, %890 : vector<4x4x128xf32>
    %892 = arith.addf %885, %891 : vector<4x4x128xf32>
    %893 = vector.extract_strided_slice %876 {offsets = [0, 0, 2], sizes = [4, 4, 1], strides = [1, 1, 1]} : vector<4x4x3xf32> to vector<4x4x1xf32>
    %894 = vector.extract_strided_slice %878 {offsets = [2, 0], sizes = [1, 128], strides = [1, 1]} : vector<3x128xf32> to vector<1x128xf32>
    %895 = vector.shape_cast %894 : vector<1x128xf32> to vector<1x1x128xf32>
    %896 = vector.broadcast %893 : vector<4x4x1xf32> to vector<4x4x128xf32>
    %897 = vector.broadcast %895 : vector<1x1x128xf32> to vector<4x4x128xf32>
    %898 = arith.mulf %896, %897 : vector<4x4x128xf32>
    %899 = arith.addf %892, %898 : vector<4x4x128xf32>
    %c12_253 = arith.constant 12 : index
    %c0_254 = arith.constant 0 : index
    %c1_255 = arith.constant 1 : index
    %c0_256 = arith.constant 0 : index
    %900 = vector.load %arg1[%c12_253, %c0_254, %c1_255, %c0_256] : memref<16x5x5x3xbf16, #tpu.memory_space<vmem>>, vector<1x4x4x3xbf16>
    %901 = vector.shape_cast %900 : vector<1x4x4x3xbf16> to vector<4x4x3xbf16>
    %902 = arith.extf %901 : vector<4x4x3xbf16> to vector<4x4x3xf32>
    %c5_257 = arith.constant 5 : index
    %c0_258 = arith.constant 0 : index
    %c0_259 = arith.constant 0 : index
    %903 = vector.load %arg2[%c5_257, %c0_258, %c0_259] : memref<9x3x128xf32, #tpu.memory_space<vmem>>, vector<1x3x128xf32>
    %904 = vector.shape_cast %903 : vector<1x3x128xf32> to vector<3x128xf32>
    %905 = vector.extract_strided_slice %902 {offsets = [0, 0, 0], sizes = [4, 4, 1], strides = [1, 1, 1]} : vector<4x4x3xf32> to vector<4x4x1xf32>
    %906 = vector.extract_strided_slice %904 {offsets = [0, 0], sizes = [1, 128], strides = [1, 1]} : vector<3x128xf32> to vector<1x128xf32>
    %907 = vector.shape_cast %906 : vector<1x128xf32> to vector<1x1x128xf32>
    %908 = vector.broadcast %905 : vector<4x4x1xf32> to vector<4x4x128xf32>
    %909 = vector.broadcast %907 : vector<1x1x128xf32> to vector<4x4x128xf32>
    %910 = arith.mulf %908, %909 : vector<4x4x128xf32>
    %911 = arith.addf %899, %910 : vector<4x4x128xf32>
    %912 = vector.extract_strided_slice %902 {offsets = [0, 0, 1], sizes = [4, 4, 1], strides = [1, 1, 1]} : vector<4x4x3xf32> to vector<4x4x1xf32>
    %913 = vector.extract_strided_slice %904 {offsets = [1, 0], sizes = [1, 128], strides = [1, 1]} : vector<3x128xf32> to vector<1x128xf32>
    %914 = vector.shape_cast %913 : vector<1x128xf32> to vector<1x1x128xf32>
    %915 = vector.broadcast %912 : vector<4x4x1xf32> to vector<4x4x128xf32>
    %916 = vector.broadcast %914 : vector<1x1x128xf32> to vector<4x4x128xf32>
    %917 = arith.mulf %915, %916 : vector<4x4x128xf32>
    %918 = arith.addf %911, %917 : vector<4x4x128xf32>
    %919 = vector.extract_strided_slice %902 {offsets = [0, 0, 2], sizes = [4, 4, 1], strides = [1, 1, 1]} : vector<4x4x3xf32> to vector<4x4x1xf32>
    %920 = vector.extract_strided_slice %904 {offsets = [2, 0], sizes = [1, 128], strides = [1, 1]} : vector<3x128xf32> to vector<1x128xf32>
    %921 = vector.shape_cast %920 : vector<1x128xf32> to vector<1x1x128xf32>
    %922 = vector.broadcast %919 : vector<4x4x1xf32> to vector<4x4x128xf32>
    %923 = vector.broadcast %921 : vector<1x1x128xf32> to vector<4x4x128xf32>
    %924 = arith.mulf %922, %923 : vector<4x4x128xf32>
    %925 = arith.addf %918, %924 : vector<4x4x128xf32>
    %c2_260 = arith.constant 2 : index
    %c1_261 = arith.constant 1 : index
    %c0_262 = arith.constant 0 : index
    %c0_263 = arith.constant 0 : index
    %926 = vector.load %arg1[%c2_260, %c1_261, %c0_262, %c0_263] : memref<16x5x5x3xbf16, #tpu.memory_space<vmem>>, vector<1x4x4x3xbf16>
    %927 = vector.shape_cast %926 : vector<1x4x4x3xbf16> to vector<4x4x3xbf16>
    %928 = arith.extf %927 : vector<4x4x3xbf16> to vector<4x4x3xf32>
    %c6_264 = arith.constant 6 : index
    %c0_265 = arith.constant 0 : index
    %c0_266 = arith.constant 0 : index
    %929 = vector.load %arg2[%c6_264, %c0_265, %c0_266] : memref<9x3x128xf32, #tpu.memory_space<vmem>>, vector<1x3x128xf32>
    %930 = vector.shape_cast %929 : vector<1x3x128xf32> to vector<3x128xf32>
    %931 = vector.extract_strided_slice %928 {offsets = [0, 0, 0], sizes = [4, 4, 1], strides = [1, 1, 1]} : vector<4x4x3xf32> to vector<4x4x1xf32>
    %932 = vector.extract_strided_slice %930 {offsets = [0, 0], sizes = [1, 128], strides = [1, 1]} : vector<3x128xf32> to vector<1x128xf32>
    %933 = vector.shape_cast %932 : vector<1x128xf32> to vector<1x1x128xf32>
    %934 = vector.broadcast %931 : vector<4x4x1xf32> to vector<4x4x128xf32>
    %935 = vector.broadcast %933 : vector<1x1x128xf32> to vector<4x4x128xf32>
    %936 = arith.mulf %934, %935 : vector<4x4x128xf32>
    %937 = arith.addf %925, %936 : vector<4x4x128xf32>
    %938 = vector.extract_strided_slice %928 {offsets = [0, 0, 1], sizes = [4, 4, 1], strides = [1, 1, 1]} : vector<4x4x3xf32> to vector<4x4x1xf32>
    %939 = vector.extract_strided_slice %930 {offsets = [1, 0], sizes = [1, 128], strides = [1, 1]} : vector<3x128xf32> to vector<1x128xf32>
    %940 = vector.shape_cast %939 : vector<1x128xf32> to vector<1x1x128xf32>
    %941 = vector.broadcast %938 : vector<4x4x1xf32> to vector<4x4x128xf32>
    %942 = vector.broadcast %940 : vector<1x1x128xf32> to vector<4x4x128xf32>
    %943 = arith.mulf %941, %942 : vector<4x4x128xf32>
    %944 = arith.addf %937, %943 : vector<4x4x128xf32>
    %945 = vector.extract_strided_slice %928 {offsets = [0, 0, 2], sizes = [4, 4, 1], strides = [1, 1, 1]} : vector<4x4x3xf32> to vector<4x4x1xf32>
    %946 = vector.extract_strided_slice %930 {offsets = [2, 0], sizes = [1, 128], strides = [1, 1]} : vector<3x128xf32> to vector<1x128xf32>
    %947 = vector.shape_cast %946 : vector<1x128xf32> to vector<1x1x128xf32>
    %948 = vector.broadcast %945 : vector<4x4x1xf32> to vector<4x4x128xf32>
    %949 = vector.broadcast %947 : vector<1x1x128xf32> to vector<4x4x128xf32>
    %950 = arith.mulf %948, %949 : vector<4x4x128xf32>
    %951 = arith.addf %944, %950 : vector<4x4x128xf32>
    %c3_267 = arith.constant 3 : index
    %c1_268 = arith.constant 1 : index
    %c0_269 = arith.constant 0 : index
    %c0_270 = arith.constant 0 : index
    %952 = vector.load %arg1[%c3_267, %c1_268, %c0_269, %c0_270] : memref<16x5x5x3xbf16, #tpu.memory_space<vmem>>, vector<1x4x4x3xbf16>
    %953 = vector.shape_cast %952 : vector<1x4x4x3xbf16> to vector<4x4x3xbf16>
    %954 = arith.extf %953 : vector<4x4x3xbf16> to vector<4x4x3xf32>
    %c7_271 = arith.constant 7 : index
    %c0_272 = arith.constant 0 : index
    %c0_273 = arith.constant 0 : index
    %955 = vector.load %arg2[%c7_271, %c0_272, %c0_273] : memref<9x3x128xf32, #tpu.memory_space<vmem>>, vector<1x3x128xf32>
    %956 = vector.shape_cast %955 : vector<1x3x128xf32> to vector<3x128xf32>
    %957 = vector.extract_strided_slice %954 {offsets = [0, 0, 0], sizes = [4, 4, 1], strides = [1, 1, 1]} : vector<4x4x3xf32> to vector<4x4x1xf32>
    %958 = vector.extract_strided_slice %956 {offsets = [0, 0], sizes = [1, 128], strides = [1, 1]} : vector<3x128xf32> to vector<1x128xf32>
    %959 = vector.shape_cast %958 : vector<1x128xf32> to vector<1x1x128xf32>
    %960 = vector.broadcast %957 : vector<4x4x1xf32> to vector<4x4x128xf32>
    %961 = vector.broadcast %959 : vector<1x1x128xf32> to vector<4x4x128xf32>
    %962 = arith.mulf %960, %961 : vector<4x4x128xf32>
    %963 = arith.addf %951, %962 : vector<4x4x128xf32>
    %964 = vector.extract_strided_slice %954 {offsets = [0, 0, 1], sizes = [4, 4, 1], strides = [1, 1, 1]} : vector<4x4x3xf32> to vector<4x4x1xf32>
    %965 = vector.extract_strided_slice %956 {offsets = [1, 0], sizes = [1, 128], strides = [1, 1]} : vector<3x128xf32> to vector<1x128xf32>
    %966 = vector.shape_cast %965 : vector<1x128xf32> to vector<1x1x128xf32>
    %967 = vector.broadcast %964 : vector<4x4x1xf32> to vector<4x4x128xf32>
    %968 = vector.broadcast %966 : vector<1x1x128xf32> to vector<4x4x128xf32>
    %969 = arith.mulf %967, %968 : vector<4x4x128xf32>
    %970 = arith.addf %963, %969 : vector<4x4x128xf32>
    %971 = vector.extract_strided_slice %954 {offsets = [0, 0, 2], sizes = [4, 4, 1], strides = [1, 1, 1]} : vector<4x4x3xf32> to vector<4x4x1xf32>
    %972 = vector.extract_strided_slice %956 {offsets = [2, 0], sizes = [1, 128], strides = [1, 1]} : vector<3x128xf32> to vector<1x128xf32>
    %973 = vector.shape_cast %972 : vector<1x128xf32> to vector<1x1x128xf32>
    %974 = vector.broadcast %971 : vector<4x4x1xf32> to vector<4x4x128xf32>
    %975 = vector.broadcast %973 : vector<1x1x128xf32> to vector<4x4x128xf32>
    %976 = arith.mulf %974, %975 : vector<4x4x128xf32>
    %977 = arith.addf %970, %976 : vector<4x4x128xf32>
    %c0_274 = arith.constant 0 : index
    %c1_275 = arith.constant 1 : index
    %c1_276 = arith.constant 1 : index
    %c0_277 = arith.constant 0 : index
    %978 = vector.load %arg1[%c0_274, %c1_275, %c1_276, %c0_277] : memref<16x5x5x3xbf16, #tpu.memory_space<vmem>>, vector<1x4x4x3xbf16>
    %979 = vector.shape_cast %978 : vector<1x4x4x3xbf16> to vector<4x4x3xbf16>
    %980 = arith.extf %979 : vector<4x4x3xbf16> to vector<4x4x3xf32>
    %c8_278 = arith.constant 8 : index
    %c0_279 = arith.constant 0 : index
    %c0_280 = arith.constant 0 : index
    %981 = vector.load %arg2[%c8_278, %c0_279, %c0_280] : memref<9x3x128xf32, #tpu.memory_space<vmem>>, vector<1x3x128xf32>
    %982 = vector.shape_cast %981 : vector<1x3x128xf32> to vector<3x128xf32>
    %983 = vector.extract_strided_slice %980 {offsets = [0, 0, 0], sizes = [4, 4, 1], strides = [1, 1, 1]} : vector<4x4x3xf32> to vector<4x4x1xf32>
    %984 = vector.extract_strided_slice %982 {offsets = [0, 0], sizes = [1, 128], strides = [1, 1]} : vector<3x128xf32> to vector<1x128xf32>
    %985 = vector.shape_cast %984 : vector<1x128xf32> to vector<1x1x128xf32>
    %986 = vector.broadcast %983 : vector<4x4x1xf32> to vector<4x4x128xf32>
    %987 = vector.broadcast %985 : vector<1x1x128xf32> to vector<4x4x128xf32>
    %988 = arith.mulf %986, %987 : vector<4x4x128xf32>
    %989 = arith.addf %977, %988 : vector<4x4x128xf32>
    %990 = vector.extract_strided_slice %980 {offsets = [0, 0, 1], sizes = [4, 4, 1], strides = [1, 1, 1]} : vector<4x4x3xf32> to vector<4x4x1xf32>
    %991 = vector.extract_strided_slice %982 {offsets = [1, 0], sizes = [1, 128], strides = [1, 1]} : vector<3x128xf32> to vector<1x128xf32>
    %992 = vector.shape_cast %991 : vector<1x128xf32> to vector<1x1x128xf32>
    %993 = vector.broadcast %990 : vector<4x4x1xf32> to vector<4x4x128xf32>
    %994 = vector.broadcast %992 : vector<1x1x128xf32> to vector<4x4x128xf32>
    %995 = arith.mulf %993, %994 : vector<4x4x128xf32>
    %996 = arith.addf %989, %995 : vector<4x4x128xf32>
    %997 = vector.extract_strided_slice %980 {offsets = [0, 0, 2], sizes = [4, 4, 1], strides = [1, 1, 1]} : vector<4x4x3xf32> to vector<4x4x1xf32>
    %998 = vector.extract_strided_slice %982 {offsets = [2, 0], sizes = [1, 128], strides = [1, 1]} : vector<3x128xf32> to vector<1x128xf32>
    %999 = vector.shape_cast %998 : vector<1x128xf32> to vector<1x1x128xf32>
    %1000 = vector.broadcast %997 : vector<4x4x1xf32> to vector<4x4x128xf32>
    %1001 = vector.broadcast %999 : vector<1x1x128xf32> to vector<4x4x128xf32>
    %1002 = arith.mulf %1000, %1001 : vector<4x4x128xf32>
    %1003 = arith.addf %996, %1002 : vector<4x4x128xf32>
    %c0_281 = arith.constant 0 : index
    %c0_282 = arith.constant 0 : index
    %1004 = vector.load %arg5[%c0_281, %c0_282] : memref<3x128xf32, #tpu.memory_space<vmem>>, vector<1x128xf32>
    %1005 = vector.shape_cast %1004 : vector<1x128xf32> to vector<1x1x128xf32>
    %1006 = vector.broadcast %1005 : vector<1x1x128xf32> to vector<4x4x128xf32>
    %1007 = arith.mulf %1003, %1006 : vector<4x4x128xf32>
    %c0_283 = arith.constant 0 : index
    %c0_284 = arith.constant 0 : index
    %1008 = vector.load %arg6[%c0_283, %c0_284] : memref<3x128xf32, #tpu.memory_space<vmem>>, vector<1x128xf32>
    %1009 = vector.shape_cast %1008 : vector<1x128xf32> to vector<1x1x128xf32>
    %1010 = vector.broadcast %1009 : vector<1x1x128xf32> to vector<4x4x128xf32>
    %1011 = arith.addf %1007, %1010 : vector<4x4x128xf32>
    %cst_285 = arith.constant 5.000000e-01 : f32
    %1012 = vector.broadcast %cst_285 : f32 to vector<4x4x128xf32>
    %1013 = arith.mulf %1012, %1011 : vector<4x4x128xf32>
    %cst_286 = arith.constant 0.707106769 : f32
    %1014 = vector.broadcast %cst_286 : f32 to vector<4x4x128xf32>
    %1015 = arith.mulf %1011, %1014 : vector<4x4x128xf32>
    %1016 = math.erf %1015 : vector<4x4x128xf32>
    %cst_287 = arith.constant 1.000000e+00 : f32
    %1017 = vector.broadcast %cst_287 : f32 to vector<4x4x128xf32>
    %1018 = arith.addf %1017, %1016 : vector<4x4x128xf32>
    %1019 = arith.mulf %1013, %1018 : vector<4x4x128xf32>
    %1020 = arith.truncf %1019 : vector<4x4x128xf32> to vector<4x4x128xbf16>
    %c3_288 = arith.constant 3 : index
    %c1_289 = arith.constant 1 : index
    %c1_290 = arith.constant 1 : index
    %c0_291 = arith.constant 0 : index
    %1021 = vector.load %arg8[%c3_288, %c1_289, %c1_290, %c0_291] : memref<4x6x6x128xbf16, #tpu.memory_space<vmem>>, vector<1x4x4x128xbf16>
    %1022 = vector.shape_cast %1021 : vector<1x4x4x128xbf16> to vector<4x4x128xbf16>
    %1023 = vector.shape_cast %1020 : vector<4x4x128xbf16> to vector<1x4x4x128xbf16>
    tpu.vector_store %arg8[%c3_288, %c1_289, %c1_290, %c0_291], %1023 {strides = array<i32>} : memref<4x6x6x128xbf16, #tpu.memory_space<vmem>>, vector<1x4x4x128xbf16>,
    %cst_292 = arith.constant 0.000000e+00 : f32
    %1024 = vector.broadcast %cst_292 : f32 to vector<16x128xf32>
    %c3_293 = arith.constant 3 : index
    %c0_294 = arith.constant 0 : index
    %c0_295 = arith.constant 0 : index
    %c0_296 = arith.constant 0 : index
    %1025 = vector.load %arg8[%c3_293, %c0_294, %c0_295, %c0_296] : memref<4x6x6x128xbf16, #tpu.memory_space<vmem>>, vector<1x4x4x128xbf16>
    %1026 = vector.shape_cast %1025 : vector<1x4x4x128xbf16> to vector<4x4x128xbf16>
    %1027 = vector.shape_cast %1026 : vector<4x4x128xbf16> to vector<16x128xbf16>
    %c0_297 = arith.constant 0 : index
    %c0_298 = arith.constant 0 : index
    %c0_299 = arith.constant 0 : index
    %1028 = vector.load %arg3[%c0_297, %c0_298, %c0_299] : memref<9x128x128xbf16, #tpu.memory_space<vmem>>, vector<1x128x128xbf16>
    %1029 = vector.shape_cast %1028 : vector<1x128x128xbf16> to vector<128x128xbf16>
    %cst_300 = arith.constant dense<0.000000e+00> : vector<16x128xf32>
    %1030 = tpu.matmul %1027, %1029, %cst_300 {dimension_numbers = #tpu.dot_dimension_numbers<[1], [0], [0], [1], [0, 0, 1, 1], [], []>} : vector<16x128xbf16>, vector<128x128xbf16>, vector<16x128xf32> -> vector<16x128xf32>
    %1031 = arith.addf %1024, %1030 : vector<16x128xf32>
    %c2_301 = arith.constant 2 : index
    %c0_302 = arith.constant 0 : index
    %c1_303 = arith.constant 1 : index
    %c0_304 = arith.constant 0 : index
    %1032 = vector.load %arg8[%c2_301, %c0_302, %c1_303, %c0_304] : memref<4x6x6x128xbf16, #tpu.memory_space<vmem>>, vector<1x4x4x128xbf16>
    %1033 = vector.shape_cast %1032 : vector<1x4x4x128xbf16> to vector<4x4x128xbf16>
    %1034 = vector.shape_cast %1033 : vector<4x4x128xbf16> to vector<16x128xbf16>
    %c1_305 = arith.constant 1 : index
    %c0_306 = arith.constant 0 : index
    %c0_307 = arith.constant 0 : index
    %1035 = vector.load %arg3[%c1_305, %c0_306, %c0_307] : memref<9x128x128xbf16, #tpu.memory_space<vmem>>, vector<1x128x128xbf16>
    %1036 = vector.shape_cast %1035 : vector<1x128x128xbf16> to vector<128x128xbf16>
    %cst_308 = arith.constant dense<0.000000e+00> : vector<16x128xf32>
    %1037 = tpu.matmul %1034, %1036, %cst_308 {dimension_numbers = #tpu.dot_dimension_numbers<[1], [0], [0], [1], [0, 0, 1, 1], [], []>} : vector<16x128xbf16>, vector<128x128xbf16>, vector<16x128xf32> -> vector<16x128xf32>
    %1038 = arith.addf %1031, %1037 : vector<16x128xf32>
    %c3_309 = arith.constant 3 : index
    %c0_310 = arith.constant 0 : index
    %c1_311 = arith.constant 1 : index
    %c0_312 = arith.constant 0 : index
    %1039 = vector.load %arg8[%c3_309, %c0_310, %c1_311, %c0_312] : memref<4x6x6x128xbf16, #tpu.memory_space<vmem>>, vector<1x4x4x128xbf16>
    %1040 = vector.shape_cast %1039 : vector<1x4x4x128xbf16> to vector<4x4x128xbf16>
    %1041 = vector.shape_cast %1040 : vector<4x4x128xbf16> to vector<16x128xbf16>
    %c2_313 = arith.constant 2 : index
    %c0_314 = arith.constant 0 : index
    %c0_315 = arith.constant 0 : index
    %1042 = vector.load %arg3[%c2_313, %c0_314, %c0_315] : memref<9x128x128xbf16, #tpu.memory_space<vmem>>, vector<1x128x128xbf16>
    %1043 = vector.shape_cast %1042 : vector<1x128x128xbf16> to vector<128x128xbf16>
    %cst_316 = arith.constant dense<0.000000e+00> : vector<16x128xf32>
    %1044 = tpu.matmul %1041, %1043, %cst_316 {dimension_numbers = #tpu.dot_dimension_numbers<[1], [0], [0], [1], [0, 0, 1, 1], [], []>} : vector<16x128xbf16>, vector<128x128xbf16>, vector<16x128xf32> -> vector<16x128xf32>
    %1045 = arith.addf %1038, %1044 : vector<16x128xf32>
    %c1_317 = arith.constant 1 : index
    %c1_318 = arith.constant 1 : index
    %c0_319 = arith.constant 0 : index
    %c0_320 = arith.constant 0 : index
    %1046 = vector.load %arg8[%c1_317, %c1_318, %c0_319, %c0_320] : memref<4x6x6x128xbf16, #tpu.memory_space<vmem>>, vector<1x4x4x128xbf16>
    %1047 = vector.shape_cast %1046 : vector<1x4x4x128xbf16> to vector<4x4x128xbf16>
    %1048 = vector.shape_cast %1047 : vector<4x4x128xbf16> to vector<16x128xbf16>
    %c3_321 = arith.constant 3 : index
    %c0_322 = arith.constant 0 : index
    %c0_323 = arith.constant 0 : index
    %1049 = vector.load %arg3[%c3_321, %c0_322, %c0_323] : memref<9x128x128xbf16, #tpu.memory_space<vmem>>, vector<1x128x128xbf16>
    %1050 = vector.shape_cast %1049 : vector<1x128x128xbf16> to vector<128x128xbf16>
    %cst_324 = arith.constant dense<0.000000e+00> : vector<16x128xf32>
    %1051 = tpu.matmul %1048, %1050, %cst_324 {dimension_numbers = #tpu.dot_dimension_numbers<[1], [0], [0], [1], [0, 0, 1, 1], [], []>} : vector<16x128xbf16>, vector<128x128xbf16>, vector<16x128xf32> -> vector<16x128xf32>
    %1052 = arith.addf %1045, %1051 : vector<16x128xf32>
    %c0_325 = arith.constant 0 : index
    %c1_326 = arith.constant 1 : index
    %c1_327 = arith.constant 1 : index
    %c0_328 = arith.constant 0 : index
    %1053 = vector.load %arg8[%c0_325, %c1_326, %c1_327, %c0_328] : memref<4x6x6x128xbf16, #tpu.memory_space<vmem>>, vector<1x4x4x128xbf16>
    %1054 = vector.shape_cast %1053 : vector<1x4x4x128xbf16> to vector<4x4x128xbf16>
    %1055 = vector.shape_cast %1054 : vector<4x4x128xbf16> to vector<16x128xbf16>
    %c4_329 = arith.constant 4 : index
    %c0_330 = arith.constant 0 : index
    %c0_331 = arith.constant 0 : index
    %1056 = vector.load %arg3[%c4_329, %c0_330, %c0_331] : memref<9x128x128xbf16, #tpu.memory_space<vmem>>, vector<1x128x128xbf16>
    %1057 = vector.shape_cast %1056 : vector<1x128x128xbf16> to vector<128x128xbf16>
    %cst_332 = arith.constant dense<0.000000e+00> : vector<16x128xf32>
    %1058 = tpu.matmul %1055, %1057, %cst_332 {dimension_numbers = #tpu.dot_dimension_numbers<[1], [0], [0], [1], [0, 0, 1, 1], [], []>} : vector<16x128xbf16>, vector<128x128xbf16>, vector<16x128xf32> -> vector<16x128xf32>
    %1059 = arith.addf %1052, %1058 : vector<16x128xf32>
    %c1_333 = arith.constant 1 : index
    %c1_334 = arith.constant 1 : index
    %c1_335 = arith.constant 1 : index
    %c0_336 = arith.constant 0 : index
    %1060 = vector.load %arg8[%c1_333, %c1_334, %c1_335, %c0_336] : memref<4x6x6x128xbf16, #tpu.memory_space<vmem>>, vector<1x4x4x128xbf16>
    %1061 = vector.shape_cast %1060 : vector<1x4x4x128xbf16> to vector<4x4x128xbf16>
    %1062 = vector.shape_cast %1061 : vector<4x4x128xbf16> to vector<16x128xbf16>
    %c5_337 = arith.constant 5 : index
    %c0_338 = arith.constant 0 : index
    %c0_339 = arith.constant 0 : index
    %1063 = vector.load %arg3[%c5_337, %c0_338, %c0_339] : memref<9x128x128xbf16, #tpu.memory_space<vmem>>, vector<1x128x128xbf16>
    %1064 = vector.shape_cast %1063 : vector<1x128x128xbf16> to vector<128x128xbf16>
    %cst_340 = arith.constant dense<0.000000e+00> : vector<16x128xf32>
    %1065 = tpu.matmul %1062, %1064, %cst_340 {dimension_numbers = #tpu.dot_dimension_numbers<[1], [0], [0], [1], [0, 0, 1, 1], [], []>} : vector<16x128xbf16>, vector<128x128xbf16>, vector<16x128xf32> -> vector<16x128xf32>
    %1066 = arith.addf %1059, %1065 : vector<16x128xf32>
    %c3_341 = arith.constant 3 : index
    %c1_342 = arith.constant 1 : index
    %c0_343 = arith.constant 0 : index
    %c0_344 = arith.constant 0 : index
    %1067 = vector.load %arg8[%c3_341, %c1_342, %c0_343, %c0_344] : memref<4x6x6x128xbf16, #tpu.memory_space<vmem>>, vector<1x4x4x128xbf16>
    %1068 = vector.shape_cast %1067 : vector<1x4x4x128xbf16> to vector<4x4x128xbf16>
    %1069 = vector.shape_cast %1068 : vector<4x4x128xbf16> to vector<16x128xbf16>
    %c6_345 = arith.constant 6 : index
    %c0_346 = arith.constant 0 : index
    %c0_347 = arith.constant 0 : index
    %1070 = vector.load %arg3[%c6_345, %c0_346, %c0_347] : memref<9x128x128xbf16, #tpu.memory_space<vmem>>, vector<1x128x128xbf16>
    %1071 = vector.shape_cast %1070 : vector<1x128x128xbf16> to vector<128x128xbf16>
    %cst_348 = arith.constant dense<0.000000e+00> : vector<16x128xf32>
    %1072 = tpu.matmul %1069, %1071, %cst_348 {dimension_numbers = #tpu.dot_dimension_numbers<[1], [0], [0], [1], [0, 0, 1, 1], [], []>} : vector<16x128xbf16>, vector<128x128xbf16>, vector<16x128xf32> -> vector<16x128xf32>
    %1073 = arith.addf %1066, %1072 : vector<16x128xf32>
    %c2_349 = arith.constant 2 : index
    %c1_350 = arith.constant 1 : index
    %c1_351 = arith.constant 1 : index
    %c0_352 = arith.constant 0 : index
    %1074 = vector.load %arg8[%c2_349, %c1_350, %c1_351, %c0_352] : memref<4x6x6x128xbf16, #tpu.memory_space<vmem>>, vector<1x4x4x128xbf16>
    %1075 = vector.shape_cast %1074 : vector<1x4x4x128xbf16> to vector<4x4x128xbf16>
    %1076 = vector.shape_cast %1075 : vector<4x4x128xbf16> to vector<16x128xbf16>
    %c7_353 = arith.constant 7 : index
    %c0_354 = arith.constant 0 : index
    %c0_355 = arith.constant 0 : index
    %1077 = vector.load %arg3[%c7_353, %c0_354, %c0_355] : memref<9x128x128xbf16, #tpu.memory_space<vmem>>, vector<1x128x128xbf16>
    %1078 = vector.shape_cast %1077 : vector<1x128x128xbf16> to vector<128x128xbf16>
    %cst_356 = arith.constant dense<0.000000e+00> : vector<16x128xf32>
    %1079 = tpu.matmul %1076, %1078, %cst_356 {dimension_numbers = #tpu.dot_dimension_numbers<[1], [0], [0], [1], [0, 0, 1, 1], [], []>} : vector<16x128xbf16>, vector<128x128xbf16>, vector<16x128xf32> -> vector<16x128xf32>
    %1080 = arith.addf %1073, %1079 : vector<16x128xf32>
    %c3_357 = arith.constant 3 : index
    %c1_358 = arith.constant 1 : index
    %c1_359 = arith.constant 1 : index
    %c0_360 = arith.constant 0 : index
    %1081 = vector.load %arg8[%c3_357, %c1_358, %c1_359, %c0_360] : memref<4x6x6x128xbf16, #tpu.memory_space<vmem>>, vector<1x4x4x128xbf16>
    %1082 = vector.shape_cast %1081 : vector<1x4x4x128xbf16> to vector<4x4x128xbf16>
    %1083 = vector.shape_cast %1082 : vector<4x4x128xbf16> to vector<16x128xbf16>
    %c8_361 = arith.constant 8 : index
    %c0_362 = arith.constant 0 : index
    %c0_363 = arith.constant 0 : index
    %1084 = vector.load %arg3[%c8_361, %c0_362, %c0_363] : memref<9x128x128xbf16, #tpu.memory_space<vmem>>, vector<1x128x128xbf16>
    %1085 = vector.shape_cast %1084 : vector<1x128x128xbf16> to vector<128x128xbf16>
    %cst_364 = arith.constant dense<0.000000e+00> : vector<16x128xf32>
    %1086 = tpu.matmul %1083, %1085, %cst_364 {dimension_numbers = #tpu.dot_dimension_numbers<[1], [0], [0], [1], [0, 0, 1, 1], [], []>} : vector<16x128xbf16>, vector<128x128xbf16>, vector<16x128xf32> -> vector<16x128xf32>
    %1087 = arith.addf %1080, %1086 : vector<16x128xf32>
    %c1_365 = arith.constant 1 : index
    %c0_366 = arith.constant 0 : index
    %1088 = vector.load %arg5[%c1_365, %c0_366] : memref<3x128xf32, #tpu.memory_space<vmem>>, vector<1x128xf32>
    %1089 = vector.broadcast %1088 : vector<1x128xf32> to vector<16x128xf32>
    %1090 = arith.mulf %1087, %1089 : vector<16x128xf32>
    %c1_367 = arith.constant 1 : index
    %c0_368 = arith.constant 0 : index
    %1091 = vector.load %arg6[%c1_367, %c0_368] : memref<3x128xf32, #tpu.memory_space<vmem>>, vector<1x128xf32>
    %1092 = vector.broadcast %1091 : vector<1x128xf32> to vector<16x128xf32>
    %1093 = arith.addf %1090, %1092 : vector<16x128xf32>
    %cst_369 = arith.constant 5.000000e-01 : f32
    %1094 = vector.broadcast %cst_369 : f32 to vector<16x128xf32>
    %1095 = arith.mulf %1094, %1093 : vector<16x128xf32>
    %cst_370 = arith.constant 0.707106769 : f32
    %1096 = vector.broadcast %cst_370 : f32 to vector<16x128xf32>
    %1097 = arith.mulf %1093, %1096 : vector<16x128xf32>
    %1098 = math.erf %1097 : vector<16x128xf32>
    %cst_371 = arith.constant 1.000000e+00 : f32
    %1099 = vector.broadcast %cst_371 : f32 to vector<16x128xf32>
    %1100 = arith.addf %1099, %1098 : vector<16x128xf32>
    %1101 = arith.mulf %1095, %1100 : vector<16x128xf32>
    %1102 = vector.shape_cast %1101 : vector<16x128xf32> to vector<4x4x128xf32>
    %1103 = arith.truncf %1102 : vector<4x4x128xf32> to vector<4x4x128xbf16>
    %c1_372 = arith.constant 1 : index
    %c1_373 = arith.constant 1 : index
    %c0_374 = arith.constant 0 : index
    %1104 = vector.load %arg9[%c1_372, %c1_373, %c0_374] : memref<6x6x128xbf16, #tpu.memory_space<vmem>>, vector<4x4x128xbf16>
    tpu.vector_store %arg9[%c1_372, %c1_373, %c0_374], %1103 {strides = array<i32>} : memref<6x6x128xbf16, #tpu.memory_space<vmem>>, vector<4x4x128xbf16>,
    %cst_375 = arith.constant 0.000000e+00 : f32
    %1105 = vector.broadcast %cst_375 : f32 to vector<16x128xf32>
    %c0_376 = arith.constant 0 : index
    %c0_377 = arith.constant 0 : index
    %c0_378 = arith.constant 0 : index
    %1106 = vector.load %arg9[%c0_376, %c0_377, %c0_378] : memref<6x6x128xbf16, #tpu.memory_space<vmem>>, vector<4x4x128xbf16>
    %1107 = vector.shape_cast %1106 : vector<4x4x128xbf16> to vector<16x128xbf16>
    %c0_379 = arith.constant 0 : index
    %c0_380 = arith.constant 0 : index
    %c0_381 = arith.constant 0 : index
    %1108 = vector.load %arg4[%c0_379, %c0_380, %c0_381] : memref<9x128x128xbf16, #tpu.memory_space<vmem>>, vector<1x128x128xbf16>
    %1109 = vector.shape_cast %1108 : vector<1x128x128xbf16> to vector<128x128xbf16>
    %cst_382 = arith.constant dense<0.000000e+00> : vector<16x128xf32>
    %1110 = tpu.matmul %1107, %1109, %cst_382 {dimension_numbers = #tpu.dot_dimension_numbers<[1], [0], [0], [1], [0, 0, 1, 1], [], []>} : vector<16x128xbf16>, vector<128x128xbf16>, vector<16x128xf32> -> vector<16x128xf32>
    %1111 = arith.addf %1105, %1110 : vector<16x128xf32>
    %c0_383 = arith.constant 0 : index
    %c1_384 = arith.constant 1 : index
    %c0_385 = arith.constant 0 : index
    %1112 = vector.load %arg9[%c0_383, %c1_384, %c0_385] : memref<6x6x128xbf16, #tpu.memory_space<vmem>>, vector<4x4x128xbf16>
    %1113 = vector.shape_cast %1112 : vector<4x4x128xbf16> to vector<16x128xbf16>
    %c1_386 = arith.constant 1 : index
    %c0_387 = arith.constant 0 : index
    %c0_388 = arith.constant 0 : index
    %1114 = vector.load %arg4[%c1_386, %c0_387, %c0_388] : memref<9x128x128xbf16, #tpu.memory_space<vmem>>, vector<1x128x128xbf16>
    %1115 = vector.shape_cast %1114 : vector<1x128x128xbf16> to vector<128x128xbf16>
    %cst_389 = arith.constant dense<0.000000e+00> : vector<16x128xf32>
    %1116 = tpu.matmul %1113, %1115, %cst_389 {dimension_numbers = #tpu.dot_dimension_numbers<[1], [0], [0], [1], [0, 0, 1, 1], [], []>} : vector<16x128xbf16>, vector<128x128xbf16>, vector<16x128xf32> -> vector<16x128xf32>
    %1117 = arith.addf %1111, %1116 : vector<16x128xf32>
    %c0_390 = arith.constant 0 : index
    %c2_391 = arith.constant 2 : index
    %c0_392 = arith.constant 0 : index
    %1118 = vector.load %arg9[%c0_390, %c2_391, %c0_392] : memref<6x6x128xbf16, #tpu.memory_space<vmem>>, vector<4x4x128xbf16>
    %1119 = vector.shape_cast %1118 : vector<4x4x128xbf16> to vector<16x128xbf16>
    %c2_393 = arith.constant 2 : index
    %c0_394 = arith.constant 0 : index
    %c0_395 = arith.constant 0 : index
    %1120 = vector.load %arg4[%c2_393, %c0_394, %c0_395] : memref<9x128x128xbf16, #tpu.memory_space<vmem>>, vector<1x128x128xbf16>
    %1121 = vector.shape_cast %1120 : vector<1x128x128xbf16> to vector<128x128xbf16>
    %cst_396 = arith.constant dense<0.000000e+00> : vector<16x128xf32>
    %1122 = tpu.matmul %1119, %1121, %cst_396 {dimension_numbers = #tpu.dot_dimension_numbers<[1], [0], [0], [1], [0, 0, 1, 1], [], []>} : vector<16x128xbf16>, vector<128x128xbf16>, vector<16x128xf32> -> vector<16x128xf32>
    %1123 = arith.addf %1117, %1122 : vector<16x128xf32>
    %c1_397 = arith.constant 1 : index
    %c0_398 = arith.constant 0 : index
    %c0_399 = arith.constant 0 : index
    %1124 = vector.load %arg9[%c1_397, %c0_398, %c0_399] : memref<6x6x128xbf16, #tpu.memory_space<vmem>>, vector<4x4x128xbf16>
    %1125 = vector.shape_cast %1124 : vector<4x4x128xbf16> to vector<16x128xbf16>
    %c3_400 = arith.constant 3 : index
    %c0_401 = arith.constant 0 : index
    %c0_402 = arith.constant 0 : index
    %1126 = vector.load %arg4[%c3_400, %c0_401, %c0_402] : memref<9x128x128xbf16, #tpu.memory_space<vmem>>, vector<1x128x128xbf16>
    %1127 = vector.shape_cast %1126 : vector<1x128x128xbf16> to vector<128x128xbf16>
    %cst_403 = arith.constant dense<0.000000e+00> : vector<16x128xf32>
    %1128 = tpu.matmul %1125, %1127, %cst_403 {dimension_numbers = #tpu.dot_dimension_numbers<[1], [0], [0], [1], [0, 0, 1, 1], [], []>} : vector<16x128xbf16>, vector<128x128xbf16>, vector<16x128xf32> -> vector<16x128xf32>
    %1129 = arith.addf %1123, %1128 : vector<16x128xf32>
    %c1_404 = arith.constant 1 : index
    %c1_405 = arith.constant 1 : index
    %c0_406 = arith.constant 0 : index
    %1130 = vector.load %arg9[%c1_404, %c1_405, %c0_406] : memref<6x6x128xbf16, #tpu.memory_space<vmem>>, vector<4x4x128xbf16>
    %1131 = vector.shape_cast %1130 : vector<4x4x128xbf16> to vector<16x128xbf16>
    %c4_407 = arith.constant 4 : index
    %c0_408 = arith.constant 0 : index
    %c0_409 = arith.constant 0 : index
    %1132 = vector.load %arg4[%c4_407, %c0_408, %c0_409] : memref<9x128x128xbf16, #tpu.memory_space<vmem>>, vector<1x128x128xbf16>
    %1133 = vector.shape_cast %1132 : vector<1x128x128xbf16> to vector<128x128xbf16>
    %cst_410 = arith.constant dense<0.000000e+00> : vector<16x128xf32>
    %1134 = tpu.matmul %1131, %1133, %cst_410 {dimension_numbers = #tpu.dot_dimension_numbers<[1], [0], [0], [1], [0, 0, 1, 1], [], []>} : vector<16x128xbf16>, vector<128x128xbf16>, vector<16x128xf32> -> vector<16x128xf32>
    %1135 = arith.addf %1129, %1134 : vector<16x128xf32>
    %c1_411 = arith.constant 1 : index
    %c2_412 = arith.constant 2 : index
    %c0_413 = arith.constant 0 : index
    %1136 = vector.load %arg9[%c1_411, %c2_412, %c0_413] : memref<6x6x128xbf16, #tpu.memory_space<vmem>>, vector<4x4x128xbf16>
    %1137 = vector.shape_cast %1136 : vector<4x4x128xbf16> to vector<16x128xbf16>
    %c5_414 = arith.constant 5 : index
    %c0_415 = arith.constant 0 : index
    %c0_416 = arith.constant 0 : index
    %1138 = vector.load %arg4[%c5_414, %c0_415, %c0_416] : memref<9x128x128xbf16, #tpu.memory_space<vmem>>, vector<1x128x128xbf16>
    %1139 = vector.shape_cast %1138 : vector<1x128x128xbf16> to vector<128x128xbf16>
    %cst_417 = arith.constant dense<0.000000e+00> : vector<16x128xf32>
    %1140 = tpu.matmul %1137, %1139, %cst_417 {dimension_numbers = #tpu.dot_dimension_numbers<[1], [0], [0], [1], [0, 0, 1, 1], [], []>} : vector<16x128xbf16>, vector<128x128xbf16>, vector<16x128xf32> -> vector<16x128xf32>
    %1141 = arith.addf %1135, %1140 : vector<16x128xf32>
    %c2_418 = arith.constant 2 : index
    %c0_419 = arith.constant 0 : index
    %c0_420 = arith.constant 0 : index
    %1142 = vector.load %arg9[%c2_418, %c0_419, %c0_420] : memref<6x6x128xbf16, #tpu.memory_space<vmem>>, vector<4x4x128xbf16>
    %1143 = vector.shape_cast %1142 : vector<4x4x128xbf16> to vector<16x128xbf16>
    %c6_421 = arith.constant 6 : index
    %c0_422 = arith.constant 0 : index
    %c0_423 = arith.constant 0 : index
    %1144 = vector.load %arg4[%c6_421, %c0_422, %c0_423] : memref<9x128x128xbf16, #tpu.memory_space<vmem>>, vector<1x128x128xbf16>
    %1145 = vector.shape_cast %1144 : vector<1x128x128xbf16> to vector<128x128xbf16>
    %cst_424 = arith.constant dense<0.000000e+00> : vector<16x128xf32>
    %1146 = tpu.matmul %1143, %1145, %cst_424 {dimension_numbers = #tpu.dot_dimension_numbers<[1], [0], [0], [1], [0, 0, 1, 1], [], []>} : vector<16x128xbf16>, vector<128x128xbf16>, vector<16x128xf32> -> vector<16x128xf32>
    %1147 = arith.addf %1141, %1146 : vector<16x128xf32>
    %c2_425 = arith.constant 2 : index
    %c1_426 = arith.constant 1 : index
    %c0_427 = arith.constant 0 : index
    %1148 = vector.load %arg9[%c2_425, %c1_426, %c0_427] : memref<6x6x128xbf16, #tpu.memory_space<vmem>>, vector<4x4x128xbf16>
    %1149 = vector.shape_cast %1148 : vector<4x4x128xbf16> to vector<16x128xbf16>
    %c7_428 = arith.constant 7 : index
    %c0_429 = arith.constant 0 : index
    %c0_430 = arith.constant 0 : index
    %1150 = vector.load %arg4[%c7_428, %c0_429, %c0_430] : memref<9x128x128xbf16, #tpu.memory_space<vmem>>, vector<1x128x128xbf16>
    %1151 = vector.shape_cast %1150 : vector<1x128x128xbf16> to vector<128x128xbf16>
    %cst_431 = arith.constant dense<0.000000e+00> : vector<16x128xf32>
    %1152 = tpu.matmul %1149, %1151, %cst_431 {dimension_numbers = #tpu.dot_dimension_numbers<[1], [0], [0], [1], [0, 0, 1, 1], [], []>} : vector<16x128xbf16>, vector<128x128xbf16>, vector<16x128xf32> -> vector<16x128xf32>
    %1153 = arith.addf %1147, %1152 : vector<16x128xf32>
    %c2_432 = arith.constant 2 : index
    %c2_433 = arith.constant 2 : index
    %c0_434 = arith.constant 0 : index
    %1154 = vector.load %arg9[%c2_432, %c2_433, %c0_434] : memref<6x6x128xbf16, #tpu.memory_space<vmem>>, vector<4x4x128xbf16>
    %1155 = vector.shape_cast %1154 : vector<4x4x128xbf16> to vector<16x128xbf16>
    %c8_435 = arith.constant 8 : index
    %c0_436 = arith.constant 0 : index
    %c0_437 = arith.constant 0 : index
    %1156 = vector.load %arg4[%c8_435, %c0_436, %c0_437] : memref<9x128x128xbf16, #tpu.memory_space<vmem>>, vector<1x128x128xbf16>
    %1157 = vector.shape_cast %1156 : vector<1x128x128xbf16> to vector<128x128xbf16>
    %cst_438 = arith.constant dense<0.000000e+00> : vector<16x128xf32>
    %1158 = tpu.matmul %1155, %1157, %cst_438 {dimension_numbers = #tpu.dot_dimension_numbers<[1], [0], [0], [1], [0, 0, 1, 1], [], []>} : vector<16x128xbf16>, vector<128x128xbf16>, vector<16x128xf32> -> vector<16x128xf32>
    %1159 = arith.addf %1153, %1158 : vector<16x128xf32>
    %c2_439 = arith.constant 2 : index
    %c0_440 = arith.constant 0 : index
    %1160 = vector.load %arg5[%c2_439, %c0_440] : memref<3x128xf32, #tpu.memory_space<vmem>>, vector<1x128xf32>
    %1161 = vector.broadcast %1160 : vector<1x128xf32> to vector<16x128xf32>
    %1162 = arith.mulf %1159, %1161 : vector<16x128xf32>
    %c2_441 = arith.constant 2 : index
    %c0_442 = arith.constant 0 : index
    %1163 = vector.load %arg6[%c2_441, %c0_442] : memref<3x128xf32, #tpu.memory_space<vmem>>, vector<1x128xf32>
    %1164 = vector.broadcast %1163 : vector<1x128xf32> to vector<16x128xf32>
    %1165 = arith.addf %1162, %1164 : vector<16x128xf32>
    %cst_443 = arith.constant 5.000000e-01 : f32
    %1166 = vector.broadcast %cst_443 : f32 to vector<16x128xf32>
    %1167 = arith.mulf %1166, %1165 : vector<16x128xf32>
    %cst_444 = arith.constant 0.707106769 : f32
    %1168 = vector.broadcast %cst_444 : f32 to vector<16x128xf32>
    %1169 = arith.mulf %1165, %1168 : vector<16x128xf32>
    %1170 = math.erf %1169 : vector<16x128xf32>
    %cst_445 = arith.constant 1.000000e+00 : f32
    %1171 = vector.broadcast %cst_445 : f32 to vector<16x128xf32>
    %1172 = arith.addf %1171, %1170 : vector<16x128xf32>
    %1173 = arith.mulf %1167, %1172 : vector<16x128xf32>
    %c0_446 = arith.constant 0 : index
    %c0_447 = arith.constant 0 : index
    %c0_448 = arith.constant 0 : index
    %1174 = vector.load %arg7[%c0_446, %c0_447, %c0_448] : memref<1x16x128xf32, #tpu.memory_space<vmem>>, vector<1x16x128xf32>
    %1175 = vector.shape_cast %1174 : vector<1x16x128xf32> to vector<16x128xf32>
    %1176 = vector.shape_cast %1173 : vector<16x128xf32> to vector<1x16x128xf32>
    tpu.vector_store %arg7[%c0_446, %c0_447, %c0_448], %1176 {strides = array<i32>} : memref<1x16x128xf32, #tpu.memory_space<vmem>>, vector<1x16x128xf32>,
    return
  }
  func.func @transform_0(%arg0: i32) -> (i32, i32, i32, i32) {
    %c0_i32 = arith.constant 0 : i32
    %c0_i32_0 = arith.constant 0 : i32
    %c0_i32_1 = arith.constant 0 : i32
    %c0_i32_2 = arith.constant 0 : i32
    return %arg0, %c0_i32, %c0_i32_0, %c0_i32_1 : i32, i32, i32, i32
  }
  func.func @transform_1(%arg0: i32) -> (i32, i32, i32) {
    %c0_i32 = arith.constant 0 : i32
    %c0_i32_0 = arith.constant 0 : i32
    %c0_i32_1 = arith.constant 0 : i32
    %c0_i32_2 = arith.constant 0 : i32
    return %c0_i32, %c0_i32_0, %c0_i32_1 : i32, i32, i32
  }
  func.func @transform_2(%arg0: i32) -> (i32, i32, i32) {
    %c0_i32 = arith.constant 0 : i32
    %c0_i32_0 = arith.constant 0 : i32
    %c0_i32_1 = arith.constant 0 : i32
    %c0_i32_2 = arith.constant 0 : i32
    return %c0_i32, %c0_i32_0, %c0_i32_1 : i32, i32, i32
  }
  func.func @transform_3(%arg0: i32) -> (i32, i32, i32) {
    %c0_i32 = arith.constant 0 : i32
    %c0_i32_0 = arith.constant 0 : i32
    %c0_i32_1 = arith.constant 0 : i32
    %c0_i32_2 = arith.constant 0 : i32
    return %c0_i32, %c0_i32_0, %c0_i32_1 : i32, i32, i32
  }
  func.func @transform_4(%arg0: i32) -> (i32, i32) {
    %c0_i32 = arith.constant 0 : i32
    %c0_i32_0 = arith.constant 0 : i32
    %c0_i32_1 = arith.constant 0 : i32
    return %c0_i32, %c0_i32_0 : i32, i32
  }
  func.func @transform_5(%arg0: i32) -> (i32, i32) {
    %c0_i32 = arith.constant 0 : i32
    %c0_i32_0 = arith.constant 0 : i32
    %c0_i32_1 = arith.constant 0 : i32
    return %c0_i32, %c0_i32_0 : i32, i32
  }
  func.func @transform_6(%arg0: i32) -> (i32, i32, i32) {
    %c0_i32 = arith.constant 0 : i32
    %c0_i32_0 = arith.constant 0 : i32
    %c0_i32_1 = arith.constant 0 : i32
    return %arg0, %c0_i32, %c0_i32_0 : i32, i32, i32
  }
}

</mosaic_0001>

<llo_original>
// kernel: conv_stem_forward.1
$region0: #{conv_stem_forward.1}
  #allocation0 [shape = 'u32[]', space=smem, size = 0x4, offset = 0x4, fixed_abs, tag = 'smem constant byte address 0x4 - core index']
  #allocation1 [shape = 'u32[144,128]{1,0:T(1,128)}', space=vmem, size = 0x12000, scoped, tag = 'internal scratch']
  #allocation2 [shape = 'bf16[4,6,6,128]{3,2,1,0:T(8,128)(2,1)}', space=vmem, size = 0xc000, scoped, tag = 'scratch operand']
  #allocation3 [shape = 'bf16[6,6,128]{2,1,0:T(8,128)(2,1)}', space=vmem, size = 0x3000, scoped, tag = 'scratch operand']
  %s0 = inlined_call_operand.vmem [shape: bf16[32,5,5,3], index: 0, kind: input, shape index: {}]
  %s1 = inlined_call_operand.vmem [shape: f32[9,3,128], index: 1, kind: input, shape index: {}]
  %s2 = inlined_call_operand.vmem [shape: bf16[9,128,128], index: 2, kind: input, shape index: {}]
  %s3 = inlined_call_operand.vmem [shape: bf16[9,128,128], index: 3, kind: input, shape index: {}]
  %s4 = inlined_call_operand.vmem [shape: f32[3,128], index: 4, kind: input, shape index: {}]
  %s5 = inlined_call_operand.vmem [shape: f32[3,128], index: 5, kind: input, shape index: {}]
  %s6 = inlined_call_operand.vmem [shape: f32[2,16,128], index: 6, kind: output, shape index: {}]
  %s7 = sld [smem:[#allocation0]]
  $region57: #{conv_stem_forward.1} parent=0
    _
  %s9 = ssub.s32 1, %s7
  %s10 = scalar_select 0, %s9, %s7
  loop: start=0, step=1, limit=4
  $region2: #{conv_stem_forward.1} parent=0 // loop_pre_header
    _
  $region3: #{conv_stem_forward.1} parent=0 // loop_header
    %s12 = sphi 0, %s16
    %p13 = scmp.ge.s32.totalorder %s12, 4
    %s22 = sphi 0, %s24
    %s25 = sphi 0, %s22
    %s26 = sphi 0, %s25
    %s42 = sphi 0, %s26
    %s46 = sphi 0, %s46
    %s48 = sphi 0, %s46
    %s49 = sphi 0, %s48
    %s63 = sphi 0, %s49
    %s67 = sphi 0, %s67
    %s69 = sphi 0, %s67
    %s70 = sphi 0, %s69
    %s84 = sphi 0, %s70
    %s88 = sphi 0, %s88
    %s90 = sphi 0, %s88
    %s91 = sphi 0, %s90
    %s105 = sphi 0, %s91
    %s109 = sphi 0, %s109
    %s111 = sphi 0, %s109
    %s112 = sphi 0, %s111
    %s126 = sphi 0, %s112
    %s130 = sphi 0, %s130
    %s132 = sphi 0, %s130
    %s133 = sphi 0, %s132
    %s147 = sphi 0, %s133
    %s153 = sphi 0, %s155
    %s156 = sphi 0, %s153
    %s157 = sphi 0, %s156
    %s173 = sphi 0, %s157
  $region4: #{conv_stem_forward.1} parent=0 // loop_header_branch
    %15 = sbr.rel (%p13) target = $region8
  $region5: #{conv_stem_forward.1} parent=0 // loop_body
    %s17 = ssub.s32 %s12, 1
    %s18 = ssub.s32 %s12, 2
    %s19 = sadd.s32 %s12, 1
    %s20 = ssub.s32 %s12, %s19
    %p21 = scmp.eq.s32.totalorder %s20, 0
    %s23 = sadd.s32 %s22, 1
    %s24 = scalar_select %p21, %s22, %s23
    %p27 = pneg %p21
    %p28 = scmp.eq.s32.totalorder %s12, 1
    %p29 = por %p27, %p28
    %p30 = scmp.ne.s32.totalorder %s22, %s25
    %p31 = scmp.eq.s32.totalorder %s12, 0
    %p32 = por %p30, %p31
    %p33 = scmp.ne.s32.totalorder %s22, %s25
    %p34 = scmp.eq.s32.totalorder %s17, 1
    %p35 = por %p33, %p34
    %p36 = scmp.ne.s32.totalorder %s25, %s26
    %p37 = scmp.eq.s32.totalorder %s17, 0
    %p38 = por %p36, %p37
    %p39 = scmp.ne.s32.totalorder %s25, %s26
    %p40 = scmp.eq.s32.totalorder %s18, 1
    %p41 = por %p39, %p40
    %p43 = scmp.ne.s32.totalorder %s26, %s42
    %p44 = scmp.eq.s32.totalorder %s18, 0
    %p45 = por %p43, %p44
    %s47 = sadd.s32 %s46, 1
    %p50 = scmp.eq.s32.totalorder %s12, 1
    %p51 = scmp.ne.s32.totalorder %s46, %s48
    %p52 = scmp.eq.s32.totalorder %s12, 0
    %p53 = por %p51, %p52
    %p54 = scmp.ne.s32.totalorder %s46, %s48
    %p55 = scmp.eq.s32.totalorder %s17, 1
    %p56 = por %p54, %p55
    %p57 = scmp.ne.s32.totalorder %s48, %s49
    %p58 = scmp.eq.s32.totalorder %s17, 0
    %p59 = por %p57, %p58
    %p60 = scmp.ne.s32.totalorder %s48, %s49
    %p61 = scmp.eq.s32.totalorder %s18, 1
    %p62 = por %p60, %p61
    %p64 = scmp.ne.s32.totalorder %s49, %s63
    %p65 = scmp.eq.s32.totalorder %s18, 0
    %p66 = por %p64, %p65
    %s68 = sadd.s32 %s67, 1
    %p71 = scmp.eq.s32.totalorder %s12, 1
    %p72 = scmp.ne.s32.totalorder %s67, %s69
    %p73 = scmp.eq.s32.totalorder %s12, 0
    %p74 = por %p72, %p73
    %p75 = scmp.ne.s32.totalorder %s67, %s69
    %p76 = scmp.eq.s32.totalorder %s17, 1
    %p77 = por %p75, %p76
    %p78 = scmp.ne.s32.totalorder %s69, %s70
    %p79 = scmp.eq.s32.totalorder %s17, 0
    %p80 = por %p78, %p79
    %p81 = scmp.ne.s32.totalorder %s69, %s70
    %p82 = scmp.eq.s32.totalorder %s18, 1
    %p83 = por %p81, %p82
    %p85 = scmp.ne.s32.totalorder %s70, %s84
    %p86 = scmp.eq.s32.totalorder %s18, 0
    %p87 = por %p85, %p86
    %s89 = sadd.s32 %s88, 1
    %p92 = scmp.eq.s32.totalorder %s12, 1
    %p93 = scmp.ne.s32.totalorder %s88, %s90
    %p94 = scmp.eq.s32.totalorder %s12, 0
    %p95 = por %p93, %p94
    %p96 = scmp.ne.s32.totalorder %s88, %s90
    %p97 = scmp.eq.s32.totalorder %s17, 1
    %p98 = por %p96, %p97
    %p99 = scmp.ne.s32.totalorder %s90, %s91
    %p100 = scmp.eq.s32.totalorder %s17, 0
    %p101 = por %p99, %p100
    %p102 = scmp.ne.s32.totalorder %s90, %s91
    %p103 = scmp.eq.s32.totalorder %s18, 1
    %p104 = por %p102, %p103
    %p106 = scmp.ne.s32.totalorder %s91, %s105
    %p107 = scmp.eq.s32.totalorder %s18, 0
    %p108 = por %p106, %p107
    %s110 = sadd.s32 %s109, 1
    %p113 = scmp.eq.s32.totalorder %s12, 1
    %p114 = scmp.ne.s32.totalorder %s109, %s111
    %p115 = scmp.eq.s32.totalorder %s12, 0
    %p116 = por %p114, %p115
    %p117 = scmp.ne.s32.totalorder %s109, %s111
    %p118 = scmp.eq.s32.totalorder %s17, 1
    %p119 = por %p117, %p118
    %p120 = scmp.ne.s32.totalorder %s111, %s112
    %p121 = scmp.eq.s32.totalorder %s17, 0
    %p122 = por %p120, %p121
    %p123 = scmp.ne.s32.totalorder %s111, %s112
    %p124 = scmp.eq.s32.totalorder %s18, 1
    %p125 = por %p123, %p124
    %p127 = scmp.ne.s32.totalorder %s112, %s126
    %p128 = scmp.eq.s32.totalorder %s18, 0
    %p129 = por %p127, %p128
    %s131 = sadd.s32 %s130, 1
    %p134 = scmp.eq.s32.totalorder %s12, 1
    %p135 = scmp.ne.s32.totalorder %s130, %s132
    %p136 = scmp.eq.s32.totalorder %s12, 0
    %p137 = por %p135, %p136
    %p138 = scmp.ne.s32.totalorder %s130, %s132
    %p139 = scmp.eq.s32.totalorder %s17, 1
    %p140 = por %p138, %p139
    %p141 = scmp.ne.s32.totalorder %s132, %s133
    %p142 = scmp.eq.s32.totalorder %s17, 0
    %p143 = por %p141, %p142
    %p144 = scmp.ne.s32.totalorder %s132, %s133
    %p145 = scmp.eq.s32.totalorder %s18, 1
    %p146 = por %p144, %p145
    %p148 = scmp.ne.s32.totalorder %s133, %s147
    %p149 = scmp.eq.s32.totalorder %s18, 0
    %p150 = por %p148, %p149
    %s151 = ssub.s32 %s12, %s19
    %p152 = scmp.eq.s32.totalorder %s151, 0
    %s154 = sadd.s32 %s153, 1
    %s155 = scalar_select %p152, %s153, %s154
    %p158 = pneg %p152
    %p159 = scmp.eq.s32.totalorder %s12, 1
    %p160 = por %p158, %p159
    %p161 = scmp.ne.s32.totalorder %s153, %s156
    %p162 = scmp.eq.s32.totalorder %s12, 0
    %p163 = por %p161, %p162
    %p164 = scmp.ne.s32.totalorder %s153, %s156
    %p165 = scmp.eq.s32.totalorder %s17, 1
    %p166 = por %p164, %p165
    %p167 = scmp.ne.s32.totalorder %s156, %s157
    %p168 = scmp.eq.s32.totalorder %s17, 0
    %p169 = por %p167, %p168
    %p170 = scmp.ne.s32.totalorder %s156, %s157
    %p171 = scmp.eq.s32.totalorder %s18, 1
    %p172 = por %p170, %p171
    %p174 = scmp.ne.s32.totalorder %s157, %s173
    %p175 = scmp.eq.s32.totalorder %s18, 0
    %p176 = por %p174, %p175
    %p177 = scmp.le.s32.totalorder 1, %s12
    %p178 = scmp.lt.s32.totalorder %s12, 3
    %p179 = pnand %p177, %p178
    %p180 = pneg %p179
    // Predicated region
    $region9: #{conv_stem_forward.1} parent=5 // pred_check
      _
    $region10: #{conv_stem_forward.1} parent=5 // pred_check_branch
      %182 = sbr.rel (%p179) target = $region12
    $region11: #{conv_stem_forward.1} parent=5 // pred_region
      %s183 = ssub.s32 %s12, 1
      // Predicated region
      $region13: #{conv_stem_forward.1} parent=11 // pred_check
        %p184 = pneg %p59
      $region14: #{conv_stem_forward.1} parent=11 // pred_check_branch
        %186 = sbr.rel (%p184) target = $region16
      $region15: #{conv_stem_forward.1} parent=11 // pred_region
        _
      $region16: #{conv_stem_forward.1} parent=11 // pred_fallthru
        _
      // Predicated region
      $region17: #{conv_stem_forward.1} parent=11 // pred_check
        %p187 = pneg %p80
      $region18: #{conv_stem_forward.1} parent=11 // pred_check_branch
        %189 = sbr.rel (%p187) target = $region20
      $region19: #{conv_stem_forward.1} parent=11 // pred_region
        _
      $region20: #{conv_stem_forward.1} parent=11 // pred_fallthru
        _
      // Predicated region
      $region21: #{conv_stem_forward.1} parent=11 // pred_check
        %p190 = pneg %p101
      $region22: #{conv_stem_forward.1} parent=11 // pred_check_branch
        %192 = sbr.rel (%p190) target = $region24
      $region23: #{conv_stem_forward.1} parent=11 // pred_region
        _
      $region24: #{conv_stem_forward.1} parent=11 // pred_fallthru
        _
      // Predicated region
      $region25: #{conv_stem_forward.1} parent=11 // pred_check
        %p193 = pneg %p122
      $region26: #{conv_stem_forward.1} parent=11 // pred_check_branch
        %195 = sbr.rel (%p193) target = $region28
      $region27: #{conv_stem_forward.1} parent=11 // pred_region
        _
      $region28: #{conv_stem_forward.1} parent=11 // pred_fallthru
        _
      // Predicated region
      $region29: #{conv_stem_forward.1} parent=11 // pred_check
        %p196 = pneg %p143
      $region30: #{conv_stem_forward.1} parent=11 // pred_check_branch
        %198 = sbr.rel (%p196) target = $region32
      $region31: #{conv_stem_forward.1} parent=11 // pred_region
        _
      $region32: #{conv_stem_forward.1} parent=11 // pred_fallthru
        _
    $region12: #{conv_stem_forward.1} parent=5 // pred_fallthru
      _
    %p199 = scmp.lt.s32.totalorder %s12, 2
    // Predicated region
    $region33: #{conv_stem_forward.1} parent=5 // pred_check
      %p200 = pneg %p199
    $region34: #{conv_stem_forward.1} parent=5 // pred_check_branch
      %202 = sbr.rel (%p200) target = $region36
    $region35: #{conv_stem_forward.1} parent=5 // pred_region
      // Predicated region
      $region37: #{conv_stem_forward.1} parent=35 // pred_check
        %p203 = pneg %p32
      $region38: #{conv_stem_forward.1} parent=35 // pred_check_branch
        %205 = sbr.rel (%p203) target = $region40
      $region39: #{conv_stem_forward.1} parent=35 // pred_region
        %s206 = smul.u32 16, %s12
        %p207 = scmp.lt.s32.totalorder %s206, 31
        %s208 = scalar_select %p207, %s206, 31
        %s209 = smul.addr %s208, 5
        %s210 = smul.addr %s209, 4
        %s211 = scalar_lea.vmem %s0, %s210
        %s212 = smul.u32 16, %s12
      $region40: #{conv_stem_forward.1} parent=35 // pred_fallthru
        _
    $region36: #{conv_stem_forward.1} parent=5 // pred_fallthru
      _
    %p213 = scmp.le.s32.totalorder 1, %s12
    %p214 = scmp.lt.s32.totalorder %s12, 3
    %p215 = pnand %p213, %p214
    %p216 = pneg %p215
    // Predicated region
    $region41: #{conv_stem_forward.1} parent=5 // pred_check
      _
    $region42: #{conv_stem_forward.1} parent=5 // pred_check_branch
      %218 = sbr.rel (%p215) target = $region44
    $region43: #{conv_stem_forward.1} parent=5 // pred_region
      %s219 = ssub.s32 %s12, 1
      %s220 = smul.u32 16, %s17
      %p221 = scmp.lt.s32.totalorder %s220, 31
      %s222 = scalar_select %p221, %s220, 31
      %s223 = smul.addr %s222, 5
      %s224 = smul.addr %s223, 4
      %s225 = scalar_lea.vmem %s0, %s224
      %p226 = pneg %p38
      %p227 = pneg %p35
      %p228 = pneg %p59
      %p229 = pneg %p56
      %p230 = pneg %p80
      %p231 = pneg %p77
      %p232 = pneg %p101
      %p233 = pneg %p98
      %p234 = pneg %p122
      %p235 = pneg %p119
      %p236 = pneg %p143
      %p237 = pneg %p140
      %p238 = pneg %p169
      %p239 = pneg %p166
      %p240 = scmp.lt.s32.totalorder %s17, 1
      %s241 = scalar_select %p240, %s17, 1
      %s242 = smul.addr %s241, 2
      %s243 = smul.addr %s242, 8
      %s244 = scalar_lea.vmem %s6, %s243
      %s245 = smul.u32 16, %s17
      %p246 = scmp.lt.s32.totalorder %s245, 31
      %s247 = scalar_select %p246, %s245, 31
      %s248 = smul.addr %s247, 5
      %s249 = smul.addr %s248, 4
      %s250 = scalar_lea.vmem %s0, %s249
      %s251 = smul.u32 16, %s17
      %p252 = scmp.lt.s32.totalorder %s17, 1
      %s253 = scalar_select %p252, %s17, 1
      %s254 = smul.addr %s253, 2
      %s255 = smul.addr %s254, 8
      %s256 = scalar_lea.vmem %s6, %s255
      %258 = vst [vmem:[#allocation2] sm:$0x7] 0
      %259 = vst [vmem:[#allocation2 + $0x4] sm:$0x7] 0
      %260 = vst [vmem:[#allocation2 + $0x8] sm:$0x7] 0
      %261 = vst [vmem:[#allocation2 + $0xc] sm:$0x7] 0
      %262 = vst [vmem:[#allocation2 + $0x10] sm:$0x7] 0
      %263 = vst [vmem:[#allocation2 + $0x14] sm:$0x7] 0
      %264 = vst [vmem:[#allocation2 + $0x18] sm:$0x7] 0
      %265 = vst [vmem:[#allocation2 + $0x1c] sm:$0x7] 0
      %266 = vst [vmem:[#allocation2 + $0x20] sm:$0x7] 0
      %267 = vst [vmem:[#allocation2 + $0x24] sm:$0x7] 0
      %268 = vst [vmem:[#allocation2 + $0x28] sm:$0x7] 0
      %269 = vst [vmem:[#allocation2 + $0x2c] sm:$0x7] 0
      %270 = vst [vmem:[#allocation2 + $0x30] sm:$0x7] 0
      %271 = vst [vmem:[#allocation2 + $0x34] sm:$0x7] 0
      %272 = vst [vmem:[#allocation2 + $0x38] sm:$0x7] 0
      %273 = vst [vmem:[#allocation2 + $0x3c] sm:$0x7] 0
      %274 = vst [vmem:[#allocation2 + $0x40] sm:$0x7] 0
      %275 = vst [vmem:[#allocation2 + $0x44] sm:$0x7] 0
      %276 = vst [vmem:[#allocation2 + $0x48] sm:$0x7] 0
      %277 = vst [vmem:[#allocation2 + $0x4c] sm:$0x7] 0
      %278 = vst [vmem:[#allocation2 + $0x50] sm:$0x7] 0
      %279 = vst [vmem:[#allocation2 + $0x54] sm:$0x7] 0
      %280 = vst [vmem:[#allocation2 + $0x58] sm:$0x7] 0
      %281 = vst [vmem:[#allocation2 + $0x5c] sm:$0x7] 0
      %282 = vst [vmem:[#allocation3] sm:$0x7] 0
      %283 = vst [vmem:[#allocation3 + $0x4] sm:$0x7] 0
      %284 = vst [vmem:[#allocation3 + $0x8] sm:$0x7] 0
      %285 = vst [vmem:[#allocation3 + $0xc] sm:$0x7] 0
      %286 = vst [vmem:[#allocation3 + $0x10] sm:$0x7] 0
      %287 = vst [vmem:[#allocation3 + $0x14] sm:$0x7] 0
      %v288 = vld [vmem:[%s250] sm:$0x3]
      %v289 = vld [vmem:[%s250 + $0x4] sm:$0x3]
      %v290 = vld [vmem:[%s250 + $0x8] sm:$0x3]
      %v291 = vld [vmem:[%s250 + $0xc] sm:$0x3]
      %v292 = vunpack.c.l.bf16 %v288
      %v293 = vunpack.c.l.bf16 %v289
      %v294 = vunpack.c.l.bf16 %v290
      %v295 = vunpack.c.l.bf16 %v291
      %v296 = vld [vmem:[%s1] sm:$0x7]
      %298 = vset.pattern.permute.xlu0 0
      %299 = vperm.xlu0 %298, %v292
      %v300 = vpop.permute.xlu0 %299
      %303 = vset.pattern.permute.xlu0 0
      %304 = vperm.xlu0 %303, %v293
      %v305 = vpop.permute.xlu0 %304
      %308 = vset.pattern.permute.xlu0 0
      %309 = vperm.xlu0 %308, %v294
      %v310 = vpop.permute.xlu0 %309
      %313 = vset.pattern.permute.xlu0 0
      %314 = vperm.xlu0 %313, %v295
      %v315 = vpop.permute.xlu0 %314
      %v317 = vlaneseq
      %v318 = vshrl.u32 %v317, 7
      %v319 = vsub.s32 0, %v318
      %v320 = vrot.slane %v296, %v319
      %v321 = vmul.f32 %v300, %v320
      %v322 = vmul.f32 %v305, %v320
      %v323 = vmul.f32 %v310, %v320
      %v324 = vmul.f32 %v315, %v320
      %v325 = vadd.f32 %v321, 0.0
      %v326 = vadd.f32 %v322, 0.0
      %v327 = vadd.f32 %v323, 0.0
      %v328 = vadd.f32 %v324, 0.0
      %329 = vset.pattern.permute.xlu0 1
      %330 = vperm.xlu0 %329, %v292
      %v331 = vpop.permute.xlu0 %330
      %333 = vset.pattern.permute.xlu0 1
      %334 = vperm.xlu0 %333, %v293
      %v335 = vpop.permute.xlu0 %334
      %337 = vset.pattern.permute.xlu0 1
      %338 = vperm.xlu0 %337, %v294
      %v339 = vpop.permute.xlu0 %338
      %341 = vset.pattern.permute.xlu0 1
      %342 = vperm.xlu0 %341, %v295
      %v343 = vpop.permute.xlu0 %342
      %v345 = vlaneseq
      %v346 = vshrl.u32 %v345, 7
      %v347 = vsub.s32 1, %v346
      %v348 = vrot.slane %v296, %v347
      %v349 = vmul.f32 %v331, %v348
      %v350 = vmul.f32 %v335, %v348
      %v351 = vmul.f32 %v339, %v348
      %v352 = vmul.f32 %v343, %v348
      %v353 = vadd.f32 %v325, %v349
      %v354 = vadd.f32 %v326, %v350
      %v355 = vadd.f32 %v327, %v351
      %v356 = vadd.f32 %v328, %v352
      %357 = vset.pattern.permute.xlu0 2
      %358 = vperm.xlu0 %357, %v292
      %v359 = vpop.permute.xlu0 %358
      %361 = vset.pattern.permute.xlu0 2
      %362 = vperm.xlu0 %361, %v293
      %v363 = vpop.permute.xlu0 %362
      %365 = vset.pattern.permute.xlu0 2
      %366 = vperm.xlu0 %365, %v294
      %v367 = vpop.permute.xlu0 %366
      %369 = vset.pattern.permute.xlu0 2
      %370 = vperm.xlu0 %369, %v295
      %v371 = vpop.permute.xlu0 %370
      %v373 = vlaneseq
      %v374 = vshrl.u32 %v373, 7
      %v375 = vsub.s32 2, %v374
      %v376 = vrot.slane %v296, %v375
      %v377 = vmul.f32 %v359, %v376
      %v378 = vmul.f32 %v363, %v376
      %v379 = vmul.f32 %v367, %v376
      %v380 = vmul.f32 %v371, %v376
      %v381 = vadd.f32 %v353, %v377
      %v382 = vadd.f32 %v354, %v378
      %v383 = vadd.f32 %v355, %v379
      %v384 = vadd.f32 %v356, %v380
      %s385 = scalar_lea.vmem %s250, 20
      %v386 = vld [vmem:[%s385] sm:$0x3]
      %v387 = vld [vmem:[%s385 + $0x4] sm:$0x3]
      %v388 = vld [vmem:[%s385 + $0x8] sm:$0x3]
      %v389 = vld [vmem:[%s385 + $0xc] sm:$0x3]
      %v390 = vunpack.c.l.bf16 %v386
      %v391 = vunpack.c.l.bf16 %v387
      %v392 = vunpack.c.l.bf16 %v388
      %v393 = vunpack.c.l.bf16 %v389
      %s394 = scalar_lea.vmem %s1, 4
      %v395 = vld [vmem:[%s394] sm:$0x7]
      %397 = vset.pattern.permute.xlu0 0
      %398 = vperm.xlu0 %397, %v390
      %v399 = vpop.permute.xlu0 %398
      %402 = vset.pattern.permute.xlu0 0
      %403 = vperm.xlu0 %402, %v391
      %v404 = vpop.permute.xlu0 %403
      %407 = vset.pattern.permute.xlu0 0
      %408 = vperm.xlu0 %407, %v392
      %v409 = vpop.permute.xlu0 %408
      %412 = vset.pattern.permute.xlu0 0
      %413 = vperm.xlu0 %412, %v393
      %v414 = vpop.permute.xlu0 %413
      %v416 = vlaneseq
      %v417 = vshrl.u32 %v416, 7
      %v418 = vsub.s32 0, %v417
      %v419 = vrot.slane %v395, %v418
      %v420 = vmul.f32 %v399, %v419
      %v421 = vmul.f32 %v404, %v419
      %v422 = vmul.f32 %v409, %v419
      %v423 = vmul.f32 %v414, %v419
      %v424 = vadd.f32 %v381, %v420
      %v425 = vadd.f32 %v382, %v421
      %v426 = vadd.f32 %v383, %v422
      %v427 = vadd.f32 %v384, %v423
      %428 = vset.pattern.permute.xlu0 1
      %429 = vperm.xlu0 %428, %v390
      %v430 = vpop.permute.xlu0 %429
      %432 = vset.pattern.permute.xlu0 1
      %433 = vperm.xlu0 %432, %v391
      %v434 = vpop.permute.xlu0 %433
      %436 = vset.pattern.permute.xlu0 1
      %437 = vperm.xlu0 %436, %v392
      %v438 = vpop.permute.xlu0 %437
      %440 = vset.pattern.permute.xlu0 1
      %441 = vperm.xlu0 %440, %v393
      %v442 = vpop.permute.xlu0 %441
      %v444 = vlaneseq
      %v445 = vshrl.u32 %v444, 7
      %v446 = vsub.s32 1, %v445
      %v447 = vrot.slane %v395, %v446
      %v448 = vmul.f32 %v430, %v447
      %v449 = vmul.f32 %v434, %v447
      %v450 = vmul.f32 %v438, %v447
      %v451 = vmul.f32 %v442, %v447
      %v452 = vadd.f32 %v424, %v448
      %v453 = vadd.f32 %v425, %v449
      %v454 = vadd.f32 %v426, %v450
      %v455 = vadd.f32 %v427, %v451
      %456 = vset.pattern.permute.xlu0 2
      %457 = vperm.xlu0 %456, %v390
      %v458 = vpop.permute.xlu0 %457
      %460 = vset.pattern.permute.xlu0 2
      %461 = vperm.xlu0 %460, %v391
      %v462 = vpop.permute.xlu0 %461
      %464 = vset.pattern.permute.xlu0 2
      %465 = vperm.xlu0 %464, %v392
      %v466 = vpop.permute.xlu0 %465
      %468 = vset.pattern.permute.xlu0 2
      %469 = vperm.xlu0 %468, %v393
      %v470 = vpop.permute.xlu0 %469
      %v472 = vlaneseq
      %v473 = vshrl.u32 %v472, 7
      %v474 = vsub.s32 2, %v473
      %v475 = vrot.slane %v395, %v474
      %v476 = vmul.f32 %v458, %v475
      %v477 = vmul.f32 %v462, %v475
      %v478 = vmul.f32 %v466, %v475
      %v479 = vmul.f32 %v470, %v475
      %v480 = vadd.f32 %v452, %v476
      %v481 = vadd.f32 %v453, %v477
      %v482 = vadd.f32 %v454, %v478
      %v483 = vadd.f32 %v455, %v479
      %s484 = scalar_lea.vmem %s250, 40
      %v485 = vld [vmem:[%s484] sm:$0x3]
      %v486 = vld [vmem:[%s484 + $0x4] sm:$0x3]
      %v487 = vld [vmem:[%s484 + $0x8] sm:$0x3]
      %v488 = vld [vmem:[%s484 + $0xc] sm:$0x3]
      %v489 = vunpack.c.l.bf16 %v485
      %v490 = vunpack.c.l.bf16 %v486
      %v491 = vunpack.c.l.bf16 %v487
      %v492 = vunpack.c.l.bf16 %v488
      %s493 = scalar_lea.vmem %s1, 8
      %v494 = vld [vmem:[%s493] sm:$0x7]
      %496 = vset.pattern.permute.xlu0 0
      %497 = vperm.xlu0 %496, %v489
      %v498 = vpop.permute.xlu0 %497
      %501 = vset.pattern.permute.xlu0 0
      %502 = vperm.xlu0 %501, %v490
      %v503 = vpop.permute.xlu0 %502
      %506 = vset.pattern.permute.xlu0 0
      %507 = vperm.xlu0 %506, %v491
      %v508 = vpop.permute.xlu0 %507
      %511 = vset.pattern.permute.xlu0 0
      %512 = vperm.xlu0 %511, %v492
      %v513 = vpop.permute.xlu0 %512
      %v515 = vlaneseq
      %v516 = vshrl.u32 %v515, 7
      %v517 = vsub.s32 0, %v516
      %v518 = vrot.slane %v494, %v517
      %v519 = vmul.f32 %v498, %v518
      %v520 = vmul.f32 %v503, %v518
      %v521 = vmul.f32 %v508, %v518
      %v522 = vmul.f32 %v513, %v518
      %v523 = vadd.f32 %v480, %v519
      %v524 = vadd.f32 %v481, %v520
      %v525 = vadd.f32 %v482, %v521
      %v526 = vadd.f32 %v483, %v522
      %527 = vset.pattern.permute.xlu0 1
      %528 = vperm.xlu0 %527, %v489
      %v529 = vpop.permute.xlu0 %528
      %531 = vset.pattern.permute.xlu0 1
      %532 = vperm.xlu0 %531, %v490
      %v533 = vpop.permute.xlu0 %532
      %535 = vset.pattern.permute.xlu0 1
      %536 = vperm.xlu0 %535, %v491
      %v537 = vpop.permute.xlu0 %536
      %539 = vset.pattern.permute.xlu0 1
      %540 = vperm.xlu0 %539, %v492
      %v541 = vpop.permute.xlu0 %540
      %v543 = vlaneseq
      %v544 = vshrl.u32 %v543, 7
      %v545 = vsub.s32 1, %v544
      %v546 = vrot.slane %v494, %v545
      %v547 = vmul.f32 %v529, %v546
      %v548 = vmul.f32 %v533, %v546
      %v549 = vmul.f32 %v537, %v546
      %v550 = vmul.f32 %v541, %v546
      %v551 = vadd.f32 %v523, %v547
      %v552 = vadd.f32 %v524, %v548
      %v553 = vadd.f32 %v525, %v549
      %v554 = vadd.f32 %v526, %v550
      %555 = vset.pattern.permute.xlu0 2
      %556 = vperm.xlu0 %555, %v489
      %v557 = vpop.permute.xlu0 %556
      %559 = vset.pattern.permute.xlu0 2
      %560 = vperm.xlu0 %559, %v490
      %v561 = vpop.permute.xlu0 %560
      %563 = vset.pattern.permute.xlu0 2
      %564 = vperm.xlu0 %563, %v491
      %v565 = vpop.permute.xlu0 %564
      %567 = vset.pattern.permute.xlu0 2
      %568 = vperm.xlu0 %567, %v492
      %v569 = vpop.permute.xlu0 %568
      %v571 = vlaneseq
      %v572 = vshrl.u32 %v571, 7
      %v573 = vsub.s32 2, %v572
      %v574 = vrot.slane %v494, %v573
      %v575 = vmul.f32 %v557, %v574
      %v576 = vmul.f32 %v561, %v574
      %v577 = vmul.f32 %v565, %v574
      %v578 = vmul.f32 %v569, %v574
      %v579 = vadd.f32 %v551, %v575
      %v580 = vadd.f32 %v552, %v576
      %v581 = vadd.f32 %v553, %v577
      %v582 = vadd.f32 %v554, %v578
      %s583 = scalar_lea.vmem %s250, 80
      %v584 = vld [vmem:[%s583] sm:$0x3]
      %v585 = vld [vmem:[%s583 + $0x4] sm:$0x3]
      %v586 = vld [vmem:[%s583 + $0x8] sm:$0x3]
      %v587 = vld [vmem:[%s583 + $0xc] sm:$0x3]
      %v588 = vunpack.c.l.bf16 %v584
      %v589 = vunpack.c.l.bf16 %v585
      %v590 = vunpack.c.l.bf16 %v586
      %v591 = vunpack.c.l.bf16 %v587
      %s592 = scalar_lea.vmem %s1, 12
      %v593 = vld [vmem:[%s592] sm:$0x7]
      %595 = vset.pattern.permute.xlu0 0
      %596 = vperm.xlu0 %595, %v588
      %v597 = vpop.permute.xlu0 %596
      %600 = vset.pattern.permute.xlu0 0
      %601 = vperm.xlu0 %600, %v589
      %v602 = vpop.permute.xlu0 %601
      %605 = vset.pattern.permute.xlu0 0
      %606 = vperm.xlu0 %605, %v590
      %v607 = vpop.permute.xlu0 %606
      %610 = vset.pattern.permute.xlu0 0
      %611 = vperm.xlu0 %610, %v591
      %v612 = vpop.permute.xlu0 %611
      %v614 = vlaneseq
      %v615 = vshrl.u32 %v614, 7
      %v616 = vsub.s32 0, %v615
      %v617 = vrot.slane %v593, %v616
      %v618 = vmul.f32 %v597, %v617
      %v619 = vmul.f32 %v602, %v617
      %v620 = vmul.f32 %v607, %v617
      %v621 = vmul.f32 %v612, %v617
      %v622 = vadd.f32 %v579, %v618
      %v623 = vadd.f32 %v580, %v619
      %v624 = vadd.f32 %v581, %v620
      %v625 = vadd.f32 %v582, %v621
      %626 = vset.pattern.permute.xlu0 1
      %627 = vperm.xlu0 %626, %v588
      %v628 = vpop.permute.xlu0 %627
      %630 = vset.pattern.permute.xlu0 1
      %631 = vperm.xlu0 %630, %v589
      %v632 = vpop.permute.xlu0 %631
      %634 = vset.pattern.permute.xlu0 1
      %635 = vperm.xlu0 %634, %v590
      %v636 = vpop.permute.xlu0 %635
      %638 = vset.pattern.permute.xlu0 1
      %639 = vperm.xlu0 %638, %v591
      %v640 = vpop.permute.xlu0 %639
      %v642 = vlaneseq
      %v643 = vshrl.u32 %v642, 7
      %v644 = vsub.s32 1, %v643
      %v645 = vrot.slane %v593, %v644
      %v646 = vmul.f32 %v628, %v645
      %v647 = vmul.f32 %v632, %v645
      %v648 = vmul.f32 %v636, %v645
      %v649 = vmul.f32 %v640, %v645
      %v650 = vadd.f32 %v622, %v646
      %v651 = vadd.f32 %v623, %v647
      %v652 = vadd.f32 %v624, %v648
      %v653 = vadd.f32 %v625, %v649
      %654 = vset.pattern.permute.xlu0 2
      %655 = vperm.xlu0 %654, %v588
      %v656 = vpop.permute.xlu0 %655
      %658 = vset.pattern.permute.xlu0 2
      %659 = vperm.xlu0 %658, %v589
      %v660 = vpop.permute.xlu0 %659
      %662 = vset.pattern.permute.xlu0 2
      %663 = vperm.xlu0 %662, %v590
      %v664 = vpop.permute.xlu0 %663
      %666 = vset.pattern.permute.xlu0 2
      %667 = vperm.xlu0 %666, %v591
      %v668 = vpop.permute.xlu0 %667
      %v670 = vlaneseq
      %v671 = vshrl.u32 %v670, 7
      %v672 = vsub.s32 2, %v671
      %v673 = vrot.slane %v593, %v672
      %v674 = vmul.f32 %v656, %v673
      %v675 = vmul.f32 %v660, %v673
      %v676 = vmul.f32 %v664, %v673
      %v677 = vmul.f32 %v668, %v673
      %v678 = vadd.f32 %v650, %v674
      %v679 = vadd.f32 %v651, %v675
      %v680 = vadd.f32 %v652, %v676
      %v681 = vadd.f32 %v653, %v677
      %s682 = scalar_lea.vmem %s250, 100
      %v683 = vld [vmem:[%s682] sm:$0x3]
      %v684 = vld [vmem:[%s682 + $0x4] sm:$0x3]
      %v685 = vld [vmem:[%s682 + $0x8] sm:$0x3]
      %v686 = vld [vmem:[%s682 + $0xc] sm:$0x3]
      %v687 = vunpack.c.l.bf16 %v683
      %v688 = vunpack.c.l.bf16 %v684
      %v689 = vunpack.c.l.bf16 %v685
      %v690 = vunpack.c.l.bf16 %v686
      %s691 = scalar_lea.vmem %s1, 16
      %v692 = vld [vmem:[%s691] sm:$0x7]
      %694 = vset.pattern.permute.xlu0 0
      %695 = vperm.xlu0 %694, %v687
      %v696 = vpop.permute.xlu0 %695
      %699 = vset.pattern.permute.xlu0 0
      %700 = vperm.xlu0 %699, %v688
      %v701 = vpop.permute.xlu0 %700
      %704 = vset.pattern.permute.xlu0 0
      %705 = vperm.xlu0 %704, %v689
      %v706 = vpop.permute.xlu0 %705
      %709 = vset.pattern.permute.xlu0 0
      %710 = vperm.xlu0 %709, %v690
      %v711 = vpop.permute.xlu0 %710
      %v713 = vlaneseq
      %v714 = vshrl.u32 %v713, 7
      %v715 = vsub.s32 0, %v714
      %v716 = vrot.slane %v692, %v715
      %v717 = vmul.f32 %v696, %v716
      %v718 = vmul.f32 %v701, %v716
      %v719 = vmul.f32 %v706, %v716
      %v720 = vmul.f32 %v711, %v716
      %v721 = vadd.f32 %v678, %v717
      %v722 = vadd.f32 %v679, %v718
      %v723 = vadd.f32 %v680, %v719
      %v724 = vadd.f32 %v681, %v720
      %725 = vset.pattern.permute.xlu0 1
      %726 = vperm.xlu0 %725, %v687
      %v727 = vpop.permute.xlu0 %726
      %729 = vset.pattern.permute.xlu0 1
      %730 = vperm.xlu0 %729, %v688
      %v731 = vpop.permute.xlu0 %730
      %733 = vset.pattern.permute.xlu0 1
      %734 = vperm.xlu0 %733, %v689
      %v735 = vpop.permute.xlu0 %734
      %737 = vset.pattern.permute.xlu0 1
      %738 = vperm.xlu0 %737, %v690
      %v739 = vpop.permute.xlu0 %738
      %v741 = vlaneseq
      %v742 = vshrl.u32 %v741, 7
      %v743 = vsub.s32 1, %v742
      %v744 = vrot.slane %v692, %v743
      %v745 = vmul.f32 %v727, %v744
      %v746 = vmul.f32 %v731, %v744
      %v747 = vmul.f32 %v735, %v744
      %v748 = vmul.f32 %v739, %v744
      %v749 = vadd.f32 %v721, %v745
      %v750 = vadd.f32 %v722, %v746
      %v751 = vadd.f32 %v723, %v747
      %v752 = vadd.f32 %v724, %v748
      %753 = vset.pattern.permute.xlu0 2
      %754 = vperm.xlu0 %753, %v687
      %v755 = vpop.permute.xlu0 %754
      %757 = vset.pattern.permute.xlu0 2
      %758 = vperm.xlu0 %757, %v688
      %v759 = vpop.permute.xlu0 %758
      %761 = vset.pattern.permute.xlu0 2
      %762 = vperm.xlu0 %761, %v689
      %v763 = vpop.permute.xlu0 %762
      %765 = vset.pattern.permute.xlu0 2
      %766 = vperm.xlu0 %765, %v690
      %v767 = vpop.permute.xlu0 %766
      %v769 = vlaneseq
      %v770 = vshrl.u32 %v769, 7
      %v771 = vsub.s32 2, %v770
      %v772 = vrot.slane %v692, %v771
      %v773 = vmul.f32 %v755, %v772
      %v774 = vmul.f32 %v759, %v772
      %v775 = vmul.f32 %v763, %v772
      %v776 = vmul.f32 %v767, %v772
      %v777 = vadd.f32 %v749, %v773
      %v778 = vadd.f32 %v750, %v774
      %v779 = vadd.f32 %v751, %v775
      %v780 = vadd.f32 %v752, %v776
      %s781 = scalar_lea.vmem %s250, 120
      %v782 = vld [vmem:[%s781] sm:$0x3]
      %v783 = vld [vmem:[%s781 + $0x4] sm:$0x3]
      %v784 = vld [vmem:[%s781 + $0x8] sm:$0x3]
      %v785 = vld [vmem:[%s781 + $0xc] sm:$0x3]
      %v786 = vunpack.c.l.bf16 %v782
      %v787 = vunpack.c.l.bf16 %v783
      %v788 = vunpack.c.l.bf16 %v784
      %v789 = vunpack.c.l.bf16 %v785
      %s790 = scalar_lea.vmem %s1, 20
      %v791 = vld [vmem:[%s790] sm:$0x7]
      %793 = vset.pattern.permute.xlu0 0
      %794 = vperm.xlu0 %793, %v786
      %v795 = vpop.permute.xlu0 %794
      %798 = vset.pattern.permute.xlu0 0
      %799 = vperm.xlu0 %798, %v787
      %v800 = vpop.permute.xlu0 %799
      %803 = vset.pattern.permute.xlu0 0
      %804 = vperm.xlu0 %803, %v788
      %v805 = vpop.permute.xlu0 %804
      %808 = vset.pattern.permute.xlu0 0
      %809 = vperm.xlu0 %808, %v789
      %v810 = vpop.permute.xlu0 %809
      %v812 = vlaneseq
      %v813 = vshrl.u32 %v812, 7
      %v814 = vsub.s32 0, %v813
      %v815 = vrot.slane %v791, %v814
      %v816 = vmul.f32 %v795, %v815
      %v817 = vmul.f32 %v800, %v815
      %v818 = vmul.f32 %v805, %v815
      %v819 = vmul.f32 %v810, %v815
      %v820 = vadd.f32 %v777, %v816
      %v821 = vadd.f32 %v778, %v817
      %v822 = vadd.f32 %v779, %v818
      %v823 = vadd.f32 %v780, %v819
      %824 = vset.pattern.permute.xlu0 1
      %825 = vperm.xlu0 %824, %v786
      %v826 = vpop.permute.xlu0 %825
      %828 = vset.pattern.permute.xlu0 1
      %829 = vperm.xlu0 %828, %v787
      %v830 = vpop.permute.xlu0 %829
      %832 = vset.pattern.permute.xlu0 1
      %833 = vperm.xlu0 %832, %v788
      %v834 = vpop.permute.xlu0 %833
      %836 = vset.pattern.permute.xlu0 1
      %837 = vperm.xlu0 %836, %v789
      %v838 = vpop.permute.xlu0 %837
      %v840 = vlaneseq
      %v841 = vshrl.u32 %v840, 7
      %v842 = vsub.s32 1, %v841
      %v843 = vrot.slane %v791, %v842
      %v844 = vmul.f32 %v826, %v843
      %v845 = vmul.f32 %v830, %v843
      %v846 = vmul.f32 %v834, %v843
      %v847 = vmul.f32 %v838, %v843
      %v848 = vadd.f32 %v820, %v844
      %v849 = vadd.f32 %v821, %v845
      %v850 = vadd.f32 %v822, %v846
      %v851 = vadd.f32 %v823, %v847
      %852 = vset.pattern.permute.xlu0 2
      %853 = vperm.xlu0 %852, %v786
      %v854 = vpop.permute.xlu0 %853
      %856 = vset.pattern.permute.xlu0 2
      %857 = vperm.xlu0 %856, %v787
      %v858 = vpop.permute.xlu0 %857
      %860 = vset.pattern.permute.xlu0 2
      %861 = vperm.xlu0 %860, %v788
      %v862 = vpop.permute.xlu0 %861
      %864 = vset.pattern.permute.xlu0 2
      %865 = vperm.xlu0 %864, %v789
      %v866 = vpop.permute.xlu0 %865
      %v868 = vlaneseq
      %v869 = vshrl.u32 %v868, 7
      %v870 = vsub.s32 2, %v869
      %v871 = vrot.slane %v791, %v870
      %v872 = vmul.f32 %v854, %v871
      %v873 = vmul.f32 %v858, %v871
      %v874 = vmul.f32 %v862, %v871
      %v875 = vmul.f32 %v866, %v871
      %v876 = vadd.f32 %v848, %v872
      %v877 = vadd.f32 %v849, %v873
      %v878 = vadd.f32 %v850, %v874
      %v879 = vadd.f32 %v851, %v875
      %s880 = scalar_lea.vmem %s250, 160
      %v881 = vld [vmem:[%s880] sm:$0x3]
      %v882 = vld [vmem:[%s880 + $0x4] sm:$0x3]
      %v883 = vld [vmem:[%s880 + $0x8] sm:$0x3]
      %v884 = vld [vmem:[%s880 + $0xc] sm:$0x3]
      %v885 = vunpack.c.l.bf16 %v881
      %v886 = vunpack.c.l.bf16 %v882
      %v887 = vunpack.c.l.bf16 %v883
      %v888 = vunpack.c.l.bf16 %v884
      %s889 = scalar_lea.vmem %s1, 24
      %v890 = vld [vmem:[%s889] sm:$0x7]
      %892 = vset.pattern.permute.xlu0 0
      %893 = vperm.xlu0 %892, %v885
      %v894 = vpop.permute.xlu0 %893
      %897 = vset.pattern.permute.xlu0 0
      %898 = vperm.xlu0 %897, %v886
      %v899 = vpop.permute.xlu0 %898
      %902 = vset.pattern.permute.xlu0 0
      %903 = vperm.xlu0 %902, %v887
      %v904 = vpop.permute.xlu0 %903
      %907 = vset.pattern.permute.xlu0 0
      %908 = vperm.xlu0 %907, %v888
      %v909 = vpop.permute.xlu0 %908
      %v911 = vlaneseq
      %v912 = vshrl.u32 %v911, 7
      %v913 = vsub.s32 0, %v912
      %v914 = vrot.slane %v890, %v913
      %v915 = vmul.f32 %v894, %v914
      %v916 = vmul.f32 %v899, %v914
      %v917 = vmul.f32 %v904, %v914
      %v918 = vmul.f32 %v909, %v914
      %v919 = vadd.f32 %v876, %v915
      %v920 = vadd.f32 %v877, %v916
      %v921 = vadd.f32 %v878, %v917
      %v922 = vadd.f32 %v879, %v918
      %923 = vset.pattern.permute.xlu0 1
      %924 = vperm.xlu0 %923, %v885
      %v925 = vpop.permute.xlu0 %924
      %927 = vset.pattern.permute.xlu0 1
      %928 = vperm.xlu0 %927, %v886
      %v929 = vpop.permute.xlu0 %928
      %931 = vset.pattern.permute.xlu0 1
      %932 = vperm.xlu0 %931, %v887
      %v933 = vpop.permute.xlu0 %932
      %935 = vset.pattern.permute.xlu0 1
      %936 = vperm.xlu0 %935, %v888
      %v937 = vpop.permute.xlu0 %936
      %v939 = vlaneseq
      %v940 = vshrl.u32 %v939, 7
      %v941 = vsub.s32 1, %v940
      %v942 = vrot.slane %v890, %v941
      %v943 = vmul.f32 %v925, %v942
      %v944 = vmul.f32 %v929, %v942
      %v945 = vmul.f32 %v933, %v942
      %v946 = vmul.f32 %v937, %v942
      %v947 = vadd.f32 %v919, %v943
      %v948 = vadd.f32 %v920, %v944
      %v949 = vadd.f32 %v921, %v945
      %v950 = vadd.f32 %v922, %v946
      %951 = vset.pattern.permute.xlu0 2
      %952 = vperm.xlu0 %951, %v885
      %v953 = vpop.permute.xlu0 %952
      %955 = vset.pattern.permute.xlu0 2
      %956 = vperm.xlu0 %955, %v886
      %v957 = vpop.permute.xlu0 %956
      %959 = vset.pattern.permute.xlu0 2
      %960 = vperm.xlu0 %959, %v887
      %v961 = vpop.permute.xlu0 %960
      %963 = vset.pattern.permute.xlu0 2
      %964 = vperm.xlu0 %963, %v888
      %v965 = vpop.permute.xlu0 %964
      %v967 = vlaneseq
      %v968 = vshrl.u32 %v967, 7
      %v969 = vsub.s32 2, %v968
      %v970 = vrot.slane %v890, %v969
      %v971 = vmul.f32 %v953, %v970
      %v972 = vmul.f32 %v957, %v970
      %v973 = vmul.f32 %v961, %v970
      %v974 = vmul.f32 %v965, %v970
      %v975 = vadd.f32 %v947, %v971
      %v976 = vadd.f32 %v948, %v972
      %v977 = vadd.f32 %v949, %v973
      %v978 = vadd.f32 %v950, %v974
      %s979 = scalar_lea.vmem %s250, 180
      %v980 = vld [vmem:[%s979] sm:$0x3]
      %v981 = vld [vmem:[%s979 + $0x4] sm:$0x3]
      %v982 = vld [vmem:[%s979 + $0x8] sm:$0x3]
      %v983 = vld [vmem:[%s979 + $0xc] sm:$0x3]
      %v984 = vunpack.c.l.bf16 %v980
      %v985 = vunpack.c.l.bf16 %v981
      %v986 = vunpack.c.l.bf16 %v982
      %v987 = vunpack.c.l.bf16 %v983
      %s988 = scalar_lea.vmem %s1, 28
      %v989 = vld [vmem:[%s988] sm:$0x7]
      %991 = vset.pattern.permute.xlu0 0
      %992 = vperm.xlu0 %991, %v984
      %v993 = vpop.permute.xlu0 %992
      %996 = vset.pattern.permute.xlu0 0
      %997 = vperm.xlu0 %996, %v985
      %v998 = vpop.permute.xlu0 %997
      %1001 = vset.pattern.permute.xlu0 0
      %1002 = vperm.xlu0 %1001, %v986
      %v1003 = vpop.permute.xlu0 %1002
      %1006 = vset.pattern.permute.xlu0 0
      %1007 = vperm.xlu0 %1006, %v987
      %v1008 = vpop.permute.xlu0 %1007
      %v1010 = vlaneseq
      %v1011 = vshrl.u32 %v1010, 7
      %v1012 = vsub.s32 0, %v1011
      %v1013 = vrot.slane %v989, %v1012
      %v1014 = vmul.f32 %v993, %v1013
      %v1015 = vmul.f32 %v998, %v1013
      %v1016 = vmul.f32 %v1003, %v1013
      %v1017 = vmul.f32 %v1008, %v1013
      %v1018 = vadd.f32 %v975, %v1014
      %v1019 = vadd.f32 %v976, %v1015
      %v1020 = vadd.f32 %v977, %v1016
      %v1021 = vadd.f32 %v978, %v1017
      %1022 = vset.pattern.permute.xlu0 1
      %1023 = vperm.xlu0 %1022, %v984
      %v1024 = vpop.permute.xlu0 %1023
      %1026 = vset.pattern.permute.xlu0 1
      %1027 = vperm.xlu0 %1026, %v985
      %v1028 = vpop.permute.xlu0 %1027
      %1030 = vset.pattern.permute.xlu0 1
      %1031 = vperm.xlu0 %1030, %v986
      %v1032 = vpop.permute.xlu0 %1031
      %1034 = vset.pattern.permute.xlu0 1
      %1035 = vperm.xlu0 %1034, %v987
      %v1036 = vpop.permute.xlu0 %1035
      %v1038 = vlaneseq
      %v1039 = vshrl.u32 %v1038, 7
      %v1040 = vsub.s32 1, %v1039
      %v1041 = vrot.slane %v989, %v1040
      %v1042 = vmul.f32 %v1024, %v1041
      %v1043 = vmul.f32 %v1028, %v1041
      %v1044 = vmul.f32 %v1032, %v1041
      %v1045 = vmul.f32 %v1036, %v1041
      %v1046 = vadd.f32 %v1018, %v1042
      %v1047 = vadd.f32 %v1019, %v1043
      %v1048 = vadd.f32 %v1020, %v1044
      %v1049 = vadd.f32 %v1021, %v1045
      %1050 = vset.pattern.permute.xlu0 2
      %1051 = vperm.xlu0 %1050, %v984
      %v1052 = vpop.permute.xlu0 %1051
      %1054 = vset.pattern.permute.xlu0 2
      %1055 = vperm.xlu0 %1054, %v985
      %v1056 = vpop.permute.xlu0 %1055
      %1058 = vset.pattern.permute.xlu0 2
      %1059 = vperm.xlu0 %1058, %v986
      %v1060 = vpop.permute.xlu0 %1059
      %1062 = vset.pattern.permute.xlu0 2
      %1063 = vperm.xlu0 %1062, %v987
      %v1064 = vpop.permute.xlu0 %1063
      %v1066 = vlaneseq
      %v1067 = vshrl.u32 %v1066, 7
      %v1068 = vsub.s32 2, %v1067
      %v1069 = vrot.slane %v989, %v1068
      %v1070 = vmul.f32 %v1052, %v1069
      %v1071 = vmul.f32 %v1056, %v1069
      %v1072 = vmul.f32 %v1060, %v1069
      %v1073 = vmul.f32 %v1064, %v1069
      %v1074 = vadd.f32 %v1046, %v1070
      %v1075 = vadd.f32 %v1047, %v1071
      %v1076 = vadd.f32 %v1048, %v1072
      %v1077 = vadd.f32 %v1049, %v1073
      %s1078 = scalar_lea.vmem %s250, 200
      %v1079 = vld [vmem:[%s1078] sm:$0x3]
      %v1080 = vld [vmem:[%s1078 + $0x4] sm:$0x3]
      %v1081 = vld [vmem:[%s1078 + $0x8] sm:$0x3]
      %v1082 = vld [vmem:[%s1078 + $0xc] sm:$0x3]
      %v1083 = vunpack.c.l.bf16 %v1079
      %v1084 = vunpack.c.l.bf16 %v1080
      %v1085 = vunpack.c.l.bf16 %v1081
      %v1086 = vunpack.c.l.bf16 %v1082
      %s1087 = scalar_lea.vmem %s1, 32
      %v1088 = vld [vmem:[%s1087] sm:$0x7]
      %1090 = vset.pattern.permute.xlu0 0
      %1091 = vperm.xlu0 %1090, %v1083
      %v1092 = vpop.permute.xlu0 %1091
      %1095 = vset.pattern.permute.xlu0 0
      %1096 = vperm.xlu0 %1095, %v1084
      %v1097 = vpop.permute.xlu0 %1096
      %1100 = vset.pattern.permute.xlu0 0
      %1101 = vperm.xlu0 %1100, %v1085
      %v1102 = vpop.permute.xlu0 %1101
      %1105 = vset.pattern.permute.xlu0 0
      %1106 = vperm.xlu0 %1105, %v1086
      %v1107 = vpop.permute.xlu0 %1106
      %v1109 = vlaneseq
      %v1110 = vshrl.u32 %v1109, 7
      %v1111 = vsub.s32 0, %v1110
      %v1112 = vrot.slane %v1088, %v1111
      %v1113 = vmul.f32 %v1092, %v1112
      %v1114 = vmul.f32 %v1097, %v1112
      %v1115 = vmul.f32 %v1102, %v1112
      %v1116 = vmul.f32 %v1107, %v1112
      %v1117 = vadd.f32 %v1074, %v1113
      %v1118 = vadd.f32 %v1075, %v1114
      %v1119 = vadd.f32 %v1076, %v1115
      %v1120 = vadd.f32 %v1077, %v1116
      %1121 = vset.pattern.permute.xlu0 1
      %1122 = vperm.xlu0 %1121, %v1083
      %v1123 = vpop.permute.xlu0 %1122
      %1125 = vset.pattern.permute.xlu0 1
      %1126 = vperm.xlu0 %1125, %v1084
      %v1127 = vpop.permute.xlu0 %1126
      %1129 = vset.pattern.permute.xlu0 1
      %1130 = vperm.xlu0 %1129, %v1085
      %v1131 = vpop.permute.xlu0 %1130
      %1133 = vset.pattern.permute.xlu0 1
      %1134 = vperm.xlu0 %1133, %v1086
      %v1135 = vpop.permute.xlu0 %1134
      %v1137 = vlaneseq
      %v1138 = vshrl.u32 %v1137, 7
      %v1139 = vsub.s32 1, %v1138
      %v1140 = vrot.slane %v1088, %v1139
      %v1141 = vmul.f32 %v1123, %v1140
      %v1142 = vmul.f32 %v1127, %v1140
      %v1143 = vmul.f32 %v1131, %v1140
      %v1144 = vmul.f32 %v1135, %v1140
      %v1145 = vadd.f32 %v1117, %v1141
      %v1146 = vadd.f32 %v1118, %v1142
      %v1147 = vadd.f32 %v1119, %v1143
      %v1148 = vadd.f32 %v1120, %v1144
      %1149 = vset.pattern.permute.xlu0 2
      %1150 = vperm.xlu0 %1149, %v1083
      %v1151 = vpop.permute.xlu0 %1150
      %1153 = vset.pattern.permute.xlu0 2
      %1154 = vperm.xlu0 %1153, %v1084
      %v1155 = vpop.permute.xlu0 %1154
      %1157 = vset.pattern.permute.xlu0 2
      %1158 = vperm.xlu0 %1157, %v1085
      %v1159 = vpop.permute.xlu0 %1158
      %1161 = vset.pattern.permute.xlu0 2
      %1162 = vperm.xlu0 %1161, %v1086
      %v1163 = vpop.permute.xlu0 %1162
      %v1165 = vlaneseq
      %v1166 = vshrl.u32 %v1165, 7
      %v1167 = vsub.s32 2, %v1166
      %v1168 = vrot.slane %v1088, %v1167
      %v1169 = vmul.f32 %v1151, %v1168
      %v1170 = vmul.f32 %v1155, %v1168
      %v1171 = vmul.f32 %v1159, %v1168
      %v1172 = vmul.f32 %v1163, %v1168
      %v1173 = vadd.f32 %v1145, %v1169
      %v1174 = vadd.f32 %v1146, %v1170
      %v1175 = vadd.f32 %v1147, %v1171
      %v1176 = vadd.f32 %v1148, %v1172
      %v1177 = vld [vmem:[%s4] sm:$0x1]
      %v1178 = vlaneseq
      %v1179 = vshrl.u32 %v1178, 7
      %v1180 = vsub.s32 0, %v1179
      %v1181 = vrot.slane %v1177, %v1180
      %v1182 = vmul.f32 %v1173, %v1181
      %v1183 = vmul.f32 %v1174, %v1181
      %v1184 = vmul.f32 %v1175, %v1181
      %v1185 = vmul.f32 %v1176, %v1181
      %v1186 = vld [vmem:[%s5] sm:$0x1]
      %v1187 = vlaneseq
      %v1188 = vshrl.u32 %v1187, 7
      %v1189 = vsub.s32 0, %v1188
      %v1190 = vrot.slane %v1186, %v1189
      %v1191 = vadd.f32 %v1182, %v1190
      %v1192 = vadd.f32 %v1183, %v1190
      %v1193 = vadd.f32 %v1184, %v1190
      %v1194 = vadd.f32 %v1185, %v1190
      %v1195 = vmul.f32 %v1191, 0.5
      %v1196 = vmul.f32 %v1192, 0.5
      %v1197 = vmul.f32 %v1193, 0.5
      %v1198 = vmul.f32 %v1194, 0.5
      %v1199 = vmul.f32 %v1191, 0.70710677
      %v1200 = vmul.f32 %v1192, 0.70710677
      %v1201 = vmul.f32 %v1193, 0.70710677
      %v1202 = vmul.f32 %v1194, 0.70710677
      %v1203 = verf.f32.pop %v1199
      %v1204 = verf.f32.pop %v1200
      %v1205 = verf.f32.pop %v1201
      %v1206 = verf.f32.pop %v1202
      %v1207 = vadd.f32 %v1203, 1.0
      %v1208 = vadd.f32 %v1204, 1.0
      %v1209 = vadd.f32 %v1205, 1.0
      %v1210 = vadd.f32 %v1206, 1.0
      %v1211 = vmul.f32 %v1195, %v1207
      %v1212 = vmul.f32 %v1196, %v1208
      %v1213 = vmul.f32 %v1197, %v1209
      %v1214 = vmul.f32 %v1198, %v1210
      %v1215 = vpack.c.bf16 %v1211, %v1211
      %v1216 = vpack.c.bf16 %v1212, %v1212
      %v1217 = vpack.c.bf16 %v1213, %v1213
      %v1218 = vpack.c.bf16 %v1214, %v1214
      %v1223 = vunpack.c.l.b16 %v1215
      %v1224 = vunpack.c.l.b16 %v1216
      %v1225 = vunpack.c.l.b16 %v1217
      %v1226 = vunpack.c.l.b16 %v1218
      %v1227 = vpack.c.b16 %v1223, %v1223
      %v1228 = vpack.c.b16 %v1224, %v1224
      %v1229 = vpack.c.b16 %v1225, %v1225
      %v1230 = vpack.c.b16 %v1226, %v1226
      %v1232 = vshrl.u32 %v1227, 16
      %v1234 = vrot.slane %v1232, 7
      %v1235 = vshll.u32 %v1227, 16
      %v1237 = vor.u32 %v1234, %v1235
      %v1239 = vshrl.u32 %v1228, 16
      %v1241 = vrot.slane %v1239, 7
      %v1242 = vshll.u32 %v1228, 16
      %v1244 = vor.u32 %v1241, %v1242
      %v1246 = vshrl.u32 %v1229, 16
      %v1248 = vrot.slane %v1246, 7
      %v1249 = vshll.u32 %v1229, 16
      %v1251 = vor.u32 %v1248, %v1249
      %v1253 = vshrl.u32 %v1230, 16
      %v1255 = vrot.slane %v1253, 7
      %v1256 = vshll.u32 %v1230, 16
      %v1258 = vor.u32 %v1255, %v1256
      %s1263 = scalar_lea.vmem [#allocation2], 4
      %vm1264 = vcmask 1042432
      %vm1265 = vsmask.f32 2306
      %vm1266 = vmand %vm1264, %vm1265
      %v1267 = vld [vmem:[%s1263] sm:$0x7]
      %v1268 = vsel %vm1266, %v1237, %v1267
      %1269 = vst [vmem:[%s1263] sm:$0x7] %v1268
      %v1270 = vld [vmem:[%s1263 + $0x4] sm:$0x7]
      %v1271 = vsel %vm1266, %v1244, %v1270
      %1272 = vst [vmem:[%s1263 + $0x4] sm:$0x7] %v1271
      %v1273 = vld [vmem:[%s1263 + $0x8] sm:$0x7]
      %v1274 = vsel %vm1266, %v1251, %v1273
      %1275 = vst [vmem:[%s1263 + $0x8] sm:$0x7] %v1274
      %v1276 = vld [vmem:[%s1263 + $0xc] sm:$0x7]
      %v1277 = vsel %vm1266, %v1258, %v1276
      %1278 = vst [vmem:[%s1263 + $0xc] sm:$0x7] %v1277
      %v1279 = vld [vmem:[%s484] sm:$0x3]
      %v1280 = vld [vmem:[%s484 + $0x4] sm:$0x3]
      %v1281 = vld [vmem:[%s484 + $0x8] sm:$0x3]
      %v1282 = vld [vmem:[%s484 + $0xc] sm:$0x3]
      %v1283 = vunpack.c.l.bf16 %v1279
      %v1284 = vunpack.c.l.bf16 %v1280
      %v1285 = vunpack.c.l.bf16 %v1281
      %v1286 = vunpack.c.l.bf16 %v1282
      %v1287 = vld [vmem:[%s1] sm:$0x7]
      %1289 = vset.pattern.permute.xlu0 0
      %1290 = vperm.xlu0 %1289, %v1283
      %v1291 = vpop.permute.xlu0 %1290
      %1294 = vset.pattern.permute.xlu0 0
      %1295 = vperm.xlu0 %1294, %v1284
      %v1296 = vpop.permute.xlu0 %1295
      %1299 = vset.pattern.permute.xlu0 0
      %1300 = vperm.xlu0 %1299, %v1285
      %v1301 = vpop.permute.xlu0 %1300
      %1304 = vset.pattern.permute.xlu0 0
      %1305 = vperm.xlu0 %1304, %v1286
      %v1306 = vpop.permute.xlu0 %1305
      %v1308 = vlaneseq
      %v1309 = vshrl.u32 %v1308, 7
      %v1310 = vsub.s32 0, %v1309
      %v1311 = vrot.slane %v1287, %v1310
      %v1312 = vmul.f32 %v1291, %v1311
      %v1313 = vmul.f32 %v1296, %v1311
      %v1314 = vmul.f32 %v1301, %v1311
      %v1315 = vmul.f32 %v1306, %v1311
      %v1316 = vadd.f32 %v1312, 0.0
      %v1317 = vadd.f32 %v1313, 0.0
      %v1318 = vadd.f32 %v1314, 0.0
      %v1319 = vadd.f32 %v1315, 0.0
      %1320 = vset.pattern.permute.xlu0 1
      %1321 = vperm.xlu0 %1320, %v1283
      %v1322 = vpop.permute.xlu0 %1321
      %1324 = vset.pattern.permute.xlu0 1
      %1325 = vperm.xlu0 %1324, %v1284
      %v1326 = vpop.permute.xlu0 %1325
      %1328 = vset.pattern.permute.xlu0 1
      %1329 = vperm.xlu0 %1328, %v1285
      %v1330 = vpop.permute.xlu0 %1329
      %1332 = vset.pattern.permute.xlu0 1
      %1333 = vperm.xlu0 %1332, %v1286
      %v1334 = vpop.permute.xlu0 %1333
      %v1336 = vlaneseq
      %v1337 = vshrl.u32 %v1336, 7
      %v1338 = vsub.s32 1, %v1337
      %v1339 = vrot.slane %v1287, %v1338
      %v1340 = vmul.f32 %v1322, %v1339
      %v1341 = vmul.f32 %v1326, %v1339
      %v1342 = vmul.f32 %v1330, %v1339
      %v1343 = vmul.f32 %v1334, %v1339
      %v1344 = vadd.f32 %v1316, %v1340
      %v1345 = vadd.f32 %v1317, %v1341
      %v1346 = vadd.f32 %v1318, %v1342
      %v1347 = vadd.f32 %v1319, %v1343
      %1348 = vset.pattern.permute.xlu0 2
      %1349 = vperm.xlu0 %1348, %v1283
      %v1350 = vpop.permute.xlu0 %1349
      %1352 = vset.pattern.permute.xlu0 2
      %1353 = vperm.xlu0 %1352, %v1284
      %v1354 = vpop.permute.xlu0 %1353
      %1356 = vset.pattern.permute.xlu0 2
      %1357 = vperm.xlu0 %1356, %v1285
      %v1358 = vpop.permute.xlu0 %1357
      %1360 = vset.pattern.permute.xlu0 2
      %1361 = vperm.xlu0 %1360, %v1286
      %v1362 = vpop.permute.xlu0 %1361
      %v1364 = vlaneseq
      %v1365 = vshrl.u32 %v1364, 7
      %v1366 = vsub.s32 2, %v1365
      %v1367 = vrot.slane %v1287, %v1366
      %v1368 = vmul.f32 %v1350, %v1367
      %v1369 = vmul.f32 %v1354, %v1367
      %v1370 = vmul.f32 %v1358, %v1367
      %v1371 = vmul.f32 %v1362, %v1367
      %v1372 = vadd.f32 %v1344, %v1368
      %v1373 = vadd.f32 %v1345, %v1369
      %v1374 = vadd.f32 %v1346, %v1370
      %v1375 = vadd.f32 %v1347, %v1371
      %s1376 = scalar_lea.vmem %s250, 60
      %v1377 = vld [vmem:[%s1376] sm:$0x3]
      %v1378 = vld [vmem:[%s1376 + $0x4] sm:$0x3]
      %v1379 = vld [vmem:[%s1376 + $0x8] sm:$0x3]
      %v1380 = vld [vmem:[%s1376 + $0xc] sm:$0x3]
      %v1381 = vunpack.c.l.bf16 %v1377
      %v1382 = vunpack.c.l.bf16 %v1378
      %v1383 = vunpack.c.l.bf16 %v1379
      %v1384 = vunpack.c.l.bf16 %v1380
      %v1385 = vld [vmem:[%s394] sm:$0x7]
      %1387 = vset.pattern.permute.xlu0 0
      %1388 = vperm.xlu0 %1387, %v1381
      %v1389 = vpop.permute.xlu0 %1388
      %1392 = vset.pattern.permute.xlu0 0
      %1393 = vperm.xlu0 %1392, %v1382
      %v1394 = vpop.permute.xlu0 %1393
      %1397 = vset.pattern.permute.xlu0 0
      %1398 = vperm.xlu0 %1397, %v1383
      %v1399 = vpop.permute.xlu0 %1398
      %1402 = vset.pattern.permute.xlu0 0
      %1403 = vperm.xlu0 %1402, %v1384
      %v1404 = vpop.permute.xlu0 %1403
      %v1406 = vlaneseq
      %v1407 = vshrl.u32 %v1406, 7
      %v1408 = vsub.s32 0, %v1407
      %v1409 = vrot.slane %v1385, %v1408
      %v1410 = vmul.f32 %v1389, %v1409
      %v1411 = vmul.f32 %v1394, %v1409
      %v1412 = vmul.f32 %v1399, %v1409
      %v1413 = vmul.f32 %v1404, %v1409
      %v1414 = vadd.f32 %v1372, %v1410
      %v1415 = vadd.f32 %v1373, %v1411
      %v1416 = vadd.f32 %v1374, %v1412
      %v1417 = vadd.f32 %v1375, %v1413
      %1418 = vset.pattern.permute.xlu0 1
      %1419 = vperm.xlu0 %1418, %v1381
      %v1420 = vpop.permute.xlu0 %1419
      %1422 = vset.pattern.permute.xlu0 1
      %1423 = vperm.xlu0 %1422, %v1382
      %v1424 = vpop.permute.xlu0 %1423
      %1426 = vset.pattern.permute.xlu0 1
      %1427 = vperm.xlu0 %1426, %v1383
      %v1428 = vpop.permute.xlu0 %1427
      %1430 = vset.pattern.permute.xlu0 1
      %1431 = vperm.xlu0 %1430, %v1384
      %v1432 = vpop.permute.xlu0 %1431
      %v1434 = vlaneseq
      %v1435 = vshrl.u32 %v1434, 7
      %v1436 = vsub.s32 1, %v1435
      %v1437 = vrot.slane %v1385, %v1436
      %v1438 = vmul.f32 %v1420, %v1437
      %v1439 = vmul.f32 %v1424, %v1437
      %v1440 = vmul.f32 %v1428, %v1437
      %v1441 = vmul.f32 %v1432, %v1437
      %v1442 = vadd.f32 %v1414, %v1438
      %v1443 = vadd.f32 %v1415, %v1439
      %v1444 = vadd.f32 %v1416, %v1440
      %v1445 = vadd.f32 %v1417, %v1441
      %1446 = vset.pattern.permute.xlu0 2
      %1447 = vperm.xlu0 %1446, %v1381
      %v1448 = vpop.permute.xlu0 %1447
      %1450 = vset.pattern.permute.xlu0 2
      %1451 = vperm.xlu0 %1450, %v1382
      %v1452 = vpop.permute.xlu0 %1451
      %1454 = vset.pattern.permute.xlu0 2
      %1455 = vperm.xlu0 %1454, %v1383
      %v1456 = vpop.permute.xlu0 %1455
      %1458 = vset.pattern.permute.xlu0 2
      %1459 = vperm.xlu0 %1458, %v1384
      %v1460 = vpop.permute.xlu0 %1459
      %v1462 = vlaneseq
      %v1463 = vshrl.u32 %v1462, 7
      %v1464 = vsub.s32 2, %v1463
      %v1465 = vrot.slane %v1385, %v1464
      %v1466 = vmul.f32 %v1448, %v1465
      %v1467 = vmul.f32 %v1452, %v1465
      %v1468 = vmul.f32 %v1456, %v1465
      %v1469 = vmul.f32 %v1460, %v1465
      %v1470 = vadd.f32 %v1442, %v1466
      %v1471 = vadd.f32 %v1443, %v1467
      %v1472 = vadd.f32 %v1444, %v1468
      %v1473 = vadd.f32 %v1445, %v1469
      %v1474 = vld [vmem:[%s250] sm:$0x7]
      %v1475 = vld [vmem:[%s250 + $0x4] sm:$0x7]
      %v1476 = vld [vmem:[%s250 + $0x8] sm:$0x7]
      %v1477 = vld [vmem:[%s250 + $0xc] sm:$0x7]
      %v1478 = vunpack.c.l.bf16 %v1474
      %v1479 = vunpack.c.l.bf16 %v1475
      %v1480 = vunpack.c.l.bf16 %v1476
      %v1481 = vunpack.c.l.bf16 %v1477
      %v1482 = vld [vmem:[%s493] sm:$0x7]
      %1484 = vset.pattern.permute.xlu0 0
      %1485 = vperm.xlu0 %1484, %v1478
      %v1486 = vpop.permute.xlu0 %1485
      %1489 = vset.pattern.permute.xlu0 0
      %1490 = vperm.xlu0 %1489, %v1479
      %v1491 = vpop.permute.xlu0 %1490
      %1494 = vset.pattern.permute.xlu0 0
      %1495 = vperm.xlu0 %1494, %v1480
      %v1496 = vpop.permute.xlu0 %1495
      %1499 = vset.pattern.permute.xlu0 0
      %1500 = vperm.xlu0 %1499, %v1481
      %v1501 = vpop.permute.xlu0 %1500
      %v1503 = vlaneseq
      %v1504 = vshrl.u32 %v1503, 7
      %v1505 = vsub.s32 0, %v1504
      %v1506 = vrot.slane %v1482, %v1505
      %v1507 = vmul.f32 %v1486, %v1506
      %v1508 = vmul.f32 %v1491, %v1506
      %v1509 = vmul.f32 %v1496, %v1506
      %v1510 = vmul.f32 %v1501, %v1506
      %v1515 = vrot.slane %v1507, 1
      %v1516 = vrot.slane %v1508, 1
      %v1517 = vrot.slane %v1509, 1
      %v1518 = vrot.slane %v1510, 1
      %v1523 = vadd.f32 %v1470, %v1515
      %v1524 = vadd.f32 %v1471, %v1516
      %v1525 = vadd.f32 %v1472, %v1517
      %v1526 = vadd.f32 %v1473, %v1518
      %1527 = vset.pattern.permute.xlu0 1
      %1528 = vperm.xlu0 %1527, %v1478
      %v1529 = vpop.permute.xlu0 %1528
      %1531 = vset.pattern.permute.xlu0 1
      %1532 = vperm.xlu0 %1531, %v1479
      %v1533 = vpop.permute.xlu0 %1532
      %1535 = vset.pattern.permute.xlu0 1
      %1536 = vperm.xlu0 %1535, %v1480
      %v1537 = vpop.permute.xlu0 %1536
      %1539 = vset.pattern.permute.xlu0 1
      %1540 = vperm.xlu0 %1539, %v1481
      %v1541 = vpop.permute.xlu0 %1540
      %v1543 = vlaneseq
      %v1544 = vshrl.u32 %v1543, 7
      %v1545 = vsub.s32 1, %v1544
      %v1546 = vrot.slane %v1482, %v1545
      %v1547 = vmul.f32 %v1529, %v1546
      %v1548 = vmul.f32 %v1533, %v1546
      %v1549 = vmul.f32 %v1537, %v1546
      %v1550 = vmul.f32 %v1541, %v1546
      %v1555 = vrot.slane %v1547, 1
      %v1556 = vrot.slane %v1548, 1
      %v1557 = vrot.slane %v1549, 1
      %v1558 = vrot.slane %v1550, 1
      %v1563 = vadd.f32 %v1523, %v1555
      %v1564 = vadd.f32 %v1524, %v1556
      %v1565 = vadd.f32 %v1525, %v1557
      %v1566 = vadd.f32 %v1526, %v1558
      %1567 = vset.pattern.permute.xlu0 2
      %1568 = vperm.xlu0 %1567, %v1478
      %v1569 = vpop.permute.xlu0 %1568
      %1571 = vset.pattern.permute.xlu0 2
      %1572 = vperm.xlu0 %1571, %v1479
      %v1573 = vpop.permute.xlu0 %1572
      %1575 = vset.pattern.permute.xlu0 2
      %1576 = vperm.xlu0 %1575, %v1480
      %v1577 = vpop.permute.xlu0 %1576
      %1579 = vset.pattern.permute.xlu0 2
      %1580 = vperm.xlu0 %1579, %v1481
      %v1581 = vpop.permute.xlu0 %1580
      %v1583 = vlaneseq
      %v1584 = vshrl.u32 %v1583, 7
      %v1585 = vsub.s32 2, %v1584
      %v1586 = vrot.slane %v1482, %v1585
      %v1587 = vmul.f32 %v1569, %v1586
      %v1588 = vmul.f32 %v1573, %v1586
      %v1589 = vmul.f32 %v1577, %v1586
      %v1590 = vmul.f32 %v1581, %v1586
      %v1595 = vrot.slane %v1587, 1
      %v1596 = vrot.slane %v1588, 1
      %v1597 = vrot.slane %v1589, 1
      %v1598 = vrot.slane %v1590, 1
      %v1603 = vadd.f32 %v1563, %v1595
      %v1604 = vadd.f32 %v1564, %v1596
      %v1605 = vadd.f32 %v1565, %v1597
      %v1606 = vadd.f32 %v1566, %v1598
      %v1607 = vld [vmem:[%s781] sm:$0x3]
      %v1608 = vld [vmem:[%s781 + $0x4] sm:$0x3]
      %v1609 = vld [vmem:[%s781 + $0x8] sm:$0x3]
      %v1610 = vld [vmem:[%s781 + $0xc] sm:$0x3]
      %v1611 = vunpack.c.l.bf16 %v1607
      %v1612 = vunpack.c.l.bf16 %v1608
      %v1613 = vunpack.c.l.bf16 %v1609
      %v1614 = vunpack.c.l.bf16 %v1610
      %v1615 = vld [vmem:[%s592] sm:$0x7]
      %1617 = vset.pattern.permute.xlu0 0
      %1618 = vperm.xlu0 %1617, %v1611
      %v1619 = vpop.permute.xlu0 %1618
      %1622 = vset.pattern.permute.xlu0 0
      %1623 = vperm.xlu0 %1622, %v1612
      %v1624 = vpop.permute.xlu0 %1623
      %1627 = vset.pattern.permute.xlu0 0
      %1628 = vperm.xlu0 %1627, %v1613
      %v1629 = vpop.permute.xlu0 %1628
      %1632 = vset.pattern.permute.xlu0 0
      %1633 = vperm.xlu0 %1632, %v1614
      %v1634 = vpop.permute.xlu0 %1633
      %v1636 = vlaneseq
      %v1637 = vshrl.u32 %v1636, 7
      %v1638 = vsub.s32 0, %v1637
      %v1639 = vrot.slane %v1615, %v1638
      %v1640 = vmul.f32 %v1619, %v1639
      %v1641 = vmul.f32 %v1624, %v1639
      %v1642 = vmul.f32 %v1629, %v1639
      %v1643 = vmul.f32 %v1634, %v1639
      %v1644 = vadd.f32 %v1603, %v1640
      %v1645 = vadd.f32 %v1604, %v1641
      %v1646 = vadd.f32 %v1605, %v1642
      %v1647 = vadd.f32 %v1606, %v1643
      %1648 = vset.pattern.permute.xlu0 1
      %1649 = vperm.xlu0 %1648, %v1611
      %v1650 = vpop.permute.xlu0 %1649
      %1652 = vset.pattern.permute.xlu0 1
      %1653 = vperm.xlu0 %1652, %v1612
      %v1654 = vpop.permute.xlu0 %1653
      %1656 = vset.pattern.permute.xlu0 1
      %1657 = vperm.xlu0 %1656, %v1613
      %v1658 = vpop.permute.xlu0 %1657
      %1660 = vset.pattern.permute.xlu0 1
      %1661 = vperm.xlu0 %1660, %v1614
      %v1662 = vpop.permute.xlu0 %1661
      %v1664 = vlaneseq
      %v1665 = vshrl.u32 %v1664, 7
      %v1666 = vsub.s32 1, %v1665
      %v1667 = vrot.slane %v1615, %v1666
      %v1668 = vmul.f32 %v1650, %v1667
      %v1669 = vmul.f32 %v1654, %v1667
      %v1670 = vmul.f32 %v1658, %v1667
      %v1671 = vmul.f32 %v1662, %v1667
      %v1672 = vadd.f32 %v1644, %v1668
      %v1673 = vadd.f32 %v1645, %v1669
      %v1674 = vadd.f32 %v1646, %v1670
      %v1675 = vadd.f32 %v1647, %v1671
      %1676 = vset.pattern.permute.xlu0 2
      %1677 = vperm.xlu0 %1676, %v1611
      %v1678 = vpop.permute.xlu0 %1677
      %1680 = vset.pattern.permute.xlu0 2
      %1681 = vperm.xlu0 %1680, %v1612
      %v1682 = vpop.permute.xlu0 %1681
      %1684 = vset.pattern.permute.xlu0 2
      %1685 = vperm.xlu0 %1684, %v1613
      %v1686 = vpop.permute.xlu0 %1685
      %1688 = vset.pattern.permute.xlu0 2
      %1689 = vperm.xlu0 %1688, %v1614
      %v1690 = vpop.permute.xlu0 %1689
      %v1692 = vlaneseq
      %v1693 = vshrl.u32 %v1692, 7
      %v1694 = vsub.s32 2, %v1693
      %v1695 = vrot.slane %v1615, %v1694
      %v1696 = vmul.f32 %v1678, %v1695
      %v1697 = vmul.f32 %v1682, %v1695
      %v1698 = vmul.f32 %v1686, %v1695
      %v1699 = vmul.f32 %v1690, %v1695
      %v1700 = vadd.f32 %v1672, %v1696
      %v1701 = vadd.f32 %v1673, %v1697
      %v1702 = vadd.f32 %v1674, %v1698
      %v1703 = vadd.f32 %v1675, %v1699
      %s1704 = scalar_lea.vmem %s250, 140
      %v1705 = vld [vmem:[%s1704] sm:$0x3]
      %v1706 = vld [vmem:[%s1704 + $0x4] sm:$0x3]
      %v1707 = vld [vmem:[%s1704 + $0x8] sm:$0x3]
      %v1708 = vld [vmem:[%s1704 + $0xc] sm:$0x3]
      %v1709 = vunpack.c.l.bf16 %v1705
      %v1710 = vunpack.c.l.bf16 %v1706
      %v1711 = vunpack.c.l.bf16 %v1707
      %v1712 = vunpack.c.l.bf16 %v1708
      %v1713 = vld [vmem:[%s691] sm:$0x7]
      %1715 = vset.pattern.permute.xlu0 0
      %1716 = vperm.xlu0 %1715, %v1709
      %v1717 = vpop.permute.xlu0 %1716
      %1720 = vset.pattern.permute.xlu0 0
      %1721 = vperm.xlu0 %1720, %v1710
      %v1722 = vpop.permute.xlu0 %1721
      %1725 = vset.pattern.permute.xlu0 0
      %1726 = vperm.xlu0 %1725, %v1711
      %v1727 = vpop.permute.xlu0 %1726
      %1730 = vset.pattern.permute.xlu0 0
      %1731 = vperm.xlu0 %1730, %v1712
      %v1732 = vpop.permute.xlu0 %1731
      %v1734 = vlaneseq
      %v1735 = vshrl.u32 %v1734, 7
      %v1736 = vsub.s32 0, %v1735
      %v1737 = vrot.slane %v1713, %v1736
      %v1738 = vmul.f32 %v1717, %v1737
      %v1739 = vmul.f32 %v1722, %v1737
      %v1740 = vmul.f32 %v1727, %v1737
      %v1741 = vmul.f32 %v1732, %v1737
      %v1742 = vadd.f32 %v1700, %v1738
      %v1743 = vadd.f32 %v1701, %v1739
      %v1744 = vadd.f32 %v1702, %v1740
      %v1745 = vadd.f32 %v1703, %v1741
      %1746 = vset.pattern.permute.xlu0 1
      %1747 = vperm.xlu0 %1746, %v1709
      %v1748 = vpop.permute.xlu0 %1747
      %1750 = vset.pattern.permute.xlu0 1
      %1751 = vperm.xlu0 %1750, %v1710
      %v1752 = vpop.permute.xlu0 %1751
      %1754 = vset.pattern.permute.xlu0 1
      %1755 = vperm.xlu0 %1754, %v1711
      %v1756 = vpop.permute.xlu0 %1755
      %1758 = vset.pattern.permute.xlu0 1
      %1759 = vperm.xlu0 %1758, %v1712
      %v1760 = vpop.permute.xlu0 %1759
      %v1762 = vlaneseq
      %v1763 = vshrl.u32 %v1762, 7
      %v1764 = vsub.s32 1, %v1763
      %v1765 = vrot.slane %v1713, %v1764
      %v1766 = vmul.f32 %v1748, %v1765
      %v1767 = vmul.f32 %v1752, %v1765
      %v1768 = vmul.f32 %v1756, %v1765
      %v1769 = vmul.f32 %v1760, %v1765
      %v1770 = vadd.f32 %v1742, %v1766
      %v1771 = vadd.f32 %v1743, %v1767
      %v1772 = vadd.f32 %v1744, %v1768
      %v1773 = vadd.f32 %v1745, %v1769
      %1774 = vset.pattern.permute.xlu0 2
      %1775 = vperm.xlu0 %1774, %v1709
      %v1776 = vpop.permute.xlu0 %1775
      %1778 = vset.pattern.permute.xlu0 2
      %1779 = vperm.xlu0 %1778, %v1710
      %v1780 = vpop.permute.xlu0 %1779
      %1782 = vset.pattern.permute.xlu0 2
      %1783 = vperm.xlu0 %1782, %v1711
      %v1784 = vpop.permute.xlu0 %1783
      %1786 = vset.pattern.permute.xlu0 2
      %1787 = vperm.xlu0 %1786, %v1712
      %v1788 = vpop.permute.xlu0 %1787
      %v1790 = vlaneseq
      %v1791 = vshrl.u32 %v1790, 7
      %v1792 = vsub.s32 2, %v1791
      %v1793 = vrot.slane %v1713, %v1792
      %v1794 = vmul.f32 %v1776, %v1793
      %v1795 = vmul.f32 %v1780, %v1793
      %v1796 = vmul.f32 %v1784, %v1793
      %v1797 = vmul.f32 %v1788, %v1793
      %v1798 = vadd.f32 %v1770, %v1794
      %v1799 = vadd.f32 %v1771, %v1795
      %v1800 = vadd.f32 %v1772, %v1796
      %v1801 = vadd.f32 %v1773, %v1797
      %v1802 = vld [vmem:[%s583] sm:$0x7]
      %v1803 = vld [vmem:[%s583 + $0x4] sm:$0x7]
      %v1804 = vld [vmem:[%s583 + $0x8] sm:$0x7]
      %v1805 = vld [vmem:[%s583 + $0xc] sm:$0x7]
      %v1806 = vunpack.c.l.bf16 %v1802
      %v1807 = vunpack.c.l.bf16 %v1803
      %v1808 = vunpack.c.l.bf16 %v1804
      %v1809 = vunpack.c.l.bf16 %v1805
      %v1810 = vld [vmem:[%s790] sm:$0x7]
      %1812 = vset.pattern.permute.xlu0 0
      %1813 = vperm.xlu0 %1812, %v1806
      %v1814 = vpop.permute.xlu0 %1813
      %1817 = vset.pattern.permute.xlu0 0
      %1818 = vperm.xlu0 %1817, %v1807
      %v1819 = vpop.permute.xlu0 %1818
      %1822 = vset.pattern.permute.xlu0 0
      %1823 = vperm.xlu0 %1822, %v1808
      %v1824 = vpop.permute.xlu0 %1823
      %1827 = vset.pattern.permute.xlu0 0
      %1828 = vperm.xlu0 %1827, %v1809
      %v1829 = vpop.permute.xlu0 %1828
      %v1831 = vlaneseq
      %v1832 = vshrl.u32 %v1831, 7
      %v1833 = vsub.s32 0, %v1832
      %v1834 = vrot.slane %v1810, %v1833
      %v1835 = vmul.f32 %v1814, %v1834
      %v1836 = vmul.f32 %v1819, %v1834
      %v1837 = vmul.f32 %v1824, %v1834
      %v1838 = vmul.f32 %v1829, %v1834
      %v1843 = vrot.slane %v1835, 1
      %v1844 = vrot.slane %v1836, 1
      %v1845 = vrot.slane %v1837, 1
      %v1846 = vrot.slane %v1838, 1
      %v1851 = vadd.f32 %v1798, %v1843
      %v1852 = vadd.f32 %v1799, %v1844
      %v1853 = vadd.f32 %v1800, %v1845
      %v1854 = vadd.f32 %v1801, %v1846
      %1855 = vset.pattern.permute.xlu0 1
      %1856 = vperm.xlu0 %1855, %v1806
      %v1857 = vpop.permute.xlu0 %1856
      %1859 = vset.pattern.permute.xlu0 1
      %1860 = vperm.xlu0 %1859, %v1807
      %v1861 = vpop.permute.xlu0 %1860
      %1863 = vset.pattern.permute.xlu0 1
      %1864 = vperm.xlu0 %1863, %v1808
      %v1865 = vpop.permute.xlu0 %1864
      %1867 = vset.pattern.permute.xlu0 1
      %1868 = vperm.xlu0 %1867, %v1809
      %v1869 = vpop.permute.xlu0 %1868
      %v1871 = vlaneseq
      %v1872 = vshrl.u32 %v1871, 7
      %v1873 = vsub.s32 1, %v1872
      %v1874 = vrot.slane %v1810, %v1873
      %v1875 = vmul.f32 %v1857, %v1874
      %v1876 = vmul.f32 %v1861, %v1874
      %v1877 = vmul.f32 %v1865, %v1874
      %v1878 = vmul.f32 %v1869, %v1874
      %v1883 = vrot.slane %v1875, 1
      %v1884 = vrot.slane %v1876, 1
      %v1885 = vrot.slane %v1877, 1
      %v1886 = vrot.slane %v1878, 1
      %v1891 = vadd.f32 %v1851, %v1883
      %v1892 = vadd.f32 %v1852, %v1884
      %v1893 = vadd.f32 %v1853, %v1885
      %v1894 = vadd.f32 %v1854, %v1886
      %1895 = vset.pattern.permute.xlu0 2
      %1896 = vperm.xlu0 %1895, %v1806
      %v1897 = vpop.permute.xlu0 %1896
      %1899 = vset.pattern.permute.xlu0 2
      %1900 = vperm.xlu0 %1899, %v1807
      %v1901 = vpop.permute.xlu0 %1900
      %1903 = vset.pattern.permute.xlu0 2
      %1904 = vperm.xlu0 %1903, %v1808
      %v1905 = vpop.permute.xlu0 %1904
      %1907 = vset.pattern.permute.xlu0 2
      %1908 = vperm.xlu0 %1907, %v1809
      %v1909 = vpop.permute.xlu0 %1908
      %v1911 = vlaneseq
      %v1912 = vshrl.u32 %v1911, 7
      %v1913 = vsub.s32 2, %v1912
      %v1914 = vrot.slane %v1810, %v1913
      %v1915 = vmul.f32 %v1897, %v1914
      %v1916 = vmul.f32 %v1901, %v1914
      %v1917 = vmul.f32 %v1905, %v1914
      %v1918 = vmul.f32 %v1909, %v1914
      %v1923 = vrot.slane %v1915, 1
      %v1924 = vrot.slane %v1916, 1
      %v1925 = vrot.slane %v1917, 1
      %v1926 = vrot.slane %v1918, 1
      %v1931 = vadd.f32 %v1891, %v1923
      %v1932 = vadd.f32 %v1892, %v1924
      %v1933 = vadd.f32 %v1893, %v1925
      %v1934 = vadd.f32 %v1894, %v1926
      %v1935 = vld [vmem:[%s1078] sm:$0x3]
      %v1936 = vld [vmem:[%s1078 + $0x4] sm:$0x3]
      %v1937 = vld [vmem:[%s1078 + $0x8] sm:$0x3]
      %v1938 = vld [vmem:[%s1078 + $0xc] sm:$0x3]
      %v1939 = vunpack.c.l.bf16 %v1935
      %v1940 = vunpack.c.l.bf16 %v1936
      %v1941 = vunpack.c.l.bf16 %v1937
      %v1942 = vunpack.c.l.bf16 %v1938
      %v1943 = vld [vmem:[%s889] sm:$0x7]
      %1945 = vset.pattern.permute.xlu0 0
      %1946 = vperm.xlu0 %1945, %v1939
      %v1947 = vpop.permute.xlu0 %1946
      %1950 = vset.pattern.permute.xlu0 0
      %1951 = vperm.xlu0 %1950, %v1940
      %v1952 = vpop.permute.xlu0 %1951
      %1955 = vset.pattern.permute.xlu0 0
      %1956 = vperm.xlu0 %1955, %v1941
      %v1957 = vpop.permute.xlu0 %1956
      %1960 = vset.pattern.permute.xlu0 0
      %1961 = vperm.xlu0 %1960, %v1942
      %v1962 = vpop.permute.xlu0 %1961
      %v1964 = vlaneseq
      %v1965 = vshrl.u32 %v1964, 7
      %v1966 = vsub.s32 0, %v1965
      %v1967 = vrot.slane %v1943, %v1966
      %v1968 = vmul.f32 %v1947, %v1967
      %v1969 = vmul.f32 %v1952, %v1967
      %v1970 = vmul.f32 %v1957, %v1967
      %v1971 = vmul.f32 %v1962, %v1967
      %v1972 = vadd.f32 %v1931, %v1968
      %v1973 = vadd.f32 %v1932, %v1969
      %v1974 = vadd.f32 %v1933, %v1970
      %v1975 = vadd.f32 %v1934, %v1971
      %1976 = vset.pattern.permute.xlu0 1
      %1977 = vperm.xlu0 %1976, %v1939
      %v1978 = vpop.permute.xlu0 %1977
      %1980 = vset.pattern.permute.xlu0 1
      %1981 = vperm.xlu0 %1980, %v1940
      %v1982 = vpop.permute.xlu0 %1981
      %1984 = vset.pattern.permute.xlu0 1
      %1985 = vperm.xlu0 %1984, %v1941
      %v1986 = vpop.permute.xlu0 %1985
      %1988 = vset.pattern.permute.xlu0 1
      %1989 = vperm.xlu0 %1988, %v1942
      %v1990 = vpop.permute.xlu0 %1989
      %v1992 = vlaneseq
      %v1993 = vshrl.u32 %v1992, 7
      %v1994 = vsub.s32 1, %v1993
      %v1995 = vrot.slane %v1943, %v1994
      %v1996 = vmul.f32 %v1978, %v1995
      %v1997 = vmul.f32 %v1982, %v1995
      %v1998 = vmul.f32 %v1986, %v1995
      %v1999 = vmul.f32 %v1990, %v1995
      %v2000 = vadd.f32 %v1972, %v1996
      %v2001 = vadd.f32 %v1973, %v1997
      %v2002 = vadd.f32 %v1974, %v1998
      %v2003 = vadd.f32 %v1975, %v1999
      %2004 = vset.pattern.permute.xlu0 2
      %2005 = vperm.xlu0 %2004, %v1939
      %v2006 = vpop.permute.xlu0 %2005
      %2008 = vset.pattern.permute.xlu0 2
      %2009 = vperm.xlu0 %2008, %v1940
      %v2010 = vpop.permute.xlu0 %2009
      %2012 = vset.pattern.permute.xlu0 2
      %2013 = vperm.xlu0 %2012, %v1941
      %v2014 = vpop.permute.xlu0 %2013
      %2016 = vset.pattern.permute.xlu0 2
      %2017 = vperm.xlu0 %2016, %v1942
      %v2018 = vpop.permute.xlu0 %2017
      %v2020 = vlaneseq
      %v2021 = vshrl.u32 %v2020, 7
      %v2022 = vsub.s32 2, %v2021
      %v2023 = vrot.slane %v1943, %v2022
      %v2024 = vmul.f32 %v2006, %v2023
      %v2025 = vmul.f32 %v2010, %v2023
      %v2026 = vmul.f32 %v2014, %v2023
      %v2027 = vmul.f32 %v2018, %v2023
      %v2028 = vadd.f32 %v2000, %v2024
      %v2029 = vadd.f32 %v2001, %v2025
      %v2030 = vadd.f32 %v2002, %v2026
      %v2031 = vadd.f32 %v2003, %v2027
      %s2032 = scalar_lea.vmem %s250, 220
      %v2033 = vld [vmem:[%s2032] sm:$0x3]
      %v2034 = vld [vmem:[%s2032 + $0x4] sm:$0x3]
      %v2035 = vld [vmem:[%s2032 + $0x8] sm:$0x3]
      %v2036 = vld [vmem:[%s2032 + $0xc] sm:$0x3]
      %v2037 = vunpack.c.l.bf16 %v2033
      %v2038 = vunpack.c.l.bf16 %v2034
      %v2039 = vunpack.c.l.bf16 %v2035
      %v2040 = vunpack.c.l.bf16 %v2036
      %v2041 = vld [vmem:[%s988] sm:$0x7]
      %2043 = vset.pattern.permute.xlu0 0
      %2044 = vperm.xlu0 %2043, %v2037
      %v2045 = vpop.permute.xlu0 %2044
      %2048 = vset.pattern.permute.xlu0 0
      %2049 = vperm.xlu0 %2048, %v2038
      %v2050 = vpop.permute.xlu0 %2049
      %2053 = vset.pattern.permute.xlu0 0
      %2054 = vperm.xlu0 %2053, %v2039
      %v2055 = vpop.permute.xlu0 %2054
      %2058 = vset.pattern.permute.xlu0 0
      %2059 = vperm.xlu0 %2058, %v2040
      %v2060 = vpop.permute.xlu0 %2059
      %v2062 = vlaneseq
      %v2063 = vshrl.u32 %v2062, 7
      %v2064 = vsub.s32 0, %v2063
      %v2065 = vrot.slane %v2041, %v2064
      %v2066 = vmul.f32 %v2045, %v2065
      %v2067 = vmul.f32 %v2050, %v2065
      %v2068 = vmul.f32 %v2055, %v2065
      %v2069 = vmul.f32 %v2060, %v2065
      %v2070 = vadd.f32 %v2028, %v2066
      %v2071 = vadd.f32 %v2029, %v2067
      %v2072 = vadd.f32 %v2030, %v2068
      %v2073 = vadd.f32 %v2031, %v2069
      %2074 = vset.pattern.permute.xlu0 1
      %2075 = vperm.xlu0 %2074, %v2037
      %v2076 = vpop.permute.xlu0 %2075
      %2078 = vset.pattern.permute.xlu0 1
      %2079 = vperm.xlu0 %2078, %v2038
      %v2080 = vpop.permute.xlu0 %2079
      %2082 = vset.pattern.permute.xlu0 1
      %2083 = vperm.xlu0 %2082, %v2039
      %v2084 = vpop.permute.xlu0 %2083
      %2086 = vset.pattern.permute.xlu0 1
      %2087 = vperm.xlu0 %2086, %v2040
      %v2088 = vpop.permute.xlu0 %2087
      %v2090 = vlaneseq
      %v2091 = vshrl.u32 %v2090, 7
      %v2092 = vsub.s32 1, %v2091
      %v2093 = vrot.slane %v2041, %v2092
      %v2094 = vmul.f32 %v2076, %v2093
      %v2095 = vmul.f32 %v2080, %v2093
      %v2096 = vmul.f32 %v2084, %v2093
      %v2097 = vmul.f32 %v2088, %v2093
      %v2098 = vadd.f32 %v2070, %v2094
      %v2099 = vadd.f32 %v2071, %v2095
      %v2100 = vadd.f32 %v2072, %v2096
      %v2101 = vadd.f32 %v2073, %v2097
      %2102 = vset.pattern.permute.xlu0 2
      %2103 = vperm.xlu0 %2102, %v2037
      %v2104 = vpop.permute.xlu0 %2103
      %2106 = vset.pattern.permute.xlu0 2
      %2107 = vperm.xlu0 %2106, %v2038
      %v2108 = vpop.permute.xlu0 %2107
      %2110 = vset.pattern.permute.xlu0 2
      %2111 = vperm.xlu0 %2110, %v2039
      %v2112 = vpop.permute.xlu0 %2111
      %2114 = vset.pattern.permute.xlu0 2
      %2115 = vperm.xlu0 %2114, %v2040
      %v2116 = vpop.permute.xlu0 %2115
      %v2118 = vlaneseq
      %v2119 = vshrl.u32 %v2118, 7
      %v2120 = vsub.s32 2, %v2119
      %v2121 = vrot.slane %v2041, %v2120
      %v2122 = vmul.f32 %v2104, %v2121
      %v2123 = vmul.f32 %v2108, %v2121
      %v2124 = vmul.f32 %v2112, %v2121
      %v2125 = vmul.f32 %v2116, %v2121
      %v2126 = vadd.f32 %v2098, %v2122
      %v2127 = vadd.f32 %v2099, %v2123
      %v2128 = vadd.f32 %v2100, %v2124
      %v2129 = vadd.f32 %v2101, %v2125
      %v2130 = vld [vmem:[%s880] sm:$0x7]
      %v2131 = vld [vmem:[%s880 + $0x4] sm:$0x7]
      %v2132 = vld [vmem:[%s880 + $0x8] sm:$0x7]
      %v2133 = vld [vmem:[%s880 + $0xc] sm:$0x7]
      %v2134 = vunpack.c.l.bf16 %v2130
      %v2135 = vunpack.c.l.bf16 %v2131
      %v2136 = vunpack.c.l.bf16 %v2132
      %v2137 = vunpack.c.l.bf16 %v2133
      %v2138 = vld [vmem:[%s1087] sm:$0x7]
      %2140 = vset.pattern.permute.xlu0 0
      %2141 = vperm.xlu0 %2140, %v2134
      %v2142 = vpop.permute.xlu0 %2141
      %2145 = vset.pattern.permute.xlu0 0
      %2146 = vperm.xlu0 %2145, %v2135
      %v2147 = vpop.permute.xlu0 %2146
      %2150 = vset.pattern.permute.xlu0 0
      %2151 = vperm.xlu0 %2150, %v2136
      %v2152 = vpop.permute.xlu0 %2151
      %2155 = vset.pattern.permute.xlu0 0
      %2156 = vperm.xlu0 %2155, %v2137
      %v2157 = vpop.permute.xlu0 %2156
      %v2159 = vlaneseq
      %v2160 = vshrl.u32 %v2159, 7
      %v2161 = vsub.s32 0, %v2160
      %v2162 = vrot.slane %v2138, %v2161
      %v2163 = vmul.f32 %v2142, %v2162
      %v2164 = vmul.f32 %v2147, %v2162
      %v2165 = vmul.f32 %v2152, %v2162
      %v2166 = vmul.f32 %v2157, %v2162
      %v2171 = vrot.slane %v2163, 1
      %v2172 = vrot.slane %v2164, 1
      %v2173 = vrot.slane %v2165, 1
      %v2174 = vrot.slane %v2166, 1
      %v2179 = vadd.f32 %v2126, %v2171
      %v2180 = vadd.f32 %v2127, %v2172
      %v2181 = vadd.f32 %v2128, %v2173
      %v2182 = vadd.f32 %v2129, %v2174
      %2183 = vset.pattern.permute.xlu0 1
      %2184 = vperm.xlu0 %2183, %v2134
      %v2185 = vpop.permute.xlu0 %2184
      %2187 = vset.pattern.permute.xlu0 1
      %2188 = vperm.xlu0 %2187, %v2135
      %v2189 = vpop.permute.xlu0 %2188
      %2191 = vset.pattern.permute.xlu0 1
      %2192 = vperm.xlu0 %2191, %v2136
      %v2193 = vpop.permute.xlu0 %2192
      %2195 = vset.pattern.permute.xlu0 1
      %2196 = vperm.xlu0 %2195, %v2137
      %v2197 = vpop.permute.xlu0 %2196
      %v2199 = vlaneseq
      %v2200 = vshrl.u32 %v2199, 7
      %v2201 = vsub.s32 1, %v2200
      %v2202 = vrot.slane %v2138, %v2201
      %v2203 = vmul.f32 %v2185, %v2202
      %v2204 = vmul.f32 %v2189, %v2202
      %v2205 = vmul.f32 %v2193, %v2202
      %v2206 = vmul.f32 %v2197, %v2202
      %v2211 = vrot.slane %v2203, 1
      %v2212 = vrot.slane %v2204, 1
      %v2213 = vrot.slane %v2205, 1
      %v2214 = vrot.slane %v2206, 1
      %v2219 = vadd.f32 %v2179, %v2211
      %v2220 = vadd.f32 %v2180, %v2212
      %v2221 = vadd.f32 %v2181, %v2213
      %v2222 = vadd.f32 %v2182, %v2214
      %2223 = vset.pattern.permute.xlu0 2
      %2224 = vperm.xlu0 %2223, %v2134
      %v2225 = vpop.permute.xlu0 %2224
      %2227 = vset.pattern.permute.xlu0 2
      %2228 = vperm.xlu0 %2227, %v2135
      %v2229 = vpop.permute.xlu0 %2228
      %2231 = vset.pattern.permute.xlu0 2
      %2232 = vperm.xlu0 %2231, %v2136
      %v2233 = vpop.permute.xlu0 %2232
      %2235 = vset.pattern.permute.xlu0 2
      %2236 = vperm.xlu0 %2235, %v2137
      %v2237 = vpop.permute.xlu0 %2236
      %v2239 = vlaneseq
      %v2240 = vshrl.u32 %v2239, 7
      %v2241 = vsub.s32 2, %v2240
      %v2242 = vrot.slane %v2138, %v2241
      %v2243 = vmul.f32 %v2225, %v2242
      %v2244 = vmul.f32 %v2229, %v2242
      %v2245 = vmul.f32 %v2233, %v2242
      %v2246 = vmul.f32 %v2237, %v2242
      %v2251 = vrot.slane %v2243, 1
      %v2252 = vrot.slane %v2244, 1
      %v2253 = vrot.slane %v2245, 1
      %v2254 = vrot.slane %v2246, 1
      %v2259 = vadd.f32 %v2219, %v2251
      %v2260 = vadd.f32 %v2220, %v2252
      %v2261 = vadd.f32 %v2221, %v2253
      %v2262 = vadd.f32 %v2222, %v2254
      %v2263 = vld [vmem:[%s4] sm:$0x1]
      %v2264 = vlaneseq
      %v2265 = vshrl.u32 %v2264, 7
      %v2266 = vsub.s32 0, %v2265
      %v2267 = vrot.slane %v2263, %v2266
      %v2268 = vmul.f32 %v2259, %v2267
      %v2269 = vmul.f32 %v2260, %v2267
      %v2270 = vmul.f32 %v2261, %v2267
      %v2271 = vmul.f32 %v2262, %v2267
      %v2272 = vld [vmem:[%s5] sm:$0x1]
      %v2273 = vlaneseq
      %v2274 = vshrl.u32 %v2273, 7
      %v2275 = vsub.s32 0, %v2274
      %v2276 = vrot.slane %v2272, %v2275
      %v2277 = vadd.f32 %v2268, %v2276
      %v2278 = vadd.f32 %v2269, %v2276
      %v2279 = vadd.f32 %v2270, %v2276
      %v2280 = vadd.f32 %v2271, %v2276
      %v2281 = vmul.f32 %v2277, 0.5
      %v2282 = vmul.f32 %v2278, 0.5
      %v2283 = vmul.f32 %v2279, 0.5
      %v2284 = vmul.f32 %v2280, 0.5
      %v2285 = vmul.f32 %v2277, 0.70710677
      %v2286 = vmul.f32 %v2278, 0.70710677
      %v2287 = vmul.f32 %v2279, 0.70710677
      %v2288 = vmul.f32 %v2280, 0.70710677
      %v2289 = verf.f32.pop %v2285
      %v2290 = verf.f32.pop %v2286
      %v2291 = verf.f32.pop %v2287
      %v2292 = verf.f32.pop %v2288
      %v2293 = vadd.f32 %v2289, 1.0
      %v2294 = vadd.f32 %v2290, 1.0
      %v2295 = vadd.f32 %v2291, 1.0
      %v2296 = vadd.f32 %v2292, 1.0
      %v2297 = vmul.f32 %v2281, %v2293
      %v2298 = vmul.f32 %v2282, %v2294
      %v2299 = vmul.f32 %v2283, %v2295
      %v2300 = vmul.f32 %v2284, %v2296
      %v2301 = vpack.c.bf16 %v2297, %v2297
      %v2302 = vpack.c.bf16 %v2298, %v2298
      %v2303 = vpack.c.bf16 %v2299, %v2299
      %v2304 = vpack.c.bf16 %v2300, %v2300
      %v2309 = vunpack.c.l.b16 %v2301
      %v2310 = vunpack.c.l.b16 %v2302
      %v2311 = vunpack.c.l.b16 %v2303
      %v2312 = vunpack.c.l.b16 %v2304
      %v2313 = vpack.c.b16 %v2309, %v2309
      %v2314 = vpack.c.b16 %v2310, %v2310
      %v2315 = vpack.c.b16 %v2311, %v2311
      %v2316 = vpack.c.b16 %v2312, %v2312
      %v2318 = vshrl.u32 %v2313, 16
      %v2320 = vrot.slane %v2318, 7
      %v2321 = vshll.u32 %v2313, 16
      %v2323 = vor.u32 %v2320, %v2321
      %v2325 = vshrl.u32 %v2314, 16
      %v2327 = vrot.slane %v2325, 7
      %v2328 = vshll.u32 %v2314, 16
      %v2330 = vor.u32 %v2327, %v2328
      %v2332 = vshrl.u32 %v2315, 16
      %v2334 = vrot.slane %v2332, 7
      %v2335 = vshll.u32 %v2315, 16
      %v2337 = vor.u32 %v2334, %v2335
      %v2339 = vshrl.u32 %v2316, 16
      %v2341 = vrot.slane %v2339, 7
      %v2342 = vshll.u32 %v2316, 16
      %v2344 = vor.u32 %v2341, %v2342
      %s2349 = scalar_lea.vmem [#allocation2], 28
      %v2350 = vld [vmem:[%s2349] sm:$0x7]
      %v2351 = vsel %vm1266, %v2323, %v2350
      %2352 = vst [vmem:[%s2349] sm:$0x7] %v2351
      %v2353 = vld [vmem:[%s2349 + $0x4] sm:$0x7]
      %v2354 = vsel %vm1266, %v2330, %v2353
      %2355 = vst [vmem:[%s2349 + $0x4] sm:$0x7] %v2354
      %v2356 = vld [vmem:[%s2349 + $0x8] sm:$0x7]
      %v2357 = vsel %vm1266, %v2337, %v2356
      %2358 = vst [vmem:[%s2349 + $0x8] sm:$0x7] %v2357
      %v2359 = vld [vmem:[%s2349 + $0xc] sm:$0x7]
      %v2360 = vsel %vm1266, %v2344, %v2359
      %2361 = vst [vmem:[%s2349 + $0xc] sm:$0x7] %v2360
      %v2362 = vld [vmem:[%s880] sm:$0x3]
      %v2363 = vld [vmem:[%s880 + $0x4] sm:$0x3]
      %v2364 = vld [vmem:[%s880 + $0x8] sm:$0x3]
      %v2365 = vld [vmem:[%s880 + $0xc] sm:$0x3]
      %v2366 = vunpack.c.l.bf16 %v2362
      %v2367 = vunpack.c.l.bf16 %v2363
      %v2368 = vunpack.c.l.bf16 %v2364
      %v2369 = vunpack.c.l.bf16 %v2365
      %v2370 = vld [vmem:[%s1] sm:$0x7]
      %2372 = vset.pattern.permute.xlu0 0
      %2373 = vperm.xlu0 %2372, %v2366
      %v2374 = vpop.permute.xlu0 %2373
      %2377 = vset.pattern.permute.xlu0 0
      %2378 = vperm.xlu0 %2377, %v2367
      %v2379 = vpop.permute.xlu0 %2378
      %2382 = vset.pattern.permute.xlu0 0
      %2383 = vperm.xlu0 %2382, %v2368
      %v2384 = vpop.permute.xlu0 %2383
      %2387 = vset.pattern.permute.xlu0 0
      %2388 = vperm.xlu0 %2387, %v2369
      %v2389 = vpop.permute.xlu0 %2388
      %v2391 = vlaneseq
      %v2392 = vshrl.u32 %v2391, 7
      %v2393 = vsub.s32 0, %v2392
      %v2394 = vrot.slane %v2370, %v2393
      %v2395 = vmul.f32 %v2374, %v2394
      %v2396 = vmul.f32 %v2379, %v2394
      %v2397 = vmul.f32 %v2384, %v2394
      %v2398 = vmul.f32 %v2389, %v2394
      %v2399 = vadd.f32 %v2395, 0.0
      %v2400 = vadd.f32 %v2396, 0.0
      %v2401 = vadd.f32 %v2397, 0.0
      %v2402 = vadd.f32 %v2398, 0.0
      %2403 = vset.pattern.permute.xlu0 1
      %2404 = vperm.xlu0 %2403, %v2366
      %v2405 = vpop.permute.xlu0 %2404
      %2407 = vset.pattern.permute.xlu0 1
      %2408 = vperm.xlu0 %2407, %v2367
      %v2409 = vpop.permute.xlu0 %2408
      %2411 = vset.pattern.permute.xlu0 1
      %2412 = vperm.xlu0 %2411, %v2368
      %v2413 = vpop.permute.xlu0 %2412
      %2415 = vset.pattern.permute.xlu0 1
      %2416 = vperm.xlu0 %2415, %v2369
      %v2417 = vpop.permute.xlu0 %2416
      %v2419 = vlaneseq
      %v2420 = vshrl.u32 %v2419, 7
      %v2421 = vsub.s32 1, %v2420
      %v2422 = vrot.slane %v2370, %v2421
      %v2423 = vmul.f32 %v2405, %v2422
      %v2424 = vmul.f32 %v2409, %v2422
      %v2425 = vmul.f32 %v2413, %v2422
      %v2426 = vmul.f32 %v2417, %v2422
      %v2427 = vadd.f32 %v2399, %v2423
      %v2428 = vadd.f32 %v2400, %v2424
      %v2429 = vadd.f32 %v2401, %v2425
      %v2430 = vadd.f32 %v2402, %v2426
      %2431 = vset.pattern.permute.xlu0 2
      %2432 = vperm.xlu0 %2431, %v2366
      %v2433 = vpop.permute.xlu0 %2432
      %2435 = vset.pattern.permute.xlu0 2
      %2436 = vperm.xlu0 %2435, %v2367
      %v2437 = vpop.permute.xlu0 %2436
      %2439 = vset.pattern.permute.xlu0 2
      %2440 = vperm.xlu0 %2439, %v2368
      %v2441 = vpop.permute.xlu0 %2440
      %2443 = vset.pattern.permute.xlu0 2
      %2444 = vperm.xlu0 %2443, %v2369
      %v2445 = vpop.permute.xlu0 %2444
      %v2447 = vlaneseq
      %v2448 = vshrl.u32 %v2447, 7
      %v2449 = vsub.s32 2, %v2448
      %v2450 = vrot.slane %v2370, %v2449
      %v2451 = vmul.f32 %v2433, %v2450
      %v2452 = vmul.f32 %v2437, %v2450
      %v2453 = vmul.f32 %v2441, %v2450
      %v2454 = vmul.f32 %v2445, %v2450
      %v2455 = vadd.f32 %v2427, %v2451
      %v2456 = vadd.f32 %v2428, %v2452
      %v2457 = vadd.f32 %v2429, %v2453
      %v2458 = vadd.f32 %v2430, %v2454
      %v2459 = vld [vmem:[%s979] sm:$0x3]
      %v2460 = vld [vmem:[%s979 + $0x4] sm:$0x3]
      %v2461 = vld [vmem:[%s979 + $0x8] sm:$0x3]
      %v2462 = vld [vmem:[%s979 + $0xc] sm:$0x3]
      %v2463 = vunpack.c.l.bf16 %v2459
      %v2464 = vunpack.c.l.bf16 %v2460
      %v2465 = vunpack.c.l.bf16 %v2461
      %v2466 = vunpack.c.l.bf16 %v2462
      %v2467 = vld [vmem:[%s394] sm:$0x7]
      %2469 = vset.pattern.permute.xlu0 0
      %2470 = vperm.xlu0 %2469, %v2463
      %v2471 = vpop.permute.xlu0 %2470
      %2474 = vset.pattern.permute.xlu0 0
      %2475 = vperm.xlu0 %2474, %v2464
      %v2476 = vpop.permute.xlu0 %2475
      %2479 = vset.pattern.permute.xlu0 0
      %2480 = vperm.xlu0 %2479, %v2465
      %v2481 = vpop.permute.xlu0 %2480
      %2484 = vset.pattern.permute.xlu0 0
      %2485 = vperm.xlu0 %2484, %v2466
      %v2486 = vpop.permute.xlu0 %2485
      %v2488 = vlaneseq
      %v2489 = vshrl.u32 %v2488, 7
      %v2490 = vsub.s32 0, %v2489
      %v2491 = vrot.slane %v2467, %v2490
      %v2492 = vmul.f32 %v2471, %v2491
      %v2493 = vmul.f32 %v2476, %v2491
      %v2494 = vmul.f32 %v2481, %v2491
      %v2495 = vmul.f32 %v2486, %v2491
      %v2496 = vadd.f32 %v2455, %v2492
      %v2497 = vadd.f32 %v2456, %v2493
      %v2498 = vadd.f32 %v2457, %v2494
      %v2499 = vadd.f32 %v2458, %v2495
      %2500 = vset.pattern.permute.xlu0 1
      %2501 = vperm.xlu0 %2500, %v2463
      %v2502 = vpop.permute.xlu0 %2501
      %2504 = vset.pattern.permute.xlu0 1
      %2505 = vperm.xlu0 %2504, %v2464
      %v2506 = vpop.permute.xlu0 %2505
      %2508 = vset.pattern.permute.xlu0 1
      %2509 = vperm.xlu0 %2508, %v2465
      %v2510 = vpop.permute.xlu0 %2509
      %2512 = vset.pattern.permute.xlu0 1
      %2513 = vperm.xlu0 %2512, %v2466
      %v2514 = vpop.permute.xlu0 %2513
      %v2516 = vlaneseq
      %v2517 = vshrl.u32 %v2516, 7
      %v2518 = vsub.s32 1, %v2517
      %v2519 = vrot.slane %v2467, %v2518
      %v2520 = vmul.f32 %v2502, %v2519
      %v2521 = vmul.f32 %v2506, %v2519
      %v2522 = vmul.f32 %v2510, %v2519
      %v2523 = vmul.f32 %v2514, %v2519
      %v2524 = vadd.f32 %v2496, %v2520
      %v2525 = vadd.f32 %v2497, %v2521
      %v2526 = vadd.f32 %v2498, %v2522
      %v2527 = vadd.f32 %v2499, %v2523
      %2528 = vset.pattern.permute.xlu0 2
      %2529 = vperm.xlu0 %2528, %v2463
      %v2530 = vpop.permute.xlu0 %2529
      %2532 = vset.pattern.permute.xlu0 2
      %2533 = vperm.xlu0 %2532, %v2464
      %v2534 = vpop.permute.xlu0 %2533
      %2536 = vset.pattern.permute.xlu0 2
      %2537 = vperm.xlu0 %2536, %v2465
      %v2538 = vpop.permute.xlu0 %2537
      %2540 = vset.pattern.permute.xlu0 2
      %2541 = vperm.xlu0 %2540, %v2466
      %v2542 = vpop.permute.xlu0 %2541
      %v2544 = vlaneseq
      %v2545 = vshrl.u32 %v2544, 7
      %v2546 = vsub.s32 2, %v2545
      %v2547 = vrot.slane %v2467, %v2546
      %v2548 = vmul.f32 %v2530, %v2547
      %v2549 = vmul.f32 %v2534, %v2547
      %v2550 = vmul.f32 %v2538, %v2547
      %v2551 = vmul.f32 %v2542, %v2547
      %v2552 = vadd.f32 %v2524, %v2548
      %v2553 = vadd.f32 %v2525, %v2549
      %v2554 = vadd.f32 %v2526, %v2550
      %v2555 = vadd.f32 %v2527, %v2551
      %v2556 = vld [vmem:[%s1078] sm:$0x3]
      %v2557 = vld [vmem:[%s1078 + $0x4] sm:$0x3]
      %v2558 = vld [vmem:[%s1078 + $0x8] sm:$0x3]
      %v2559 = vld [vmem:[%s1078 + $0xc] sm:$0x3]
      %v2560 = vunpack.c.l.bf16 %v2556
      %v2561 = vunpack.c.l.bf16 %v2557
      %v2562 = vunpack.c.l.bf16 %v2558
      %v2563 = vunpack.c.l.bf16 %v2559
      %v2564 = vld [vmem:[%s493] sm:$0x7]
      %2566 = vset.pattern.permute.xlu0 0
      %2567 = vperm.xlu0 %2566, %v2560
      %v2568 = vpop.permute.xlu0 %2567
      %2571 = vset.pattern.permute.xlu0 0
      %2572 = vperm.xlu0 %2571, %v2561
      %v2573 = vpop.permute.xlu0 %2572
      %2576 = vset.pattern.permute.xlu0 0
      %2577 = vperm.xlu0 %2576, %v2562
      %v2578 = vpop.permute.xlu0 %2577
      %2581 = vset.pattern.permute.xlu0 0
      %2582 = vperm.xlu0 %2581, %v2563
      %v2583 = vpop.permute.xlu0 %2582
      %v2585 = vlaneseq
      %v2586 = vshrl.u32 %v2585, 7
      %v2587 = vsub.s32 0, %v2586
      %v2588 = vrot.slane %v2564, %v2587
      %v2589 = vmul.f32 %v2568, %v2588
      %v2590 = vmul.f32 %v2573, %v2588
      %v2591 = vmul.f32 %v2578, %v2588
      %v2592 = vmul.f32 %v2583, %v2588
      %v2593 = vadd.f32 %v2552, %v2589
      %v2594 = vadd.f32 %v2553, %v2590
      %v2595 = vadd.f32 %v2554, %v2591
      %v2596 = vadd.f32 %v2555, %v2592
      %2597 = vset.pattern.permute.xlu0 1
      %2598 = vperm.xlu0 %2597, %v2560
      %v2599 = vpop.permute.xlu0 %2598
      %2601 = vset.pattern.permute.xlu0 1
      %2602 = vperm.xlu0 %2601, %v2561
      %v2603 = vpop.permute.xlu0 %2602
      %2605 = vset.pattern.permute.xlu0 1
      %2606 = vperm.xlu0 %2605, %v2562
      %v2607 = vpop.permute.xlu0 %2606
      %2609 = vset.pattern.permute.xlu0 1
      %2610 = vperm.xlu0 %2609, %v2563
      %v2611 = vpop.permute.xlu0 %2610
      %v2613 = vlaneseq
      %v2614 = vshrl.u32 %v2613, 7
      %v2615 = vsub.s32 1, %v2614
      %v2616 = vrot.slane %v2564, %v2615
      %v2617 = vmul.f32 %v2599, %v2616
      %v2618 = vmul.f32 %v2603, %v2616
      %v2619 = vmul.f32 %v2607, %v2616
      %v2620 = vmul.f32 %v2611, %v2616
      %v2621 = vadd.f32 %v2593, %v2617
      %v2622 = vadd.f32 %v2594, %v2618
      %v2623 = vadd.f32 %v2595, %v2619
      %v2624 = vadd.f32 %v2596, %v2620
      %2625 = vset.pattern.permute.xlu0 2
      %2626 = vperm.xlu0 %2625, %v2560
      %v2627 = vpop.permute.xlu0 %2626
      %2629 = vset.pattern.permute.xlu0 2
      %2630 = vperm.xlu0 %2629, %v2561
      %v2631 = vpop.permute.xlu0 %2630
      %2633 = vset.pattern.permute.xlu0 2
      %2634 = vperm.xlu0 %2633, %v2562
      %v2635 = vpop.permute.xlu0 %2634
      %2637 = vset.pattern.permute.xlu0 2
      %2638 = vperm.xlu0 %2637, %v2563
      %v2639 = vpop.permute.xlu0 %2638
      %v2641 = vlaneseq
      %v2642 = vshrl.u32 %v2641, 7
      %v2643 = vsub.s32 2, %v2642
      %v2644 = vrot.slane %v2564, %v2643
      %v2645 = vmul.f32 %v2627, %v2644
      %v2646 = vmul.f32 %v2631, %v2644
      %v2647 = vmul.f32 %v2635, %v2644
      %v2648 = vmul.f32 %v2639, %v2644
      %v2649 = vadd.f32 %v2621, %v2645
      %v2650 = vadd.f32 %v2622, %v2646
      %v2651 = vadd.f32 %v2623, %v2647
      %v2652 = vadd.f32 %v2624, %v2648
      %s2653 = scalar_lea.vmem %s250, 240
      %v2654 = vld [vmem:[%s2653] sm:$0x3]
      %v2655 = vld [vmem:[%s2653 + $0x4] sm:$0x3]
      %v2656 = vld [vmem:[%s2653 + $0x8] sm:$0x3]
      %v2657 = vld [vmem:[%s2653 + $0xc] sm:$0x3]
      %v2658 = vunpack.c.l.bf16 %v2654
      %v2659 = vunpack.c.l.bf16 %v2655
      %v2660 = vunpack.c.l.bf16 %v2656
      %v2661 = vunpack.c.l.bf16 %v2657
      %v2662 = vld [vmem:[%s592] sm:$0x7]
      %2664 = vset.pattern.permute.xlu0 0
      %2665 = vperm.xlu0 %2664, %v2658
      %v2666 = vpop.permute.xlu0 %2665
      %2669 = vset.pattern.permute.xlu0 0
      %2670 = vperm.xlu0 %2669, %v2659
      %v2671 = vpop.permute.xlu0 %2670
      %2674 = vset.pattern.permute.xlu0 0
      %2675 = vperm.xlu0 %2674, %v2660
      %v2676 = vpop.permute.xlu0 %2675
      %2679 = vset.pattern.permute.xlu0 0
      %2680 = vperm.xlu0 %2679, %v2661
      %v2681 = vpop.permute.xlu0 %2680
      %v2683 = vlaneseq
      %v2684 = vshrl.u32 %v2683, 7
      %v2685 = vsub.s32 0, %v2684
      %v2686 = vrot.slane %v2662, %v2685
      %v2687 = vmul.f32 %v2666, %v2686
      %v2688 = vmul.f32 %v2671, %v2686
      %v2689 = vmul.f32 %v2676, %v2686
      %v2690 = vmul.f32 %v2681, %v2686
      %v2691 = vadd.f32 %v2649, %v2687
      %v2692 = vadd.f32 %v2650, %v2688
      %v2693 = vadd.f32 %v2651, %v2689
      %v2694 = vadd.f32 %v2652, %v2690
      %2695 = vset.pattern.permute.xlu0 1
      %2696 = vperm.xlu0 %2695, %v2658
      %v2697 = vpop.permute.xlu0 %2696
      %2699 = vset.pattern.permute.xlu0 1
      %2700 = vperm.xlu0 %2699, %v2659
      %v2701 = vpop.permute.xlu0 %2700
      %2703 = vset.pattern.permute.xlu0 1
      %2704 = vperm.xlu0 %2703, %v2660
      %v2705 = vpop.permute.xlu0 %2704
      %2707 = vset.pattern.permute.xlu0 1
      %2708 = vperm.xlu0 %2707, %v2661
      %v2709 = vpop.permute.xlu0 %2708
      %v2711 = vlaneseq
      %v2712 = vshrl.u32 %v2711, 7
      %v2713 = vsub.s32 1, %v2712
      %v2714 = vrot.slane %v2662, %v2713
      %v2715 = vmul.f32 %v2697, %v2714
      %v2716 = vmul.f32 %v2701, %v2714
      %v2717 = vmul.f32 %v2705, %v2714
      %v2718 = vmul.f32 %v2709, %v2714
      %v2719 = vadd.f32 %v2691, %v2715
      %v2720 = vadd.f32 %v2692, %v2716
      %v2721 = vadd.f32 %v2693, %v2717
      %v2722 = vadd.f32 %v2694, %v2718
      %2723 = vset.pattern.permute.xlu0 2
      %2724 = vperm.xlu0 %2723, %v2658
      %v2725 = vpop.permute.xlu0 %2724
      %2727 = vset.pattern.permute.xlu0 2
      %2728 = vperm.xlu0 %2727, %v2659
      %v2729 = vpop.permute.xlu0 %2728
      %2731 = vset.pattern.permute.xlu0 2
      %2732 = vperm.xlu0 %2731, %v2660
      %v2733 = vpop.permute.xlu0 %2732
      %2735 = vset.pattern.permute.xlu0 2
      %2736 = vperm.xlu0 %2735, %v2661
      %v2737 = vpop.permute.xlu0 %2736
      %v2739 = vlaneseq
      %v2740 = vshrl.u32 %v2739, 7
      %v2741 = vsub.s32 2, %v2740
      %v2742 = vrot.slane %v2662, %v2741
      %v2743 = vmul.f32 %v2725, %v2742
      %v2744 = vmul.f32 %v2729, %v2742
      %v2745 = vmul.f32 %v2733, %v2742
      %v2746 = vmul.f32 %v2737, %v2742
      %v2747 = vadd.f32 %v2719, %v2743
      %v2748 = vadd.f32 %v2720, %v2744
      %v2749 = vadd.f32 %v2721, %v2745
      %v2750 = vadd.f32 %v2722, %v2746
      %s2751 = scalar_lea.vmem %s250, 260
      %v2752 = vld [vmem:[%s2751] sm:$0x3]
      %v2753 = vld [vmem:[%s2751 + $0x4] sm:$0x3]
      %v2754 = vld [vmem:[%s2751 + $0x8] sm:$0x3]
      %v2755 = vld [vmem:[%s2751 + $0xc] sm:$0x3]
      %v2756 = vunpack.c.l.bf16 %v2752
      %v2757 = vunpack.c.l.bf16 %v2753
      %v2758 = vunpack.c.l.bf16 %v2754
      %v2759 = vunpack.c.l.bf16 %v2755
      %v2760 = vld [vmem:[%s691] sm:$0x7]
      %2762 = vset.pattern.permute.xlu0 0
      %2763 = vperm.xlu0 %2762, %v2756
      %v2764 = vpop.permute.xlu0 %2763
      %2767 = vset.pattern.permute.xlu0 0
      %2768 = vperm.xlu0 %2767, %v2757
      %v2769 = vpop.permute.xlu0 %2768
      %2772 = vset.pattern.permute.xlu0 0
      %2773 = vperm.xlu0 %2772, %v2758
      %v2774 = vpop.permute.xlu0 %2773
      %2777 = vset.pattern.permute.xlu0 0
      %2778 = vperm.xlu0 %2777, %v2759
      %v2779 = vpop.permute.xlu0 %2778
      %v2781 = vlaneseq
      %v2782 = vshrl.u32 %v2781, 7
      %v2783 = vsub.s32 0, %v2782
      %v2784 = vrot.slane %v2760, %v2783
      %v2785 = vmul.f32 %v2764, %v2784
      %v2786 = vmul.f32 %v2769, %v2784
      %v2787 = vmul.f32 %v2774, %v2784
      %v2788 = vmul.f32 %v2779, %v2784
      %v2789 = vadd.f32 %v2747, %v2785
      %v2790 = vadd.f32 %v2748, %v2786
      %v2791 = vadd.f32 %v2749, %v2787
      %v2792 = vadd.f32 %v2750, %v2788
      %2793 = vset.pattern.permute.xlu0 1
      %2794 = vperm.xlu0 %2793, %v2756
      %v2795 = vpop.permute.xlu0 %2794
      %2797 = vset.pattern.permute.xlu0 1
      %2798 = vperm.xlu0 %2797, %v2757
      %v2799 = vpop.permute.xlu0 %2798
      %2801 = vset.pattern.permute.xlu0 1
      %2802 = vperm.xlu0 %2801, %v2758
      %v2803 = vpop.permute.xlu0 %2802
      %2805 = vset.pattern.permute.xlu0 1
      %2806 = vperm.xlu0 %2805, %v2759
      %v2807 = vpop.permute.xlu0 %2806
      %v2809 = vlaneseq
      %v2810 = vshrl.u32 %v2809, 7
      %v2811 = vsub.s32 1, %v2810
      %v2812 = vrot.slane %v2760, %v2811
      %v2813 = vmul.f32 %v2795, %v2812
      %v2814 = vmul.f32 %v2799, %v2812
      %v2815 = vmul.f32 %v2803, %v2812
      %v2816 = vmul.f32 %v2807, %v2812
      %v2817 = vadd.f32 %v2789, %v2813
      %v2818 = vadd.f32 %v2790, %v2814
      %v2819 = vadd.f32 %v2791, %v2815
      %v2820 = vadd.f32 %v2792, %v2816
      %2821 = vset.pattern.permute.xlu0 2
      %2822 = vperm.xlu0 %2821, %v2756
      %v2823 = vpop.permute.xlu0 %2822
      %2825 = vset.pattern.permute.xlu0 2
      %2826 = vperm.xlu0 %2825, %v2757
      %v2827 = vpop.permute.xlu0 %2826
      %2829 = vset.pattern.permute.xlu0 2
      %2830 = vperm.xlu0 %2829, %v2758
      %v2831 = vpop.permute.xlu0 %2830
      %2833 = vset.pattern.permute.xlu0 2
      %2834 = vperm.xlu0 %2833, %v2759
      %v2835 = vpop.permute.xlu0 %2834
      %v2837 = vlaneseq
      %v2838 = vshrl.u32 %v2837, 7
      %v2839 = vsub.s32 2, %v2838
      %v2840 = vrot.slane %v2760, %v2839
      %v2841 = vmul.f32 %v2823, %v2840
      %v2842 = vmul.f32 %v2827, %v2840
      %v2843 = vmul.f32 %v2831, %v2840
      %v2844 = vmul.f32 %v2835, %v2840
      %v2845 = vadd.f32 %v2817, %v2841
      %v2846 = vadd.f32 %v2818, %v2842
      %v2847 = vadd.f32 %v2819, %v2843
      %v2848 = vadd.f32 %v2820, %v2844
      %s2849 = scalar_lea.vmem %s250, 280
      %v2850 = vld [vmem:[%s2849] sm:$0x3]
      %v2851 = vld [vmem:[%s2849 + $0x4] sm:$0x3]
      %v2852 = vld [vmem:[%s2849 + $0x8] sm:$0x3]
      %v2853 = vld [vmem:[%s2849 + $0xc] sm:$0x3]
      %v2854 = vunpack.c.l.bf16 %v2850
      %v2855 = vunpack.c.l.bf16 %v2851
      %v2856 = vunpack.c.l.bf16 %v2852
      %v2857 = vunpack.c.l.bf16 %v2853
      %v2858 = vld [vmem:[%s790] sm:$0x7]
      %2860 = vset.pattern.permute.xlu0 0
      %2861 = vperm.xlu0 %2860, %v2854
      %v2862 = vpop.permute.xlu0 %2861
      %2865 = vset.pattern.permute.xlu0 0
      %2866 = vperm.xlu0 %2865, %v2855
      %v2867 = vpop.permute.xlu0 %2866
      %2870 = vset.pattern.permute.xlu0 0
      %2871 = vperm.xlu0 %2870, %v2856
      %v2872 = vpop.permute.xlu0 %2871
      %2875 = vset.pattern.permute.xlu0 0
      %2876 = vperm.xlu0 %2875, %v2857
      %v2877 = vpop.permute.xlu0 %2876
      %v2879 = vlaneseq
      %v2880 = vshrl.u32 %v2879, 7
      %v2881 = vsub.s32 0, %v2880
      %v2882 = vrot.slane %v2858, %v2881
      %v2883 = vmul.f32 %v2862, %v2882
      %v2884 = vmul.f32 %v2867, %v2882
      %v2885 = vmul.f32 %v2872, %v2882
      %v2886 = vmul.f32 %v2877, %v2882
      %v2887 = vadd.f32 %v2845, %v2883
      %v2888 = vadd.f32 %v2846, %v2884
      %v2889 = vadd.f32 %v2847, %v2885
      %v2890 = vadd.f32 %v2848, %v2886
      %2891 = vset.pattern.permute.xlu0 1
      %2892 = vperm.xlu0 %2891, %v2854
      %v2893 = vpop.permute.xlu0 %2892
      %2895 = vset.pattern.permute.xlu0 1
      %2896 = vperm.xlu0 %2895, %v2855
      %v2897 = vpop.permute.xlu0 %2896
      %2899 = vset.pattern.permute.xlu0 1
      %2900 = vperm.xlu0 %2899, %v2856
      %v2901 = vpop.permute.xlu0 %2900
      %2903 = vset.pattern.permute.xlu0 1
      %2904 = vperm.xlu0 %2903, %v2857
      %v2905 = vpop.permute.xlu0 %2904
      %v2907 = vlaneseq
      %v2908 = vshrl.u32 %v2907, 7
      %v2909 = vsub.s32 1, %v2908
      %v2910 = vrot.slane %v2858, %v2909
      %v2911 = vmul.f32 %v2893, %v2910
      %v2912 = vmul.f32 %v2897, %v2910
      %v2913 = vmul.f32 %v2901, %v2910
      %v2914 = vmul.f32 %v2905, %v2910
      %v2915 = vadd.f32 %v2887, %v2911
      %v2916 = vadd.f32 %v2888, %v2912
      %v2917 = vadd.f32 %v2889, %v2913
      %v2918 = vadd.f32 %v2890, %v2914
      %2919 = vset.pattern.permute.xlu0 2
      %2920 = vperm.xlu0 %2919, %v2854
      %v2921 = vpop.permute.xlu0 %2920
      %2923 = vset.pattern.permute.xlu0 2
      %2924 = vperm.xlu0 %2923, %v2855
      %v2925 = vpop.permute.xlu0 %2924
      %2927 = vset.pattern.permute.xlu0 2
      %2928 = vperm.xlu0 %2927, %v2856
      %v2929 = vpop.permute.xlu0 %2928
      %2931 = vset.pattern.permute.xlu0 2
      %2932 = vperm.xlu0 %2931, %v2857
      %v2933 = vpop.permute.xlu0 %2932
      %v2935 = vlaneseq
      %v2936 = vshrl.u32 %v2935, 7
      %v2937 = vsub.s32 2, %v2936
      %v2938 = vrot.slane %v2858, %v2937
      %v2939 = vmul.f32 %v2921, %v2938
      %v2940 = vmul.f32 %v2925, %v2938
      %v2941 = vmul.f32 %v2929, %v2938
      %v2942 = vmul.f32 %v2933, %v2938
      %v2943 = vadd.f32 %v2915, %v2939
      %v2944 = vadd.f32 %v2916, %v2940
      %v2945 = vadd.f32 %v2917, %v2941
      %v2946 = vadd.f32 %v2918, %v2942
      %s2947 = scalar_lea.vmem %s250, 4
      %v2948 = vld [vmem:[%s2947] sm:$0x3]
      %v2949 = vld [vmem:[%s2947 + $0x4] sm:$0x3]
      %v2950 = vld [vmem:[%s2947 + $0x8] sm:$0x3]
      %v2951 = vld [vmem:[%s2947 + $0xc] sm:$0x3]
      %v2952 = vunpack.c.l.bf16 %v2948
      %v2953 = vunpack.c.l.bf16 %v2949
      %v2954 = vunpack.c.l.bf16 %v2950
      %v2955 = vunpack.c.l.bf16 %v2951
      %v2956 = vld [vmem:[%s889] sm:$0x7]
      %2958 = vset.pattern.permute.xlu0 0
      %2959 = vperm.xlu0 %2958, %v2952
      %v2960 = vpop.permute.xlu0 %2959
      %2963 = vset.pattern.permute.xlu0 0
      %2964 = vperm.xlu0 %2963, %v2953
      %v2965 = vpop.permute.xlu0 %2964
      %2968 = vset.pattern.permute.xlu0 0
      %2969 = vperm.xlu0 %2968, %v2954
      %v2970 = vpop.permute.xlu0 %2969
      %2973 = vset.pattern.permute.xlu0 0
      %2974 = vperm.xlu0 %2973, %v2955
      %v2975 = vpop.permute.xlu0 %2974
      %v2977 = vlaneseq
      %v2978 = vshrl.u32 %v2977, 7
      %v2979 = vsub.s32 0, %v2978
      %v2980 = vrot.slane %v2956, %v2979
      %v2981 = vmul.f32 %v2960, %v2980
      %v2982 = vmul.f32 %v2965, %v2980
      %v2983 = vmul.f32 %v2970, %v2980
      %v2984 = vmul.f32 %v2975, %v2980
      %v2985 = vadd.f32 %v2943, %v2981
      %v2986 = vadd.f32 %v2944, %v2982
      %v2987 = vadd.f32 %v2945, %v2983
      %v2988 = vadd.f32 %v2946, %v2984
      %2989 = vset.pattern.permute.xlu0 1
      %2990 = vperm.xlu0 %2989, %v2952
      %v2991 = vpop.permute.xlu0 %2990
      %2993 = vset.pattern.permute.xlu0 1
      %2994 = vperm.xlu0 %2993, %v2953
      %v2995 = vpop.permute.xlu0 %2994
      %2997 = vset.pattern.permute.xlu0 1
      %2998 = vperm.xlu0 %2997, %v2954
      %v2999 = vpop.permute.xlu0 %2998
      %3001 = vset.pattern.permute.xlu0 1
      %3002 = vperm.xlu0 %3001, %v2955
      %v3003 = vpop.permute.xlu0 %3002
      %v3005 = vlaneseq
      %v3006 = vshrl.u32 %v3005, 7
      %v3007 = vsub.s32 1, %v3006
      %v3008 = vrot.slane %v2956, %v3007
      %v3009 = vmul.f32 %v2991, %v3008
      %v3010 = vmul.f32 %v2995, %v3008
      %v3011 = vmul.f32 %v2999, %v3008
      %v3012 = vmul.f32 %v3003, %v3008
      %v3013 = vadd.f32 %v2985, %v3009
      %v3014 = vadd.f32 %v2986, %v3010
      %v3015 = vadd.f32 %v2987, %v3011
      %v3016 = vadd.f32 %v2988, %v3012
      %3017 = vset.pattern.permute.xlu0 2
      %3018 = vperm.xlu0 %3017, %v2952
      %v3019 = vpop.permute.xlu0 %3018
      %3021 = vset.pattern.permute.xlu0 2
      %3022 = vperm.xlu0 %3021, %v2953
      %v3023 = vpop.permute.xlu0 %3022
      %3025 = vset.pattern.permute.xlu0 2
      %3026 = vperm.xlu0 %3025, %v2954
      %v3027 = vpop.permute.xlu0 %3026
      %3029 = vset.pattern.permute.xlu0 2
      %3030 = vperm.xlu0 %3029, %v2955
      %v3031 = vpop.permute.xlu0 %3030
      %v3033 = vlaneseq
      %v3034 = vshrl.u32 %v3033, 7
      %v3035 = vsub.s32 2, %v3034
      %v3036 = vrot.slane %v2956, %v3035
      %v3037 = vmul.f32 %v3019, %v3036
      %v3038 = vmul.f32 %v3023, %v3036
      %v3039 = vmul.f32 %v3027, %v3036
      %v3040 = vmul.f32 %v3031, %v3036
      %v3041 = vadd.f32 %v3013, %v3037
      %v3042 = vadd.f32 %v3014, %v3038
      %v3043 = vadd.f32 %v3015, %v3039
      %v3044 = vadd.f32 %v3016, %v3040
      %s3045 = scalar_lea.vmem %s250, 24
      %v3046 = vld [vmem:[%s3045] sm:$0x3]
      %v3047 = vld [vmem:[%s3045 + $0x4] sm:$0x3]
      %v3048 = vld [vmem:[%s3045 + $0x8] sm:$0x3]
      %v3049 = vld [vmem:[%s3045 + $0xc] sm:$0x3]
      %v3050 = vunpack.c.l.bf16 %v3046
      %v3051 = vunpack.c.l.bf16 %v3047
      %v3052 = vunpack.c.l.bf16 %v3048
      %v3053 = vunpack.c.l.bf16 %v3049
      %v3054 = vld [vmem:[%s988] sm:$0x7]
      %3056 = vset.pattern.permute.xlu0 0
      %3057 = vperm.xlu0 %3056, %v3050
      %v3058 = vpop.permute.xlu0 %3057
      %3061 = vset.pattern.permute.xlu0 0
      %3062 = vperm.xlu0 %3061, %v3051
      %v3063 = vpop.permute.xlu0 %3062
      %3066 = vset.pattern.permute.xlu0 0
      %3067 = vperm.xlu0 %3066, %v3052
      %v3068 = vpop.permute.xlu0 %3067
      %3071 = vset.pattern.permute.xlu0 0
      %3072 = vperm.xlu0 %3071, %v3053
      %v3073 = vpop.permute.xlu0 %3072
      %v3075 = vlaneseq
      %v3076 = vshrl.u32 %v3075, 7
      %v3077 = vsub.s32 0, %v3076
      %v3078 = vrot.slane %v3054, %v3077
      %v3079 = vmul.f32 %v3058, %v3078
      %v3080 = vmul.f32 %v3063, %v3078
      %v3081 = vmul.f32 %v3068, %v3078
      %v3082 = vmul.f32 %v3073, %v3078
      %v3083 = vadd.f32 %v3041, %v3079
      %v3084 = vadd.f32 %v3042, %v3080
      %v3085 = vadd.f32 %v3043, %v3081
      %v3086 = vadd.f32 %v3044, %v3082
      %3087 = vset.pattern.permute.xlu0 1
      %3088 = vperm.xlu0 %3087, %v3050
      %v3089 = vpop.permute.xlu0 %3088
      %3091 = vset.pattern.permute.xlu0 1
      %3092 = vperm.xlu0 %3091, %v3051
      %v3093 = vpop.permute.xlu0 %3092
      %3095 = vset.pattern.permute.xlu0 1
      %3096 = vperm.xlu0 %3095, %v3052
      %v3097 = vpop.permute.xlu0 %3096
      %3099 = vset.pattern.permute.xlu0 1
      %3100 = vperm.xlu0 %3099, %v3053
      %v3101 = vpop.permute.xlu0 %3100
      %v3103 = vlaneseq
      %v3104 = vshrl.u32 %v3103, 7
      %v3105 = vsub.s32 1, %v3104
      %v3106 = vrot.slane %v3054, %v3105
      %v3107 = vmul.f32 %v3089, %v3106
      %v3108 = vmul.f32 %v3093, %v3106
      %v3109 = vmul.f32 %v3097, %v3106
      %v3110 = vmul.f32 %v3101, %v3106
      %v3111 = vadd.f32 %v3083, %v3107
      %v3112 = vadd.f32 %v3084, %v3108
      %v3113 = vadd.f32 %v3085, %v3109
      %v3114 = vadd.f32 %v3086, %v3110
      %3115 = vset.pattern.permute.xlu0 2
      %3116 = vperm.xlu0 %3115, %v3050
      %v3117 = vpop.permute.xlu0 %3116
      %3119 = vset.pattern.permute.xlu0 2
      %3120 = vperm.xlu0 %3119, %v3051
      %v3121 = vpop.permute.xlu0 %3120
      %3123 = vset.pattern.permute.xlu0 2
      %3124 = vperm.xlu0 %3123, %v3052
      %v3125 = vpop.permute.xlu0 %3124
      %3127 = vset.pattern.permute.xlu0 2
      %3128 = vperm.xlu0 %3127, %v3053
      %v3129 = vpop.permute.xlu0 %3128
      %v3131 = vlaneseq
      %v3132 = vshrl.u32 %v3131, 7
      %v3133 = vsub.s32 2, %v3132
      %v3134 = vrot.slane %v3054, %v3133
      %v3135 = vmul.f32 %v3117, %v3134
      %v3136 = vmul.f32 %v3121, %v3134
      %v3137 = vmul.f32 %v3125, %v3134
      %v3138 = vmul.f32 %v3129, %v3134
      %v3139 = vadd.f32 %v3111, %v3135
      %v3140 = vadd.f32 %v3112, %v3136
      %v3141 = vadd.f32 %v3113, %v3137
      %v3142 = vadd.f32 %v3114, %v3138
      %s3143 = scalar_lea.vmem %s250, 44
      %v3144 = vld [vmem:[%s3143] sm:$0x3]
      %v3145 = vld [vmem:[%s3143 + $0x4] sm:$0x3]
      %v3146 = vld [vmem:[%s3143 + $0x8] sm:$0x3]
      %v3147 = vld [vmem:[%s3143 + $0xc] sm:$0x3]
      %v3148 = vunpack.c.l.bf16 %v3144
      %v3149 = vunpack.c.l.bf16 %v3145
      %v3150 = vunpack.c.l.bf16 %v3146
      %v3151 = vunpack.c.l.bf16 %v3147
      %v3152 = vld [vmem:[%s1087] sm:$0x7]
      %3154 = vset.pattern.permute.xlu0 0
      %3155 = vperm.xlu0 %3154, %v3148
      %v3156 = vpop.permute.xlu0 %3155
      %3159 = vset.pattern.permute.xlu0 0
      %3160 = vperm.xlu0 %3159, %v3149
      %v3161 = vpop.permute.xlu0 %3160
      %3164 = vset.pattern.permute.xlu0 0
      %3165 = vperm.xlu0 %3164, %v3150
      %v3166 = vpop.permute.xlu0 %3165
      %3169 = vset.pattern.permute.xlu0 0
      %3170 = vperm.xlu0 %3169, %v3151
      %v3171 = vpop.permute.xlu0 %3170
      %v3173 = vlaneseq
      %v3174 = vshrl.u32 %v3173, 7
      %v3175 = vsub.s32 0, %v3174
      %v3176 = vrot.slane %v3152, %v3175
      %v3177 = vmul.f32 %v3156, %v3176
      %v3178 = vmul.f32 %v3161, %v3176
      %v3179 = vmul.f32 %v3166, %v3176
      %v3180 = vmul.f32 %v3171, %v3176
      %v3181 = vadd.f32 %v3139, %v3177
      %v3182 = vadd.f32 %v3140, %v3178
      %v3183 = vadd.f32 %v3141, %v3179
      %v3184 = vadd.f32 %v3142, %v3180
      %3185 = vset.pattern.permute.xlu0 1
      %3186 = vperm.xlu0 %3185, %v3148
      %v3187 = vpop.permute.xlu0 %3186
      %3189 = vset.pattern.permute.xlu0 1
      %3190 = vperm.xlu0 %3189, %v3149
      %v3191 = vpop.permute.xlu0 %3190
      %3193 = vset.pattern.permute.xlu0 1
      %3194 = vperm.xlu0 %3193, %v3150
      %v3195 = vpop.permute.xlu0 %3194
      %3197 = vset.pattern.permute.xlu0 1
      %3198 = vperm.xlu0 %3197, %v3151
      %v3199 = vpop.permute.xlu0 %3198
      %v3201 = vlaneseq
      %v3202 = vshrl.u32 %v3201, 7
      %v3203 = vsub.s32 1, %v3202
      %v3204 = vrot.slane %v3152, %v3203
      %v3205 = vmul.f32 %v3187, %v3204
      %v3206 = vmul.f32 %v3191, %v3204
      %v3207 = vmul.f32 %v3195, %v3204
      %v3208 = vmul.f32 %v3199, %v3204
      %v3209 = vadd.f32 %v3181, %v3205
      %v3210 = vadd.f32 %v3182, %v3206
      %v3211 = vadd.f32 %v3183, %v3207
      %v3212 = vadd.f32 %v3184, %v3208
      %3213 = vset.pattern.permute.xlu0 2
      %3214 = vperm.xlu0 %3213, %v3148
      %v3215 = vpop.permute.xlu0 %3214
      %3217 = vset.pattern.permute.xlu0 2
      %3218 = vperm.xlu0 %3217, %v3149
      %v3219 = vpop.permute.xlu0 %3218
      %3221 = vset.pattern.permute.xlu0 2
      %3222 = vperm.xlu0 %3221, %v3150
      %v3223 = vpop.permute.xlu0 %3222
      %3225 = vset.pattern.permute.xlu0 2
      %3226 = vperm.xlu0 %3225, %v3151
      %v3227 = vpop.permute.xlu0 %3226
      %v3229 = vlaneseq
      %v3230 = vshrl.u32 %v3229, 7
      %v3231 = vsub.s32 2, %v3230
      %v3232 = vrot.slane %v3152, %v3231
      %v3233 = vmul.f32 %v3215, %v3232
      %v3234 = vmul.f32 %v3219, %v3232
      %v3235 = vmul.f32 %v3223, %v3232
      %v3236 = vmul.f32 %v3227, %v3232
      %v3237 = vadd.f32 %v3209, %v3233
      %v3238 = vadd.f32 %v3210, %v3234
      %v3239 = vadd.f32 %v3211, %v3235
      %v3240 = vadd.f32 %v3212, %v3236
      %v3241 = vld [vmem:[%s4] sm:$0x1]
      %v3242 = vlaneseq
      %v3243 = vshrl.u32 %v3242, 7
      %v3244 = vsub.s32 0, %v3243
      %v3245 = vrot.slane %v3241, %v3244
      %v3246 = vmul.f32 %v3237, %v3245
      %v3247 = vmul.f32 %v3238, %v3245
      %v3248 = vmul.f32 %v3239, %v3245
      %v3249 = vmul.f32 %v3240, %v3245
      %v3250 = vld [vmem:[%s5] sm:$0x1]
      %v3251 = vlaneseq
      %v3252 = vshrl.u32 %v3251, 7
      %v3253 = vsub.s32 0, %v3252
      %v3254 = vrot.slane %v3250, %v3253
      %v3255 = vadd.f32 %v3246, %v3254
      %v3256 = vadd.f32 %v3247, %v3254
      %v3257 = vadd.f32 %v3248, %v3254
      %v3258 = vadd.f32 %v3249, %v3254
      %v3259 = vmul.f32 %v3255, 0.5
      %v3260 = vmul.f32 %v3256, 0.5
      %v3261 = vmul.f32 %v3257, 0.5
      %v3262 = vmul.f32 %v3258, 0.5
      %v3263 = vmul.f32 %v3255, 0.70710677
      %v3264 = vmul.f32 %v3256, 0.70710677
      %v3265 = vmul.f32 %v3257, 0.70710677
      %v3266 = vmul.f32 %v3258, 0.70710677
      %v3267 = verf.f32.pop %v3263
      %v3268 = verf.f32.pop %v3264
      %v3269 = verf.f32.pop %v3265
      %v3270 = verf.f32.pop %v3266
      %v3271 = vadd.f32 %v3267, 1.0
      %v3272 = vadd.f32 %v3268, 1.0
      %v3273 = vadd.f32 %v3269, 1.0
      %v3274 = vadd.f32 %v3270, 1.0
      %v3275 = vmul.f32 %v3259, %v3271
      %v3276 = vmul.f32 %v3260, %v3272
      %v3277 = vmul.f32 %v3261, %v3273
      %v3278 = vmul.f32 %v3262, %v3274
      %v3279 = vpack.c.bf16 %v3275, %v3275
      %v3280 = vpack.c.bf16 %v3276, %v3276
      %v3281 = vpack.c.bf16 %v3277, %v3277
      %v3282 = vpack.c.bf16 %v3278, %v3278
      %v3287 = vunpack.c.l.b16 %v3279
      %v3288 = vunpack.c.l.b16 %v3280
      %v3289 = vunpack.c.l.b16 %v3281
      %v3290 = vunpack.c.l.b16 %v3282
      %v3291 = vpack.c.b16 %v3287, %v3287
      %v3292 = vpack.c.b16 %v3288, %v3288
      %v3293 = vpack.c.b16 %v3289, %v3289
      %v3294 = vpack.c.b16 %v3290, %v3290
      %v3296 = vshrl.u32 %v3291, 16
      %v3298 = vrot.slane %v3296, 7
      %v3299 = vshll.u32 %v3291, 16
      %v3301 = vor.u32 %v3298, %v3299
      %v3303 = vshrl.u32 %v3292, 16
      %v3305 = vrot.slane %v3303, 7
      %v3306 = vshll.u32 %v3292, 16
      %v3308 = vor.u32 %v3305, %v3306
      %v3310 = vshrl.u32 %v3293, 16
      %v3312 = vrot.slane %v3310, 7
      %v3313 = vshll.u32 %v3293, 16
      %v3315 = vor.u32 %v3312, %v3313
      %v3317 = vshrl.u32 %v3294, 16
      %v3319 = vrot.slane %v3317, 7
      %v3320 = vshll.u32 %v3294, 16
      %v3322 = vor.u32 %v3319, %v3320
      %s3327 = scalar_lea.vmem [#allocation2], 52
      %v3328 = vld [vmem:[%s3327] sm:$0x7]
      %v3329 = vsel %vm1266, %v3301, %v3328
      %3330 = vst [vmem:[%s3327] sm:$0x7] %v3329
      %v3331 = vld [vmem:[%s3327 + $0x4] sm:$0x7]
      %v3332 = vsel %vm1266, %v3308, %v3331
      %3333 = vst [vmem:[%s3327 + $0x4] sm:$0x7] %v3332
      %v3334 = vld [vmem:[%s3327 + $0x8] sm:$0x7]
      %v3335 = vsel %vm1266, %v3315, %v3334
      %3336 = vst [vmem:[%s3327 + $0x8] sm:$0x7] %v3335
      %v3337 = vld [vmem:[%s3327 + $0xc] sm:$0x7]
      %v3338 = vsel %vm1266, %v3322, %v3337
      %3339 = vst [vmem:[%s3327 + $0xc] sm:$0x7] %v3338
      %v3340 = vld [vmem:[%s1078] sm:$0x3]
      %v3341 = vld [vmem:[%s1078 + $0x4] sm:$0x3]
      %v3342 = vld [vmem:[%s1078 + $0x8] sm:$0x3]
      %v3343 = vld [vmem:[%s1078 + $0xc] sm:$0x3]
      %v3344 = vunpack.c.l.bf16 %v3340
      %v3345 = vunpack.c.l.bf16 %v3341
      %v3346 = vunpack.c.l.bf16 %v3342
      %v3347 = vunpack.c.l.bf16 %v3343
      %v3348 = vld [vmem:[%s1] sm:$0x7]
      %3350 = vset.pattern.permute.xlu0 0
      %3351 = vperm.xlu0 %3350, %v3344
      %v3352 = vpop.permute.xlu0 %3351
      %3355 = vset.pattern.permute.xlu0 0
      %3356 = vperm.xlu0 %3355, %v3345
      %v3357 = vpop.permute.xlu0 %3356
      %3360 = vset.pattern.permute.xlu0 0
      %3361 = vperm.xlu0 %3360, %v3346
      %v3362 = vpop.permute.xlu0 %3361
      %3365 = vset.pattern.permute.xlu0 0
      %3366 = vperm.xlu0 %3365, %v3347
      %v3367 = vpop.permute.xlu0 %3366
      %v3369 = vlaneseq
      %v3370 = vshrl.u32 %v3369, 7
      %v3371 = vsub.s32 0, %v3370
      %v3372 = vrot.slane %v3348, %v3371
      %v3373 = vmul.f32 %v3352, %v3372
      %v3374 = vmul.f32 %v3357, %v3372
      %v3375 = vmul.f32 %v3362, %v3372
      %v3376 = vmul.f32 %v3367, %v3372
      %v3377 = vadd.f32 %v3373, 0.0
      %v3378 = vadd.f32 %v3374, 0.0
      %v3379 = vadd.f32 %v3375, 0.0
      %v3380 = vadd.f32 %v3376, 0.0
      %3381 = vset.pattern.permute.xlu0 1
      %3382 = vperm.xlu0 %3381, %v3344
      %v3383 = vpop.permute.xlu0 %3382
      %3385 = vset.pattern.permute.xlu0 1
      %3386 = vperm.xlu0 %3385, %v3345
      %v3387 = vpop.permute.xlu0 %3386
      %3389 = vset.pattern.permute.xlu0 1
      %3390 = vperm.xlu0 %3389, %v3346
      %v3391 = vpop.permute.xlu0 %3390
      %3393 = vset.pattern.permute.xlu0 1
      %3394 = vperm.xlu0 %3393, %v3347
      %v3395 = vpop.permute.xlu0 %3394
      %v3397 = vlaneseq
      %v3398 = vshrl.u32 %v3397, 7
      %v3399 = vsub.s32 1, %v3398
      %v3400 = vrot.slane %v3348, %v3399
      %v3401 = vmul.f32 %v3383, %v3400
      %v3402 = vmul.f32 %v3387, %v3400
      %v3403 = vmul.f32 %v3391, %v3400
      %v3404 = vmul.f32 %v3395, %v3400
      %v3405 = vadd.f32 %v3377, %v3401
      %v3406 = vadd.f32 %v3378, %v3402
      %v3407 = vadd.f32 %v3379, %v3403
      %v3408 = vadd.f32 %v3380, %v3404
      %3409 = vset.pattern.permute.xlu0 2
      %3410 = vperm.xlu0 %3409, %v3344
      %v3411 = vpop.permute.xlu0 %3410
      %3413 = vset.pattern.permute.xlu0 2
      %3414 = vperm.xlu0 %3413, %v3345
      %v3415 = vpop.permute.xlu0 %3414
      %3417 = vset.pattern.permute.xlu0 2
      %3418 = vperm.xlu0 %3417, %v3346
      %v3419 = vpop.permute.xlu0 %3418
      %3421 = vset.pattern.permute.xlu0 2
      %3422 = vperm.xlu0 %3421, %v3347
      %v3423 = vpop.permute.xlu0 %3422
      %v3425 = vlaneseq
      %v3426 = vshrl.u32 %v3425, 7
      %v3427 = vsub.s32 2, %v3426
      %v3428 = vrot.slane %v3348, %v3427
      %v3429 = vmul.f32 %v3411, %v3428
      %v3430 = vmul.f32 %v3415, %v3428
      %v3431 = vmul.f32 %v3419, %v3428
      %v3432 = vmul.f32 %v3423, %v3428
      %v3433 = vadd.f32 %v3405, %v3429
      %v3434 = vadd.f32 %v3406, %v3430
      %v3435 = vadd.f32 %v3407, %v3431
      %v3436 = vadd.f32 %v3408, %v3432
      %v3437 = vld [vmem:[%s2032] sm:$0x3]
      %v3438 = vld [vmem:[%s2032 + $0x4] sm:$0x3]
      %v3439 = vld [vmem:[%s2032 + $0x8] sm:$0x3]
      %v3440 = vld [vmem:[%s2032 + $0xc] sm:$0x3]
      %v3441 = vunpack.c.l.bf16 %v3437
      %v3442 = vunpack.c.l.bf16 %v3438
      %v3443 = vunpack.c.l.bf16 %v3439
      %v3444 = vunpack.c.l.bf16 %v3440
      %v3445 = vld [vmem:[%s394] sm:$0x7]
      %3447 = vset.pattern.permute.xlu0 0
      %3448 = vperm.xlu0 %3447, %v3441
      %v3449 = vpop.permute.xlu0 %3448
      %3452 = vset.pattern.permute.xlu0 0
      %3453 = vperm.xlu0 %3452, %v3442
      %v3454 = vpop.permute.xlu0 %3453
      %3457 = vset.pattern.permute.xlu0 0
      %3458 = vperm.xlu0 %3457, %v3443
      %v3459 = vpop.permute.xlu0 %3458
      %3462 = vset.pattern.permute.xlu0 0
      %3463 = vperm.xlu0 %3462, %v3444
      %v3464 = vpop.permute.xlu0 %3463
      %v3466 = vlaneseq
      %v3467 = vshrl.u32 %v3466, 7
      %v3468 = vsub.s32 0, %v3467
      %v3469 = vrot.slane %v3445, %v3468
      %v3470 = vmul.f32 %v3449, %v3469
      %v3471 = vmul.f32 %v3454, %v3469
      %v3472 = vmul.f32 %v3459, %v3469
      %v3473 = vmul.f32 %v3464, %v3469
      %v3474 = vadd.f32 %v3433, %v3470
      %v3475 = vadd.f32 %v3434, %v3471
      %v3476 = vadd.f32 %v3435, %v3472
      %v3477 = vadd.f32 %v3436, %v3473
      %3478 = vset.pattern.permute.xlu0 1
      %3479 = vperm.xlu0 %3478, %v3441
      %v3480 = vpop.permute.xlu0 %3479
      %3482 = vset.pattern.permute.xlu0 1
      %3483 = vperm.xlu0 %3482, %v3442
      %v3484 = vpop.permute.xlu0 %3483
      %3486 = vset.pattern.permute.xlu0 1
      %3487 = vperm.xlu0 %3486, %v3443
      %v3488 = vpop.permute.xlu0 %3487
      %3490 = vset.pattern.permute.xlu0 1
      %3491 = vperm.xlu0 %3490, %v3444
      %v3492 = vpop.permute.xlu0 %3491
      %v3494 = vlaneseq
      %v3495 = vshrl.u32 %v3494, 7
      %v3496 = vsub.s32 1, %v3495
      %v3497 = vrot.slane %v3445, %v3496
      %v3498 = vmul.f32 %v3480, %v3497
      %v3499 = vmul.f32 %v3484, %v3497
      %v3500 = vmul.f32 %v3488, %v3497
      %v3501 = vmul.f32 %v3492, %v3497
      %v3502 = vadd.f32 %v3474, %v3498
      %v3503 = vadd.f32 %v3475, %v3499
      %v3504 = vadd.f32 %v3476, %v3500
      %v3505 = vadd.f32 %v3477, %v3501
      %3506 = vset.pattern.permute.xlu0 2
      %3507 = vperm.xlu0 %3506, %v3441
      %v3508 = vpop.permute.xlu0 %3507
      %3510 = vset.pattern.permute.xlu0 2
      %3511 = vperm.xlu0 %3510, %v3442
      %v3512 = vpop.permute.xlu0 %3511
      %3514 = vset.pattern.permute.xlu0 2
      %3515 = vperm.xlu0 %3514, %v3443
      %v3516 = vpop.permute.xlu0 %3515
      %3518 = vset.pattern.permute.xlu0 2
      %3519 = vperm.xlu0 %3518, %v3444
      %v3520 = vpop.permute.xlu0 %3519
      %v3522 = vlaneseq
      %v3523 = vshrl.u32 %v3522, 7
      %v3524 = vsub.s32 2, %v3523
      %v3525 = vrot.slane %v3445, %v3524
      %v3526 = vmul.f32 %v3508, %v3525
      %v3527 = vmul.f32 %v3512, %v3525
      %v3528 = vmul.f32 %v3516, %v3525
      %v3529 = vmul.f32 %v3520, %v3525
      %v3530 = vadd.f32 %v3502, %v3526
      %v3531 = vadd.f32 %v3503, %v3527
      %v3532 = vadd.f32 %v3504, %v3528
      %v3533 = vadd.f32 %v3505, %v3529
      %v3534 = vld [vmem:[%s880] sm:$0x7]
      %v3535 = vld [vmem:[%s880 + $0x4] sm:$0x7]
      %v3536 = vld [vmem:[%s880 + $0x8] sm:$0x7]
      %v3537 = vld [vmem:[%s880 + $0xc] sm:$0x7]
      %v3538 = vunpack.c.l.bf16 %v3534
      %v3539 = vunpack.c.l.bf16 %v3535
      %v3540 = vunpack.c.l.bf16 %v3536
      %v3541 = vunpack.c.l.bf16 %v3537
      %v3542 = vld [vmem:[%s493] sm:$0x7]
      %3544 = vset.pattern.permute.xlu0 0
      %3545 = vperm.xlu0 %3544, %v3538
      %v3546 = vpop.permute.xlu0 %3545
      %3549 = vset.pattern.permute.xlu0 0
      %3550 = vperm.xlu0 %3549, %v3539
      %v3551 = vpop.permute.xlu0 %3550
      %3554 = vset.pattern.permute.xlu0 0
      %3555 = vperm.xlu0 %3554, %v3540
      %v3556 = vpop.permute.xlu0 %3555
      %3559 = vset.pattern.permute.xlu0 0
      %3560 = vperm.xlu0 %3559, %v3541
      %v3561 = vpop.permute.xlu0 %3560
      %v3563 = vlaneseq
      %v3564 = vshrl.u32 %v3563, 7
      %v3565 = vsub.s32 0, %v3564
      %v3566 = vrot.slane %v3542, %v3565
      %v3567 = vmul.f32 %v3546, %v3566
      %v3568 = vmul.f32 %v3551, %v3566
      %v3569 = vmul.f32 %v3556, %v3566
      %v3570 = vmul.f32 %v3561, %v3566
      %v3575 = vrot.slane %v3567, 1
      %v3576 = vrot.slane %v3568, 1
      %v3577 = vrot.slane %v3569, 1
      %v3578 = vrot.slane %v3570, 1
      %v3583 = vadd.f32 %v3530, %v3575
      %v3584 = vadd.f32 %v3531, %v3576
      %v3585 = vadd.f32 %v3532, %v3577
      %v3586 = vadd.f32 %v3533, %v3578
      %3587 = vset.pattern.permute.xlu0 1
      %3588 = vperm.xlu0 %3587, %v3538
      %v3589 = vpop.permute.xlu0 %3588
      %3591 = vset.pattern.permute.xlu0 1
      %3592 = vperm.xlu0 %3591, %v3539
      %v3593 = vpop.permute.xlu0 %3592
      %3595 = vset.pattern.permute.xlu0 1
      %3596 = vperm.xlu0 %3595, %v3540
      %v3597 = vpop.permute.xlu0 %3596
      %3599 = vset.pattern.permute.xlu0 1
      %3600 = vperm.xlu0 %3599, %v3541
      %v3601 = vpop.permute.xlu0 %3600
      %v3603 = vlaneseq
      %v3604 = vshrl.u32 %v3603, 7
      %v3605 = vsub.s32 1, %v3604
      %v3606 = vrot.slane %v3542, %v3605
      %v3607 = vmul.f32 %v3589, %v3606
      %v3608 = vmul.f32 %v3593, %v3606
      %v3609 = vmul.f32 %v3597, %v3606
      %v3610 = vmul.f32 %v3601, %v3606
      %v3615 = vrot.slane %v3607, 1
      %v3616 = vrot.slane %v3608, 1
      %v3617 = vrot.slane %v3609, 1
      %v3618 = vrot.slane %v3610, 1
      %v3623 = vadd.f32 %v3583, %v3615
      %v3624 = vadd.f32 %v3584, %v3616
      %v3625 = vadd.f32 %v3585, %v3617
      %v3626 = vadd.f32 %v3586, %v3618
      %3627 = vset.pattern.permute.xlu0 2
      %3628 = vperm.xlu0 %3627, %v3538
      %v3629 = vpop.permute.xlu0 %3628
      %3631 = vset.pattern.permute.xlu0 2
      %3632 = vperm.xlu0 %3631, %v3539
      %v3633 = vpop.permute.xlu0 %3632
      %3635 = vset.pattern.permute.xlu0 2
      %3636 = vperm.xlu0 %3635, %v3540
      %v3637 = vpop.permute.xlu0 %3636
      %3639 = vset.pattern.permute.xlu0 2
      %3640 = vperm.xlu0 %3639, %v3541
      %v3641 = vpop.permute.xlu0 %3640
      %v3643 = vlaneseq
      %v3644 = vshrl.u32 %v3643, 7
      %v3645 = vsub.s32 2, %v3644
      %v3646 = vrot.slane %v3542, %v3645
      %v3647 = vmul.f32 %v3629, %v3646
      %v3648 = vmul.f32 %v3633, %v3646
      %v3649 = vmul.f32 %v3637, %v3646
      %v3650 = vmul.f32 %v3641, %v3646
      %v3655 = vrot.slane %v3647, 1
      %v3656 = vrot.slane %v3648, 1
      %v3657 = vrot.slane %v3649, 1
      %v3658 = vrot.slane %v3650, 1
      %v3663 = vadd.f32 %v3623, %v3655
      %v3664 = vadd.f32 %v3624, %v3656
      %v3665 = vadd.f32 %v3625, %v3657
      %v3666 = vadd.f32 %v3626, %v3658
      %v3667 = vld [vmem:[%s2849] sm:$0x3]
      %v3668 = vld [vmem:[%s2849 + $0x4] sm:$0x3]
      %v3669 = vld [vmem:[%s2849 + $0x8] sm:$0x3]
      %v3670 = vld [vmem:[%s2849 + $0xc] sm:$0x3]
      %v3671 = vunpack.c.l.bf16 %v3667
      %v3672 = vunpack.c.l.bf16 %v3668
      %v3673 = vunpack.c.l.bf16 %v3669
      %v3674 = vunpack.c.l.bf16 %v3670
      %v3675 = vld [vmem:[%s592] sm:$0x7]
      %3677 = vset.pattern.permute.xlu0 0
      %3678 = vperm.xlu0 %3677, %v3671
      %v3679 = vpop.permute.xlu0 %3678
      %3682 = vset.pattern.permute.xlu0 0
      %3683 = vperm.xlu0 %3682, %v3672
      %v3684 = vpop.permute.xlu0 %3683
      %3687 = vset.pattern.permute.xlu0 0
      %3688 = vperm.xlu0 %3687, %v3673
      %v3689 = vpop.permute.xlu0 %3688
      %3692 = vset.pattern.permute.xlu0 0
      %3693 = vperm.xlu0 %3692, %v3674
      %v3694 = vpop.permute.xlu0 %3693
      %v3696 = vlaneseq
      %v3697 = vshrl.u32 %v3696, 7
      %v3698 = vsub.s32 0, %v3697
      %v3699 = vrot.slane %v3675, %v3698
      %v3700 = vmul.f32 %v3679, %v3699
      %v3701 = vmul.f32 %v3684, %v3699
      %v3702 = vmul.f32 %v3689, %v3699
      %v3703 = vmul.f32 %v3694, %v3699
      %v3704 = vadd.f32 %v3663, %v3700
      %v3705 = vadd.f32 %v3664, %v3701
      %v3706 = vadd.f32 %v3665, %v3702
      %v3707 = vadd.f32 %v3666, %v3703
      %3708 = vset.pattern.permute.xlu0 1
      %3709 = vperm.xlu0 %3708, %v3671
      %v3710 = vpop.permute.xlu0 %3709
      %3712 = vset.pattern.permute.xlu0 1
      %3713 = vperm.xlu0 %3712, %v3672
      %v3714 = vpop.permute.xlu0 %3713
      %3716 = vset.pattern.permute.xlu0 1
      %3717 = vperm.xlu0 %3716, %v3673
      %v3718 = vpop.permute.xlu0 %3717
      %3720 = vset.pattern.permute.xlu0 1
      %3721 = vperm.xlu0 %3720, %v3674
      %v3722 = vpop.permute.xlu0 %3721
      %v3724 = vlaneseq
      %v3725 = vshrl.u32 %v3724, 7
      %v3726 = vsub.s32 1, %v3725
      %v3727 = vrot.slane %v3675, %v3726
      %v3728 = vmul.f32 %v3710, %v3727
      %v3729 = vmul.f32 %v3714, %v3727
      %v3730 = vmul.f32 %v3718, %v3727
      %v3731 = vmul.f32 %v3722, %v3727
      %v3732 = vadd.f32 %v3704, %v3728
      %v3733 = vadd.f32 %v3705, %v3729
      %v3734 = vadd.f32 %v3706, %v3730
      %v3735 = vadd.f32 %v3707, %v3731
      %3736 = vset.pattern.permute.xlu0 2
      %3737 = vperm.xlu0 %3736, %v3671
      %v3738 = vpop.permute.xlu0 %3737
      %3740 = vset.pattern.permute.xlu0 2
      %3741 = vperm.xlu0 %3740, %v3672
      %v3742 = vpop.permute.xlu0 %3741
      %3744 = vset.pattern.permute.xlu0 2
      %3745 = vperm.xlu0 %3744, %v3673
      %v3746 = vpop.permute.xlu0 %3745
      %3748 = vset.pattern.permute.xlu0 2
      %3749 = vperm.xlu0 %3748, %v3674
      %v3750 = vpop.permute.xlu0 %3749
      %v3752 = vlaneseq
      %v3753 = vshrl.u32 %v3752, 7
      %v3754 = vsub.s32 2, %v3753
      %v3755 = vrot.slane %v3675, %v3754
      %v3756 = vmul.f32 %v3738, %v3755
      %v3757 = vmul.f32 %v3742, %v3755
      %v3758 = vmul.f32 %v3746, %v3755
      %v3759 = vmul.f32 %v3750, %v3755
      %v3760 = vadd.f32 %v3732, %v3756
      %v3761 = vadd.f32 %v3733, %v3757
      %v3762 = vadd.f32 %v3734, %v3758
      %v3763 = vadd.f32 %v3735, %v3759
      %s3764 = scalar_lea.vmem %s250, 300
      %v3765 = vld [vmem:[%s3764] sm:$0x3]
      %v3766 = vld [vmem:[%s3764 + $0x4] sm:$0x3]
      %v3767 = vld [vmem:[%s3764 + $0x8] sm:$0x3]
      %v3768 = vld [vmem:[%s3764 + $0xc] sm:$0x3]
      %v3769 = vunpack.c.l.bf16 %v3765
      %v3770 = vunpack.c.l.bf16 %v3766
      %v3771 = vunpack.c.l.bf16 %v3767
      %v3772 = vunpack.c.l.bf16 %v3768
      %v3773 = vld [vmem:[%s691] sm:$0x7]
      %3775 = vset.pattern.permute.xlu0 0
      %3776 = vperm.xlu0 %3775, %v3769
      %v3777 = vpop.permute.xlu0 %3776
      %3780 = vset.pattern.permute.xlu0 0
      %3781 = vperm.xlu0 %3780, %v3770
      %v3782 = vpop.permute.xlu0 %3781
      %3785 = vset.pattern.permute.xlu0 0
      %3786 = vperm.xlu0 %3785, %v3771
      %v3787 = vpop.permute.xlu0 %3786
      %3790 = vset.pattern.permute.xlu0 0
      %3791 = vperm.xlu0 %3790, %v3772
      %v3792 = vpop.permute.xlu0 %3791
      %v3794 = vlaneseq
      %v3795 = vshrl.u32 %v3794, 7
      %v3796 = vsub.s32 0, %v3795
      %v3797 = vrot.slane %v3773, %v3796
      %v3798 = vmul.f32 %v3777, %v3797
      %v3799 = vmul.f32 %v3782, %v3797
      %v3800 = vmul.f32 %v3787, %v3797
      %v3801 = vmul.f32 %v3792, %v3797
      %v3802 = vadd.f32 %v3760, %v3798
      %v3803 = vadd.f32 %v3761, %v3799
      %v3804 = vadd.f32 %v3762, %v3800
      %v3805 = vadd.f32 %v3763, %v3801
      %3806 = vset.pattern.permute.xlu0 1
      %3807 = vperm.xlu0 %3806, %v3769
      %v3808 = vpop.permute.xlu0 %3807
      %3810 = vset.pattern.permute.xlu0 1
      %3811 = vperm.xlu0 %3810, %v3770
      %v3812 = vpop.permute.xlu0 %3811
      %3814 = vset.pattern.permute.xlu0 1
      %3815 = vperm.xlu0 %3814, %v3771
      %v3816 = vpop.permute.xlu0 %3815
      %3818 = vset.pattern.permute.xlu0 1
      %3819 = vperm.xlu0 %3818, %v3772
      %v3820 = vpop.permute.xlu0 %3819
      %v3822 = vlaneseq
      %v3823 = vshrl.u32 %v3822, 7
      %v3824 = vsub.s32 1, %v3823
      %v3825 = vrot.slane %v3773, %v3824
      %v3826 = vmul.f32 %v3808, %v3825
      %v3827 = vmul.f32 %v3812, %v3825
      %v3828 = vmul.f32 %v3816, %v3825
      %v3829 = vmul.f32 %v3820, %v3825
      %v3830 = vadd.f32 %v3802, %v3826
      %v3831 = vadd.f32 %v3803, %v3827
      %v3832 = vadd.f32 %v3804, %v3828
      %v3833 = vadd.f32 %v3805, %v3829
      %3834 = vset.pattern.permute.xlu0 2
      %3835 = vperm.xlu0 %3834, %v3769
      %v3836 = vpop.permute.xlu0 %3835
      %3838 = vset.pattern.permute.xlu0 2
      %3839 = vperm.xlu0 %3838, %v3770
      %v3840 = vpop.permute.xlu0 %3839
      %3842 = vset.pattern.permute.xlu0 2
      %3843 = vperm.xlu0 %3842, %v3771
      %v3844 = vpop.permute.xlu0 %3843
      %3846 = vset.pattern.permute.xlu0 2
      %3847 = vperm.xlu0 %3846, %v3772
      %v3848 = vpop.permute.xlu0 %3847
      %v3850 = vlaneseq
      %v3851 = vshrl.u32 %v3850, 7
      %v3852 = vsub.s32 2, %v3851
      %v3853 = vrot.slane %v3773, %v3852
      %v3854 = vmul.f32 %v3836, %v3853
      %v3855 = vmul.f32 %v3840, %v3853
      %v3856 = vmul.f32 %v3844, %v3853
      %v3857 = vmul.f32 %v3848, %v3853
      %v3858 = vadd.f32 %v3830, %v3854
      %v3859 = vadd.f32 %v3831, %v3855
      %v3860 = vadd.f32 %v3832, %v3856
      %v3861 = vadd.f32 %v3833, %v3857
      %v3862 = vld [vmem:[%s2653] sm:$0x7]
      %v3863 = vld [vmem:[%s2653 + $0x4] sm:$0x7]
      %v3864 = vld [vmem:[%s2653 + $0x8] sm:$0x7]
      %v3865 = vld [vmem:[%s2653 + $0xc] sm:$0x7]
      %v3866 = vunpack.c.l.bf16 %v3862
      %v3867 = vunpack.c.l.bf16 %v3863
      %v3868 = vunpack.c.l.bf16 %v3864
      %v3869 = vunpack.c.l.bf16 %v3865
      %v3870 = vld [vmem:[%s790] sm:$0x7]
      %3872 = vset.pattern.permute.xlu0 0
      %3873 = vperm.xlu0 %3872, %v3866
      %v3874 = vpop.permute.xlu0 %3873
      %3877 = vset.pattern.permute.xlu0 0
      %3878 = vperm.xlu0 %3877, %v3867
      %v3879 = vpop.permute.xlu0 %3878
      %3882 = vset.pattern.permute.xlu0 0
      %3883 = vperm.xlu0 %3882, %v3868
      %v3884 = vpop.permute.xlu0 %3883
      %3887 = vset.pattern.permute.xlu0 0
      %3888 = vperm.xlu0 %3887, %v3869
      %v3889 = vpop.permute.xlu0 %3888
      %v3891 = vlaneseq
      %v3892 = vshrl.u32 %v3891, 7
      %v3893 = vsub.s32 0, %v3892
      %v3894 = vrot.slane %v3870, %v3893
      %v3895 = vmul.f32 %v3874, %v3894
      %v3896 = vmul.f32 %v3879, %v3894
      %v3897 = vmul.f32 %v3884, %v3894
      %v3898 = vmul.f32 %v3889, %v3894
      %v3903 = vrot.slane %v3895, 1
      %v3904 = vrot.slane %v3896, 1
      %v3905 = vrot.slane %v3897, 1
      %v3906 = vrot.slane %v3898, 1
      %v3911 = vadd.f32 %v3858, %v3903
      %v3912 = vadd.f32 %v3859, %v3904
      %v3913 = vadd.f32 %v3860, %v3905
      %v3914 = vadd.f32 %v3861, %v3906
      %3915 = vset.pattern.permute.xlu0 1
      %3916 = vperm.xlu0 %3915, %v3866
      %v3917 = vpop.permute.xlu0 %3916
      %3919 = vset.pattern.permute.xlu0 1
      %3920 = vperm.xlu0 %3919, %v3867
      %v3921 = vpop.permute.xlu0 %3920
      %3923 = vset.pattern.permute.xlu0 1
      %3924 = vperm.xlu0 %3923, %v3868
      %v3925 = vpop.permute.xlu0 %3924
      %3927 = vset.pattern.permute.xlu0 1
      %3928 = vperm.xlu0 %3927, %v3869
      %v3929 = vpop.permute.xlu0 %3928
      %v3931 = vlaneseq
      %v3932 = vshrl.u32 %v3931, 7
      %v3933 = vsub.s32 1, %v3932
      %v3934 = vrot.slane %v3870, %v3933
      %v3935 = vmul.f32 %v3917, %v3934
      %v3936 = vmul.f32 %v3921, %v3934
      %v3937 = vmul.f32 %v3925, %v3934
      %v3938 = vmul.f32 %v3929, %v3934
      %v3943 = vrot.slane %v3935, 1
      %v3944 = vrot.slane %v3936, 1
      %v3945 = vrot.slane %v3937, 1
      %v3946 = vrot.slane %v3938, 1
      %v3951 = vadd.f32 %v3911, %v3943
      %v3952 = vadd.f32 %v3912, %v3944
      %v3953 = vadd.f32 %v3913, %v3945
      %v3954 = vadd.f32 %v3914, %v3946
      %3955 = vset.pattern.permute.xlu0 2
      %3956 = vperm.xlu0 %3955, %v3866
      %v3957 = vpop.permute.xlu0 %3956
      %3959 = vset.pattern.permute.xlu0 2
      %3960 = vperm.xlu0 %3959, %v3867
      %v3961 = vpop.permute.xlu0 %3960
      %3963 = vset.pattern.permute.xlu0 2
      %3964 = vperm.xlu0 %3963, %v3868
      %v3965 = vpop.permute.xlu0 %3964
      %3967 = vset.pattern.permute.xlu0 2
      %3968 = vperm.xlu0 %3967, %v3869
      %v3969 = vpop.permute.xlu0 %3968
      %v3971 = vlaneseq
      %v3972 = vshrl.u32 %v3971, 7
      %v3973 = vsub.s32 2, %v3972
      %v3974 = vrot.slane %v3870, %v3973
      %v3975 = vmul.f32 %v3957, %v3974
      %v3976 = vmul.f32 %v3961, %v3974
      %v3977 = vmul.f32 %v3965, %v3974
      %v3978 = vmul.f32 %v3969, %v3974
      %v3983 = vrot.slane %v3975, 1
      %v3984 = vrot.slane %v3976, 1
      %v3985 = vrot.slane %v3977, 1
      %v3986 = vrot.slane %v3978, 1
      %v3991 = vadd.f32 %v3951, %v3983
      %v3992 = vadd.f32 %v3952, %v3984
      %v3993 = vadd.f32 %v3953, %v3985
      %v3994 = vadd.f32 %v3954, %v3986
      %v3995 = vld [vmem:[%s3143] sm:$0x3]
      %v3996 = vld [vmem:[%s3143 + $0x4] sm:$0x3]
      %v3997 = vld [vmem:[%s3143 + $0x8] sm:$0x3]
      %v3998 = vld [vmem:[%s3143 + $0xc] sm:$0x3]
      %v3999 = vunpack.c.l.bf16 %v3995
      %v4000 = vunpack.c.l.bf16 %v3996
      %v4001 = vunpack.c.l.bf16 %v3997
      %v4002 = vunpack.c.l.bf16 %v3998
      %v4003 = vld [vmem:[%s889] sm:$0x7]
      %4005 = vset.pattern.permute.xlu0 0
      %4006 = vperm.xlu0 %4005, %v3999
      %v4007 = vpop.permute.xlu0 %4006
      %4010 = vset.pattern.permute.xlu0 0
      %4011 = vperm.xlu0 %4010, %v4000
      %v4012 = vpop.permute.xlu0 %4011
      %4015 = vset.pattern.permute.xlu0 0
      %4016 = vperm.xlu0 %4015, %v4001
      %v4017 = vpop.permute.xlu0 %4016
      %4020 = vset.pattern.permute.xlu0 0
      %4021 = vperm.xlu0 %4020, %v4002
      %v4022 = vpop.permute.xlu0 %4021
      %v4024 = vlaneseq
      %v4025 = vshrl.u32 %v4024, 7
      %v4026 = vsub.s32 0, %v4025
      %v4027 = vrot.slane %v4003, %v4026
      %v4028 = vmul.f32 %v4007, %v4027
      %v4029 = vmul.f32 %v4012, %v4027
      %v4030 = vmul.f32 %v4017, %v4027
      %v4031 = vmul.f32 %v4022, %v4027
      %v4032 = vadd.f32 %v3991, %v4028
      %v4033 = vadd.f32 %v3992, %v4029
      %v4034 = vadd.f32 %v3993, %v4030
      %v4035 = vadd.f32 %v3994, %v4031
      %4036 = vset.pattern.permute.xlu0 1
      %4037 = vperm.xlu0 %4036, %v3999
      %v4038 = vpop.permute.xlu0 %4037
      %4040 = vset.pattern.permute.xlu0 1
      %4041 = vperm.xlu0 %4040, %v4000
      %v4042 = vpop.permute.xlu0 %4041
      %4044 = vset.pattern.permute.xlu0 1
      %4045 = vperm.xlu0 %4044, %v4001
      %v4046 = vpop.permute.xlu0 %4045
      %4048 = vset.pattern.permute.xlu0 1
      %4049 = vperm.xlu0 %4048, %v4002
      %v4050 = vpop.permute.xlu0 %4049
      %v4052 = vlaneseq
      %v4053 = vshrl.u32 %v4052, 7
      %v4054 = vsub.s32 1, %v4053
      %v4055 = vrot.slane %v4003, %v4054
      %v4056 = vmul.f32 %v4038, %v4055
      %v4057 = vmul.f32 %v4042, %v4055
      %v4058 = vmul.f32 %v4046, %v4055
      %v4059 = vmul.f32 %v4050, %v4055
      %v4060 = vadd.f32 %v4032, %v4056
      %v4061 = vadd.f32 %v4033, %v4057
      %v4062 = vadd.f32 %v4034, %v4058
      %v4063 = vadd.f32 %v4035, %v4059
      %4064 = vset.pattern.permute.xlu0 2
      %4065 = vperm.xlu0 %4064, %v3999
      %v4066 = vpop.permute.xlu0 %4065
      %4068 = vset.pattern.permute.xlu0 2
      %4069 = vperm.xlu0 %4068, %v4000
      %v4070 = vpop.permute.xlu0 %4069
      %4072 = vset.pattern.permute.xlu0 2
      %4073 = vperm.xlu0 %4072, %v4001
      %v4074 = vpop.permute.xlu0 %4073
      %4076 = vset.pattern.permute.xlu0 2
      %4077 = vperm.xlu0 %4076, %v4002
      %v4078 = vpop.permute.xlu0 %4077
      %v4080 = vlaneseq
      %v4081 = vshrl.u32 %v4080, 7
      %v4082 = vsub.s32 2, %v4081
      %v4083 = vrot.slane %v4003, %v4082
      %v4084 = vmul.f32 %v4066, %v4083
      %v4085 = vmul.f32 %v4070, %v4083
      %v4086 = vmul.f32 %v4074, %v4083
      %v4087 = vmul.f32 %v4078, %v4083
      %v4088 = vadd.f32 %v4060, %v4084
      %v4089 = vadd.f32 %v4061, %v4085
      %v4090 = vadd.f32 %v4062, %v4086
      %v4091 = vadd.f32 %v4063, %v4087
      %s4092 = scalar_lea.vmem %s250, 64
      %v4093 = vld [vmem:[%s4092] sm:$0x3]
      %v4094 = vld [vmem:[%s4092 + $0x4] sm:$0x3]
      %v4095 = vld [vmem:[%s4092 + $0x8] sm:$0x3]
      %v4096 = vld [vmem:[%s4092 + $0xc] sm:$0x3]
      %v4097 = vunpack.c.l.bf16 %v4093
      %v4098 = vunpack.c.l.bf16 %v4094
      %v4099 = vunpack.c.l.bf16 %v4095
      %v4100 = vunpack.c.l.bf16 %v4096
      %v4101 = vld [vmem:[%s988] sm:$0x7]
      %4103 = vset.pattern.permute.xlu0 0
      %4104 = vperm.xlu0 %4103, %v4097
      %v4105 = vpop.permute.xlu0 %4104
      %4108 = vset.pattern.permute.xlu0 0
      %4109 = vperm.xlu0 %4108, %v4098
      %v4110 = vpop.permute.xlu0 %4109
      %4113 = vset.pattern.permute.xlu0 0
      %4114 = vperm.xlu0 %4113, %v4099
      %v4115 = vpop.permute.xlu0 %4114
      %4118 = vset.pattern.permute.xlu0 0
      %4119 = vperm.xlu0 %4118, %v4100
      %v4120 = vpop.permute.xlu0 %4119
      %v4122 = vlaneseq
      %v4123 = vshrl.u32 %v4122, 7
      %v4124 = vsub.s32 0, %v4123
      %v4125 = vrot.slane %v4101, %v4124
      %v4126 = vmul.f32 %v4105, %v4125
      %v4127 = vmul.f32 %v4110, %v4125
      %v4128 = vmul.f32 %v4115, %v4125
      %v4129 = vmul.f32 %v4120, %v4125
      %v4130 = vadd.f32 %v4088, %v4126
      %v4131 = vadd.f32 %v4089, %v4127
      %v4132 = vadd.f32 %v4090, %v4128
      %v4133 = vadd.f32 %v4091, %v4129
      %4134 = vset.pattern.permute.xlu0 1
      %4135 = vperm.xlu0 %4134, %v4097
      %v4136 = vpop.permute.xlu0 %4135
      %4138 = vset.pattern.permute.xlu0 1
      %4139 = vperm.xlu0 %4138, %v4098
      %v4140 = vpop.permute.xlu0 %4139
      %4142 = vset.pattern.permute.xlu0 1
      %4143 = vperm.xlu0 %4142, %v4099
      %v4144 = vpop.permute.xlu0 %4143
      %4146 = vset.pattern.permute.xlu0 1
      %4147 = vperm.xlu0 %4146, %v4100
      %v4148 = vpop.permute.xlu0 %4147
      %v4150 = vlaneseq
      %v4151 = vshrl.u32 %v4150, 7
      %v4152 = vsub.s32 1, %v4151
      %v4153 = vrot.slane %v4101, %v4152
      %v4154 = vmul.f32 %v4136, %v4153
      %v4155 = vmul.f32 %v4140, %v4153
      %v4156 = vmul.f32 %v4144, %v4153
      %v4157 = vmul.f32 %v4148, %v4153
      %v4158 = vadd.f32 %v4130, %v4154
      %v4159 = vadd.f32 %v4131, %v4155
      %v4160 = vadd.f32 %v4132, %v4156
      %v4161 = vadd.f32 %v4133, %v4157
      %4162 = vset.pattern.permute.xlu0 2
      %4163 = vperm.xlu0 %4162, %v4097
      %v4164 = vpop.permute.xlu0 %4163
      %4166 = vset.pattern.permute.xlu0 2
      %4167 = vperm.xlu0 %4166, %v4098
      %v4168 = vpop.permute.xlu0 %4167
      %4170 = vset.pattern.permute.xlu0 2
      %4171 = vperm.xlu0 %4170, %v4099
      %v4172 = vpop.permute.xlu0 %4171
      %4174 = vset.pattern.permute.xlu0 2
      %4175 = vperm.xlu0 %4174, %v4100
      %v4176 = vpop.permute.xlu0 %4175
      %v4178 = vlaneseq
      %v4179 = vshrl.u32 %v4178, 7
      %v4180 = vsub.s32 2, %v4179
      %v4181 = vrot.slane %v4101, %v4180
      %v4182 = vmul.f32 %v4164, %v4181
      %v4183 = vmul.f32 %v4168, %v4181
      %v4184 = vmul.f32 %v4172, %v4181
      %v4185 = vmul.f32 %v4176, %v4181
      %v4186 = vadd.f32 %v4158, %v4182
      %v4187 = vadd.f32 %v4159, %v4183
      %v4188 = vadd.f32 %v4160, %v4184
      %v4189 = vadd.f32 %v4161, %v4185
      %v4190 = vld [vmem:[%s2947] sm:$0x7]
      %v4191 = vld [vmem:[%s2947 + $0x4] sm:$0x7]
      %v4192 = vld [vmem:[%s2947 + $0x8] sm:$0x7]
      %v4193 = vld [vmem:[%s2947 + $0xc] sm:$0x7]
      %v4194 = vunpack.c.l.bf16 %v4190
      %v4195 = vunpack.c.l.bf16 %v4191
      %v4196 = vunpack.c.l.bf16 %v4192
      %v4197 = vunpack.c.l.bf16 %v4193
      %v4198 = vld [vmem:[%s1087] sm:$0x7]
      %4200 = vset.pattern.permute.xlu0 0
      %4201 = vperm.xlu0 %4200, %v4194
      %v4202 = vpop.permute.xlu0 %4201
      %4205 = vset.pattern.permute.xlu0 0
      %4206 = vperm.xlu0 %4205, %v4195
      %v4207 = vpop.permute.xlu0 %4206
      %4210 = vset.pattern.permute.xlu0 0
      %4211 = vperm.xlu0 %4210, %v4196
      %v4212 = vpop.permute.xlu0 %4211
      %4215 = vset.pattern.permute.xlu0 0
      %4216 = vperm.xlu0 %4215, %v4197
      %v4217 = vpop.permute.xlu0 %4216
      %v4219 = vlaneseq
      %v4220 = vshrl.u32 %v4219, 7
      %v4221 = vsub.s32 0, %v4220
      %v4222 = vrot.slane %v4198, %v4221
      %v4223 = vmul.f32 %v4202, %v4222
      %v4224 = vmul.f32 %v4207, %v4222
      %v4225 = vmul.f32 %v4212, %v4222
      %v4226 = vmul.f32 %v4217, %v4222
      %v4231 = vrot.slane %v4223, 1
      %v4232 = vrot.slane %v4224, 1
      %v4233 = vrot.slane %v4225, 1
      %v4234 = vrot.slane %v4226, 1
      %v4239 = vadd.f32 %v4186, %v4231
      %v4240 = vadd.f32 %v4187, %v4232
      %v4241 = vadd.f32 %v4188, %v4233
      %v4242 = vadd.f32 %v4189, %v4234
      %4243 = vset.pattern.permute.xlu0 1
      %4244 = vperm.xlu0 %4243, %v4194
      %v4245 = vpop.permute.xlu0 %4244
      %4247 = vset.pattern.permute.xlu0 1
      %4248 = vperm.xlu0 %4247, %v4195
      %v4249 = vpop.permute.xlu0 %4248
      %4251 = vset.pattern.permute.xlu0 1
      %4252 = vperm.xlu0 %4251, %v4196
      %v4253 = vpop.permute.xlu0 %4252
      %4255 = vset.pattern.permute.xlu0 1
      %4256 = vperm.xlu0 %4255, %v4197
      %v4257 = vpop.permute.xlu0 %4256
      %v4259 = vlaneseq
      %v4260 = vshrl.u32 %v4259, 7
      %v4261 = vsub.s32 1, %v4260
      %v4262 = vrot.slane %v4198, %v4261
      %v4263 = vmul.f32 %v4245, %v4262
      %v4264 = vmul.f32 %v4249, %v4262
      %v4265 = vmul.f32 %v4253, %v4262
      %v4266 = vmul.f32 %v4257, %v4262
      %v4271 = vrot.slane %v4263, 1
      %v4272 = vrot.slane %v4264, 1
      %v4273 = vrot.slane %v4265, 1
      %v4274 = vrot.slane %v4266, 1
      %v4279 = vadd.f32 %v4239, %v4271
      %v4280 = vadd.f32 %v4240, %v4272
      %v4281 = vadd.f32 %v4241, %v4273
      %v4282 = vadd.f32 %v4242, %v4274
      %4283 = vset.pattern.permute.xlu0 2
      %4284 = vperm.xlu0 %4283, %v4194
      %v4285 = vpop.permute.xlu0 %4284
      %4287 = vset.pattern.permute.xlu0 2
      %4288 = vperm.xlu0 %4287, %v4195
      %v4289 = vpop.permute.xlu0 %4288
      %4291 = vset.pattern.permute.xlu0 2
      %4292 = vperm.xlu0 %4291, %v4196
      %v4293 = vpop.permute.xlu0 %4292
      %4295 = vset.pattern.permute.xlu0 2
      %4296 = vperm.xlu0 %4295, %v4197
      %v4297 = vpop.permute.xlu0 %4296
      %v4299 = vlaneseq
      %v4300 = vshrl.u32 %v4299, 7
      %v4301 = vsub.s32 2, %v4300
      %v4302 = vrot.slane %v4198, %v4301
      %v4303 = vmul.f32 %v4285, %v4302
      %v4304 = vmul.f32 %v4289, %v4302
      %v4305 = vmul.f32 %v4293, %v4302
      %v4306 = vmul.f32 %v4297, %v4302
      %v4311 = vrot.slane %v4303, 1
      %v4312 = vrot.slane %v4304, 1
      %v4313 = vrot.slane %v4305, 1
      %v4314 = vrot.slane %v4306, 1
      %v4319 = vadd.f32 %v4279, %v4311
      %v4320 = vadd.f32 %v4280, %v4312
      %v4321 = vadd.f32 %v4281, %v4313
      %v4322 = vadd.f32 %v4282, %v4314
      %v4323 = vld [vmem:[%s4] sm:$0x1]
      %v4324 = vlaneseq
      %v4325 = vshrl.u32 %v4324, 7
      %v4326 = vsub.s32 0, %v4325
      %v4327 = vrot.slane %v4323, %v4326
      %v4328 = vmul.f32 %v4319, %v4327
      %v4329 = vmul.f32 %v4320, %v4327
      %v4330 = vmul.f32 %v4321, %v4327
      %v4331 = vmul.f32 %v4322, %v4327
      %v4332 = vld [vmem:[%s5] sm:$0x1]
      %v4333 = vlaneseq
      %v4334 = vshrl.u32 %v4333, 7
      %v4335 = vsub.s32 0, %v4334
      %v4336 = vrot.slane %v4332, %v4335
      %v4337 = vadd.f32 %v4328, %v4336
      %v4338 = vadd.f32 %v4329, %v4336
      %v4339 = vadd.f32 %v4330, %v4336
      %v4340 = vadd.f32 %v4331, %v4336
      %v4341 = vmul.f32 %v4337, 0.5
      %v4342 = vmul.f32 %v4338, 0.5
      %v4343 = vmul.f32 %v4339, 0.5
      %v4344 = vmul.f32 %v4340, 0.5
      %v4345 = vmul.f32 %v4337, 0.70710677
      %v4346 = vmul.f32 %v4338, 0.70710677
      %v4347 = vmul.f32 %v4339, 0.70710677
      %v4348 = vmul.f32 %v4340, 0.70710677
      %v4349 = verf.f32.pop %v4345
      %v4350 = verf.f32.pop %v4346
      %v4351 = verf.f32.pop %v4347
      %v4352 = verf.f32.pop %v4348
      %v4353 = vadd.f32 %v4349, 1.0
      %v4354 = vadd.f32 %v4350, 1.0
      %v4355 = vadd.f32 %v4351, 1.0
      %v4356 = vadd.f32 %v4352, 1.0
      %v4357 = vmul.f32 %v4341, %v4353
      %v4358 = vmul.f32 %v4342, %v4354
      %v4359 = vmul.f32 %v4343, %v4355
      %v4360 = vmul.f32 %v4344, %v4356
      %v4361 = vpack.c.bf16 %v4357, %v4357
      %v4362 = vpack.c.bf16 %v4358, %v4358
      %v4363 = vpack.c.bf16 %v4359, %v4359
      %v4364 = vpack.c.bf16 %v4360, %v4360
      %v4369 = vunpack.c.l.b16 %v4361
      %v4370 = vunpack.c.l.b16 %v4362
      %v4371 = vunpack.c.l.b16 %v4363
      %v4372 = vunpack.c.l.b16 %v4364
      %v4373 = vpack.c.b16 %v4369, %v4369
      %v4374 = vpack.c.b16 %v4370, %v4370
      %v4375 = vpack.c.b16 %v4371, %v4371
      %v4376 = vpack.c.b16 %v4372, %v4372
      %v4378 = vshrl.u32 %v4373, 16
      %v4380 = vrot.slane %v4378, 7
      %v4381 = vshll.u32 %v4373, 16
      %v4383 = vor.u32 %v4380, %v4381
      %v4385 = vshrl.u32 %v4374, 16
      %v4387 = vrot.slane %v4385, 7
      %v4388 = vshll.u32 %v4374, 16
      %v4390 = vor.u32 %v4387, %v4388
      %v4392 = vshrl.u32 %v4375, 16
      %v4394 = vrot.slane %v4392, 7
      %v4395 = vshll.u32 %v4375, 16
      %v4397 = vor.u32 %v4394, %v4395
      %v4399 = vshrl.u32 %v4376, 16
      %v4401 = vrot.slane %v4399, 7
      %v4402 = vshll.u32 %v4376, 16
      %v4404 = vor.u32 %v4401, %v4402
      %s4409 = scalar_lea.vmem [#allocation2], 76
      %v4410 = vld [vmem:[%s4409] sm:$0x7]
      %v4411 = vsel %vm1266, %v4383, %v4410
      %4412 = vst [vmem:[%s4409] sm:$0x7] %v4411
      %v4413 = vld [vmem:[%s4409 + $0x4] sm:$0x7]
      %v4414 = vsel %vm1266, %v4390, %v4413
      %4415 = vst [vmem:[%s4409 + $0x4] sm:$0x7] %v4414
      %v4416 = vld [vmem:[%s4409 + $0x8] sm:$0x7]
      %v4417 = vsel %vm1266, %v4397, %v4416
      %4418 = vst [vmem:[%s4409 + $0x8] sm:$0x7] %v4417
      %v4419 = vld [vmem:[%s4409 + $0xc] sm:$0x7]
      %v4420 = vsel %vm1266, %v4404, %v4419
      %4421 = vst [vmem:[%s4409 + $0xc] sm:$0x7] %v4420
      %s4422 = scalar_lea.vmem [#allocation2], 72
      %v4423 = vld [vmem:[%s4422] sm:$0x3]
      %v4424 = vld [vmem:[%s4422 + $0x4] sm:$0x3]
      %v4425 = vld [vmem:[%s4422 + $0x8] sm:$0x3]
      %v4426 = vld [vmem:[%s4422 + $0xc] sm:$0x3]
      %v4427 = vld [vmem:[%s2] sm:$0xf]
      %v4428 = vld [vmem:[%s2 + $0x4] sm:$0xf]
      %v4429 = vld [vmem:[%s2 + $0x8] sm:$0xf]
      %v4430 = vld [vmem:[%s2 + $0xc] sm:$0xf]
      %v4431 = vld [vmem:[%s2 + $0x10] sm:$0xf]
      %v4432 = vld [vmem:[%s2 + $0x14] sm:$0xf]
      %v4433 = vld [vmem:[%s2 + $0x18] sm:$0xf]
      %v4434 = vld [vmem:[%s2 + $0x1c] sm:$0xf]
      %v4435 = vld [vmem:[%s2 + $0x20] sm:$0xf]
      %v4436 = vld [vmem:[%s2 + $0x24] sm:$0xf]
      %v4437 = vld [vmem:[%s2 + $0x28] sm:$0xf]
      %v4438 = vld [vmem:[%s2 + $0x2c] sm:$0xf]
      %v4439 = vld [vmem:[%s2 + $0x30] sm:$0xf]
      %v4440 = vld [vmem:[%s2 + $0x34] sm:$0xf]
      %v4441 = vld [vmem:[%s2 + $0x38] sm:$0xf]
      %v4442 = vld [vmem:[%s2 + $0x3c] sm:$0xf]
      %s4443 = scalar_lea.vmem [#allocation2], 48
      %v4444 = vld [vmem:[%s4443] sm:$0x7]
      %v4445 = vld [vmem:[%s4443 + $0x4] sm:$0x7]
      %v4446 = vld [vmem:[%s4443 + $0x8] sm:$0x7]
      %v4447 = vld [vmem:[%s4443 + $0xc] sm:$0x7]
      %v4453 = vunpack.c.l.s4 1983009808
      %v4454 = vunpack.c.0.s8 %v4453
      %v4455 = vlaneseq
      %v4456 = vshrl.u32 %v4455, 7
      %v4457 = vsub.s32 %v4454, %v4456
      %v4458 = vrot.slane %v4444, %v4457
      %v4459 = vcombine.high %v4458, %v4458
      %v4461 = vunpack.c.l.s4 1983009808
      %v4462 = vunpack.c.0.s8 %v4461
      %v4463 = vlaneseq
      %v4464 = vshrl.u32 %v4463, 7
      %v4465 = vsub.s32 %v4462, %v4464
      %v4466 = vrot.slane %v4445, %v4465
      %v4467 = vcombine.high %v4466, %v4466
      %v4469 = vunpack.c.l.s4 1983009808
      %v4470 = vunpack.c.0.s8 %v4469
      %v4471 = vlaneseq
      %v4472 = vshrl.u32 %v4471, 7
      %v4473 = vsub.s32 %v4470, %v4472
      %v4474 = vrot.slane %v4446, %v4473
      %v4475 = vcombine.high %v4474, %v4474
      %v4477 = vunpack.c.l.s4 1983009808
      %v4478 = vunpack.c.0.s8 %v4477
      %v4479 = vlaneseq
      %v4480 = vshrl.u32 %v4479, 7
      %v4481 = vsub.s32 %v4478, %v4480
      %v4482 = vrot.slane %v4447, %v4481
      %v4483 = vcombine.high %v4482, %v4482
      %vm4484 = vsmask.f32 1280
      %vm4485 = vsmask.f32 3336
      %vm4486 = vmor %vm4484, %vm4485
      %vm4487 = vsmask.f32 5392
      %vm4488 = vmor %vm4486, %vm4487
      %vm4489 = vsmask.f32 7448
      %vm4490 = vmor %vm4488, %vm4489
      %v4492 = vshrl.u32 %v4458, 16
      %v4494 = vrot.slane %v4492, 6
      %v4495 = vshll.u32 %v4458, 16
      %v4497 = vrot.slane %v4495, 7
      %v4498 = vor.u32 %v4494, %v4497
      %v4499 = vrot.slane %v4498, 2
      %v4501 = vshll.u32 %v4459, 16
      %v4503 = vrot.slane %v4501, 7
      %v4504 = vsel %vm4490, %v4499, %v4503
      %v4506 = vshrl.u32 %v4466, 16
      %v4508 = vrot.slane %v4506, 6
      %v4509 = vshll.u32 %v4466, 16
      %v4511 = vrot.slane %v4509, 7
      %v4512 = vor.u32 %v4508, %v4511
      %v4513 = vrot.slane %v4512, 2
      %v4515 = vshll.u32 %v4467, 16
      %v4517 = vrot.slane %v4515, 7
      %v4518 = vsel %vm4490, %v4513, %v4517
      %v4520 = vshrl.u32 %v4474, 16
      %v4522 = vrot.slane %v4520, 6
      %v4523 = vshll.u32 %v4474, 16
      %v4525 = vrot.slane %v4523, 7
      %v4526 = vor.u32 %v4522, %v4525
      %v4527 = vrot.slane %v4526, 2
      %v4529 = vshll.u32 %v4475, 16
      %v4531 = vrot.slane %v4529, 7
      %v4532 = vsel %vm4490, %v4527, %v4531
      %v4534 = vshrl.u32 %v4482, 16
      %v4536 = vrot.slane %v4534, 6
      %v4537 = vshll.u32 %v4482, 16
      %v4539 = vrot.slane %v4537, 7
      %v4540 = vor.u32 %v4536, %v4539
      %v4541 = vrot.slane %v4540, 2
      %v4543 = vshll.u32 %v4483, 16
      %v4545 = vrot.slane %v4543, 7
      %v4546 = vsel %vm4490, %v4541, %v4545
      %s4547 = scalar_lea.vmem %s2, 64
      %v4548 = vld [vmem:[%s4547] sm:$0xf]
      %v4549 = vld [vmem:[%s4547 + $0x4] sm:$0xf]
      %v4550 = vld [vmem:[%s4547 + $0x8] sm:$0xf]
      %v4551 = vld [vmem:[%s4547 + $0xc] sm:$0xf]
      %v4552 = vld [vmem:[%s4547 + $0x10] sm:$0xf]
      %v4553 = vld [vmem:[%s4547 + $0x14] sm:$0xf]
      %v4554 = vld [vmem:[%s4547 + $0x18] sm:$0xf]
      %v4555 = vld [vmem:[%s4547 + $0x1c] sm:$0xf]
      %v4556 = vld [vmem:[%s4547 + $0x20] sm:$0xf]
      %v4557 = vld [vmem:[%s4547 + $0x24] sm:$0xf]
      %v4558 = vld [vmem:[%s4547 + $0x28] sm:$0xf]
      %v4559 = vld [vmem:[%s4547 + $0x2c] sm:$0xf]
      %v4560 = vld [vmem:[%s4547 + $0x30] sm:$0xf]
      %v4561 = vld [vmem:[%s4547 + $0x34] sm:$0xf]
      %v4562 = vld [vmem:[%s4547 + $0x38] sm:$0xf]
      %v4563 = vld [vmem:[%s4547 + $0x3c] sm:$0xf]
      %v4564 = vcombine.low %v4504, %v4518
      %v4565 = vcombine.low %v4532, %v4546
      %v4567 = vunpack.c.l.s4 1983009808
      %v4568 = vunpack.c.0.s8 %v4567
      %v4569 = vlaneseq
      %v4570 = vshrl.u32 %v4569, 7
      %v4571 = vsub.s32 %v4568, %v4570
      %v4572 = vrot.slane %v4564, %v4571
      %v4574 = vunpack.c.l.s4 1983009808
      %v4575 = vunpack.c.0.s8 %v4574
      %v4576 = vlaneseq
      %v4577 = vshrl.u32 %v4576, 7
      %v4578 = vsub.s32 %v4575, %v4577
      %v4579 = vrot.slane %v4565, %v4578
      %v4580 = vcombine.low %v4572, %v4579
      %v4598 = vunpack.c.l.b16 %v4548
      %v4599 = vunpack.c.l.b16 %v4549
      %v4600 = vunpack.c.l.b16 %v4550
      %v4601 = vunpack.c.l.b16 %v4551
      %v4602 = vunpack.c.l.b16 %v4552
      %v4603 = vunpack.c.l.b16 %v4553
      %v4604 = vunpack.c.l.b16 %v4554
      %v4605 = vunpack.c.l.b16 %v4555
      %v4606 = vunpack.c.l.b16 %v4556
      %v4607 = vunpack.c.l.b16 %v4557
      %v4608 = vunpack.c.l.b16 %v4558
      %v4609 = vunpack.c.l.b16 %v4559
      %v4610 = vunpack.c.l.b16 %v4560
      %v4611 = vunpack.c.l.b16 %v4561
      %v4612 = vunpack.c.l.b16 %v4562
      %v4613 = vunpack.c.l.b16 %v4563
      %v4614 = vpack.c.b16 %v4599, %v4598
      %v4615 = vpack.c.b16 %v4601, %v4600
      %v4616 = vpack.c.b16 %v4603, %v4602
      %v4617 = vpack.c.b16 %v4605, %v4604
      %v4618 = vpack.c.b16 %v4607, %v4606
      %v4619 = vpack.c.b16 %v4609, %v4608
      %v4620 = vpack.c.b16 %v4611, %v4610
      %v4621 = vpack.c.b16 %v4613, %v4612
      %4630 = vmatprep.subr.bf16.mxu0 0
      %4631 = vmatpush1.bf16.msra.mxu0 %v4621
      %4632 = vmatprep.subr.bf16.mxu0 0
      %4633 = vmatpush1.bf16.msra.mxu0 %v4620
      %4634 = vmatprep.subr.bf16.mxu0 0
      %4635 = vmatpush1.bf16.msra.mxu0 %v4619
      %4636 = vmatprep.subr.bf16.mxu0 0
      %4637 = vmatpush1.bf16.msra.mxu0 %v4618
      %4638 = vmatprep.subr.bf16.mxu0 0
      %4639 = vmatpush1.bf16.msra.mxu0 %v4617
      %4640 = vmatprep.subr.bf16.mxu0 0
      %4641 = vmatpush1.bf16.msra.mxu0 %v4616
      %4642 = vmatprep.subr.bf16.mxu0 0
      %4643 = vmatpush1.bf16.msra.mxu0 %v4615
      %4644 = vmatprep.subr.bf16.mxu0 0
      %4645 = vmatpush1.bf16.msra.mxu0 %v4614
      %4646 = vmatprep.subr.bf16.mxu0 0
      %4647 = vmatpush2.bf16.msra.mxu0 0
      %4648 = vmatprep.subr.bf16.mxu0 0
      %4649 = vmatpush2.bf16.msra.mxu0 0
      %4650 = vmatprep.subr.bf16.mxu0 0
      %4651 = vmatpush2.bf16.msra.mxu0 0
      %4652 = vmatprep.subr.bf16.mxu0 0
      %4653 = vmatpush2.bf16.msra.mxu0 0
      %4654 = vmatprep.subr.bf16.mxu0 0
      %4655 = vmatpush2.bf16.msra.mxu0 0
      %4656 = vmatprep.subr.bf16.mxu0 0
      %4657 = vmatpush2.bf16.msra.mxu0 0
      %4658 = vmatprep.subr.bf16.mxu0 0
      %4659 = vmatpush2.bf16.msra.mxu0 0
      %4660 = vmatprep.subr.bf16.mxu0 0
      %4661 = vmatpush2.bf16.msra.mxu0 0
      %4662 = vmatprep.mubr.bf16.mxu0 0
      %4663 = vmatmul.mubr.bf16.gmra.mxu0 %v4580
      %v4664 = vpop.f32.mrf.mxu0
      %v4665 = vadd.f32 0.0, %v4664
      %v4666 = vpop.f32.mrf.mxu0
      %v4667 = vpop.f32.mrf.mxu0
      %v4668 = vadd.f32 0.0, %v4667
      %v4669 = vpop.f32.mrf.mxu0
      %4670 = vdwg.mxu0
      %v4675 = vcombine.low %v4423, %v4424
      %v4676 = vcombine.low %v4425, %v4426
      %v4678 = vunpack.c.l.s4 1983009808
      %v4679 = vunpack.c.0.s8 %v4678
      %v4680 = vlaneseq
      %v4681 = vshrl.u32 %v4680, 7
      %v4682 = vsub.s32 %v4679, %v4681
      %v4683 = vrot.slane %v4675, %v4682
      %v4685 = vunpack.c.l.s4 1983009808
      %v4686 = vunpack.c.0.s8 %v4685
      %v4687 = vlaneseq
      %v4688 = vshrl.u32 %v4687, 7
      %v4689 = vsub.s32 %v4686, %v4688
      %v4690 = vrot.slane %v4676, %v4689
      %v4691 = vcombine.low %v4683, %v4690
      %v4709 = vunpack.c.l.b16 %v4427
      %v4710 = vunpack.c.l.b16 %v4428
      %v4711 = vunpack.c.l.b16 %v4429
      %v4712 = vunpack.c.l.b16 %v4430
      %v4713 = vunpack.c.l.b16 %v4431
      %v4714 = vunpack.c.l.b16 %v4432
      %v4715 = vunpack.c.l.b16 %v4433
      %v4716 = vunpack.c.l.b16 %v4434
      %v4717 = vunpack.c.l.b16 %v4435
      %v4718 = vunpack.c.l.b16 %v4436
      %v4719 = vunpack.c.l.b16 %v4437
      %v4720 = vunpack.c.l.b16 %v4438
      %v4721 = vunpack.c.l.b16 %v4439
      %v4722 = vunpack.c.l.b16 %v4440
      %v4723 = vunpack.c.l.b16 %v4441
      %v4724 = vunpack.c.l.b16 %v4442
      %v4725 = vpack.c.b16 %v4710, %v4709
      %v4726 = vpack.c.b16 %v4712, %v4711
      %v4727 = vpack.c.b16 %v4714, %v4713
      %v4728 = vpack.c.b16 %v4716, %v4715
      %v4729 = vpack.c.b16 %v4718, %v4717
      %v4730 = vpack.c.b16 %v4720, %v4719
      %v4731 = vpack.c.b16 %v4722, %v4721
      %v4732 = vpack.c.b16 %v4724, %v4723
      %4741 = vmatprep.subr.bf16.mxu0 0
      %4742 = vmatpush1.bf16.msra.mxu0 %v4732
      %4743 = vmatprep.subr.bf16.mxu0 0
      %4744 = vmatpush1.bf16.msra.mxu0 %v4731
      %4745 = vmatprep.subr.bf16.mxu0 0
      %4746 = vmatpush1.bf16.msra.mxu0 %v4730
      %4747 = vmatprep.subr.bf16.mxu0 0
      %4748 = vmatpush1.bf16.msra.mxu0 %v4729
      %4749 = vmatprep.subr.bf16.mxu0 0
      %4750 = vmatpush1.bf16.msra.mxu0 %v4728
      %4751 = vmatprep.subr.bf16.mxu0 0
      %4752 = vmatpush1.bf16.msra.mxu0 %v4727
      %4753 = vmatprep.subr.bf16.mxu0 0
      %4754 = vmatpush1.bf16.msra.mxu0 %v4726
      %4755 = vmatprep.subr.bf16.mxu0 0
      %4756 = vmatpush1.bf16.msra.mxu0 %v4725
      %4757 = vmatprep.subr.bf16.mxu0 0
      %4758 = vmatpush2.bf16.msra.mxu0 0
      %4759 = vmatprep.subr.bf16.mxu0 0
      %4760 = vmatpush2.bf16.msra.mxu0 0
      %4761 = vmatprep.subr.bf16.mxu0 0
      %4762 = vmatpush2.bf16.msra.mxu0 0
      %4763 = vmatprep.subr.bf16.mxu0 0
      %4764 = vmatpush2.bf16.msra.mxu0 0
      %4765 = vmatprep.subr.bf16.mxu0 0
      %4766 = vmatpush2.bf16.msra.mxu0 0
      %4767 = vmatprep.subr.bf16.mxu0 0
      %4768 = vmatpush2.bf16.msra.mxu0 0
      %4769 = vmatprep.subr.bf16.mxu0 0
      %4770 = vmatpush2.bf16.msra.mxu0 0
      %4771 = vmatprep.subr.bf16.mxu0 0
      %4772 = vmatpush2.bf16.msra.mxu0 0
      %4773 = vmatprep.mubr.bf16.mxu0 0
      %4774 = vmatmul.mubr.bf16.gmra.mxu0 %v4691
      %v4775 = vpop.f32.mrf.mxu0
      %v4776 = vadd.f32 %v4665, %v4775
      %v4777 = vpop.f32.mrf.mxu0
      %v4778 = vpop.f32.mrf.mxu0
      %v4779 = vadd.f32 %v4668, %v4778
      %v4780 = vpop.f32.mrf.mxu0
      %4781 = vdwg.mxu0
      %v4782 = vld [vmem:[%s4422] sm:$0x7]
      %v4783 = vld [vmem:[%s4422 + $0x4] sm:$0x7]
      %v4784 = vld [vmem:[%s4422 + $0x8] sm:$0x7]
      %v4785 = vld [vmem:[%s4422 + $0xc] sm:$0x7]
      %v4791 = vunpack.c.l.s4 1983009808
      %v4792 = vunpack.c.0.s8 %v4791
      %v4793 = vlaneseq
      %v4794 = vshrl.u32 %v4793, 7
      %v4795 = vsub.s32 %v4792, %v4794
      %v4796 = vrot.slane %v4782, %v4795
      %v4797 = vcombine.high %v4796, %v4796
      %v4799 = vunpack.c.l.s4 1983009808
      %v4800 = vunpack.c.0.s8 %v4799
      %v4801 = vlaneseq
      %v4802 = vshrl.u32 %v4801, 7
      %v4803 = vsub.s32 %v4800, %v4802
      %v4804 = vrot.slane %v4783, %v4803
      %v4805 = vcombine.high %v4804, %v4804
      %v4807 = vunpack.c.l.s4 1983009808
      %v4808 = vunpack.c.0.s8 %v4807
      %v4809 = vlaneseq
      %v4810 = vshrl.u32 %v4809, 7
      %v4811 = vsub.s32 %v4808, %v4810
      %v4812 = vrot.slane %v4784, %v4811
      %v4813 = vcombine.high %v4812, %v4812
      %v4815 = vunpack.c.l.s4 1983009808
      %v4816 = vunpack.c.0.s8 %v4815
      %v4817 = vlaneseq
      %v4818 = vshrl.u32 %v4817, 7
      %v4819 = vsub.s32 %v4816, %v4818
      %v4820 = vrot.slane %v4785, %v4819
      %v4821 = vcombine.high %v4820, %v4820
      %v4823 = vshrl.u32 %v4796, 16
      %v4825 = vrot.slane %v4823, 6
      %v4826 = vshll.u32 %v4796, 16
      %v4828 = vrot.slane %v4826, 7
      %v4829 = vor.u32 %v4825, %v4828
      %v4830 = vrot.slane %v4829, 2
      %v4832 = vshll.u32 %v4797, 16
      %v4834 = vrot.slane %v4832, 7
      %v4835 = vsel %vm4490, %v4830, %v4834
      %v4837 = vshrl.u32 %v4804, 16
      %v4839 = vrot.slane %v4837, 6
      %v4840 = vshll.u32 %v4804, 16
      %v4842 = vrot.slane %v4840, 7
      %v4843 = vor.u32 %v4839, %v4842
      %v4844 = vrot.slane %v4843, 2
      %v4846 = vshll.u32 %v4805, 16
      %v4848 = vrot.slane %v4846, 7
      %v4849 = vsel %vm4490, %v4844, %v4848
      %v4851 = vshrl.u32 %v4812, 16
      %v4853 = vrot.slane %v4851, 6
      %v4854 = vshll.u32 %v4812, 16
      %v4856 = vrot.slane %v4854, 7
      %v4857 = vor.u32 %v4853, %v4856
      %v4858 = vrot.slane %v4857, 2
      %v4860 = vshll.u32 %v4813, 16
      %v4862 = vrot.slane %v4860, 7
      %v4863 = vsel %vm4490, %v4858, %v4862
      %v4865 = vshrl.u32 %v4820, 16
      %v4867 = vrot.slane %v4865, 6
      %v4868 = vshll.u32 %v4820, 16
      %v4870 = vrot.slane %v4868, 7
      %v4871 = vor.u32 %v4867, %v4870
      %v4872 = vrot.slane %v4871, 2
      %v4874 = vshll.u32 %v4821, 16
      %v4876 = vrot.slane %v4874, 7
      %v4877 = vsel %vm4490, %v4872, %v4876
      %s4878 = scalar_lea.vmem %s2, 128
      %v4879 = vld [vmem:[%s4878] sm:$0xf]
      %v4880 = vld [vmem:[%s4878 + $0x4] sm:$0xf]
      %v4881 = vld [vmem:[%s4878 + $0x8] sm:$0xf]
      %v4882 = vld [vmem:[%s4878 + $0xc] sm:$0xf]
      %v4883 = vld [vmem:[%s4878 + $0x10] sm:$0xf]
      %v4884 = vld [vmem:[%s4878 + $0x14] sm:$0xf]
      %v4885 = vld [vmem:[%s4878 + $0x18] sm:$0xf]
      %v4886 = vld [vmem:[%s4878 + $0x1c] sm:$0xf]
      %v4887 = vld [vmem:[%s4878 + $0x20] sm:$0xf]
      %v4888 = vld [vmem:[%s4878 + $0x24] sm:$0xf]
      %v4889 = vld [vmem:[%s4878 + $0x28] sm:$0xf]
      %v4890 = vld [vmem:[%s4878 + $0x2c] sm:$0xf]
      %v4891 = vld [vmem:[%s4878 + $0x30] sm:$0xf]
      %v4892 = vld [vmem:[%s4878 + $0x34] sm:$0xf]
      %v4893 = vld [vmem:[%s4878 + $0x38] sm:$0xf]
      %v4894 = vld [vmem:[%s4878 + $0x3c] sm:$0xf]
      %v4895 = vcombine.low %v4835, %v4849
      %v4896 = vcombine.low %v4863, %v4877
      %v4898 = vunpack.c.l.s4 1983009808
      %v4899 = vunpack.c.0.s8 %v4898
      %v4900 = vlaneseq
      %v4901 = vshrl.u32 %v4900, 7
      %v4902 = vsub.s32 %v4899, %v4901
      %v4903 = vrot.slane %v4895, %v4902
      %v4905 = vunpack.c.l.s4 1983009808
      %v4906 = vunpack.c.0.s8 %v4905
      %v4907 = vlaneseq
      %v4908 = vshrl.u32 %v4907, 7
      %v4909 = vsub.s32 %v4906, %v4908
      %v4910 = vrot.slane %v4896, %v4909
      %v4911 = vcombine.low %v4903, %v4910
      %v4929 = vunpack.c.l.b16 %v4879
      %v4930 = vunpack.c.l.b16 %v4880
      %v4931 = vunpack.c.l.b16 %v4881
      %v4932 = vunpack.c.l.b16 %v4882
      %v4933 = vunpack.c.l.b16 %v4883
      %v4934 = vunpack.c.l.b16 %v4884
      %v4935 = vunpack.c.l.b16 %v4885
      %v4936 = vunpack.c.l.b16 %v4886
      %v4937 = vunpack.c.l.b16 %v4887
      %v4938 = vunpack.c.l.b16 %v4888
      %v4939 = vunpack.c.l.b16 %v4889
      %v4940 = vunpack.c.l.b16 %v4890
      %v4941 = vunpack.c.l.b16 %v4891
      %v4942 = vunpack.c.l.b16 %v4892
      %v4943 = vunpack.c.l.b16 %v4893
      %v4944 = vunpack.c.l.b16 %v4894
      %v4945 = vpack.c.b16 %v4930, %v4929
      %v4946 = vpack.c.b16 %v4932, %v4931
      %v4947 = vpack.c.b16 %v4934, %v4933
      %v4948 = vpack.c.b16 %v4936, %v4935
      %v4949 = vpack.c.b16 %v4938, %v4937
      %v4950 = vpack.c.b16 %v4940, %v4939
      %v4951 = vpack.c.b16 %v4942, %v4941
      %v4952 = vpack.c.b16 %v4944, %v4943
      %4961 = vmatprep.subr.bf16.mxu0 0
      %4962 = vmatpush1.bf16.msra.mxu0 %v4952
      %4963 = vmatprep.subr.bf16.mxu0 0
      %4964 = vmatpush1.bf16.msra.mxu0 %v4951
      %4965 = vmatprep.subr.bf16.mxu0 0
      %4966 = vmatpush1.bf16.msra.mxu0 %v4950
      %4967 = vmatprep.subr.bf16.mxu0 0
      %4968 = vmatpush1.bf16.msra.mxu0 %v4949
      %4969 = vmatprep.subr.bf16.mxu0 0
      %4970 = vmatpush1.bf16.msra.mxu0 %v4948
      %4971 = vmatprep.subr.bf16.mxu0 0
      %4972 = vmatpush1.bf16.msra.mxu0 %v4947
      %4973 = vmatprep.subr.bf16.mxu0 0
      %4974 = vmatpush1.bf16.msra.mxu0 %v4946
      %4975 = vmatprep.subr.bf16.mxu0 0
      %4976 = vmatpush1.bf16.msra.mxu0 %v4945
      %4977 = vmatprep.subr.bf16.mxu0 0
      %4978 = vmatpush2.bf16.msra.mxu0 0
      %4979 = vmatprep.subr.bf16.mxu0 0
      %4980 = vmatpush2.bf16.msra.mxu0 0
      %4981 = vmatprep.subr.bf16.mxu0 0
      %4982 = vmatpush2.bf16.msra.mxu0 0
      %4983 = vmatprep.subr.bf16.mxu0 0
      %4984 = vmatpush2.bf16.msra.mxu0 0
      %4985 = vmatprep.subr.bf16.mxu0 0
      %4986 = vmatpush2.bf16.msra.mxu0 0
      %4987 = vmatprep.subr.bf16.mxu0 0
      %4988 = vmatpush2.bf16.msra.mxu0 0
      %4989 = vmatprep.subr.bf16.mxu0 0
      %4990 = vmatpush2.bf16.msra.mxu0 0
      %4991 = vmatprep.subr.bf16.mxu0 0
      %4992 = vmatpush2.bf16.msra.mxu0 0
      %4993 = vmatprep.mubr.bf16.mxu0 0
      %4994 = vmatmul.mubr.bf16.gmra.mxu0 %v4911
      %v4995 = vpop.f32.mrf.mxu0
      %v4996 = vadd.f32 0.0, %v4995
      %v4997 = vpop.f32.mrf.mxu0
      %v4998 = vpop.f32.mrf.mxu0
      %v4999 = vadd.f32 0.0, %v4998
      %v5000 = vpop.f32.mrf.mxu0
      %5001 = vdwg.mxu0
      %v5002 = vadd.f32 %v4776, %v4996
      %v5003 = vadd.f32 %v4779, %v4999
      %v5004 = vld [vmem:[%s2349] sm:$0x3]
      %v5005 = vld [vmem:[%s2349 + $0x4] sm:$0x3]
      %v5006 = vld [vmem:[%s2349 + $0x8] sm:$0x3]
      %v5007 = vld [vmem:[%s2349 + $0xc] sm:$0x3]
      %s5008 = scalar_lea.vmem %s2, 192
      %v5009 = vld [vmem:[%s5008] sm:$0xf]
      %v5010 = vld [vmem:[%s5008 + $0x4] sm:$0xf]
      %v5011 = vld [vmem:[%s5008 + $0x8] sm:$0xf]
      %v5012 = vld [vmem:[%s5008 + $0xc] sm:$0xf]
      %v5013 = vld [vmem:[%s5008 + $0x10] sm:$0xf]
      %v5014 = vld [vmem:[%s5008 + $0x14] sm:$0xf]
      %v5015 = vld [vmem:[%s5008 + $0x18] sm:$0xf]
      %v5016 = vld [vmem:[%s5008 + $0x1c] sm:$0xf]
      %v5017 = vld [vmem:[%s5008 + $0x20] sm:$0xf]
      %v5018 = vld [vmem:[%s5008 + $0x24] sm:$0xf]
      %v5019 = vld [vmem:[%s5008 + $0x28] sm:$0xf]
      %v5020 = vld [vmem:[%s5008 + $0x2c] sm:$0xf]
      %v5021 = vld [vmem:[%s5008 + $0x30] sm:$0xf]
      %v5022 = vld [vmem:[%s5008 + $0x34] sm:$0xf]
      %v5023 = vld [vmem:[%s5008 + $0x38] sm:$0xf]
      %v5024 = vld [vmem:[%s5008 + $0x3c] sm:$0xf]
      %v5029 = vcombine.low %v5004, %v5005
      %v5030 = vcombine.low %v5006, %v5007
      %v5032 = vunpack.c.l.s4 1983009808
      %v5033 = vunpack.c.0.s8 %v5032
      %v5034 = vlaneseq
      %v5035 = vshrl.u32 %v5034, 7
      %v5036 = vsub.s32 %v5033, %v5035
      %v5037 = vrot.slane %v5029, %v5036
      %v5039 = vunpack.c.l.s4 1983009808
      %v5040 = vunpack.c.0.s8 %v5039
      %v5041 = vlaneseq
      %v5042 = vshrl.u32 %v5041, 7
      %v5043 = vsub.s32 %v5040, %v5042
      %v5044 = vrot.slane %v5030, %v5043
      %v5045 = vcombine.low %v5037, %v5044
      %v5063 = vunpack.c.l.b16 %v5009
      %v5064 = vunpack.c.l.b16 %v5010
      %v5065 = vunpack.c.l.b16 %v5011
      %v5066 = vunpack.c.l.b16 %v5012
      %v5067 = vunpack.c.l.b16 %v5013
      %v5068 = vunpack.c.l.b16 %v5014
      %v5069 = vunpack.c.l.b16 %v5015
      %v5070 = vunpack.c.l.b16 %v5016
      %v5071 = vunpack.c.l.b16 %v5017
      %v5072 = vunpack.c.l.b16 %v5018
      %v5073 = vunpack.c.l.b16 %v5019
      %v5074 = vunpack.c.l.b16 %v5020
      %v5075 = vunpack.c.l.b16 %v5021
      %v5076 = vunpack.c.l.b16 %v5022
      %v5077 = vunpack.c.l.b16 %v5023
      %v5078 = vunpack.c.l.b16 %v5024
      %v5079 = vpack.c.b16 %v5064, %v5063
      %v5080 = vpack.c.b16 %v5066, %v5065
      %v5081 = vpack.c.b16 %v5068, %v5067
      %v5082 = vpack.c.b16 %v5070, %v5069
      %v5083 = vpack.c.b16 %v5072, %v5071
      %v5084 = vpack.c.b16 %v5074, %v5073
      %v5085 = vpack.c.b16 %v5076, %v5075
      %v5086 = vpack.c.b16 %v5078, %v5077
      %5095 = vmatprep.subr.bf16.mxu0 0
      %5096 = vmatpush1.bf16.msra.mxu0 %v5086
      %5097 = vmatprep.subr.bf16.mxu0 0
      %5098 = vmatpush1.bf16.msra.mxu0 %v5085
      %5099 = vmatprep.subr.bf16.mxu0 0
      %5100 = vmatpush1.bf16.msra.mxu0 %v5084
      %5101 = vmatprep.subr.bf16.mxu0 0
      %5102 = vmatpush1.bf16.msra.mxu0 %v5083
      %5103 = vmatprep.subr.bf16.mxu0 0
      %5104 = vmatpush1.bf16.msra.mxu0 %v5082
      %5105 = vmatprep.subr.bf16.mxu0 0
      %5106 = vmatpush1.bf16.msra.mxu0 %v5081
      %5107 = vmatprep.subr.bf16.mxu0 0
      %5108 = vmatpush1.bf16.msra.mxu0 %v5080
      %5109 = vmatprep.subr.bf16.mxu0 0
      %5110 = vmatpush1.bf16.msra.mxu0 %v5079
      %5111 = vmatprep.subr.bf16.mxu0 0
      %5112 = vmatpush2.bf16.msra.mxu0 0
      %5113 = vmatprep.subr.bf16.mxu0 0
      %5114 = vmatpush2.bf16.msra.mxu0 0
      %5115 = vmatprep.subr.bf16.mxu0 0
      %5116 = vmatpush2.bf16.msra.mxu0 0
      %5117 = vmatprep.subr.bf16.mxu0 0
      %5118 = vmatpush2.bf16.msra.mxu0 0
      %5119 = vmatprep.subr.bf16.mxu0 0
      %5120 = vmatpush2.bf16.msra.mxu0 0
      %5121 = vmatprep.subr.bf16.mxu0 0
      %5122 = vmatpush2.bf16.msra.mxu0 0
      %5123 = vmatprep.subr.bf16.mxu0 0
      %5124 = vmatpush2.bf16.msra.mxu0 0
      %5125 = vmatprep.subr.bf16.mxu0 0
      %5126 = vmatpush2.bf16.msra.mxu0 0
      %5127 = vmatprep.mubr.bf16.mxu0 0
      %5128 = vmatmul.mubr.bf16.gmra.mxu0 %v5045
      %v5129 = vpop.f32.mrf.mxu0
      %v5130 = vadd.f32 0.0, %v5129
      %v5131 = vpop.f32.mrf.mxu0
      %v5132 = vpop.f32.mrf.mxu0
      %v5133 = vadd.f32 0.0, %v5132
      %v5134 = vpop.f32.mrf.mxu0
      %5135 = vdwg.mxu0
      %v5136 = vadd.f32 %v5002, %v5130
      %v5137 = vadd.f32 %v5003, %v5133
      %v5138 = vld [vmem:[%s1263] sm:$0x7]
      %v5139 = vld [vmem:[%s1263 + $0x4] sm:$0x7]
      %v5140 = vld [vmem:[%s1263 + $0x8] sm:$0x7]
      %v5141 = vld [vmem:[%s1263 + $0xc] sm:$0x7]
      %v5147 = vunpack.c.l.s4 1983009808
      %v5148 = vunpack.c.0.s8 %v5147
      %v5149 = vlaneseq
      %v5150 = vshrl.u32 %v5149, 7
      %v5151 = vsub.s32 %v5148, %v5150
      %v5152 = vrot.slane %v5138, %v5151
      %v5153 = vcombine.high %v5152, %v5152
      %v5155 = vunpack.c.l.s4 1983009808
      %v5156 = vunpack.c.0.s8 %v5155
      %v5157 = vlaneseq
      %v5158 = vshrl.u32 %v5157, 7
      %v5159 = vsub.s32 %v5156, %v5158
      %v5160 = vrot.slane %v5139, %v5159
      %v5161 = vcombine.high %v5160, %v5160
      %v5163 = vunpack.c.l.s4 1983009808
      %v5164 = vunpack.c.0.s8 %v5163
      %v5165 = vlaneseq
      %v5166 = vshrl.u32 %v5165, 7
      %v5167 = vsub.s32 %v5164, %v5166
      %v5168 = vrot.slane %v5140, %v5167
      %v5169 = vcombine.high %v5168, %v5168
      %v5171 = vunpack.c.l.s4 1983009808
      %v5172 = vunpack.c.0.s8 %v5171
      %v5173 = vlaneseq
      %v5174 = vshrl.u32 %v5173, 7
      %v5175 = vsub.s32 %v5172, %v5174
      %v5176 = vrot.slane %v5141, %v5175
      %v5177 = vcombine.high %v5176, %v5176
      %v5179 = vshrl.u32 %v5152, 16
      %v5181 = vrot.slane %v5179, 6
      %v5182 = vshll.u32 %v5152, 16
      %v5184 = vrot.slane %v5182, 7
      %v5185 = vor.u32 %v5181, %v5184
      %v5186 = vrot.slane %v5185, 2
      %v5188 = vshll.u32 %v5153, 16
      %v5190 = vrot.slane %v5188, 7
      %v5191 = vsel %vm4490, %v5186, %v5190
      %v5193 = vshrl.u32 %v5160, 16
      %v5195 = vrot.slane %v5193, 6
      %v5196 = vshll.u32 %v5160, 16
      %v5198 = vrot.slane %v5196, 7
      %v5199 = vor.u32 %v5195, %v5198
      %v5200 = vrot.slane %v5199, 2
      %v5202 = vshll.u32 %v5161, 16
      %v5204 = vrot.slane %v5202, 7
      %v5205 = vsel %vm4490, %v5200, %v5204
      %v5207 = vshrl.u32 %v5168, 16
      %v5209 = vrot.slane %v5207, 6
      %v5210 = vshll.u32 %v5168, 16
      %v5212 = vrot.slane %v5210, 7
      %v5213 = vor.u32 %v5209, %v5212
      %v5214 = vrot.slane %v5213, 2
      %v5216 = vshll.u32 %v5169, 16
      %v5218 = vrot.slane %v5216, 7
      %v5219 = vsel %vm4490, %v5214, %v5218
      %v5221 = vshrl.u32 %v5176, 16
      %v5223 = vrot.slane %v5221, 6
      %v5224 = vshll.u32 %v5176, 16
      %v5226 = vrot.slane %v5224, 7
      %v5227 = vor.u32 %v5223, %v5226
      %v5228 = vrot.slane %v5227, 2
      %v5230 = vshll.u32 %v5177, 16
      %v5232 = vrot.slane %v5230, 7
      %v5233 = vsel %vm4490, %v5228, %v5232
      %s5234 = scalar_lea.vmem %s2, 256
      %v5235 = vld [vmem:[%s5234] sm:$0xf]
      %v5236 = vld [vmem:[%s5234 + $0x4] sm:$0xf]
      %v5237 = vld [vmem:[%s5234 + $0x8] sm:$0xf]
      %v5238 = vld [vmem:[%s5234 + $0xc] sm:$0xf]
      %v5239 = vld [vmem:[%s5234 + $0x10] sm:$0xf]
      %v5240 = vld [vmem:[%s5234 + $0x14] sm:$0xf]
      %v5241 = vld [vmem:[%s5234 + $0x18] sm:$0xf]
      %v5242 = vld [vmem:[%s5234 + $0x1c] sm:$0xf]
      %v5243 = vld [vmem:[%s5234 + $0x20] sm:$0xf]
      %v5244 = vld [vmem:[%s5234 + $0x24] sm:$0xf]
      %v5245 = vld [vmem:[%s5234 + $0x28] sm:$0xf]
      %v5246 = vld [vmem:[%s5234 + $0x2c] sm:$0xf]
      %v5247 = vld [vmem:[%s5234 + $0x30] sm:$0xf]
      %v5248 = vld [vmem:[%s5234 + $0x34] sm:$0xf]
      %v5249 = vld [vmem:[%s5234 + $0x38] sm:$0xf]
      %v5250 = vld [vmem:[%s5234 + $0x3c] sm:$0xf]
      %v5251 = vcombine.low %v5191, %v5205
      %v5252 = vcombine.low %v5219, %v5233
      %v5254 = vunpack.c.l.s4 1983009808
      %v5255 = vunpack.c.0.s8 %v5254
      %v5256 = vlaneseq
      %v5257 = vshrl.u32 %v5256, 7
      %v5258 = vsub.s32 %v5255, %v5257
      %v5259 = vrot.slane %v5251, %v5258
      %v5261 = vunpack.c.l.s4 1983009808
      %v5262 = vunpack.c.0.s8 %v5261
      %v5263 = vlaneseq
      %v5264 = vshrl.u32 %v5263, 7
      %v5265 = vsub.s32 %v5262, %v5264
      %v5266 = vrot.slane %v5252, %v5265
      %v5267 = vcombine.low %v5259, %v5266
      %v5285 = vunpack.c.l.b16 %v5235
      %v5286 = vunpack.c.l.b16 %v5236
      %v5287 = vunpack.c.l.b16 %v5237
      %v5288 = vunpack.c.l.b16 %v5238
      %v5289 = vunpack.c.l.b16 %v5239
      %v5290 = vunpack.c.l.b16 %v5240
      %v5291 = vunpack.c.l.b16 %v5241
      %v5292 = vunpack.c.l.b16 %v5242
      %v5293 = vunpack.c.l.b16 %v5243
      %v5294 = vunpack.c.l.b16 %v5244
      %v5295 = vunpack.c.l.b16 %v5245
      %v5296 = vunpack.c.l.b16 %v5246
      %v5297 = vunpack.c.l.b16 %v5247
      %v5298 = vunpack.c.l.b16 %v5248
      %v5299 = vunpack.c.l.b16 %v5249
      %v5300 = vunpack.c.l.b16 %v5250
      %v5301 = vpack.c.b16 %v5286, %v5285
      %v5302 = vpack.c.b16 %v5288, %v5287
      %v5303 = vpack.c.b16 %v5290, %v5289
      %v5304 = vpack.c.b16 %v5292, %v5291
      %v5305 = vpack.c.b16 %v5294, %v5293
      %v5306 = vpack.c.b16 %v5296, %v5295
      %v5307 = vpack.c.b16 %v5298, %v5297
      %v5308 = vpack.c.b16 %v5300, %v5299
      %5317 = vmatprep.subr.bf16.mxu0 0
      %5318 = vmatpush1.bf16.msra.mxu0 %v5308
      %5319 = vmatprep.subr.bf16.mxu0 0
      %5320 = vmatpush1.bf16.msra.mxu0 %v5307
      %5321 = vmatprep.subr.bf16.mxu0 0
      %5322 = vmatpush1.bf16.msra.mxu0 %v5306
      %5323 = vmatprep.subr.bf16.mxu0 0
      %5324 = vmatpush1.bf16.msra.mxu0 %v5305
      %5325 = vmatprep.subr.bf16.mxu0 0
      %5326 = vmatpush1.bf16.msra.mxu0 %v5304
      %5327 = vmatprep.subr.bf16.mxu0 0
      %5328 = vmatpush1.bf16.msra.mxu0 %v5303
      %5329 = vmatprep.subr.bf16.mxu0 0
      %5330 = vmatpush1.bf16.msra.mxu0 %v5302
      %5331 = vmatprep.subr.bf16.mxu0 0
      %5332 = vmatpush1.bf16.msra.mxu0 %v5301
      %5333 = vmatprep.subr.bf16.mxu0 0
      %5334 = vmatpush2.bf16.msra.mxu0 0
      %5335 = vmatprep.subr.bf16.mxu0 0
      %5336 = vmatpush2.bf16.msra.mxu0 0
      %5337 = vmatprep.subr.bf16.mxu0 0
      %5338 = vmatpush2.bf16.msra.mxu0 0
      %5339 = vmatprep.subr.bf16.mxu0 0
      %5340 = vmatpush2.bf16.msra.mxu0 0
      %5341 = vmatprep.subr.bf16.mxu0 0
      %5342 = vmatpush2.bf16.msra.mxu0 0
      %5343 = vmatprep.subr.bf16.mxu0 0
      %5344 = vmatpush2.bf16.msra.mxu0 0
      %5345 = vmatprep.subr.bf16.mxu0 0
      %5346 = vmatpush2.bf16.msra.mxu0 0
      %5347 = vmatprep.subr.bf16.mxu0 0
      %5348 = vmatpush2.bf16.msra.mxu0 0
      %5349 = vmatprep.mubr.bf16.mxu0 0
      %5350 = vmatmul.mubr.bf16.gmra.mxu0 %v5267
      %v5351 = vpop.f32.mrf.mxu0
      %v5352 = vadd.f32 0.0, %v5351
      %v5353 = vpop.f32.mrf.mxu0
      %v5354 = vpop.f32.mrf.mxu0
      %v5355 = vadd.f32 0.0, %v5354
      %v5356 = vpop.f32.mrf.mxu0
      %5357 = vdwg.mxu0
      %v5358 = vadd.f32 %v5136, %v5352
      %v5359 = vadd.f32 %v5137, %v5355
      %v5360 = vld [vmem:[%s2349] sm:$0x7]
      %v5361 = vld [vmem:[%s2349 + $0x4] sm:$0x7]
      %v5362 = vld [vmem:[%s2349 + $0x8] sm:$0x7]
      %v5363 = vld [vmem:[%s2349 + $0xc] sm:$0x7]
      %v5369 = vunpack.c.l.s4 1983009808
      %v5370 = vunpack.c.0.s8 %v5369
      %v5371 = vlaneseq
      %v5372 = vshrl.u32 %v5371, 7
      %v5373 = vsub.s32 %v5370, %v5372
      %v5374 = vrot.slane %v5360, %v5373
      %v5375 = vcombine.high %v5374, %v5374
      %v5377 = vunpack.c.l.s4 1983009808
      %v5378 = vunpack.c.0.s8 %v5377
      %v5379 = vlaneseq
      %v5380 = vshrl.u32 %v5379, 7
      %v5381 = vsub.s32 %v5378, %v5380
      %v5382 = vrot.slane %v5361, %v5381
      %v5383 = vcombine.high %v5382, %v5382
      %v5385 = vunpack.c.l.s4 1983009808
      %v5386 = vunpack.c.0.s8 %v5385
      %v5387 = vlaneseq
      %v5388 = vshrl.u32 %v5387, 7
      %v5389 = vsub.s32 %v5386, %v5388
      %v5390 = vrot.slane %v5362, %v5389
      %v5391 = vcombine.high %v5390, %v5390
      %v5393 = vunpack.c.l.s4 1983009808
      %v5394 = vunpack.c.0.s8 %v5393
      %v5395 = vlaneseq
      %v5396 = vshrl.u32 %v5395, 7
      %v5397 = vsub.s32 %v5394, %v5396
      %v5398 = vrot.slane %v5363, %v5397
      %v5399 = vcombine.high %v5398, %v5398
      %v5401 = vshrl.u32 %v5374, 16
      %v5403 = vrot.slane %v5401, 6
      %v5404 = vshll.u32 %v5374, 16
      %v5406 = vrot.slane %v5404, 7
      %v5407 = vor.u32 %v5403, %v5406
      %v5408 = vrot.slane %v5407, 2
      %v5410 = vshll.u32 %v5375, 16
      %v5412 = vrot.slane %v5410, 7
      %v5413 = vsel %vm4490, %v5408, %v5412
      %v5415 = vshrl.u32 %v5382, 16
      %v5417 = vrot.slane %v5415, 6
      %v5418 = vshll.u32 %v5382, 16
      %v5420 = vrot.slane %v5418, 7
      %v5421 = vor.u32 %v5417, %v5420
      %v5422 = vrot.slane %v5421, 2
      %v5424 = vshll.u32 %v5383, 16
      %v5426 = vrot.slane %v5424, 7
      %v5427 = vsel %vm4490, %v5422, %v5426
      %v5429 = vshrl.u32 %v5390, 16
      %v5431 = vrot.slane %v5429, 6
      %v5432 = vshll.u32 %v5390, 16
      %v5434 = vrot.slane %v5432, 7
      %v5435 = vor.u32 %v5431, %v5434
      %v5436 = vrot.slane %v5435, 2
      %v5438 = vshll.u32 %v5391, 16
      %v5440 = vrot.slane %v5438, 7
      %v5441 = vsel %vm4490, %v5436, %v5440
      %v5443 = vshrl.u32 %v5398, 16
      %v5445 = vrot.slane %v5443, 6
      %v5446 = vshll.u32 %v5398, 16
      %v5448 = vrot.slane %v5446, 7
      %v5449 = vor.u32 %v5445, %v5448
      %v5450 = vrot.slane %v5449, 2
      %v5452 = vshll.u32 %v5399, 16
      %v5454 = vrot.slane %v5452, 7
      %v5455 = vsel %vm4490, %v5450, %v5454
      %s5456 = scalar_lea.vmem %s2, 320
      %v5457 = vld [vmem:[%s5456] sm:$0xf]
      %v5458 = vld [vmem:[%s5456 + $0x4] sm:$0xf]
      %v5459 = vld [vmem:[%s5456 + $0x8] sm:$0xf]
      %v5460 = vld [vmem:[%s5456 + $0xc] sm:$0xf]
      %v5461 = vld [vmem:[%s5456 + $0x10] sm:$0xf]
      %v5462 = vld [vmem:[%s5456 + $0x14] sm:$0xf]
      %v5463 = vld [vmem:[%s5456 + $0x18] sm:$0xf]
      %v5464 = vld [vmem:[%s5456 + $0x1c] sm:$0xf]
      %v5465 = vld [vmem:[%s5456 + $0x20] sm:$0xf]
      %v5466 = vld [vmem:[%s5456 + $0x24] sm:$0xf]
      %v5467 = vld [vmem:[%s5456 + $0x28] sm:$0xf]
      %v5468 = vld [vmem:[%s5456 + $0x2c] sm:$0xf]
      %v5469 = vld [vmem:[%s5456 + $0x30] sm:$0xf]
      %v5470 = vld [vmem:[%s5456 + $0x34] sm:$0xf]
      %v5471 = vld [vmem:[%s5456 + $0x38] sm:$0xf]
      %v5472 = vld [vmem:[%s5456 + $0x3c] sm:$0xf]
      %v5473 = vcombine.low %v5413, %v5427
      %v5474 = vcombine.low %v5441, %v5455
      %v5476 = vunpack.c.l.s4 1983009808
      %v5477 = vunpack.c.0.s8 %v5476
      %v5478 = vlaneseq
      %v5479 = vshrl.u32 %v5478, 7
      %v5480 = vsub.s32 %v5477, %v5479
      %v5481 = vrot.slane %v5473, %v5480
      %v5483 = vunpack.c.l.s4 1983009808
      %v5484 = vunpack.c.0.s8 %v5483
      %v5485 = vlaneseq
      %v5486 = vshrl.u32 %v5485, 7
      %v5487 = vsub.s32 %v5484, %v5486
      %v5488 = vrot.slane %v5474, %v5487
      %v5489 = vcombine.low %v5481, %v5488
      %v5507 = vunpack.c.l.b16 %v5457
      %v5508 = vunpack.c.l.b16 %v5458
      %v5509 = vunpack.c.l.b16 %v5459
      %v5510 = vunpack.c.l.b16 %v5460
      %v5511 = vunpack.c.l.b16 %v5461
      %v5512 = vunpack.c.l.b16 %v5462
      %v5513 = vunpack.c.l.b16 %v5463
      %v5514 = vunpack.c.l.b16 %v5464
      %v5515 = vunpack.c.l.b16 %v5465
      %v5516 = vunpack.c.l.b16 %v5466
      %v5517 = vunpack.c.l.b16 %v5467
      %v5518 = vunpack.c.l.b16 %v5468
      %v5519 = vunpack.c.l.b16 %v5469
      %v5520 = vunpack.c.l.b16 %v5470
      %v5521 = vunpack.c.l.b16 %v5471
      %v5522 = vunpack.c.l.b16 %v5472
      %v5523 = vpack.c.b16 %v5508, %v5507
      %v5524 = vpack.c.b16 %v5510, %v5509
      %v5525 = vpack.c.b16 %v5512, %v5511
      %v5526 = vpack.c.b16 %v5514, %v5513
      %v5527 = vpack.c.b16 %v5516, %v5515
      %v5528 = vpack.c.b16 %v5518, %v5517
      %v5529 = vpack.c.b16 %v5520, %v5519
      %v5530 = vpack.c.b16 %v5522, %v5521
      %5539 = vmatprep.subr.bf16.mxu0 0
      %5540 = vmatpush1.bf16.msra.mxu0 %v5530
      %5541 = vmatprep.subr.bf16.mxu0 0
      %5542 = vmatpush1.bf16.msra.mxu0 %v5529
      %5543 = vmatprep.subr.bf16.mxu0 0
      %5544 = vmatpush1.bf16.msra.mxu0 %v5528
      %5545 = vmatprep.subr.bf16.mxu0 0
      %5546 = vmatpush1.bf16.msra.mxu0 %v5527
      %5547 = vmatprep.subr.bf16.mxu0 0
      %5548 = vmatpush1.bf16.msra.mxu0 %v5526
      %5549 = vmatprep.subr.bf16.mxu0 0
      %5550 = vmatpush1.bf16.msra.mxu0 %v5525
      %5551 = vmatprep.subr.bf16.mxu0 0
      %5552 = vmatpush1.bf16.msra.mxu0 %v5524
      %5553 = vmatprep.subr.bf16.mxu0 0
      %5554 = vmatpush1.bf16.msra.mxu0 %v5523
      %5555 = vmatprep.subr.bf16.mxu0 0
      %5556 = vmatpush2.bf16.msra.mxu0 0
      %5557 = vmatprep.subr.bf16.mxu0 0
      %5558 = vmatpush2.bf16.msra.mxu0 0
      %5559 = vmatprep.subr.bf16.mxu0 0
      %5560 = vmatpush2.bf16.msra.mxu0 0
      %5561 = vmatprep.subr.bf16.mxu0 0
      %5562 = vmatpush2.bf16.msra.mxu0 0
      %5563 = vmatprep.subr.bf16.mxu0 0
      %5564 = vmatpush2.bf16.msra.mxu0 0
      %5565 = vmatprep.subr.bf16.mxu0 0
      %5566 = vmatpush2.bf16.msra.mxu0 0
      %5567 = vmatprep.subr.bf16.mxu0 0
      %5568 = vmatpush2.bf16.msra.mxu0 0
      %5569 = vmatprep.subr.bf16.mxu0 0
      %5570 = vmatpush2.bf16.msra.mxu0 0
      %5571 = vmatprep.mubr.bf16.mxu0 0
      %5572 = vmatmul.mubr.bf16.gmra.mxu0 %v5489
      %v5573 = vpop.f32.mrf.mxu0
      %v5574 = vadd.f32 0.0, %v5573
      %v5575 = vpop.f32.mrf.mxu0
      %v5576 = vpop.f32.mrf.mxu0
      %v5577 = vadd.f32 0.0, %v5576
      %v5578 = vpop.f32.mrf.mxu0
      %5579 = vdwg.mxu0
      %v5580 = vadd.f32 %v5358, %v5574
      %v5581 = vadd.f32 %v5359, %v5577
      %v5582 = vld [vmem:[%s4409] sm:$0x3]
      %v5583 = vld [vmem:[%s4409 + $0x4] sm:$0x3]
      %v5584 = vld [vmem:[%s4409 + $0x8] sm:$0x3]
      %v5585 = vld [vmem:[%s4409 + $0xc] sm:$0x3]
      %s5586 = scalar_lea.vmem %s2, 384
      %v5587 = vld [vmem:[%s5586] sm:$0xf]
      %v5588 = vld [vmem:[%s5586 + $0x4] sm:$0xf]
      %v5589 = vld [vmem:[%s5586 + $0x8] sm:$0xf]
      %v5590 = vld [vmem:[%s5586 + $0xc] sm:$0xf]
      %v5591 = vld [vmem:[%s5586 + $0x10] sm:$0xf]
      %v5592 = vld [vmem:[%s5586 + $0x14] sm:$0xf]
      %v5593 = vld [vmem:[%s5586 + $0x18] sm:$0xf]
      %v5594 = vld [vmem:[%s5586 + $0x1c] sm:$0xf]
      %v5595 = vld [vmem:[%s5586 + $0x20] sm:$0xf]
      %v5596 = vld [vmem:[%s5586 + $0x24] sm:$0xf]
      %v5597 = vld [vmem:[%s5586 + $0x28] sm:$0xf]
      %v5598 = vld [vmem:[%s5586 + $0x2c] sm:$0xf]
      %v5599 = vld [vmem:[%s5586 + $0x30] sm:$0xf]
      %v5600 = vld [vmem:[%s5586 + $0x34] sm:$0xf]
      %v5601 = vld [vmem:[%s5586 + $0x38] sm:$0xf]
      %v5602 = vld [vmem:[%s5586 + $0x3c] sm:$0xf]
      %v5607 = vcombine.low %v5582, %v5583
      %v5608 = vcombine.low %v5584, %v5585
      %v5610 = vunpack.c.l.s4 1983009808
      %v5611 = vunpack.c.0.s8 %v5610
      %v5612 = vlaneseq
      %v5613 = vshrl.u32 %v5612, 7
      %v5614 = vsub.s32 %v5611, %v5613
      %v5615 = vrot.slane %v5607, %v5614
      %v5617 = vunpack.c.l.s4 1983009808
      %v5618 = vunpack.c.0.s8 %v5617
      %v5619 = vlaneseq
      %v5620 = vshrl.u32 %v5619, 7
      %v5621 = vsub.s32 %v5618, %v5620
      %v5622 = vrot.slane %v5608, %v5621
      %v5623 = vcombine.low %v5615, %v5622
      %v5641 = vunpack.c.l.b16 %v5587
      %v5642 = vunpack.c.l.b16 %v5588
      %v5643 = vunpack.c.l.b16 %v5589
      %v5644 = vunpack.c.l.b16 %v5590
      %v5645 = vunpack.c.l.b16 %v5591
      %v5646 = vunpack.c.l.b16 %v5592
      %v5647 = vunpack.c.l.b16 %v5593
      %v5648 = vunpack.c.l.b16 %v5594
      %v5649 = vunpack.c.l.b16 %v5595
      %v5650 = vunpack.c.l.b16 %v5596
      %v5651 = vunpack.c.l.b16 %v5597
      %v5652 = vunpack.c.l.b16 %v5598
      %v5653 = vunpack.c.l.b16 %v5599
      %v5654 = vunpack.c.l.b16 %v5600
      %v5655 = vunpack.c.l.b16 %v5601
      %v5656 = vunpack.c.l.b16 %v5602
      %v5657 = vpack.c.b16 %v5642, %v5641
      %v5658 = vpack.c.b16 %v5644, %v5643
      %v5659 = vpack.c.b16 %v5646, %v5645
      %v5660 = vpack.c.b16 %v5648, %v5647
      %v5661 = vpack.c.b16 %v5650, %v5649
      %v5662 = vpack.c.b16 %v5652, %v5651
      %v5663 = vpack.c.b16 %v5654, %v5653
      %v5664 = vpack.c.b16 %v5656, %v5655
      %5673 = vmatprep.subr.bf16.mxu0 0
      %5674 = vmatpush1.bf16.msra.mxu0 %v5664
      %5675 = vmatprep.subr.bf16.mxu0 0
      %5676 = vmatpush1.bf16.msra.mxu0 %v5663
      %5677 = vmatprep.subr.bf16.mxu0 0
      %5678 = vmatpush1.bf16.msra.mxu0 %v5662
      %5679 = vmatprep.subr.bf16.mxu0 0
      %5680 = vmatpush1.bf16.msra.mxu0 %v5661
      %5681 = vmatprep.subr.bf16.mxu0 0
      %5682 = vmatpush1.bf16.msra.mxu0 %v5660
      %5683 = vmatprep.subr.bf16.mxu0 0
      %5684 = vmatpush1.bf16.msra.mxu0 %v5659
      %5685 = vmatprep.subr.bf16.mxu0 0
      %5686 = vmatpush1.bf16.msra.mxu0 %v5658
      %5687 = vmatprep.subr.bf16.mxu0 0
      %5688 = vmatpush1.bf16.msra.mxu0 %v5657
      %5689 = vmatprep.subr.bf16.mxu0 0
      %5690 = vmatpush2.bf16.msra.mxu0 0
      %5691 = vmatprep.subr.bf16.mxu0 0
      %5692 = vmatpush2.bf16.msra.mxu0 0
      %5693 = vmatprep.subr.bf16.mxu0 0
      %5694 = vmatpush2.bf16.msra.mxu0 0
      %5695 = vmatprep.subr.bf16.mxu0 0
      %5696 = vmatpush2.bf16.msra.mxu0 0
      %5697 = vmatprep.subr.bf16.mxu0 0
      %5698 = vmatpush2.bf16.msra.mxu0 0
      %5699 = vmatprep.subr.bf16.mxu0 0
      %5700 = vmatpush2.bf16.msra.mxu0 0
      %5701 = vmatprep.subr.bf16.mxu0 0
      %5702 = vmatpush2.bf16.msra.mxu0 0
      %5703 = vmatprep.subr.bf16.mxu0 0
      %5704 = vmatpush2.bf16.msra.mxu0 0
      %5705 = vmatprep.mubr.bf16.mxu0 0
      %5706 = vmatmul.mubr.bf16.gmra.mxu0 %v5623
      %v5707 = vpop.f32.mrf.mxu0
      %v5708 = vadd.f32 0.0, %v5707
      %v5709 = vpop.f32.mrf.mxu0
      %v5710 = vpop.f32.mrf.mxu0
      %v5711 = vadd.f32 0.0, %v5710
      %v5712 = vpop.f32.mrf.mxu0
      %5713 = vdwg.mxu0
      %v5714 = vadd.f32 %v5580, %v5708
      %v5715 = vadd.f32 %v5581, %v5711
      %v5716 = vld [vmem:[%s3327] sm:$0x7]
      %v5717 = vld [vmem:[%s3327 + $0x4] sm:$0x7]
      %v5718 = vld [vmem:[%s3327 + $0x8] sm:$0x7]
      %v5719 = vld [vmem:[%s3327 + $0xc] sm:$0x7]
      %v5725 = vunpack.c.l.s4 1983009808
      %v5726 = vunpack.c.0.s8 %v5725
      %v5727 = vlaneseq
      %v5728 = vshrl.u32 %v5727, 7
      %v5729 = vsub.s32 %v5726, %v5728
      %v5730 = vrot.slane %v5716, %v5729
      %v5731 = vcombine.high %v5730, %v5730
      %v5733 = vunpack.c.l.s4 1983009808
      %v5734 = vunpack.c.0.s8 %v5733
      %v5735 = vlaneseq
      %v5736 = vshrl.u32 %v5735, 7
      %v5737 = vsub.s32 %v5734, %v5736
      %v5738 = vrot.slane %v5717, %v5737
      %v5739 = vcombine.high %v5738, %v5738
      %v5741 = vunpack.c.l.s4 1983009808
      %v5742 = vunpack.c.0.s8 %v5741
      %v5743 = vlaneseq
      %v5744 = vshrl.u32 %v5743, 7
      %v5745 = vsub.s32 %v5742, %v5744
      %v5746 = vrot.slane %v5718, %v5745
      %v5747 = vcombine.high %v5746, %v5746
      %v5749 = vunpack.c.l.s4 1983009808
      %v5750 = vunpack.c.0.s8 %v5749
      %v5751 = vlaneseq
      %v5752 = vshrl.u32 %v5751, 7
      %v5753 = vsub.s32 %v5750, %v5752
      %v5754 = vrot.slane %v5719, %v5753
      %v5755 = vcombine.high %v5754, %v5754
      %v5757 = vshrl.u32 %v5730, 16
      %v5759 = vrot.slane %v5757, 6
      %v5760 = vshll.u32 %v5730, 16
      %v5762 = vrot.slane %v5760, 7
      %v5763 = vor.u32 %v5759, %v5762
      %v5764 = vrot.slane %v5763, 2
      %v5766 = vshll.u32 %v5731, 16
      %v5768 = vrot.slane %v5766, 7
      %v5769 = vsel %vm4490, %v5764, %v5768
      %v5771 = vshrl.u32 %v5738, 16
      %v5773 = vrot.slane %v5771, 6
      %v5774 = vshll.u32 %v5738, 16
      %v5776 = vrot.slane %v5774, 7
      %v5777 = vor.u32 %v5773, %v5776
      %v5778 = vrot.slane %v5777, 2
      %v5780 = vshll.u32 %v5739, 16
      %v5782 = vrot.slane %v5780, 7
      %v5783 = vsel %vm4490, %v5778, %v5782
      %v5785 = vshrl.u32 %v5746, 16
      %v5787 = vrot.slane %v5785, 6
      %v5788 = vshll.u32 %v5746, 16
      %v5790 = vrot.slane %v5788, 7
      %v5791 = vor.u32 %v5787, %v5790
      %v5792 = vrot.slane %v5791, 2
      %v5794 = vshll.u32 %v5747, 16
      %v5796 = vrot.slane %v5794, 7
      %v5797 = vsel %vm4490, %v5792, %v5796
      %v5799 = vshrl.u32 %v5754, 16
      %v5801 = vrot.slane %v5799, 6
      %v5802 = vshll.u32 %v5754, 16
      %v5804 = vrot.slane %v5802, 7
      %v5805 = vor.u32 %v5801, %v5804
      %v5806 = vrot.slane %v5805, 2
      %v5808 = vshll.u32 %v5755, 16
      %v5810 = vrot.slane %v5808, 7
      %v5811 = vsel %vm4490, %v5806, %v5810
      %s5812 = scalar_lea.vmem %s2, 448
      %v5813 = vld [vmem:[%s5812] sm:$0xf]
      %v5814 = vld [vmem:[%s5812 + $0x4] sm:$0xf]
      %v5815 = vld [vmem:[%s5812 + $0x8] sm:$0xf]
      %v5816 = vld [vmem:[%s5812 + $0xc] sm:$0xf]
      %v5817 = vld [vmem:[%s5812 + $0x10] sm:$0xf]
      %v5818 = vld [vmem:[%s5812 + $0x14] sm:$0xf]
      %v5819 = vld [vmem:[%s5812 + $0x18] sm:$0xf]
      %v5820 = vld [vmem:[%s5812 + $0x1c] sm:$0xf]
      %v5821 = vld [vmem:[%s5812 + $0x20] sm:$0xf]
      %v5822 = vld [vmem:[%s5812 + $0x24] sm:$0xf]
      %v5823 = vld [vmem:[%s5812 + $0x28] sm:$0xf]
      %v5824 = vld [vmem:[%s5812 + $0x2c] sm:$0xf]
      %v5825 = vld [vmem:[%s5812 + $0x30] sm:$0xf]
      %v5826 = vld [vmem:[%s5812 + $0x34] sm:$0xf]
      %v5827 = vld [vmem:[%s5812 + $0x38] sm:$0xf]
      %v5828 = vld [vmem:[%s5812 + $0x3c] sm:$0xf]
      %v5829 = vcombine.low %v5769, %v5783
      %v5830 = vcombine.low %v5797, %v5811
      %v5832 = vunpack.c.l.s4 1983009808
      %v5833 = vunpack.c.0.s8 %v5832
      %v5834 = vlaneseq
      %v5835 = vshrl.u32 %v5834, 7
      %v5836 = vsub.s32 %v5833, %v5835
      %v5837 = vrot.slane %v5829, %v5836
      %v5839 = vunpack.c.l.s4 1983009808
      %v5840 = vunpack.c.0.s8 %v5839
      %v5841 = vlaneseq
      %v5842 = vshrl.u32 %v5841, 7
      %v5843 = vsub.s32 %v5840, %v5842
      %v5844 = vrot.slane %v5830, %v5843
      %v5845 = vcombine.low %v5837, %v5844
      %v5863 = vunpack.c.l.b16 %v5813
      %v5864 = vunpack.c.l.b16 %v5814
      %v5865 = vunpack.c.l.b16 %v5815
      %v5866 = vunpack.c.l.b16 %v5816
      %v5867 = vunpack.c.l.b16 %v5817
      %v5868 = vunpack.c.l.b16 %v5818
      %v5869 = vunpack.c.l.b16 %v5819
      %v5870 = vunpack.c.l.b16 %v5820
      %v5871 = vunpack.c.l.b16 %v5821
      %v5872 = vunpack.c.l.b16 %v5822
      %v5873 = vunpack.c.l.b16 %v5823
      %v5874 = vunpack.c.l.b16 %v5824
      %v5875 = vunpack.c.l.b16 %v5825
      %v5876 = vunpack.c.l.b16 %v5826
      %v5877 = vunpack.c.l.b16 %v5827
      %v5878 = vunpack.c.l.b16 %v5828
      %v5879 = vpack.c.b16 %v5864, %v5863
      %v5880 = vpack.c.b16 %v5866, %v5865
      %v5881 = vpack.c.b16 %v5868, %v5867
      %v5882 = vpack.c.b16 %v5870, %v5869
      %v5883 = vpack.c.b16 %v5872, %v5871
      %v5884 = vpack.c.b16 %v5874, %v5873
      %v5885 = vpack.c.b16 %v5876, %v5875
      %v5886 = vpack.c.b16 %v5878, %v5877
      %5895 = vmatprep.subr.bf16.mxu0 0
      %5896 = vmatpush1.bf16.msra.mxu0 %v5886
      %5897 = vmatprep.subr.bf16.mxu0 0
      %5898 = vmatpush1.bf16.msra.mxu0 %v5885
      %5899 = vmatprep.subr.bf16.mxu0 0
      %5900 = vmatpush1.bf16.msra.mxu0 %v5884
      %5901 = vmatprep.subr.bf16.mxu0 0
      %5902 = vmatpush1.bf16.msra.mxu0 %v5883
      %5903 = vmatprep.subr.bf16.mxu0 0
      %5904 = vmatpush1.bf16.msra.mxu0 %v5882
      %5905 = vmatprep.subr.bf16.mxu0 0
      %5906 = vmatpush1.bf16.msra.mxu0 %v5881
      %5907 = vmatprep.subr.bf16.mxu0 0
      %5908 = vmatpush1.bf16.msra.mxu0 %v5880
      %5909 = vmatprep.subr.bf16.mxu0 0
      %5910 = vmatpush1.bf16.msra.mxu0 %v5879
      %5911 = vmatprep.subr.bf16.mxu0 0
      %5912 = vmatpush2.bf16.msra.mxu0 0
      %5913 = vmatprep.subr.bf16.mxu0 0
      %5914 = vmatpush2.bf16.msra.mxu0 0
      %5915 = vmatprep.subr.bf16.mxu0 0
      %5916 = vmatpush2.bf16.msra.mxu0 0
      %5917 = vmatprep.subr.bf16.mxu0 0
      %5918 = vmatpush2.bf16.msra.mxu0 0
      %5919 = vmatprep.subr.bf16.mxu0 0
      %5920 = vmatpush2.bf16.msra.mxu0 0
      %5921 = vmatprep.subr.bf16.mxu0 0
      %5922 = vmatpush2.bf16.msra.mxu0 0
      %5923 = vmatprep.subr.bf16.mxu0 0
      %5924 = vmatpush2.bf16.msra.mxu0 0
      %5925 = vmatprep.subr.bf16.mxu0 0
      %5926 = vmatpush2.bf16.msra.mxu0 0
      %5927 = vmatprep.mubr.bf16.mxu0 0
      %5928 = vmatmul.mubr.bf16.gmra.mxu0 %v5845
      %v5929 = vpop.f32.mrf.mxu0
      %v5930 = vadd.f32 0.0, %v5929
      %v5931 = vpop.f32.mrf.mxu0
      %v5932 = vpop.f32.mrf.mxu0
      %v5933 = vadd.f32 0.0, %v5932
      %v5934 = vpop.f32.mrf.mxu0
      %5935 = vdwg.mxu0
      %v5936 = vadd.f32 %v5714, %v5930
      %v5937 = vadd.f32 %v5715, %v5933
      %v5938 = vld [vmem:[%s4409] sm:$0x7]
      %v5939 = vld [vmem:[%s4409 + $0x4] sm:$0x7]
      %v5940 = vld [vmem:[%s4409 + $0x8] sm:$0x7]
      %v5941 = vld [vmem:[%s4409 + $0xc] sm:$0x7]
      %v5947 = vunpack.c.l.s4 1983009808
      %v5948 = vunpack.c.0.s8 %v5947
      %v5949 = vlaneseq
      %v5950 = vshrl.u32 %v5949, 7
      %v5951 = vsub.s32 %v5948, %v5950
      %v5952 = vrot.slane %v5938, %v5951
      %v5953 = vcombine.high %v5952, %v5952
      %v5955 = vunpack.c.l.s4 1983009808
      %v5956 = vunpack.c.0.s8 %v5955
      %v5957 = vlaneseq
      %v5958 = vshrl.u32 %v5957, 7
      %v5959 = vsub.s32 %v5956, %v5958
      %v5960 = vrot.slane %v5939, %v5959
      %v5961 = vcombine.high %v5960, %v5960
      %v5963 = vunpack.c.l.s4 1983009808
      %v5964 = vunpack.c.0.s8 %v5963
      %v5965 = vlaneseq
      %v5966 = vshrl.u32 %v5965, 7
      %v5967 = vsub.s32 %v5964, %v5966
      %v5968 = vrot.slane %v5940, %v5967
      %v5969 = vcombine.high %v5968, %v5968
      %v5971 = vunpack.c.l.s4 1983009808
      %v5972 = vunpack.c.0.s8 %v5971
      %v5973 = vlaneseq
      %v5974 = vshrl.u32 %v5973, 7
      %v5975 = vsub.s32 %v5972, %v5974
      %v5976 = vrot.slane %v5941, %v5975
      %v5977 = vcombine.high %v5976, %v5976
      %v5979 = vshrl.u32 %v5952, 16
      %v5981 = vrot.slane %v5979, 6
      %v5982 = vshll.u32 %v5952, 16
      %v5984 = vrot.slane %v5982, 7
      %v5985 = vor.u32 %v5981, %v5984
      %v5986 = vrot.slane %v5985, 2
      %v5988 = vshll.u32 %v5953, 16
      %v5990 = vrot.slane %v5988, 7
      %v5991 = vsel %vm4490, %v5986, %v5990
      %v5993 = vshrl.u32 %v5960, 16
      %v5995 = vrot.slane %v5993, 6
      %v5996 = vshll.u32 %v5960, 16
      %v5998 = vrot.slane %v5996, 7
      %v5999 = vor.u32 %v5995, %v5998
      %v6000 = vrot.slane %v5999, 2
      %v6002 = vshll.u32 %v5961, 16
      %v6004 = vrot.slane %v6002, 7
      %v6005 = vsel %vm4490, %v6000, %v6004
      %v6007 = vshrl.u32 %v5968, 16
      %v6009 = vrot.slane %v6007, 6
      %v6010 = vshll.u32 %v5968, 16
      %v6012 = vrot.slane %v6010, 7
      %v6013 = vor.u32 %v6009, %v6012
      %v6014 = vrot.slane %v6013, 2
      %v6016 = vshll.u32 %v5969, 16
      %v6018 = vrot.slane %v6016, 7
      %v6019 = vsel %vm4490, %v6014, %v6018
      %v6021 = vshrl.u32 %v5976, 16
      %v6023 = vrot.slane %v6021, 6
      %v6024 = vshll.u32 %v5976, 16
      %v6026 = vrot.slane %v6024, 7
      %v6027 = vor.u32 %v6023, %v6026
      %v6028 = vrot.slane %v6027, 2
      %v6030 = vshll.u32 %v5977, 16
      %v6032 = vrot.slane %v6030, 7
      %v6033 = vsel %vm4490, %v6028, %v6032
      %s6034 = scalar_lea.vmem %s2, 512
      %v6035 = vld [vmem:[%s6034] sm:$0xf]
      %v6036 = vld [vmem:[%s6034 + $0x4] sm:$0xf]
      %v6037 = vld [vmem:[%s6034 + $0x8] sm:$0xf]
      %v6038 = vld [vmem:[%s6034 + $0xc] sm:$0xf]
      %v6039 = vld [vmem:[%s6034 + $0x10] sm:$0xf]
      %v6040 = vld [vmem:[%s6034 + $0x14] sm:$0xf]
      %v6041 = vld [vmem:[%s6034 + $0x18] sm:$0xf]
      %v6042 = vld [vmem:[%s6034 + $0x1c] sm:$0xf]
      %v6043 = vld [vmem:[%s6034 + $0x20] sm:$0xf]
      %v6044 = vld [vmem:[%s6034 + $0x24] sm:$0xf]
      %v6045 = vld [vmem:[%s6034 + $0x28] sm:$0xf]
      %v6046 = vld [vmem:[%s6034 + $0x2c] sm:$0xf]
      %v6047 = vld [vmem:[%s6034 + $0x30] sm:$0xf]
      %v6048 = vld [vmem:[%s6034 + $0x34] sm:$0xf]
      %v6049 = vld [vmem:[%s6034 + $0x38] sm:$0xf]
      %v6050 = vld [vmem:[%s6034 + $0x3c] sm:$0xf]
      %v6051 = vcombine.low %v5991, %v6005
      %v6052 = vcombine.low %v6019, %v6033
      %v6054 = vunpack.c.l.s4 1983009808
      %v6055 = vunpack.c.0.s8 %v6054
      %v6056 = vlaneseq
      %v6057 = vshrl.u32 %v6056, 7
      %v6058 = vsub.s32 %v6055, %v6057
      %v6059 = vrot.slane %v6051, %v6058
      %v6061 = vunpack.c.l.s4 1983009808
      %v6062 = vunpack.c.0.s8 %v6061
      %v6063 = vlaneseq
      %v6064 = vshrl.u32 %v6063, 7
      %v6065 = vsub.s32 %v6062, %v6064
      %v6066 = vrot.slane %v6052, %v6065
      %v6067 = vcombine.low %v6059, %v6066
      %v6085 = vunpack.c.l.b16 %v6035
      %v6086 = vunpack.c.l.b16 %v6036
      %v6087 = vunpack.c.l.b16 %v6037
      %v6088 = vunpack.c.l.b16 %v6038
      %v6089 = vunpack.c.l.b16 %v6039
      %v6090 = vunpack.c.l.b16 %v6040
      %v6091 = vunpack.c.l.b16 %v6041
      %v6092 = vunpack.c.l.b16 %v6042
      %v6093 = vunpack.c.l.b16 %v6043
      %v6094 = vunpack.c.l.b16 %v6044
      %v6095 = vunpack.c.l.b16 %v6045
      %v6096 = vunpack.c.l.b16 %v6046
      %v6097 = vunpack.c.l.b16 %v6047
      %v6098 = vunpack.c.l.b16 %v6048
      %v6099 = vunpack.c.l.b16 %v6049
      %v6100 = vunpack.c.l.b16 %v6050
      %v6101 = vpack.c.b16 %v6086, %v6085
      %v6102 = vpack.c.b16 %v6088, %v6087
      %v6103 = vpack.c.b16 %v6090, %v6089
      %v6104 = vpack.c.b16 %v6092, %v6091
      %v6105 = vpack.c.b16 %v6094, %v6093
      %v6106 = vpack.c.b16 %v6096, %v6095
      %v6107 = vpack.c.b16 %v6098, %v6097
      %v6108 = vpack.c.b16 %v6100, %v6099
      %6117 = vmatprep.subr.bf16.mxu0 0
      %6118 = vmatpush1.bf16.msra.mxu0 %v6108
      %6119 = vmatprep.subr.bf16.mxu0 0
      %6120 = vmatpush1.bf16.msra.mxu0 %v6107
      %6121 = vmatprep.subr.bf16.mxu0 0
      %6122 = vmatpush1.bf16.msra.mxu0 %v6106
      %6123 = vmatprep.subr.bf16.mxu0 0
      %6124 = vmatpush1.bf16.msra.mxu0 %v6105
      %6125 = vmatprep.subr.bf16.mxu0 0
      %6126 = vmatpush1.bf16.msra.mxu0 %v6104
      %6127 = vmatprep.subr.bf16.mxu0 0
      %6128 = vmatpush1.bf16.msra.mxu0 %v6103
      %6129 = vmatprep.subr.bf16.mxu0 0
      %6130 = vmatpush1.bf16.msra.mxu0 %v6102
      %6131 = vmatprep.subr.bf16.mxu0 0
      %6132 = vmatpush1.bf16.msra.mxu0 %v6101
      %6133 = vmatprep.subr.bf16.mxu0 0
      %6134 = vmatpush2.bf16.msra.mxu0 0
      %6135 = vmatprep.subr.bf16.mxu0 0
      %6136 = vmatpush2.bf16.msra.mxu0 0
      %6137 = vmatprep.subr.bf16.mxu0 0
      %6138 = vmatpush2.bf16.msra.mxu0 0
      %6139 = vmatprep.subr.bf16.mxu0 0
      %6140 = vmatpush2.bf16.msra.mxu0 0
      %6141 = vmatprep.subr.bf16.mxu0 0
      %6142 = vmatpush2.bf16.msra.mxu0 0
      %6143 = vmatprep.subr.bf16.mxu0 0
      %6144 = vmatpush2.bf16.msra.mxu0 0
      %6145 = vmatprep.subr.bf16.mxu0 0
      %6146 = vmatpush2.bf16.msra.mxu0 0
      %6147 = vmatprep.subr.bf16.mxu0 0
      %6148 = vmatpush2.bf16.msra.mxu0 0
      %6149 = vmatprep.mubr.bf16.mxu0 0
      %6150 = vmatmul.mubr.bf16.gmra.mxu0 %v6067
      %v6151 = vpop.f32.mrf.mxu0
      %v6152 = vadd.f32 0.0, %v6151
      %v6153 = vpop.f32.mrf.mxu0
      %v6154 = vpop.f32.mrf.mxu0
      %v6155 = vadd.f32 0.0, %v6154
      %v6156 = vpop.f32.mrf.mxu0
      %6157 = vdwg.mxu0
      %v6158 = vadd.f32 %v5936, %v6152
      %v6159 = vadd.f32 %v5937, %v6155
      %v6160 = vld [vmem:[%s4 + $0x1] sm:$0x1]
      %v6161 = vlaneseq
      %v6162 = vshrl.u32 %v6161, 7
      %v6163 = vsub.s32 0, %v6162
      %v6164 = vrot.slane %v6160, %v6163
      %v6165 = vmul.f32 %v6158, %v6164
      %v6166 = vmul.f32 %v6159, %v6164
      %v6167 = vld [vmem:[%s5 + $0x1] sm:$0x1]
      %v6168 = vlaneseq
      %v6169 = vshrl.u32 %v6168, 7
      %v6170 = vsub.s32 0, %v6169
      %v6171 = vrot.slane %v6167, %v6170
      %v6172 = vadd.f32 %v6165, %v6171
      %v6173 = vadd.f32 %v6166, %v6171
      %v6174 = vmul.f32 %v6172, 0.5
      %v6175 = vmul.f32 %v6173, 0.5
      %v6176 = vmul.f32 %v6172, 0.70710677
      %v6177 = vmul.f32 %v6173, 0.70710677
      %v6178 = verf.f32.pop %v6176
      %v6179 = verf.f32.pop %v6177
      %v6180 = vadd.f32 %v6178, 1.0
      %v6181 = vadd.f32 %v6179, 1.0
      %v6182 = vmul.f32 %v6174, %v6180
      %v6183 = vmul.f32 %v6175, %v6181
      %v6186 = vcombine.high %v6182, %v6182
      %v6187 = vcombine.high %v6183, %v6183
      %v6190 = vpack.c.bf16 %v6182, %v6182
      %v6191 = vpack.c.bf16 %v6186, %v6186
      %v6192 = vpack.c.bf16 %v6183, %v6183
      %v6193 = vpack.c.bf16 %v6187, %v6187
      %v6198 = vunpack.c.l.b16 %v6190
      %v6199 = vunpack.c.l.b16 %v6191
      %v6200 = vunpack.c.l.b16 %v6192
      %v6201 = vunpack.c.l.b16 %v6193
      %v6202 = vpack.c.b16 %v6198, %v6198
      %v6203 = vpack.c.b16 %v6199, %v6199
      %v6204 = vpack.c.b16 %v6200, %v6200
      %v6205 = vpack.c.b16 %v6201, %v6201
      %v6207 = vshrl.u32 %v6202, 16
      %v6209 = vrot.slane %v6207, 7
      %v6210 = vshll.u32 %v6202, 16
      %v6212 = vor.u32 %v6209, %v6210
      %v6214 = vshrl.u32 %v6203, 16
      %v6216 = vrot.slane %v6214, 7
      %v6217 = vshll.u32 %v6203, 16
      %v6219 = vor.u32 %v6216, %v6217
      %v6221 = vshrl.u32 %v6204, 16
      %v6223 = vrot.slane %v6221, 7
      %v6224 = vshll.u32 %v6204, 16
      %v6226 = vor.u32 %v6223, %v6224
      %v6228 = vshrl.u32 %v6205, 16
      %v6230 = vrot.slane %v6228, 7
      %v6231 = vshll.u32 %v6205, 16
      %v6233 = vor.u32 %v6230, %v6231
      %s6238 = scalar_lea.vmem [#allocation3], 4
      %v6239 = vld [vmem:[%s6238] sm:$0x7]
      %v6240 = vsel %vm1266, %v6212, %v6239
      %6241 = vst [vmem:[%s6238] sm:$0x7] %v6240
      %v6242 = vld [vmem:[%s6238 + $0x4] sm:$0x7]
      %v6243 = vsel %vm1266, %v6219, %v6242
      %6244 = vst [vmem:[%s6238 + $0x4] sm:$0x7] %v6243
      %v6245 = vld [vmem:[%s6238 + $0x8] sm:$0x7]
      %v6246 = vsel %vm1266, %v6226, %v6245
      %6247 = vst [vmem:[%s6238 + $0x8] sm:$0x7] %v6246
      %v6248 = vld [vmem:[%s6238 + $0xc] sm:$0x7]
      %v6249 = vsel %vm1266, %v6233, %v6248
      %6250 = vst [vmem:[%s6238 + $0xc] sm:$0x7] %v6249
      %v6251 = vld [vmem:[#allocation3] sm:$0x3]
      %v6252 = vld [vmem:[#allocation3 + $0x4] sm:$0x3]
      %v6253 = vld [vmem:[#allocation3 + $0x8] sm:$0x3]
      %v6254 = vld [vmem:[#allocation3 + $0xc] sm:$0x3]
      %v6255 = vld [vmem:[%s3] sm:$0xf]
      %v6256 = vld [vmem:[%s3 + $0x4] sm:$0xf]
      %v6257 = vld [vmem:[%s3 + $0x8] sm:$0xf]
      %v6258 = vld [vmem:[%s3 + $0xc] sm:$0xf]
      %v6259 = vld [vmem:[%s3 + $0x10] sm:$0xf]
      %v6260 = vld [vmem:[%s3 + $0x14] sm:$0xf]
      %v6261 = vld [vmem:[%s3 + $0x18] sm:$0xf]
      %v6262 = vld [vmem:[%s3 + $0x1c] sm:$0xf]
      %v6263 = vld [vmem:[%s3 + $0x20] sm:$0xf]
      %v6264 = vld [vmem:[%s3 + $0x24] sm:$0xf]
      %v6265 = vld [vmem:[%s3 + $0x28] sm:$0xf]
      %v6266 = vld [vmem:[%s3 + $0x2c] sm:$0xf]
      %v6267 = vld [vmem:[%s3 + $0x30] sm:$0xf]
      %v6268 = vld [vmem:[%s3 + $0x34] sm:$0xf]
      %v6269 = vld [vmem:[%s3 + $0x38] sm:$0xf]
      %v6270 = vld [vmem:[%s3 + $0x3c] sm:$0xf]
      %v6271 = vld [vmem:[#allocation3] sm:$0x7]
      %v6272 = vld [vmem:[#allocation3 + $0x4] sm:$0x7]
      %v6273 = vld [vmem:[#allocation3 + $0x8] sm:$0x7]
      %v6274 = vld [vmem:[#allocation3 + $0xc] sm:$0x7]
      %v6280 = vunpack.c.l.s4 1983009808
      %v6281 = vunpack.c.0.s8 %v6280
      %v6282 = vlaneseq
      %v6283 = vshrl.u32 %v6282, 7
      %v6284 = vsub.s32 %v6281, %v6283
      %v6285 = vrot.slane %v6271, %v6284
      %v6286 = vcombine.high %v6285, %v6285
      %v6288 = vunpack.c.l.s4 1983009808
      %v6289 = vunpack.c.0.s8 %v6288
      %v6290 = vlaneseq
      %v6291 = vshrl.u32 %v6290, 7
      %v6292 = vsub.s32 %v6289, %v6291
      %v6293 = vrot.slane %v6272, %v6292
      %v6294 = vcombine.high %v6293, %v6293
      %v6296 = vunpack.c.l.s4 1983009808
      %v6297 = vunpack.c.0.s8 %v6296
      %v6298 = vlaneseq
      %v6299 = vshrl.u32 %v6298, 7
      %v6300 = vsub.s32 %v6297, %v6299
      %v6301 = vrot.slane %v6273, %v6300
      %v6302 = vcombine.high %v6301, %v6301
      %v6304 = vunpack.c.l.s4 1983009808
      %v6305 = vunpack.c.0.s8 %v6304
      %v6306 = vlaneseq
      %v6307 = vshrl.u32 %v6306, 7
      %v6308 = vsub.s32 %v6305, %v6307
      %v6309 = vrot.slane %v6274, %v6308
      %v6310 = vcombine.high %v6309, %v6309
      %v6312 = vshrl.u32 %v6285, 16
      %v6314 = vrot.slane %v6312, 6
      %v6315 = vshll.u32 %v6285, 16
      %v6317 = vrot.slane %v6315, 7
      %v6318 = vor.u32 %v6314, %v6317
      %v6319 = vrot.slane %v6318, 2
      %v6321 = vshll.u32 %v6286, 16
      %v6323 = vrot.slane %v6321, 7
      %v6324 = vsel %vm4490, %v6319, %v6323
      %v6326 = vshrl.u32 %v6293, 16
      %v6328 = vrot.slane %v6326, 6
      %v6329 = vshll.u32 %v6293, 16
      %v6331 = vrot.slane %v6329, 7
      %v6332 = vor.u32 %v6328, %v6331
      %v6333 = vrot.slane %v6332, 2
      %v6335 = vshll.u32 %v6294, 16
      %v6337 = vrot.slane %v6335, 7
      %v6338 = vsel %vm4490, %v6333, %v6337
      %v6340 = vshrl.u32 %v6301, 16
      %v6342 = vrot.slane %v6340, 6
      %v6343 = vshll.u32 %v6301, 16
      %v6345 = vrot.slane %v6343, 7
      %v6346 = vor.u32 %v6342, %v6345
      %v6347 = vrot.slane %v6346, 2
      %v6349 = vshll.u32 %v6302, 16
      %v6351 = vrot.slane %v6349, 7
      %v6352 = vsel %vm4490, %v6347, %v6351
      %v6354 = vshrl.u32 %v6309, 16
      %v6356 = vrot.slane %v6354, 6
      %v6357 = vshll.u32 %v6309, 16
      %v6359 = vrot.slane %v6357, 7
      %v6360 = vor.u32 %v6356, %v6359
      %v6361 = vrot.slane %v6360, 2
      %v6363 = vshll.u32 %v6310, 16
      %v6365 = vrot.slane %v6363, 7
      %v6366 = vsel %vm4490, %v6361, %v6365
      %s6367 = scalar_lea.vmem %s3, 64
      %v6368 = vld [vmem:[%s6367] sm:$0xf]
      %v6369 = vld [vmem:[%s6367 + $0x4] sm:$0xf]
      %v6370 = vld [vmem:[%s6367 + $0x8] sm:$0xf]
      %v6371 = vld [vmem:[%s6367 + $0xc] sm:$0xf]
      %v6372 = vld [vmem:[%s6367 + $0x10] sm:$0xf]
      %v6373 = vld [vmem:[%s6367 + $0x14] sm:$0xf]
      %v6374 = vld [vmem:[%s6367 + $0x18] sm:$0xf]
      %v6375 = vld [vmem:[%s6367 + $0x1c] sm:$0xf]
      %v6376 = vld [vmem:[%s6367 + $0x20] sm:$0xf]
      %v6377 = vld [vmem:[%s6367 + $0x24] sm:$0xf]
      %v6378 = vld [vmem:[%s6367 + $0x28] sm:$0xf]
      %v6379 = vld [vmem:[%s6367 + $0x2c] sm:$0xf]
      %v6380 = vld [vmem:[%s6367 + $0x30] sm:$0xf]
      %v6381 = vld [vmem:[%s6367 + $0x34] sm:$0xf]
      %v6382 = vld [vmem:[%s6367 + $0x38] sm:$0xf]
      %v6383 = vld [vmem:[%s6367 + $0x3c] sm:$0xf]
      %v6384 = vcombine.low %v6324, %v6338
      %v6385 = vcombine.low %v6352, %v6366
      %v6387 = vunpack.c.l.s4 1983009808
      %v6388 = vunpack.c.0.s8 %v6387
      %v6389 = vlaneseq
      %v6390 = vshrl.u32 %v6389, 7
      %v6391 = vsub.s32 %v6388, %v6390
      %v6392 = vrot.slane %v6384, %v6391
      %v6394 = vunpack.c.l.s4 1983009808
      %v6395 = vunpack.c.0.s8 %v6394
      %v6396 = vlaneseq
      %v6397 = vshrl.u32 %v6396, 7
      %v6398 = vsub.s32 %v6395, %v6397
      %v6399 = vrot.slane %v6385, %v6398
      %v6400 = vcombine.low %v6392, %v6399
      %v6418 = vunpack.c.l.b16 %v6368
      %v6419 = vunpack.c.l.b16 %v6369
      %v6420 = vunpack.c.l.b16 %v6370
      %v6421 = vunpack.c.l.b16 %v6371
      %v6422 = vunpack.c.l.b16 %v6372
      %v6423 = vunpack.c.l.b16 %v6373
      %v6424 = vunpack.c.l.b16 %v6374
      %v6425 = vunpack.c.l.b16 %v6375
      %v6426 = vunpack.c.l.b16 %v6376
      %v6427 = vunpack.c.l.b16 %v6377
      %v6428 = vunpack.c.l.b16 %v6378
      %v6429 = vunpack.c.l.b16 %v6379
      %v6430 = vunpack.c.l.b16 %v6380
      %v6431 = vunpack.c.l.b16 %v6381
      %v6432 = vunpack.c.l.b16 %v6382
      %v6433 = vunpack.c.l.b16 %v6383
      %v6434 = vpack.c.b16 %v6419, %v6418
      %v6435 = vpack.c.b16 %v6421, %v6420
      %v6436 = vpack.c.b16 %v6423, %v6422
      %v6437 = vpack.c.b16 %v6425, %v6424
      %v6438 = vpack.c.b16 %v6427, %v6426
      %v6439 = vpack.c.b16 %v6429, %v6428
      %v6440 = vpack.c.b16 %v6431, %v6430
      %v6441 = vpack.c.b16 %v6433, %v6432
      %6450 = vmatprep.subr.bf16.mxu0 0
      %6451 = vmatpush1.bf16.msra.mxu0 %v6441
      %6452 = vmatprep.subr.bf16.mxu0 0
      %6453 = vmatpush1.bf16.msra.mxu0 %v6440
      %6454 = vmatprep.subr.bf16.mxu0 0
      %6455 = vmatpush1.bf16.msra.mxu0 %v6439
      %6456 = vmatprep.subr.bf16.mxu0 0
      %6457 = vmatpush1.bf16.msra.mxu0 %v6438
      %6458 = vmatprep.subr.bf16.mxu0 0
      %6459 = vmatpush1.bf16.msra.mxu0 %v6437
      %6460 = vmatprep.subr.bf16.mxu0 0
      %6461 = vmatpush1.bf16.msra.mxu0 %v6436
      %6462 = vmatprep.subr.bf16.mxu0 0
      %6463 = vmatpush1.bf16.msra.mxu0 %v6435
      %6464 = vmatprep.subr.bf16.mxu0 0
      %6465 = vmatpush1.bf16.msra.mxu0 %v6434
      %6466 = vmatprep.subr.bf16.mxu0 0
      %6467 = vmatpush2.bf16.msra.mxu0 0
      %6468 = vmatprep.subr.bf16.mxu0 0
      %6469 = vmatpush2.bf16.msra.mxu0 0
      %6470 = vmatprep.subr.bf16.mxu0 0
      %6471 = vmatpush2.bf16.msra.mxu0 0
      %6472 = vmatprep.subr.bf16.mxu0 0
      %6473 = vmatpush2.bf16.msra.mxu0 0
      %6474 = vmatprep.subr.bf16.mxu0 0
      %6475 = vmatpush2.bf16.msra.mxu0 0
      %6476 = vmatprep.subr.bf16.mxu0 0
      %6477 = vmatpush2.bf16.msra.mxu0 0
      %6478 = vmatprep.subr.bf16.mxu0 0
      %6479 = vmatpush2.bf16.msra.mxu0 0
      %6480 = vmatprep.subr.bf16.mxu0 0
      %6481 = vmatpush2.bf16.msra.mxu0 0
      %6482 = vmatprep.mubr.bf16.mxu0 0
      %6483 = vmatmul.mubr.bf16.gmra.mxu0 %v6400
      %v6484 = vpop.f32.mrf.mxu0
      %v6485 = vadd.f32 0.0, %v6484
      %v6486 = vpop.f32.mrf.mxu0
      %v6487 = vpop.f32.mrf.mxu0
      %v6488 = vadd.f32 0.0, %v6487
      %v6489 = vpop.f32.mrf.mxu0
      %6490 = vdwg.mxu0
      %v6495 = vcombine.low %v6251, %v6252
      %v6496 = vcombine.low %v6253, %v6254
      %v6498 = vunpack.c.l.s4 1983009808
      %v6499 = vunpack.c.0.s8 %v6498
      %v6500 = vlaneseq
      %v6501 = vshrl.u32 %v6500, 7
      %v6502 = vsub.s32 %v6499, %v6501
      %v6503 = vrot.slane %v6495, %v6502
      %v6505 = vunpack.c.l.s4 1983009808
      %v6506 = vunpack.c.0.s8 %v6505
      %v6507 = vlaneseq
      %v6508 = vshrl.u32 %v6507, 7
      %v6509 = vsub.s32 %v6506, %v6508
      %v6510 = vrot.slane %v6496, %v6509
      %v6511 = vcombine.low %v6503, %v6510
      %v6529 = vunpack.c.l.b16 %v6255
      %v6530 = vunpack.c.l.b16 %v6256
      %v6531 = vunpack.c.l.b16 %v6257
      %v6532 = vunpack.c.l.b16 %v6258
      %v6533 = vunpack.c.l.b16 %v6259
      %v6534 = vunpack.c.l.b16 %v6260
      %v6535 = vunpack.c.l.b16 %v6261
      %v6536 = vunpack.c.l.b16 %v6262
      %v6537 = vunpack.c.l.b16 %v6263
      %v6538 = vunpack.c.l.b16 %v6264
      %v6539 = vunpack.c.l.b16 %v6265
      %v6540 = vunpack.c.l.b16 %v6266
      %v6541 = vunpack.c.l.b16 %v6267
      %v6542 = vunpack.c.l.b16 %v6268
      %v6543 = vunpack.c.l.b16 %v6269
      %v6544 = vunpack.c.l.b16 %v6270
      %v6545 = vpack.c.b16 %v6530, %v6529
      %v6546 = vpack.c.b16 %v6532, %v6531
      %v6547 = vpack.c.b16 %v6534, %v6533
      %v6548 = vpack.c.b16 %v6536, %v6535
      %v6549 = vpack.c.b16 %v6538, %v6537
      %v6550 = vpack.c.b16 %v6540, %v6539
      %v6551 = vpack.c.b16 %v6542, %v6541
      %v6552 = vpack.c.b16 %v6544, %v6543
      %6561 = vmatprep.subr.bf16.mxu0 0
      %6562 = vmatpush1.bf16.msra.mxu0 %v6552
      %6563 = vmatprep.subr.bf16.mxu0 0
      %6564 = vmatpush1.bf16.msra.mxu0 %v6551
      %6565 = vmatprep.subr.bf16.mxu0 0
      %6566 = vmatpush1.bf16.msra.mxu0 %v6550
      %6567 = vmatprep.subr.bf16.mxu0 0
      %6568 = vmatpush1.bf16.msra.mxu0 %v6549
      %6569 = vmatprep.subr.bf16.mxu0 0
      %6570 = vmatpush1.bf16.msra.mxu0 %v6548
      %6571 = vmatprep.subr.bf16.mxu0 0
      %6572 = vmatpush1.bf16.msra.mxu0 %v6547
      %6573 = vmatprep.subr.bf16.mxu0 0
      %6574 = vmatpush1.bf16.msra.mxu0 %v6546
      %6575 = vmatprep.subr.bf16.mxu0 0
      %6576 = vmatpush1.bf16.msra.mxu0 %v6545
      %6577 = vmatprep.subr.bf16.mxu0 0
      %6578 = vmatpush2.bf16.msra.mxu0 0
      %6579 = vmatprep.subr.bf16.mxu0 0
      %6580 = vmatpush2.bf16.msra.mxu0 0
      %6581 = vmatprep.subr.bf16.mxu0 0
      %6582 = vmatpush2.bf16.msra.mxu0 0
      %6583 = vmatprep.subr.bf16.mxu0 0
      %6584 = vmatpush2.bf16.msra.mxu0 0
      %6585 = vmatprep.subr.bf16.mxu0 0
      %6586 = vmatpush2.bf16.msra.mxu0 0
      %6587 = vmatprep.subr.bf16.mxu0 0
      %6588 = vmatpush2.bf16.msra.mxu0 0
      %6589 = vmatprep.subr.bf16.mxu0 0
      %6590 = vmatpush2.bf16.msra.mxu0 0
      %6591 = vmatprep.subr.bf16.mxu0 0
      %6592 = vmatpush2.bf16.msra.mxu0 0
      %6593 = vmatprep.mubr.bf16.mxu0 0
      %6594 = vmatmul.mubr.bf16.gmra.mxu0 %v6511
      %v6595 = vpop.f32.mrf.mxu0
      %v6596 = vadd.f32 %v6485, %v6595
      %v6597 = vpop.f32.mrf.mxu0
      %v6598 = vpop.f32.mrf.mxu0
      %v6599 = vadd.f32 %v6488, %v6598
      %v6600 = vpop.f32.mrf.mxu0
      %6601 = vdwg.mxu0
      %v6602 = vld [vmem:[#allocation3] sm:$0x6]
      %v6603 = vld [vmem:[#allocation3 + $0x4] sm:$0x6]
      %v6604 = vld [vmem:[#allocation3 + $0x8] sm:$0x6]
      %v6605 = vld [vmem:[#allocation3 + $0xc] sm:$0x6]
      %v6611 = vunpack.c.l.s4 1983009808
      %v6612 = vunpack.c.0.s8 %v6611
      %v6613 = vlaneseq
      %v6614 = vshrl.u32 %v6613, 7
      %v6615 = vsub.s32 %v6612, %v6614
      %v6616 = vrot.slane %v6602, %v6615
      %v6617 = vcombine.high %v6616, %v6616
      %v6619 = vunpack.c.l.s4 1983009808
      %v6620 = vunpack.c.0.s8 %v6619
      %v6621 = vlaneseq
      %v6622 = vshrl.u32 %v6621, 7
      %v6623 = vsub.s32 %v6620, %v6622
      %v6624 = vrot.slane %v6603, %v6623
      %v6625 = vcombine.high %v6624, %v6624
      %v6627 = vunpack.c.l.s4 1983009808
      %v6628 = vunpack.c.0.s8 %v6627
      %v6629 = vlaneseq
      %v6630 = vshrl.u32 %v6629, 7
      %v6631 = vsub.s32 %v6628, %v6630
      %v6632 = vrot.slane %v6604, %v6631
      %v6633 = vcombine.high %v6632, %v6632
      %v6635 = vunpack.c.l.s4 1983009808
      %v6636 = vunpack.c.0.s8 %v6635
      %v6637 = vlaneseq
      %v6638 = vshrl.u32 %v6637, 7
      %v6639 = vsub.s32 %v6636, %v6638
      %v6640 = vrot.slane %v6605, %v6639
      %v6641 = vcombine.high %v6640, %v6640
      %vm6642 = vcmask 1040384
      %vm6643 = vcmask 1042434
      %vm6644 = vmor %vm6642, %vm6643
      %vm6645 = vcmask 1044484
      %vm6646 = vmor %vm6644, %vm6645
      %vm6647 = vcmask 1046534
      %vm6648 = vmor %vm6646, %vm6647
      %v6649 = vrot.slane %v6616, 7
      %v6650 = vrot.slane %v6649, 2
      %v6651 = vrot.slane %v6617, 7
      %v6652 = vsel %vm6648, %v6650, %v6651
      %v6653 = vrot.slane %v6624, 7
      %v6654 = vrot.slane %v6653, 2
      %v6655 = vrot.slane %v6625, 7
      %v6656 = vsel %vm6648, %v6654, %v6655
      %v6657 = vrot.slane %v6632, 7
      %v6658 = vrot.slane %v6657, 2
      %v6659 = vrot.slane %v6633, 7
      %v6660 = vsel %vm6648, %v6658, %v6659
      %v6661 = vrot.slane %v6640, 7
      %v6662 = vrot.slane %v6661, 2
      %v6663 = vrot.slane %v6641, 7
      %v6664 = vsel %vm6648, %v6662, %v6663
      %s6665 = scalar_lea.vmem %s3, 128
      %v6666 = vld [vmem:[%s6665] sm:$0xf]
      %v6667 = vld [vmem:[%s6665 + $0x4] sm:$0xf]
      %v6668 = vld [vmem:[%s6665 + $0x8] sm:$0xf]
      %v6669 = vld [vmem:[%s6665 + $0xc] sm:$0xf]
      %v6670 = vld [vmem:[%s6665 + $0x10] sm:$0xf]
      %v6671 = vld [vmem:[%s6665 + $0x14] sm:$0xf]
      %v6672 = vld [vmem:[%s6665 + $0x18] sm:$0xf]
      %v6673 = vld [vmem:[%s6665 + $0x1c] sm:$0xf]
      %v6674 = vld [vmem:[%s6665 + $0x20] sm:$0xf]
      %v6675 = vld [vmem:[%s6665 + $0x24] sm:$0xf]
      %v6676 = vld [vmem:[%s6665 + $0x28] sm:$0xf]
      %v6677 = vld [vmem:[%s6665 + $0x2c] sm:$0xf]
      %v6678 = vld [vmem:[%s6665 + $0x30] sm:$0xf]
      %v6679 = vld [vmem:[%s6665 + $0x34] sm:$0xf]
      %v6680 = vld [vmem:[%s6665 + $0x38] sm:$0xf]
      %v6681 = vld [vmem:[%s6665 + $0x3c] sm:$0xf]
      %v6682 = vcombine.low %v6652, %v6656
      %v6683 = vcombine.low %v6660, %v6664
      %v6685 = vunpack.c.l.s4 1983009808
      %v6686 = vunpack.c.0.s8 %v6685
      %v6687 = vlaneseq
      %v6688 = vshrl.u32 %v6687, 7
      %v6689 = vsub.s32 %v6686, %v6688
      %v6690 = vrot.slane %v6682, %v6689
      %v6692 = vunpack.c.l.s4 1983009808
      %v6693 = vunpack.c.0.s8 %v6692
      %v6694 = vlaneseq
      %v6695 = vshrl.u32 %v6694, 7
      %v6696 = vsub.s32 %v6693, %v6695
      %v6697 = vrot.slane %v6683, %v6696
      %v6698 = vcombine.low %v6690, %v6697
      %v6716 = vunpack.c.l.b16 %v6666
      %v6717 = vunpack.c.l.b16 %v6667
      %v6718 = vunpack.c.l.b16 %v6668
      %v6719 = vunpack.c.l.b16 %v6669
      %v6720 = vunpack.c.l.b16 %v6670
      %v6721 = vunpack.c.l.b16 %v6671
      %v6722 = vunpack.c.l.b16 %v6672
      %v6723 = vunpack.c.l.b16 %v6673
      %v6724 = vunpack.c.l.b16 %v6674
      %v6725 = vunpack.c.l.b16 %v6675
      %v6726 = vunpack.c.l.b16 %v6676
      %v6727 = vunpack.c.l.b16 %v6677
      %v6728 = vunpack.c.l.b16 %v6678
      %v6729 = vunpack.c.l.b16 %v6679
      %v6730 = vunpack.c.l.b16 %v6680
      %v6731 = vunpack.c.l.b16 %v6681
      %v6732 = vpack.c.b16 %v6717, %v6716
      %v6733 = vpack.c.b16 %v6719, %v6718
      %v6734 = vpack.c.b16 %v6721, %v6720
      %v6735 = vpack.c.b16 %v6723, %v6722
      %v6736 = vpack.c.b16 %v6725, %v6724
      %v6737 = vpack.c.b16 %v6727, %v6726
      %v6738 = vpack.c.b16 %v6729, %v6728
      %v6739 = vpack.c.b16 %v6731, %v6730
      %6748 = vmatprep.subr.bf16.mxu0 0
      %6749 = vmatpush1.bf16.msra.mxu0 %v6739
      %6750 = vmatprep.subr.bf16.mxu0 0
      %6751 = vmatpush1.bf16.msra.mxu0 %v6738
      %6752 = vmatprep.subr.bf16.mxu0 0
      %6753 = vmatpush1.bf16.msra.mxu0 %v6737
      %6754 = vmatprep.subr.bf16.mxu0 0
      %6755 = vmatpush1.bf16.msra.mxu0 %v6736
      %6756 = vmatprep.subr.bf16.mxu0 0
      %6757 = vmatpush1.bf16.msra.mxu0 %v6735
      %6758 = vmatprep.subr.bf16.mxu0 0
      %6759 = vmatpush1.bf16.msra.mxu0 %v6734
      %6760 = vmatprep.subr.bf16.mxu0 0
      %6761 = vmatpush1.bf16.msra.mxu0 %v6733
      %6762 = vmatprep.subr.bf16.mxu0 0
      %6763 = vmatpush1.bf16.msra.mxu0 %v6732
      %6764 = vmatprep.subr.bf16.mxu0 0
      %6765 = vmatpush2.bf16.msra.mxu0 0
      %6766 = vmatprep.subr.bf16.mxu0 0
      %6767 = vmatpush2.bf16.msra.mxu0 0
      %6768 = vmatprep.subr.bf16.mxu0 0
      %6769 = vmatpush2.bf16.msra.mxu0 0
      %6770 = vmatprep.subr.bf16.mxu0 0
      %6771 = vmatpush2.bf16.msra.mxu0 0
      %6772 = vmatprep.subr.bf16.mxu0 0
      %6773 = vmatpush2.bf16.msra.mxu0 0
      %6774 = vmatprep.subr.bf16.mxu0 0
      %6775 = vmatpush2.bf16.msra.mxu0 0
      %6776 = vmatprep.subr.bf16.mxu0 0
      %6777 = vmatpush2.bf16.msra.mxu0 0
      %6778 = vmatprep.subr.bf16.mxu0 0
      %6779 = vmatpush2.bf16.msra.mxu0 0
      %6780 = vmatprep.mubr.bf16.mxu0 0
      %6781 = vmatmul.mubr.bf16.gmra.mxu0 %v6698
      %v6782 = vpop.f32.mrf.mxu0
      %v6783 = vadd.f32 0.0, %v6782
      %v6784 = vpop.f32.mrf.mxu0
      %v6785 = vpop.f32.mrf.mxu0
      %v6786 = vadd.f32 0.0, %v6785
      %v6787 = vpop.f32.mrf.mxu0
      %6788 = vdwg.mxu0
      %v6789 = vadd.f32 %v6596, %v6783
      %v6790 = vadd.f32 %v6599, %v6786
      %v6791 = vld [vmem:[%s6238] sm:$0x3]
      %v6792 = vld [vmem:[%s6238 + $0x4] sm:$0x3]
      %v6793 = vld [vmem:[%s6238 + $0x8] sm:$0x3]
      %v6794 = vld [vmem:[%s6238 + $0xc] sm:$0x3]
      %s6795 = scalar_lea.vmem %s3, 192
      %v6796 = vld [vmem:[%s6795] sm:$0xf]
      %v6797 = vld [vmem:[%s6795 + $0x4] sm:$0xf]
      %v6798 = vld [vmem:[%s6795 + $0x8] sm:$0xf]
      %v6799 = vld [vmem:[%s6795 + $0xc] sm:$0xf]
      %v6800 = vld [vmem:[%s6795 + $0x10] sm:$0xf]
      %v6801 = vld [vmem:[%s6795 + $0x14] sm:$0xf]
      %v6802 = vld [vmem:[%s6795 + $0x18] sm:$0xf]
      %v6803 = vld [vmem:[%s6795 + $0x1c] sm:$0xf]
      %v6804 = vld [vmem:[%s6795 + $0x20] sm:$0xf]
      %v6805 = vld [vmem:[%s6795 + $0x24] sm:$0xf]
      %v6806 = vld [vmem:[%s6795 + $0x28] sm:$0xf]
      %v6807 = vld [vmem:[%s6795 + $0x2c] sm:$0xf]
      %v6808 = vld [vmem:[%s6795 + $0x30] sm:$0xf]
      %v6809 = vld [vmem:[%s6795 + $0x34] sm:$0xf]
      %v6810 = vld [vmem:[%s6795 + $0x38] sm:$0xf]
      %v6811 = vld [vmem:[%s6795 + $0x3c] sm:$0xf]
      %v6816 = vcombine.low %v6791, %v6792
      %v6817 = vcombine.low %v6793, %v6794
      %v6819 = vunpack.c.l.s4 1983009808
      %v6820 = vunpack.c.0.s8 %v6819
      %v6821 = vlaneseq
      %v6822 = vshrl.u32 %v6821, 7
      %v6823 = vsub.s32 %v6820, %v6822
      %v6824 = vrot.slane %v6816, %v6823
      %v6826 = vunpack.c.l.s4 1983009808
      %v6827 = vunpack.c.0.s8 %v6826
      %v6828 = vlaneseq
      %v6829 = vshrl.u32 %v6828, 7
      %v6830 = vsub.s32 %v6827, %v6829
      %v6831 = vrot.slane %v6817, %v6830
      %v6832 = vcombine.low %v6824, %v6831
      %v6850 = vunpack.c.l.b16 %v6796
      %v6851 = vunpack.c.l.b16 %v6797
      %v6852 = vunpack.c.l.b16 %v6798
      %v6853 = vunpack.c.l.b16 %v6799
      %v6854 = vunpack.c.l.b16 %v6800
      %v6855 = vunpack.c.l.b16 %v6801
      %v6856 = vunpack.c.l.b16 %v6802
      %v6857 = vunpack.c.l.b16 %v6803
      %v6858 = vunpack.c.l.b16 %v6804
      %v6859 = vunpack.c.l.b16 %v6805
      %v6860 = vunpack.c.l.b16 %v6806
      %v6861 = vunpack.c.l.b16 %v6807
      %v6862 = vunpack.c.l.b16 %v6808
      %v6863 = vunpack.c.l.b16 %v6809
      %v6864 = vunpack.c.l.b16 %v6810
      %v6865 = vunpack.c.l.b16 %v6811
      %v6866 = vpack.c.b16 %v6851, %v6850
      %v6867 = vpack.c.b16 %v6853, %v6852
      %v6868 = vpack.c.b16 %v6855, %v6854
      %v6869 = vpack.c.b16 %v6857, %v6856
      %v6870 = vpack.c.b16 %v6859, %v6858
      %v6871 = vpack.c.b16 %v6861, %v6860
      %v6872 = vpack.c.b16 %v6863, %v6862
      %v6873 = vpack.c.b16 %v6865, %v6864
      %6882 = vmatprep.subr.bf16.mxu0 0
      %6883 = vmatpush1.bf16.msra.mxu0 %v6873
      %6884 = vmatprep.subr.bf16.mxu0 0
      %6885 = vmatpush1.bf16.msra.mxu0 %v6872
      %6886 = vmatprep.subr.bf16.mxu0 0
      %6887 = vmatpush1.bf16.msra.mxu0 %v6871
      %6888 = vmatprep.subr.bf16.mxu0 0
      %6889 = vmatpush1.bf16.msra.mxu0 %v6870
      %6890 = vmatprep.subr.bf16.mxu0 0
      %6891 = vmatpush1.bf16.msra.mxu0 %v6869
      %6892 = vmatprep.subr.bf16.mxu0 0
      %6893 = vmatpush1.bf16.msra.mxu0 %v6868
      %6894 = vmatprep.subr.bf16.mxu0 0
      %6895 = vmatpush1.bf16.msra.mxu0 %v6867
      %6896 = vmatprep.subr.bf16.mxu0 0
      %6897 = vmatpush1.bf16.msra.mxu0 %v6866
      %6898 = vmatprep.subr.bf16.mxu0 0
      %6899 = vmatpush2.bf16.msra.mxu0 0
      %6900 = vmatprep.subr.bf16.mxu0 0
      %6901 = vmatpush2.bf16.msra.mxu0 0
      %6902 = vmatprep.subr.bf16.mxu0 0
      %6903 = vmatpush2.bf16.msra.mxu0 0
      %6904 = vmatprep.subr.bf16.mxu0 0
      %6905 = vmatpush2.bf16.msra.mxu0 0
      %6906 = vmatprep.subr.bf16.mxu0 0
      %6907 = vmatpush2.bf16.msra.mxu0 0
      %6908 = vmatprep.subr.bf16.mxu0 0
      %6909 = vmatpush2.bf16.msra.mxu0 0
      %6910 = vmatprep.subr.bf16.mxu0 0
      %6911 = vmatpush2.bf16.msra.mxu0 0
      %6912 = vmatprep.subr.bf16.mxu0 0
      %6913 = vmatpush2.bf16.msra.mxu0 0
      %6914 = vmatprep.mubr.bf16.mxu0 0
      %6915 = vmatmul.mubr.bf16.gmra.mxu0 %v6832
      %v6916 = vpop.f32.mrf.mxu0
      %v6917 = vadd.f32 0.0, %v6916
      %v6918 = vpop.f32.mrf.mxu0
      %v6919 = vpop.f32.mrf.mxu0
      %v6920 = vadd.f32 0.0, %v6919
      %v6921 = vpop.f32.mrf.mxu0
      %6922 = vdwg.mxu0
      %v6923 = vadd.f32 %v6789, %v6917
      %v6924 = vadd.f32 %v6790, %v6920
      %v6925 = vld [vmem:[%s6238] sm:$0x7]
      %v6926 = vld [vmem:[%s6238 + $0x4] sm:$0x7]
      %v6927 = vld [vmem:[%s6238 + $0x8] sm:$0x7]
      %v6928 = vld [vmem:[%s6238 + $0xc] sm:$0x7]
      %v6934 = vunpack.c.l.s4 1983009808
      %v6935 = vunpack.c.0.s8 %v6934
      %v6936 = vlaneseq
      %v6937 = vshrl.u32 %v6936, 7
      %v6938 = vsub.s32 %v6935, %v6937
      %v6939 = vrot.slane %v6925, %v6938
      %v6940 = vcombine.high %v6939, %v6939
      %v6942 = vunpack.c.l.s4 1983009808
      %v6943 = vunpack.c.0.s8 %v6942
      %v6944 = vlaneseq
      %v6945 = vshrl.u32 %v6944, 7
      %v6946 = vsub.s32 %v6943, %v6945
      %v6947 = vrot.slane %v6926, %v6946
      %v6948 = vcombine.high %v6947, %v6947
      %v6950 = vunpack.c.l.s4 1983009808
      %v6951 = vunpack.c.0.s8 %v6950
      %v6952 = vlaneseq
      %v6953 = vshrl.u32 %v6952, 7
      %v6954 = vsub.s32 %v6951, %v6953
      %v6955 = vrot.slane %v6927, %v6954
      %v6956 = vcombine.high %v6955, %v6955
      %v6958 = vunpack.c.l.s4 1983009808
      %v6959 = vunpack.c.0.s8 %v6958
      %v6960 = vlaneseq
      %v6961 = vshrl.u32 %v6960, 7
      %v6962 = vsub.s32 %v6959, %v6961
      %v6963 = vrot.slane %v6928, %v6962
      %v6964 = vcombine.high %v6963, %v6963
      %v6966 = vshrl.u32 %v6939, 16
      %v6968 = vrot.slane %v6966, 6
      %v6969 = vshll.u32 %v6939, 16
      %v6971 = vrot.slane %v6969, 7
      %v6972 = vor.u32 %v6968, %v6971
      %v6973 = vrot.slane %v6972, 2
      %v6975 = vshll.u32 %v6940, 16
      %v6977 = vrot.slane %v6975, 7
      %v6978 = vsel %vm4490, %v6973, %v6977
      %v6980 = vshrl.u32 %v6947, 16
      %v6982 = vrot.slane %v6980, 6
      %v6983 = vshll.u32 %v6947, 16
      %v6985 = vrot.slane %v6983, 7
      %v6986 = vor.u32 %v6982, %v6985
      %v6987 = vrot.slane %v6986, 2
      %v6989 = vshll.u32 %v6948, 16
      %v6991 = vrot.slane %v6989, 7
      %v6992 = vsel %vm4490, %v6987, %v6991
      %v6994 = vshrl.u32 %v6955, 16
      %v6996 = vrot.slane %v6994, 6
      %v6997 = vshll.u32 %v6955, 16
      %v6999 = vrot.slane %v6997, 7
      %v7000 = vor.u32 %v6996, %v6999
      %v7001 = vrot.slane %v7000, 2
      %v7003 = vshll.u32 %v6956, 16
      %v7005 = vrot.slane %v7003, 7
      %v7006 = vsel %vm4490, %v7001, %v7005
      %v7008 = vshrl.u32 %v6963, 16
      %v7010 = vrot.slane %v7008, 6
      %v7011 = vshll.u32 %v6963, 16
      %v7013 = vrot.slane %v7011, 7
      %v7014 = vor.u32 %v7010, %v7013
      %v7015 = vrot.slane %v7014, 2
      %v7017 = vshll.u32 %v6964, 16
      %v7019 = vrot.slane %v7017, 7
      %v7020 = vsel %vm4490, %v7015, %v7019
      %s7021 = scalar_lea.vmem %s3, 256
      %v7022 = vld [vmem:[%s7021] sm:$0xf]
      %v7023 = vld [vmem:[%s7021 + $0x4] sm:$0xf]
      %v7024 = vld [vmem:[%s7021 + $0x8] sm:$0xf]
      %v7025 = vld [vmem:[%s7021 + $0xc] sm:$0xf]
      %v7026 = vld [vmem:[%s7021 + $0x10] sm:$0xf]
      %v7027 = vld [vmem:[%s7021 + $0x14] sm:$0xf]
      %v7028 = vld [vmem:[%s7021 + $0x18] sm:$0xf]
      %v7029 = vld [vmem:[%s7021 + $0x1c] sm:$0xf]
      %v7030 = vld [vmem:[%s7021 + $0x20] sm:$0xf]
      %v7031 = vld [vmem:[%s7021 + $0x24] sm:$0xf]
      %v7032 = vld [vmem:[%s7021 + $0x28] sm:$0xf]
      %v7033 = vld [vmem:[%s7021 + $0x2c] sm:$0xf]
      %v7034 = vld [vmem:[%s7021 + $0x30] sm:$0xf]
      %v7035 = vld [vmem:[%s7021 + $0x34] sm:$0xf]
      %v7036 = vld [vmem:[%s7021 + $0x38] sm:$0xf]
      %v7037 = vld [vmem:[%s7021 + $0x3c] sm:$0xf]
      %v7038 = vcombine.low %v6978, %v6992
      %v7039 = vcombine.low %v7006, %v7020
      %v7041 = vunpack.c.l.s4 1983009808
      %v7042 = vunpack.c.0.s8 %v7041
      %v7043 = vlaneseq
      %v7044 = vshrl.u32 %v7043, 7
      %v7045 = vsub.s32 %v7042, %v7044
      %v7046 = vrot.slane %v7038, %v7045
      %v7048 = vunpack.c.l.s4 1983009808
      %v7049 = vunpack.c.0.s8 %v7048
      %v7050 = vlaneseq
      %v7051 = vshrl.u32 %v7050, 7
      %v7052 = vsub.s32 %v7049, %v7051
      %v7053 = vrot.slane %v7039, %v7052
      %v7054 = vcombine.low %v7046, %v7053
      %v7072 = vunpack.c.l.b16 %v7022
      %v7073 = vunpack.c.l.b16 %v7023
      %v7074 = vunpack.c.l.b16 %v7024
      %v7075 = vunpack.c.l.b16 %v7025
      %v7076 = vunpack.c.l.b16 %v7026
      %v7077 = vunpack.c.l.b16 %v7027
      %v7078 = vunpack.c.l.b16 %v7028
      %v7079 = vunpack.c.l.b16 %v7029
      %v7080 = vunpack.c.l.b16 %v7030
      %v7081 = vunpack.c.l.b16 %v7031
      %v7082 = vunpack.c.l.b16 %v7032
      %v7083 = vunpack.c.l.b16 %v7033
      %v7084 = vunpack.c.l.b16 %v7034
      %v7085 = vunpack.c.l.b16 %v7035
      %v7086 = vunpack.c.l.b16 %v7036
      %v7087 = vunpack.c.l.b16 %v7037
      %v7088 = vpack.c.b16 %v7073, %v7072
      %v7089 = vpack.c.b16 %v7075, %v7074
      %v7090 = vpack.c.b16 %v7077, %v7076
      %v7091 = vpack.c.b16 %v7079, %v7078
      %v7092 = vpack.c.b16 %v7081, %v7080
      %v7093 = vpack.c.b16 %v7083, %v7082
      %v7094 = vpack.c.b16 %v7085, %v7084
      %v7095 = vpack.c.b16 %v7087, %v7086
      %7104 = vmatprep.subr.bf16.mxu0 0
      %7105 = vmatpush1.bf16.msra.mxu0 %v7095
      %7106 = vmatprep.subr.bf16.mxu0 0
      %7107 = vmatpush1.bf16.msra.mxu0 %v7094
      %7108 = vmatprep.subr.bf16.mxu0 0
      %7109 = vmatpush1.bf16.msra.mxu0 %v7093
      %7110 = vmatprep.subr.bf16.mxu0 0
      %7111 = vmatpush1.bf16.msra.mxu0 %v7092
      %7112 = vmatprep.subr.bf16.mxu0 0
      %7113 = vmatpush1.bf16.msra.mxu0 %v7091
      %7114 = vmatprep.subr.bf16.mxu0 0
      %7115 = vmatpush1.bf16.msra.mxu0 %v7090
      %7116 = vmatprep.subr.bf16.mxu0 0
      %7117 = vmatpush1.bf16.msra.mxu0 %v7089
      %7118 = vmatprep.subr.bf16.mxu0 0
      %7119 = vmatpush1.bf16.msra.mxu0 %v7088
      %7120 = vmatprep.subr.bf16.mxu0 0
      %7121 = vmatpush2.bf16.msra.mxu0 0
      %7122 = vmatprep.subr.bf16.mxu0 0
      %7123 = vmatpush2.bf16.msra.mxu0 0
      %7124 = vmatprep.subr.bf16.mxu0 0
      %7125 = vmatpush2.bf16.msra.mxu0 0
      %7126 = vmatprep.subr.bf16.mxu0 0
      %7127 = vmatpush2.bf16.msra.mxu0 0
      %7128 = vmatprep.subr.bf16.mxu0 0
      %7129 = vmatpush2.bf16.msra.mxu0 0
      %7130 = vmatprep.subr.bf16.mxu0 0
      %7131 = vmatpush2.bf16.msra.mxu0 0
      %7132 = vmatprep.subr.bf16.mxu0 0
      %7133 = vmatpush2.bf16.msra.mxu0 0
      %7134 = vmatprep.subr.bf16.mxu0 0
      %7135 = vmatpush2.bf16.msra.mxu0 0
      %7136 = vmatprep.mubr.bf16.mxu0 0
      %7137 = vmatmul.mubr.bf16.gmra.mxu0 %v7054
      %v7138 = vpop.f32.mrf.mxu0
      %v7139 = vadd.f32 0.0, %v7138
      %v7140 = vpop.f32.mrf.mxu0
      %v7141 = vpop.f32.mrf.mxu0
      %v7142 = vadd.f32 0.0, %v7141
      %v7143 = vpop.f32.mrf.mxu0
      %7144 = vdwg.mxu0
      %v7145 = vadd.f32 %v6923, %v7139
      %v7146 = vadd.f32 %v6924, %v7142
      %v7147 = vld [vmem:[%s6238] sm:$0x6]
      %v7148 = vld [vmem:[%s6238 + $0x4] sm:$0x6]
      %v7149 = vld [vmem:[%s6238 + $0x8] sm:$0x6]
      %v7150 = vld [vmem:[%s6238 + $0xc] sm:$0x6]
      %v7156 = vunpack.c.l.s4 1983009808
      %v7157 = vunpack.c.0.s8 %v7156
      %v7158 = vlaneseq
      %v7159 = vshrl.u32 %v7158, 7
      %v7160 = vsub.s32 %v7157, %v7159
      %v7161 = vrot.slane %v7147, %v7160
      %v7162 = vcombine.high %v7161, %v7161
      %v7164 = vunpack.c.l.s4 1983009808
      %v7165 = vunpack.c.0.s8 %v7164
      %v7166 = vlaneseq
      %v7167 = vshrl.u32 %v7166, 7
      %v7168 = vsub.s32 %v7165, %v7167
      %v7169 = vrot.slane %v7148, %v7168
      %v7170 = vcombine.high %v7169, %v7169
      %v7172 = vunpack.c.l.s4 1983009808
      %v7173 = vunpack.c.0.s8 %v7172
      %v7174 = vlaneseq
      %v7175 = vshrl.u32 %v7174, 7
      %v7176 = vsub.s32 %v7173, %v7175
      %v7177 = vrot.slane %v7149, %v7176
      %v7178 = vcombine.high %v7177, %v7177
      %v7180 = vunpack.c.l.s4 1983009808
      %v7181 = vunpack.c.0.s8 %v7180
      %v7182 = vlaneseq
      %v7183 = vshrl.u32 %v7182, 7
      %v7184 = vsub.s32 %v7181, %v7183
      %v7185 = vrot.slane %v7150, %v7184
      %v7186 = vcombine.high %v7185, %v7185
      %v7187 = vrot.slane %v7161, 7
      %v7188 = vrot.slane %v7187, 2
      %v7189 = vrot.slane %v7162, 7
      %v7190 = vsel %vm6648, %v7188, %v7189
      %v7191 = vrot.slane %v7169, 7
      %v7192 = vrot.slane %v7191, 2
      %v7193 = vrot.slane %v7170, 7
      %v7194 = vsel %vm6648, %v7192, %v7193
      %v7195 = vrot.slane %v7177, 7
      %v7196 = vrot.slane %v7195, 2
      %v7197 = vrot.slane %v7178, 7
      %v7198 = vsel %vm6648, %v7196, %v7197
      %v7199 = vrot.slane %v7185, 7
      %v7200 = vrot.slane %v7199, 2
      %v7201 = vrot.slane %v7186, 7
      %v7202 = vsel %vm6648, %v7200, %v7201
      %s7203 = scalar_lea.vmem %s3, 320
      %v7204 = vld [vmem:[%s7203] sm:$0xf]
      %v7205 = vld [vmem:[%s7203 + $0x4] sm:$0xf]
      %v7206 = vld [vmem:[%s7203 + $0x8] sm:$0xf]
      %v7207 = vld [vmem:[%s7203 + $0xc] sm:$0xf]
      %v7208 = vld [vmem:[%s7203 + $0x10] sm:$0xf]
      %v7209 = vld [vmem:[%s7203 + $0x14] sm:$0xf]
      %v7210 = vld [vmem:[%s7203 + $0x18] sm:$0xf]
      %v7211 = vld [vmem:[%s7203 + $0x1c] sm:$0xf]
      %v7212 = vld [vmem:[%s7203 + $0x20] sm:$0xf]
      %v7213 = vld [vmem:[%s7203 + $0x24] sm:$0xf]
      %v7214 = vld [vmem:[%s7203 + $0x28] sm:$0xf]
      %v7215 = vld [vmem:[%s7203 + $0x2c] sm:$0xf]
      %v7216 = vld [vmem:[%s7203 + $0x30] sm:$0xf]
      %v7217 = vld [vmem:[%s7203 + $0x34] sm:$0xf]
      %v7218 = vld [vmem:[%s7203 + $0x38] sm:$0xf]
      %v7219 = vld [vmem:[%s7203 + $0x3c] sm:$0xf]
      %v7220 = vcombine.low %v7190, %v7194
      %v7221 = vcombine.low %v7198, %v7202
      %v7223 = vunpack.c.l.s4 1983009808
      %v7224 = vunpack.c.0.s8 %v7223
      %v7225 = vlaneseq
      %v7226 = vshrl.u32 %v7225, 7
      %v7227 = vsub.s32 %v7224, %v7226
      %v7228 = vrot.slane %v7220, %v7227
      %v7230 = vunpack.c.l.s4 1983009808
      %v7231 = vunpack.c.0.s8 %v7230
      %v7232 = vlaneseq
      %v7233 = vshrl.u32 %v7232, 7
      %v7234 = vsub.s32 %v7231, %v7233
      %v7235 = vrot.slane %v7221, %v7234
      %v7236 = vcombine.low %v7228, %v7235
      %v7254 = vunpack.c.l.b16 %v7204
      %v7255 = vunpack.c.l.b16 %v7205
      %v7256 = vunpack.c.l.b16 %v7206
      %v7257 = vunpack.c.l.b16 %v7207
      %v7258 = vunpack.c.l.b16 %v7208
      %v7259 = vunpack.c.l.b16 %v7209
      %v7260 = vunpack.c.l.b16 %v7210
      %v7261 = vunpack.c.l.b16 %v7211
      %v7262 = vunpack.c.l.b16 %v7212
      %v7263 = vunpack.c.l.b16 %v7213
      %v7264 = vunpack.c.l.b16 %v7214
      %v7265 = vunpack.c.l.b16 %v7215
      %v7266 = vunpack.c.l.b16 %v7216
      %v7267 = vunpack.c.l.b16 %v7217
      %v7268 = vunpack.c.l.b16 %v7218
      %v7269 = vunpack.c.l.b16 %v7219
      %v7270 = vpack.c.b16 %v7255, %v7254
      %v7271 = vpack.c.b16 %v7257, %v7256
      %v7272 = vpack.c.b16 %v7259, %v7258
      %v7273 = vpack.c.b16 %v7261, %v7260
      %v7274 = vpack.c.b16 %v7263, %v7262
      %v7275 = vpack.c.b16 %v7265, %v7264
      %v7276 = vpack.c.b16 %v7267, %v7266
      %v7277 = vpack.c.b16 %v7269, %v7268
      %7286 = vmatprep.subr.bf16.mxu0 0
      %7287 = vmatpush1.bf16.msra.mxu0 %v7277
      %7288 = vmatprep.subr.bf16.mxu0 0
      %7289 = vmatpush1.bf16.msra.mxu0 %v7276
      %7290 = vmatprep.subr.bf16.mxu0 0
      %7291 = vmatpush1.bf16.msra.mxu0 %v7275
      %7292 = vmatprep.subr.bf16.mxu0 0
      %7293 = vmatpush1.bf16.msra.mxu0 %v7274
      %7294 = vmatprep.subr.bf16.mxu0 0
      %7295 = vmatpush1.bf16.msra.mxu0 %v7273
      %7296 = vmatprep.subr.bf16.mxu0 0
      %7297 = vmatpush1.bf16.msra.mxu0 %v7272
      %7298 = vmatprep.subr.bf16.mxu0 0
      %7299 = vmatpush1.bf16.msra.mxu0 %v7271
      %7300 = vmatprep.subr.bf16.mxu0 0
      %7301 = vmatpush1.bf16.msra.mxu0 %v7270
      %7302 = vmatprep.subr.bf16.mxu0 0
      %7303 = vmatpush2.bf16.msra.mxu0 0
      %7304 = vmatprep.subr.bf16.mxu0 0
      %7305 = vmatpush2.bf16.msra.mxu0 0
      %7306 = vmatprep.subr.bf16.mxu0 0
      %7307 = vmatpush2.bf16.msra.mxu0 0
      %7308 = vmatprep.subr.bf16.mxu0 0
      %7309 = vmatpush2.bf16.msra.mxu0 0
      %7310 = vmatprep.subr.bf16.mxu0 0
      %7311 = vmatpush2.bf16.msra.mxu0 0
      %7312 = vmatprep.subr.bf16.mxu0 0
      %7313 = vmatpush2.bf16.msra.mxu0 0
      %7314 = vmatprep.subr.bf16.mxu0 0
      %7315 = vmatpush2.bf16.msra.mxu0 0
      %7316 = vmatprep.subr.bf16.mxu0 0
      %7317 = vmatpush2.bf16.msra.mxu0 0
      %7318 = vmatprep.mubr.bf16.mxu0 0
      %7319 = vmatmul.mubr.bf16.gmra.mxu0 %v7236
      %v7320 = vpop.f32.mrf.mxu0
      %v7321 = vadd.f32 0.0, %v7320
      %v7322 = vpop.f32.mrf.mxu0
      %v7323 = vpop.f32.mrf.mxu0
      %v7324 = vadd.f32 0.0, %v7323
      %v7325 = vpop.f32.mrf.mxu0
      %7326 = vdwg.mxu0
      %v7327 = vadd.f32 %v7145, %v7321
      %v7328 = vadd.f32 %v7146, %v7324
      %s7329 = scalar_lea.vmem [#allocation3], 8
      %v7330 = vld [vmem:[%s7329] sm:$0x3]
      %v7331 = vld [vmem:[%s7329 + $0x4] sm:$0x3]
      %v7332 = vld [vmem:[%s7329 + $0x8] sm:$0x3]
      %v7333 = vld [vmem:[%s7329 + $0xc] sm:$0x3]
      %s7334 = scalar_lea.vmem %s3, 384
      %v7335 = vld [vmem:[%s7334] sm:$0xf]
      %v7336 = vld [vmem:[%s7334 + $0x4] sm:$0xf]
      %v7337 = vld [vmem:[%s7334 + $0x8] sm:$0xf]
      %v7338 = vld [vmem:[%s7334 + $0xc] sm:$0xf]
      %v7339 = vld [vmem:[%s7334 + $0x10] sm:$0xf]
      %v7340 = vld [vmem:[%s7334 + $0x14] sm:$0xf]
      %v7341 = vld [vmem:[%s7334 + $0x18] sm:$0xf]
      %v7342 = vld [vmem:[%s7334 + $0x1c] sm:$0xf]
      %v7343 = vld [vmem:[%s7334 + $0x20] sm:$0xf]
      %v7344 = vld [vmem:[%s7334 + $0x24] sm:$0xf]
      %v7345 = vld [vmem:[%s7334 + $0x28] sm:$0xf]
      %v7346 = vld [vmem:[%s7334 + $0x2c] sm:$0xf]
      %v7347 = vld [vmem:[%s7334 + $0x30] sm:$0xf]
      %v7348 = vld [vmem:[%s7334 + $0x34] sm:$0xf]
      %v7349 = vld [vmem:[%s7334 + $0x38] sm:$0xf]
      %v7350 = vld [vmem:[%s7334 + $0x3c] sm:$0xf]
      %v7355 = vcombine.low %v7330, %v7331
      %v7356 = vcombine.low %v7332, %v7333
      %v7358 = vunpack.c.l.s4 1983009808
      %v7359 = vunpack.c.0.s8 %v7358
      %v7360 = vlaneseq
      %v7361 = vshrl.u32 %v7360, 7
      %v7362 = vsub.s32 %v7359, %v7361
      %v7363 = vrot.slane %v7355, %v7362
      %v7365 = vunpack.c.l.s4 1983009808
      %v7366 = vunpack.c.0.s8 %v7365
      %v7367 = vlaneseq
      %v7368 = vshrl.u32 %v7367, 7
      %v7369 = vsub.s32 %v7366, %v7368
      %v7370 = vrot.slane %v7356, %v7369
      %v7371 = vcombine.low %v7363, %v7370
      %v7389 = vunpack.c.l.b16 %v7335
      %v7390 = vunpack.c.l.b16 %v7336
      %v7391 = vunpack.c.l.b16 %v7337
      %v7392 = vunpack.c.l.b16 %v7338
      %v7393 = vunpack.c.l.b16 %v7339
      %v7394 = vunpack.c.l.b16 %v7340
      %v7395 = vunpack.c.l.b16 %v7341
      %v7396 = vunpack.c.l.b16 %v7342
      %v7397 = vunpack.c.l.b16 %v7343
      %v7398 = vunpack.c.l.b16 %v7344
      %v7399 = vunpack.c.l.b16 %v7345
      %v7400 = vunpack.c.l.b16 %v7346
      %v7401 = vunpack.c.l.b16 %v7347
      %v7402 = vunpack.c.l.b16 %v7348
      %v7403 = vunpack.c.l.b16 %v7349
      %v7404 = vunpack.c.l.b16 %v7350
      %v7405 = vpack.c.b16 %v7390, %v7389
      %v7406 = vpack.c.b16 %v7392, %v7391
      %v7407 = vpack.c.b16 %v7394, %v7393
      %v7408 = vpack.c.b16 %v7396, %v7395
      %v7409 = vpack.c.b16 %v7398, %v7397
      %v7410 = vpack.c.b16 %v7400, %v7399
      %v7411 = vpack.c.b16 %v7402, %v7401
      %v7412 = vpack.c.b16 %v7404, %v7403
      %7421 = vmatprep.subr.bf16.mxu0 0
      %7422 = vmatpush1.bf16.msra.mxu0 %v7412
      %7423 = vmatprep.subr.bf16.mxu0 0
      %7424 = vmatpush1.bf16.msra.mxu0 %v7411
      %7425 = vmatprep.subr.bf16.mxu0 0
      %7426 = vmatpush1.bf16.msra.mxu0 %v7410
      %7427 = vmatprep.subr.bf16.mxu0 0
      %7428 = vmatpush1.bf16.msra.mxu0 %v7409
      %7429 = vmatprep.subr.bf16.mxu0 0
      %7430 = vmatpush1.bf16.msra.mxu0 %v7408
      %7431 = vmatprep.subr.bf16.mxu0 0
      %7432 = vmatpush1.bf16.msra.mxu0 %v7407
      %7433 = vmatprep.subr.bf16.mxu0 0
      %7434 = vmatpush1.bf16.msra.mxu0 %v7406
      %7435 = vmatprep.subr.bf16.mxu0 0
      %7436 = vmatpush1.bf16.msra.mxu0 %v7405
      %7437 = vmatprep.subr.bf16.mxu0 0
      %7438 = vmatpush2.bf16.msra.mxu0 0
      %7439 = vmatprep.subr.bf16.mxu0 0
      %7440 = vmatpush2.bf16.msra.mxu0 0
      %7441 = vmatprep.subr.bf16.mxu0 0
      %7442 = vmatpush2.bf16.msra.mxu0 0
      %7443 = vmatprep.subr.bf16.mxu0 0
      %7444 = vmatpush2.bf16.msra.mxu0 0
      %7445 = vmatprep.subr.bf16.mxu0 0
      %7446 = vmatpush2.bf16.msra.mxu0 0
      %7447 = vmatprep.subr.bf16.mxu0 0
      %7448 = vmatpush2.bf16.msra.mxu0 0
      %7449 = vmatprep.subr.bf16.mxu0 0
      %7450 = vmatpush2.bf16.msra.mxu0 0
      %7451 = vmatprep.subr.bf16.mxu0 0
      %7452 = vmatpush2.bf16.msra.mxu0 0
      %7453 = vmatprep.mubr.bf16.mxu0 0
      %7454 = vmatmul.mubr.bf16.gmra.mxu0 %v7371
      %v7455 = vpop.f32.mrf.mxu0
      %v7456 = vadd.f32 0.0, %v7455
      %v7457 = vpop.f32.mrf.mxu0
      %v7458 = vpop.f32.mrf.mxu0
      %v7459 = vadd.f32 0.0, %v7458
      %v7460 = vpop.f32.mrf.mxu0
      %7461 = vdwg.mxu0
      %v7462 = vadd.f32 %v7327, %v7456
      %v7463 = vadd.f32 %v7328, %v7459
      %v7464 = vld [vmem:[%s7329] sm:$0x7]
      %v7465 = vld [vmem:[%s7329 + $0x4] sm:$0x7]
      %v7466 = vld [vmem:[%s7329 + $0x8] sm:$0x7]
      %v7467 = vld [vmem:[%s7329 + $0xc] sm:$0x7]
      %v7473 = vunpack.c.l.s4 1983009808
      %v7474 = vunpack.c.0.s8 %v7473
      %v7475 = vlaneseq
      %v7476 = vshrl.u32 %v7475, 7
      %v7477 = vsub.s32 %v7474, %v7476
      %v7478 = vrot.slane %v7464, %v7477
      %v7479 = vcombine.high %v7478, %v7478
      %v7481 = vunpack.c.l.s4 1983009808
      %v7482 = vunpack.c.0.s8 %v7481
      %v7483 = vlaneseq
      %v7484 = vshrl.u32 %v7483, 7
      %v7485 = vsub.s32 %v7482, %v7484
      %v7486 = vrot.slane %v7465, %v7485
      %v7487 = vcombine.high %v7486, %v7486
      %v7489 = vunpack.c.l.s4 1983009808
      %v7490 = vunpack.c.0.s8 %v7489
      %v7491 = vlaneseq
      %v7492 = vshrl.u32 %v7491, 7
      %v7493 = vsub.s32 %v7490, %v7492
      %v7494 = vrot.slane %v7466, %v7493
      %v7495 = vcombine.high %v7494, %v7494
      %v7497 = vunpack.c.l.s4 1983009808
      %v7498 = vunpack.c.0.s8 %v7497
      %v7499 = vlaneseq
      %v7500 = vshrl.u32 %v7499, 7
      %v7501 = vsub.s32 %v7498, %v7500
      %v7502 = vrot.slane %v7467, %v7501
      %v7503 = vcombine.high %v7502, %v7502
      %v7505 = vshrl.u32 %v7478, 16
      %v7507 = vrot.slane %v7505, 6
      %v7508 = vshll.u32 %v7478, 16
      %v7510 = vrot.slane %v7508, 7
      %v7511 = vor.u32 %v7507, %v7510
      %v7512 = vrot.slane %v7511, 2
      %v7514 = vshll.u32 %v7479, 16
      %v7516 = vrot.slane %v7514, 7
      %v7517 = vsel %vm4490, %v7512, %v7516
      %v7519 = vshrl.u32 %v7486, 16
      %v7521 = vrot.slane %v7519, 6
      %v7522 = vshll.u32 %v7486, 16
      %v7524 = vrot.slane %v7522, 7
      %v7525 = vor.u32 %v7521, %v7524
      %v7526 = vrot.slane %v7525, 2
      %v7528 = vshll.u32 %v7487, 16
      %v7530 = vrot.slane %v7528, 7
      %v7531 = vsel %vm4490, %v7526, %v7530
      %v7533 = vshrl.u32 %v7494, 16
      %v7535 = vrot.slane %v7533, 6
      %v7536 = vshll.u32 %v7494, 16
      %v7538 = vrot.slane %v7536, 7
      %v7539 = vor.u32 %v7535, %v7538
      %v7540 = vrot.slane %v7539, 2
      %v7542 = vshll.u32 %v7495, 16
      %v7544 = vrot.slane %v7542, 7
      %v7545 = vsel %vm4490, %v7540, %v7544
      %v7547 = vshrl.u32 %v7502, 16
      %v7549 = vrot.slane %v7547, 6
      %v7550 = vshll.u32 %v7502, 16
      %v7552 = vrot.slane %v7550, 7
      %v7553 = vor.u32 %v7549, %v7552
      %v7554 = vrot.slane %v7553, 2
      %v7556 = vshll.u32 %v7503, 16
      %v7558 = vrot.slane %v7556, 7
      %v7559 = vsel %vm4490, %v7554, %v7558
      %s7560 = scalar_lea.vmem %s3, 448
      %v7561 = vld [vmem:[%s7560] sm:$0xf]
      %v7562 = vld [vmem:[%s7560 + $0x4] sm:$0xf]
      %v7563 = vld [vmem:[%s7560 + $0x8] sm:$0xf]
      %v7564 = vld [vmem:[%s7560 + $0xc] sm:$0xf]
      %v7565 = vld [vmem:[%s7560 + $0x10] sm:$0xf]
      %v7566 = vld [vmem:[%s7560 + $0x14] sm:$0xf]
      %v7567 = vld [vmem:[%s7560 + $0x18] sm:$0xf]
      %v7568 = vld [vmem:[%s7560 + $0x1c] sm:$0xf]
      %v7569 = vld [vmem:[%s7560 + $0x20] sm:$0xf]
      %v7570 = vld [vmem:[%s7560 + $0x24] sm:$0xf]
      %v7571 = vld [vmem:[%s7560 + $0x28] sm:$0xf]
      %v7572 = vld [vmem:[%s7560 + $0x2c] sm:$0xf]
      %v7573 = vld [vmem:[%s7560 + $0x30] sm:$0xf]
      %v7574 = vld [vmem:[%s7560 + $0x34] sm:$0xf]
      %v7575 = vld [vmem:[%s7560 + $0x38] sm:$0xf]
      %v7576 = vld [vmem:[%s7560 + $0x3c] sm:$0xf]
      %v7577 = vcombine.low %v7517, %v7531
      %v7578 = vcombine.low %v7545, %v7559
      %v7580 = vunpack.c.l.s4 1983009808
      %v7581 = vunpack.c.0.s8 %v7580
      %v7582 = vlaneseq
      %v7583 = vshrl.u32 %v7582, 7
      %v7584 = vsub.s32 %v7581, %v7583
      %v7585 = vrot.slane %v7577, %v7584
      %v7587 = vunpack.c.l.s4 1983009808
      %v7588 = vunpack.c.0.s8 %v7587
      %v7589 = vlaneseq
      %v7590 = vshrl.u32 %v7589, 7
      %v7591 = vsub.s32 %v7588, %v7590
      %v7592 = vrot.slane %v7578, %v7591
      %v7593 = vcombine.low %v7585, %v7592
      %v7611 = vunpack.c.l.b16 %v7561
      %v7612 = vunpack.c.l.b16 %v7562
      %v7613 = vunpack.c.l.b16 %v7563
      %v7614 = vunpack.c.l.b16 %v7564
      %v7615 = vunpack.c.l.b16 %v7565
      %v7616 = vunpack.c.l.b16 %v7566
      %v7617 = vunpack.c.l.b16 %v7567
      %v7618 = vunpack.c.l.b16 %v7568
      %v7619 = vunpack.c.l.b16 %v7569
      %v7620 = vunpack.c.l.b16 %v7570
      %v7621 = vunpack.c.l.b16 %v7571
      %v7622 = vunpack.c.l.b16 %v7572
      %v7623 = vunpack.c.l.b16 %v7573
      %v7624 = vunpack.c.l.b16 %v7574
      %v7625 = vunpack.c.l.b16 %v7575
      %v7626 = vunpack.c.l.b16 %v7576
      %v7627 = vpack.c.b16 %v7612, %v7611
      %v7628 = vpack.c.b16 %v7614, %v7613
      %v7629 = vpack.c.b16 %v7616, %v7615
      %v7630 = vpack.c.b16 %v7618, %v7617
      %v7631 = vpack.c.b16 %v7620, %v7619
      %v7632 = vpack.c.b16 %v7622, %v7621
      %v7633 = vpack.c.b16 %v7624, %v7623
      %v7634 = vpack.c.b16 %v7626, %v7625
      %7643 = vmatprep.subr.bf16.mxu0 0
      %7644 = vmatpush1.bf16.msra.mxu0 %v7634
      %7645 = vmatprep.subr.bf16.mxu0 0
      %7646 = vmatpush1.bf16.msra.mxu0 %v7633
      %7647 = vmatprep.subr.bf16.mxu0 0
      %7648 = vmatpush1.bf16.msra.mxu0 %v7632
      %7649 = vmatprep.subr.bf16.mxu0 0
      %7650 = vmatpush1.bf16.msra.mxu0 %v7631
      %7651 = vmatprep.subr.bf16.mxu0 0
      %7652 = vmatpush1.bf16.msra.mxu0 %v7630
      %7653 = vmatprep.subr.bf16.mxu0 0
      %7654 = vmatpush1.bf16.msra.mxu0 %v7629
      %7655 = vmatprep.subr.bf16.mxu0 0
      %7656 = vmatpush1.bf16.msra.mxu0 %v7628
      %7657 = vmatprep.subr.bf16.mxu0 0
      %7658 = vmatpush1.bf16.msra.mxu0 %v7627
      %7659 = vmatprep.subr.bf16.mxu0 0
      %7660 = vmatpush2.bf16.msra.mxu0 0
      %7661 = vmatprep.subr.bf16.mxu0 0
      %7662 = vmatpush2.bf16.msra.mxu0 0
      %7663 = vmatprep.subr.bf16.mxu0 0
      %7664 = vmatpush2.bf16.msra.mxu0 0
      %7665 = vmatprep.subr.bf16.mxu0 0
      %7666 = vmatpush2.bf16.msra.mxu0 0
      %7667 = vmatprep.subr.bf16.mxu0 0
      %7668 = vmatpush2.bf16.msra.mxu0 0
      %7669 = vmatprep.subr.bf16.mxu0 0
      %7670 = vmatpush2.bf16.msra.mxu0 0
      %7671 = vmatprep.subr.bf16.mxu0 0
      %7672 = vmatpush2.bf16.msra.mxu0 0
      %7673 = vmatprep.subr.bf16.mxu0 0
      %7674 = vmatpush2.bf16.msra.mxu0 0
      %7675 = vmatprep.mubr.bf16.mxu0 0
      %7676 = vmatmul.mubr.bf16.gmra.mxu0 %v7593
      %v7677 = vpop.f32.mrf.mxu0
      %v7678 = vadd.f32 0.0, %v7677
      %v7679 = vpop.f32.mrf.mxu0
      %v7680 = vpop.f32.mrf.mxu0
      %v7681 = vadd.f32 0.0, %v7680
      %v7682 = vpop.f32.mrf.mxu0
      %7683 = vdwg.mxu0
      %v7684 = vadd.f32 %v7462, %v7678
      %v7685 = vadd.f32 %v7463, %v7681
      %v7686 = vld [vmem:[%s7329] sm:$0x6]
      %v7687 = vld [vmem:[%s7329 + $0x4] sm:$0x6]
      %v7688 = vld [vmem:[%s7329 + $0x8] sm:$0x6]
      %v7689 = vld [vmem:[%s7329 + $0xc] sm:$0x6]
      %v7695 = vunpack.c.l.s4 1983009808
      %v7696 = vunpack.c.0.s8 %v7695
      %v7697 = vlaneseq
      %v7698 = vshrl.u32 %v7697, 7
      %v7699 = vsub.s32 %v7696, %v7698
      %v7700 = vrot.slane %v7686, %v7699
      %v7701 = vcombine.high %v7700, %v7700
      %v7703 = vunpack.c.l.s4 1983009808
      %v7704 = vunpack.c.0.s8 %v7703
      %v7705 = vlaneseq
      %v7706 = vshrl.u32 %v7705, 7
      %v7707 = vsub.s32 %v7704, %v7706
      %v7708 = vrot.slane %v7687, %v7707
      %v7709 = vcombine.high %v7708, %v7708
      %v7711 = vunpack.c.l.s4 1983009808
      %v7712 = vunpack.c.0.s8 %v7711
      %v7713 = vlaneseq
      %v7714 = vshrl.u32 %v7713, 7
      %v7715 = vsub.s32 %v7712, %v7714
      %v7716 = vrot.slane %v7688, %v7715
      %v7717 = vcombine.high %v7716, %v7716
      %v7719 = vunpack.c.l.s4 1983009808
      %v7720 = vunpack.c.0.s8 %v7719
      %v7721 = vlaneseq
      %v7722 = vshrl.u32 %v7721, 7
      %v7723 = vsub.s32 %v7720, %v7722
      %v7724 = vrot.slane %v7689, %v7723
      %v7725 = vcombine.high %v7724, %v7724
      %v7726 = vrot.slane %v7700, 7
      %v7727 = vrot.slane %v7726, 2
      %v7728 = vrot.slane %v7701, 7
      %v7729 = vsel %vm6648, %v7727, %v7728
      %v7730 = vrot.slane %v7708, 7
      %v7731 = vrot.slane %v7730, 2
      %v7732 = vrot.slane %v7709, 7
      %v7733 = vsel %vm6648, %v7731, %v7732
      %v7734 = vrot.slane %v7716, 7
      %v7735 = vrot.slane %v7734, 2
      %v7736 = vrot.slane %v7717, 7
      %v7737 = vsel %vm6648, %v7735, %v7736
      %v7738 = vrot.slane %v7724, 7
      %v7739 = vrot.slane %v7738, 2
      %v7740 = vrot.slane %v7725, 7
      %v7741 = vsel %vm6648, %v7739, %v7740
      %s7742 = scalar_lea.vmem %s3, 512
      %v7743 = vld [vmem:[%s7742] sm:$0xf]
      %v7744 = vld [vmem:[%s7742 + $0x4] sm:$0xf]
      %v7745 = vld [vmem:[%s7742 + $0x8] sm:$0xf]
      %v7746 = vld [vmem:[%s7742 + $0xc] sm:$0xf]
      %v7747 = vld [vmem:[%s7742 + $0x10] sm:$0xf]
      %v7748 = vld [vmem:[%s7742 + $0x14] sm:$0xf]
      %v7749 = vld [vmem:[%s7742 + $0x18] sm:$0xf]
      %v7750 = vld [vmem:[%s7742 + $0x1c] sm:$0xf]
      %v7751 = vld [vmem:[%s7742 + $0x20] sm:$0xf]
      %v7752 = vld [vmem:[%s7742 + $0x24] sm:$0xf]
      %v7753 = vld [vmem:[%s7742 + $0x28] sm:$0xf]
      %v7754 = vld [vmem:[%s7742 + $0x2c] sm:$0xf]
      %v7755 = vld [vmem:[%s7742 + $0x30] sm:$0xf]
      %v7756 = vld [vmem:[%s7742 + $0x34] sm:$0xf]
      %v7757 = vld [vmem:[%s7742 + $0x38] sm:$0xf]
      %v7758 = vld [vmem:[%s7742 + $0x3c] sm:$0xf]
      %v7759 = vcombine.low %v7729, %v7733
      %v7760 = vcombine.low %v7737, %v7741
      %v7762 = vunpack.c.l.s4 1983009808
      %v7763 = vunpack.c.0.s8 %v7762
      %v7764 = vlaneseq
      %v7765 = vshrl.u32 %v7764, 7
      %v7766 = vsub.s32 %v7763, %v7765
      %v7767 = vrot.slane %v7759, %v7766
      %v7769 = vunpack.c.l.s4 1983009808
      %v7770 = vunpack.c.0.s8 %v7769
      %v7771 = vlaneseq
      %v7772 = vshrl.u32 %v7771, 7
      %v7773 = vsub.s32 %v7770, %v7772
      %v7774 = vrot.slane %v7760, %v7773
      %v7775 = vcombine.low %v7767, %v7774
      %v7793 = vunpack.c.l.b16 %v7743
      %v7794 = vunpack.c.l.b16 %v7744
      %v7795 = vunpack.c.l.b16 %v7745
      %v7796 = vunpack.c.l.b16 %v7746
      %v7797 = vunpack.c.l.b16 %v7747
      %v7798 = vunpack.c.l.b16 %v7748
      %v7799 = vunpack.c.l.b16 %v7749
      %v7800 = vunpack.c.l.b16 %v7750
      %v7801 = vunpack.c.l.b16 %v7751
      %v7802 = vunpack.c.l.b16 %v7752
      %v7803 = vunpack.c.l.b16 %v7753
      %v7804 = vunpack.c.l.b16 %v7754
      %v7805 = vunpack.c.l.b16 %v7755
      %v7806 = vunpack.c.l.b16 %v7756
      %v7807 = vunpack.c.l.b16 %v7757
      %v7808 = vunpack.c.l.b16 %v7758
      %v7809 = vpack.c.b16 %v7794, %v7793
      %v7810 = vpack.c.b16 %v7796, %v7795
      %v7811 = vpack.c.b16 %v7798, %v7797
      %v7812 = vpack.c.b16 %v7800, %v7799
      %v7813 = vpack.c.b16 %v7802, %v7801
      %v7814 = vpack.c.b16 %v7804, %v7803
      %v7815 = vpack.c.b16 %v7806, %v7805
      %v7816 = vpack.c.b16 %v7808, %v7807
      %7825 = vmatprep.subr.bf16.mxu0 0
      %7826 = vmatpush1.bf16.msra.mxu0 %v7816
      %7827 = vmatprep.subr.bf16.mxu0 0
      %7828 = vmatpush1.bf16.msra.mxu0 %v7815
      %7829 = vmatprep.subr.bf16.mxu0 0
      %7830 = vmatpush1.bf16.msra.mxu0 %v7814
      %7831 = vmatprep.subr.bf16.mxu0 0
      %7832 = vmatpush1.bf16.msra.mxu0 %v7813
      %7833 = vmatprep.subr.bf16.mxu0 0
      %7834 = vmatpush1.bf16.msra.mxu0 %v7812
      %7835 = vmatprep.subr.bf16.mxu0 0
      %7836 = vmatpush1.bf16.msra.mxu0 %v7811
      %7837 = vmatprep.subr.bf16.mxu0 0
      %7838 = vmatpush1.bf16.msra.mxu0 %v7810
      %7839 = vmatprep.subr.bf16.mxu0 0
      %7840 = vmatpush1.bf16.msra.mxu0 %v7809
      %7841 = vmatprep.subr.bf16.mxu0 0
      %7842 = vmatpush2.bf16.msra.mxu0 0
      %7843 = vmatprep.subr.bf16.mxu0 0
      %7844 = vmatpush2.bf16.msra.mxu0 0
      %7845 = vmatprep.subr.bf16.mxu0 0
      %7846 = vmatpush2.bf16.msra.mxu0 0
      %7847 = vmatprep.subr.bf16.mxu0 0
      %7848 = vmatpush2.bf16.msra.mxu0 0
      %7849 = vmatprep.subr.bf16.mxu0 0
      %7850 = vmatpush2.bf16.msra.mxu0 0
      %7851 = vmatprep.subr.bf16.mxu0 0
      %7852 = vmatpush2.bf16.msra.mxu0 0
      %7853 = vmatprep.subr.bf16.mxu0 0
      %7854 = vmatpush2.bf16.msra.mxu0 0
      %7855 = vmatprep.subr.bf16.mxu0 0
      %7856 = vmatpush2.bf16.msra.mxu0 0
      %7857 = vmatprep.mubr.bf16.mxu0 0
      %7858 = vmatmul.mubr.bf16.gmra.mxu0 %v7775
      %v7859 = vpop.f32.mrf.mxu0
      %v7860 = vadd.f32 0.0, %v7859
      %v7861 = vpop.f32.mrf.mxu0
      %v7862 = vpop.f32.mrf.mxu0
      %v7863 = vadd.f32 0.0, %v7862
      %v7864 = vpop.f32.mrf.mxu0
      %7865 = vdwg.mxu0
      %v7866 = vadd.f32 %v7684, %v7860
      %v7867 = vadd.f32 %v7685, %v7863
      %v7868 = vld [vmem:[%s4 + $0x2] sm:$0x1]
      %v7869 = vlaneseq
      %v7870 = vshrl.u32 %v7869, 7
      %v7871 = vsub.s32 0, %v7870
      %v7872 = vrot.slane %v7868, %v7871
      %v7873 = vmul.f32 %v7866, %v7872
      %v7874 = vmul.f32 %v7867, %v7872
      %v7875 = vld [vmem:[%s5 + $0x2] sm:$0x1]
      %v7876 = vlaneseq
      %v7877 = vshrl.u32 %v7876, 7
      %v7878 = vsub.s32 0, %v7877
      %v7879 = vrot.slane %v7875, %v7878
      %v7880 = vadd.f32 %v7873, %v7879
      %v7881 = vadd.f32 %v7874, %v7879
      %v7882 = vmul.f32 %v7880, 0.5
      %v7883 = vmul.f32 %v7881, 0.5
      %v7884 = vmul.f32 %v7880, 0.70710677
      %v7885 = vmul.f32 %v7881, 0.70710677
      %v7886 = verf.f32.pop %v7884
      %v7887 = verf.f32.pop %v7885
      %v7888 = vadd.f32 %v7886, 1.0
      %v7889 = vadd.f32 %v7887, 1.0
      %v7890 = vmul.f32 %v7882, %v7888
      %v7891 = vmul.f32 %v7883, %v7889
      %7892 = vst [vmem:[%s256] sm:$0xff] %v7890
      %7893 = vst [vmem:[%s256 + $0x8] sm:$0xff] %v7891
      %p7894 = scmp.lt.s32.totalorder %s17, 1
      %s7895 = scalar_select %p7894, %s17, 1
      %s7896 = smul.addr %s7895, 2
      %s7897 = smul.addr %s7896, 8
      %s7898 = scalar_lea.vmem %s6, %s7897
      // Predicated region
      $region45: #{conv_stem_forward.1} parent=43 // pred_check
        %p7899 = pneg %p166
      $region46: #{conv_stem_forward.1} parent=43 // pred_check_branch
        %7901 = sbr.rel (%p7899) target = $region48
      $region47: #{conv_stem_forward.1} parent=43 // pred_region
        _
      $region48: #{conv_stem_forward.1} parent=43 // pred_fallthru
        _
    $region44: #{conv_stem_forward.1} parent=5 // pred_fallthru
      _
    %p7902 = scmp.le.s32.totalorder 2, %s12
    // Predicated region
    $region49: #{conv_stem_forward.1} parent=5 // pred_check
      %p7903 = pneg %p7902
    $region50: #{conv_stem_forward.1} parent=5 // pred_check_branch
      %7905 = sbr.rel (%p7903) target = $region52
    $region51: #{conv_stem_forward.1} parent=5 // pred_region
      %s7906 = ssub.s32 %s12, 2
      // Predicated region
      $region53: #{conv_stem_forward.1} parent=51 // pred_check
        %p7907 = pneg %p172
      $region54: #{conv_stem_forward.1} parent=51 // pred_check_branch
        %7909 = sbr.rel (%p7907) target = $region56
      $region55: #{conv_stem_forward.1} parent=51 // pred_region
        %p7910 = scmp.lt.s32.totalorder %s18, 1
        %s7911 = scalar_select %p7910, %s18, 1
        %s7912 = smul.addr %s7911, 2
        %s7913 = smul.addr %s7912, 8
        %s7914 = scalar_lea.vmem %s6, %s7913
      $region56: #{conv_stem_forward.1} parent=51 // pred_fallthru
        _
    $region52: #{conv_stem_forward.1} parent=5 // pred_fallthru
      _
  $region6: #{conv_stem_forward.1} parent=0 // loop_footer
    %s16 = sadd.s32 1, %s12
  $region7: #{conv_stem_forward.1} parent=0 // loop_footer_branch
    %11 = sbr.rel target = $region3
  $region8: #{conv_stem_forward.1} parent=0 // loop_exit
    _

</llo_original>
